<compile_context>
chip_gen: v6e
topology: v6e:2x2x1
jax: 0.10.0
libtpu: 0.0.40
codegen_flags: <defaults>
</compile_context>

<pallas_src>
import math

import jax
import jax.numpy as jnp
from jax import lax
from jax.experimental import pallas as pl
from jax.experimental.pallas import tpu as pltpu


# ------------------------------ fused model kernel -----------------------------

def _fused_kernel(x_ref,
                  wih0_ref, whh0_ref, bg0_ref,
                  wih1_ref, whh1_ref, bg1_ref,
                  wih2_ref, whh2_ref, bg2_ref,
                  w1_ref, b1_ref, w2_hbm_ref, b2_ref, w3_hbm_ref, b3_ref,
                  o_ref,
                  gx_scr, hseq_a, hseq_b, w2_vmem, w3_vmem, dma_sem):
    """Fused 3-layer LSTM + (BN-folded) MLP head.

    x_ref:    (T, B, D)   time-major input (f32)
    wih*:     (Din, 4H)   input->gate weights, pre-transposed (f32)
    whh*:     (H, 4H)     hidden->gate weights, pre-transposed (f32)
    bg*:      (1, 4H)     combined LSTM biases b_ih + b_hh (f32)
    w1/b1:    (H, 512) bf16 / (1, 512) f32         first Linear
    w2/b2:    (512, 1024) bf16 (HBM) / (1, 1024)   second Linear, BN1 folded
    w3/b3:    (1024, 128) bf16 (HBM) / (1, 128)    third Linear, BN2 folded
    o_ref:    (T, B, 128) time-major output (f32)
    gx_scr:   (T, B, 4H)  VMEM scratch: hoisted input-projection gates
    hseq_a/b: (T, B, H)   VMEM scratch: per-layer hidden sequences
    w2_vmem/w3_vmem:      VMEM landing buffers for the manually-DMA'd weights
    dma_sem:  (2,)        DMA completion semaphores
    """
    T, B, D = x_ref.shape
    H = whh0_ref.shape[0]
    G = 4 * H

    # Kick off the head-weight DMAs immediately so they overlap the whole
    # 3-layer recurrence (P4-style manual copy; waited just before the head).
    w2_cp = pltpu.make_async_copy(w2_hbm_ref, w2_vmem, dma_sem.at[0])
    w3_cp = pltpu.make_async_copy(w3_hbm_ref, w3_vmem, dma_sem.at[1])
    w2_cp.start()
    w3_cp.start()

    def recurrence(whh, out_hseq):
        """Time loop given gx_scr already filled with x @ W_ih + b.

        h/c are carried as register values; the only VMEM traffic on the
        chain is the gx_scr[t] load and the out_hseq[t] store.
        """
        def step(t, carry):
            h, c = carry
            gates = gx_scr[t] + jnp.dot(h, whh,
                                        preferred_element_type=jnp.float32)
            # PyTorch gate order: i, f, g, o. One full-tile sigmoid (i/f/o are
            # 3 of 4 quarters); tanh only on the g quarter (EUP work / 4).
            sig = jax.nn.sigmoid(gates)
            i = sig[:, 0 * H:1 * H]
            f = sig[:, 1 * H:2 * H]
            o = sig[:, 3 * H:4 * H]
            g = jnp.tanh(gates[:, 2 * H:3 * H])
            c = f * c + i * g
            h = o * jnp.tanh(c)
            out_hseq[t] = h
            return (h, c)

        zeros = jnp.zeros((B, H), jnp.float32)
        # T is a static trip count: fully unroll for LLO scheduler visibility.
        lax.fori_loop(0, T, step, (zeros, zeros), unroll=True)

    # ---------------- LSTM layer 0 (input projection hoisted) -----------------
    x_flat = x_ref[...].reshape(T * B, D)
    gx_scr[...] = (jnp.dot(x_flat, wih0_ref[...],
                           preferred_element_type=jnp.float32)
                   + bg0_ref[...]).reshape(T, B, G)
    recurrence(whh0_ref[...], hseq_a)

    # ---------------- LSTM layer 1 ---------------------------------------------
    hs = hseq_a[...].reshape(T * B, H)
    gx_scr[...] = (jnp.dot(hs, wih1_ref[...],
                           preferred_element_type=jnp.float32)
                   + bg1_ref[...]).reshape(T, B, G)
    recurrence(whh1_ref[...], hseq_b)

    # ---------------- LSTM layer 2 ---------------------------------------------
    hs = hseq_b[...].reshape(T * B, H)
    gx_scr[...] = (jnp.dot(hs, wih2_ref[...],
                           preferred_element_type=jnp.float32)
                   + bg2_ref[...]).reshape(T, B, G)
    recurrence(whh2_ref[...], hseq_a)

    # ---------------- MLP head (BatchNorms folded, bf16 operands, f32 acc) -----
    hs = hseq_a[...].reshape(T * B, H)
    h1 = jnp.maximum(
        jnp.dot(hs.astype(jnp.bfloat16), w1_ref[...],
                preferred_element_type=jnp.float32) + b1_ref[...], 0.0)

    # Head weights must have landed by now; the DMA had the entire recurrence
    # plus the layer-0..2 input projections to complete in the background.
    w2_cp.wait()
    w3_cp.wait()

    h2 = jnp.maximum(
        jnp.dot(h1.astype(jnp.bfloat16), w2_vmem[...],
                preferred_element_type=jnp.float32) + b2_ref[...], 0.0)
    out = (jnp.dot(h2.astype(jnp.bfloat16), w3_vmem[...],
                   preferred_element_type=jnp.float32) + b3_ref[...])
    o_ref[...] = out.reshape(T, B, o_ref.shape[-1])


def _fused_forward_tbd(x_tbd, prepared):
    """x_tbd: (T, B, D) time-major -> (T, B, 128) time-major."""
    T, B, D = x_tbd.shape
    l0, l1, l2 = prepared["lstm"]
    fc = prepared["fc"]
    H = l0["w_hh"].shape[0]
    OUT = fc["w3"].shape[1]

    args = (
        x_tbd,
        l0["w_ih"], l0["w_hh"], l0["b"],
        l1["w_ih"], l1["w_hh"], l1["b"],
        l2["w_ih"], l2["w_hh"], l2["b"],
        fc["w1"], fc["b1"], fc["w2"], fc["b2"], fc["w3"], fc["b3"],
    )

    def full(a):
        nd = a.ndim
        return pl.BlockSpec(a.shape, lambda i, _nd=nd: (0,) * _nd)

    in_specs = [full(a) for a in args]
    # w2 (arg 12) and w3 (arg 14) stay in HBM and are streamed manually inside
    # the kernel so their DMA overlaps the recurrence instead of serializing
    # in the pipeline prologue.
    in_specs[12] = pl.BlockSpec(memory_space=pl.ANY)
    in_specs[14] = pl.BlockSpec(memory_space=pl.ANY)

    return pl.pallas_call(
        _fused_kernel,
        out_shape=jax.ShapeDtypeStruct((T, B, OUT), jnp.float32),
        grid=(1,),
        in_specs=in_specs,
        out_specs=pl.BlockSpec((T, B, OUT), lambda i: (0, 0, 0)),
        scratch_shapes=[
            pltpu.VMEM((T, B, 4 * H), jnp.float32),     # hoisted input gates
            pltpu.VMEM((T, B, H), jnp.float32),         # hidden sequence (ping)
            pltpu.VMEM((T, B, H), jnp.float32),         # hidden sequence (pong)
            pltpu.VMEM(fc["w2"].shape, fc["w2"].dtype),  # w2 landing buffer
            pltpu.VMEM(fc["w3"].shape, fc["w3"].dtype),  # w3 landing buffer
            pltpu.SemaphoreType.DMA((2,)),               # w2/w3 copy sems
        ],
        compiler_params=pltpu.CompilerParams(
            dimension_semantics=("arbitrary",)),
    )(*args)


# ------------------------------ parameter preparation ---------------------------

def prepare_params(params, eps=1e-5):
    """Fold the eval-mode BatchNorms into the following Linear layers and cast
    the head weights to bf16 (fold math stays in f32; biases stay f32).

    BN(x) = x*scale + shift, scale = g*rsqrt(rv+eps), shift = b - rm*scale.
    Then BN(x) @ W + b == x @ (scale[:,None]*W) + (shift @ W + b).
    """
    fc = params["fc"]
    s1 = fc["bn1_g"] * lax.rsqrt(fc["bn1_rv"] + eps)
    t1 = fc["bn1_b"] - fc["bn1_rm"] * s1
    s2 = fc["bn2_g"] * lax.rsqrt(fc["bn2_rv"] + eps)
    t2 = fc["bn2_b"] - fc["bn2_rm"] * s2
    fc_folded = {
        "w1": fc["w1"].astype(jnp.bfloat16),
        "b1": fc["b1"],
        "w2": (s1.reshape(-1, 1) * fc["w2"]).astype(jnp.bfloat16),
        "b2": fc["b2"] + t1 @ fc["w2"],
        "w3": (s2.reshape(-1, 1) * fc["w3"]).astype(jnp.bfloat16),
        "b3": fc["b3"] + t2 @ fc["w3"],
    }
    return {"lstm": params["lstm"], "fc": fc_folded}


# ---------------------------------- full forward --------------------------------

@jax.jit
def kinematics_lstm_forward(x_btd, prepared):
    """x_btd: (B, T, input_dim) batch-first -> (B, T, 128)."""
    x_tbd = jnp.transpose(x_btd, (1, 0, 2)).astype(jnp.float32)  # tiny reorder
    out_tbd = _fused_forward_tbd(x_tbd, prepared)
    return jnp.transpose(out_tbd, (1, 0, 2))


# ----------------------------- deterministic params ----------------------------

def init_params(key, input_dim, hidden_dim, num_layers=3):
    keys = iter(jax.random.split(key, 64))

    def unif(shape, bound):
        return jax.random.uniform(next(keys), shape, jnp.float32, -bound, bound)

    lstm = []
    k = 1.0 / math.sqrt(hidden_dim)
    for l in range(num_layers):
        din = input_dim if l == 0 else hidden_dim
        lstm.append({
            # stored transposed relative to PyTorch (4H, din): here (din, 4H)
            "w_ih": unif((din, 4 * hidden_dim), k),
            "w_hh": unif((hidden_dim, 4 * hidden_dim), k),
            "b": unif((1, 4 * hidden_dim), k) + unif((1, 4 * hidden_dim), k),
        })

    def linear(din, dout):
        bound = 1.0 / math.sqrt(din)
        return unif((din, dout), bound), unif((1, dout), bound)

    w1, b1 = linear(hidden_dim, 512)
    w2, b2 = linear(512, 1024)
    w3, b3 = linear(1024, 128)
    fc = {
        "w1": w1, "b1": b1,
        "bn1_g": jnp.ones((1, 512), jnp.float32),
        "bn1_b": jnp.zeros((1, 512), jnp.float32),
        "bn1_rm": 0.1 * unif((1, 512), 1.0),
        "bn1_rv": jnp.ones((1, 512), jnp.float32) + 0.1 * jnp.abs(unif((1, 512), 1.0)),
        "w2": w2, "b2": b2,
        "bn2_g": jnp.ones((1, 1024), jnp.float32),
        "bn2_b": jnp.zeros((1, 1024), jnp.float32),
        "bn2_rm": 0.1 * unif((1, 1024), 1.0),
        "bn2_rv": jnp.ones((1, 1024), jnp.float32) + 0.1 * jnp.abs(unif((1, 1024), 1.0)),
        "w3": w3, "b3": b3,
    }
    return {"lstm": lstm, "fc": fc}


# ------------------------------- pure-JAX reference ----------------------------

def _reference_forward(x_btd, params):
    """Un-fused, un-folded f32 reference (BatchNorm applied explicitly)."""
    B, T, _ = x_btd.shape
    h_seq = jnp.transpose(x_btd, (1, 0, 2)).astype(jnp.float32)
    H = params["lstm"][0]["w_hh"].shape[0]
    for layer in params["lstm"]:
        h = jnp.zeros((B, H), jnp.float32)
        c = jnp.zeros((B, H), jnp.float32)
        outs = []
        for t in range(T):
            gates = h_seq[t] @ layer["w_ih"] + h @ layer["w_hh"] + layer["b"]
            i = jax.nn.sigmoid(gates[:, :H])
            f = jax.nn.sigmoid(gates[:, H:2 * H])
            g = jnp.tanh(gates[:, 2 * H:3 * H])
            o = jax.nn.sigmoid(gates[:, 3 * H:])
            c = f * c + i * g
            h = o * jnp.tanh(c)
            outs.append(h)
        h_seq = jnp.stack(outs, 0)
    x = jnp.transpose(h_seq, (1, 0, 2)).reshape(B * T, H)
    p = params["fc"]
    eps = 1e-5
    h1 = jnp.maximum(x @ p["w1"] + p["b1"], 0.0)
    h1 = (h1 - p["bn1_rm"]) / jnp.sqrt(p["bn1_rv"] + eps) * p["bn1_g"] + p["bn1_b"]
    h2 = jnp.maximum(h1 @ p["w2"] + p["b2"], 0.0)
    h2 = (h2 - p["bn2_rm"]) / jnp.sqrt(p["bn2_rv"] + eps) * p["bn2_g"] + p["bn2_b"]
    return (h2 @ p["w3"] + p["b3"]).reshape(B, T, 128)


# -------------------------------------- main -----------------------------------

if __name__ == "__main__":
    INPUT_DIM = 20     # e.g. 20 kinematics features
    HIDDEN_DIM = 32
    NUM_LAYERS = 3
    B, T = 8, 8

    key = jax.random.PRNGKey(0)
    k_x, k_p = jax.random.split(key)
    x = jax.random.normal(k_x, (B, T, INPUT_DIM), jnp.float32)
    params = init_params(k_p, INPUT_DIM, HIDDEN_DIM, NUM_LAYERS)
    prepared = prepare_params(params)          # one-time BN folding + bf16 head

    out = kinematics_lstm_forward(x, prepared)
    out = jax.block_until_ready(out)

    ref = _reference_forward(x, params)
    assert out.shape == (B, T, 128), out.shape
    max_err = float(jnp.max(jnp.abs(out - ref)))
    # The LSTM recurrence stays f32 (tight); the MLP head uses bf16 operands
    # with f32 accumulation, so the comparison tolerance is set to cover the
    # expected ~1e-3-level bf16 rounding of the 512/1024-wide head matmuls.
    assert jnp.allclose(out, ref, atol=3e-3, rtol=3e-3), max_err

    print("KERNEL_OK")
</pallas_src>

<mosaic_0001>
module attributes {stable_mosaic.version = 11 : i64} {
  func.func @_fused_kernel(%arg0: i32, %arg1: memref<8x8x20xf32, #tpu.memory_space<vmem>>, %arg2: memref<20x128xf32, #tpu.memory_space<vmem>>, %arg3: memref<32x128xf32, #tpu.memory_space<vmem>>, %arg4: memref<1x128xf32, #tpu.memory_space<vmem>>, %arg5: memref<32x128xf32, #tpu.memory_space<vmem>>, %arg6: memref<32x128xf32, #tpu.memory_space<vmem>>, %arg7: memref<1x128xf32, #tpu.memory_space<vmem>>, %arg8: memref<32x128xf32, #tpu.memory_space<vmem>>, %arg9: memref<32x128xf32, #tpu.memory_space<vmem>>, %arg10: memref<1x128xf32, #tpu.memory_space<vmem>>, %arg11: memref<32x512xbf16, #tpu.memory_space<vmem>>, %arg12: memref<1x512xf32, #tpu.memory_space<vmem>>, %arg13: memref<512x1024xbf16, #tpu.memory_space<any>>, %arg14: memref<1x1024xf32, #tpu.memory_space<vmem>>, %arg15: memref<1024x128xbf16, #tpu.memory_space<any>>, %arg16: memref<1x128xf32, #tpu.memory_space<vmem>>, %arg17: memref<8x8x128xf32, #tpu.memory_space<vmem>>, %arg18: memref<8x8x128xf32, #tpu.memory_space<vmem>>, %arg19: memref<8x8x32xf32, #tpu.memory_space<vmem>>, %arg20: memref<8x8x32xf32, #tpu.memory_space<vmem>>, %arg21: memref<512x1024xbf16, #tpu.memory_space<vmem>>, %arg22: memref<1024x128xbf16, #tpu.memory_space<vmem>>, %arg23: memref<2x!tpu.dma_semaphore, #tpu.memory_space<semaphore_mem>>) attributes {dimension_semantics = [#tpu.dimension_semantics<arbitrary>], iteration_bounds = array<i64: 1>, scalar_prefetch = 0 : i64, scratch_operands = 6 : i64, tpu.core_type = #tpu.core_type<tc>, window_params = [{pipeline_mode = #tpu.pipeline_mode<synchronous>, transform_indices = @transform_0, window_bounds = array<i64: 8, 8, 20>}, {pipeline_mode = #tpu.pipeline_mode<synchronous>, transform_indices = @transform_1, window_bounds = array<i64: 20, 128>}, {pipeline_mode = #tpu.pipeline_mode<synchronous>, transform_indices = @transform_2, window_bounds = array<i64: 32, 128>}, {pipeline_mode = #tpu.pipeline_mode<synchronous>, transform_indices = @transform_3, window_bounds = array<i64: 1, 128>}, {pipeline_mode = #tpu.pipeline_mode<synchronous>, transform_indices = @transform_4, window_bounds = array<i64: 32, 128>}, {pipeline_mode = #tpu.pipeline_mode<synchronous>, transform_indices = @transform_5, window_bounds = array<i64: 32, 128>}, {pipeline_mode = #tpu.pipeline_mode<synchronous>, transform_indices = @transform_6, window_bounds = array<i64: 1, 128>}, {pipeline_mode = #tpu.pipeline_mode<synchronous>, transform_indices = @transform_7, window_bounds = array<i64: 32, 128>}, {pipeline_mode = #tpu.pipeline_mode<synchronous>, transform_indices = @transform_8, window_bounds = array<i64: 32, 128>}, {pipeline_mode = #tpu.pipeline_mode<synchronous>, transform_indices = @transform_9, window_bounds = array<i64: 1, 128>}, {pipeline_mode = #tpu.pipeline_mode<synchronous>, transform_indices = @transform_10, window_bounds = array<i64: 32, 512>}, {pipeline_mode = #tpu.pipeline_mode<synchronous>, transform_indices = @transform_11, window_bounds = array<i64: 1, 512>}, {}, {pipeline_mode = #tpu.pipeline_mode<synchronous>, transform_indices = @transform_13, window_bounds = array<i64: 1, 1024>}, {}, {pipeline_mode = #tpu.pipeline_mode<synchronous>, transform_indices = @transform_15, window_bounds = array<i64: 1, 128>}, {pipeline_mode = #tpu.pipeline_mode<synchronous>, transform_indices = @transform_16, window_bounds = array<i64: 8, 8, 128>}]} {
    %c0_i32 = arith.constant 0 : i32
    %0 = tpu.memref_slice %arg23[%c0_i32] : memref<2x!tpu.dma_semaphore, #tpu.memory_space<semaphore_mem>> -> memref<1x!tpu.dma_semaphore, #tpu.memory_space<semaphore_mem>>
    %1 = tpu.memref_squeeze %0 : memref<1x!tpu.dma_semaphore, #tpu.memory_space<semaphore_mem>> -> memref<!tpu.dma_semaphore, #tpu.memory_space<semaphore_mem>>
    tpu.enqueue_dma source(%arg13 : memref<512x1024xbf16, #tpu.memory_space<any>>) target(%arg21 : memref<512x1024xbf16, #tpu.memory_space<vmem>>) target_semaphore(%1 : memref<!tpu.dma_semaphore, #tpu.memory_space<semaphore_mem>>)
    %c1_i32 = arith.constant 1 : i32
    %2 = tpu.memref_slice %arg23[%c1_i32] : memref<2x!tpu.dma_semaphore, #tpu.memory_space<semaphore_mem>> -> memref<1x!tpu.dma_semaphore, #tpu.memory_space<semaphore_mem>>
    %3 = tpu.memref_squeeze %2 : memref<1x!tpu.dma_semaphore, #tpu.memory_space<semaphore_mem>> -> memref<!tpu.dma_semaphore, #tpu.memory_space<semaphore_mem>>
    tpu.enqueue_dma source(%arg15 : memref<1024x128xbf16, #tpu.memory_space<any>>) target(%arg22 : memref<1024x128xbf16, #tpu.memory_space<vmem>>) target_semaphore(%3 : memref<!tpu.dma_semaphore, #tpu.memory_space<semaphore_mem>>)
    %c0 = arith.constant 0 : index
    %c0_0 = arith.constant 0 : index
    %c0_1 = arith.constant 0 : index
    %4 = vector.load %arg1[%c0, %c0_0, %c0_1] : memref<8x8x20xf32, #tpu.memory_space<vmem>>, vector<8x8x20xf32>
    %5 = vector.shape_cast %4 : vector<8x8x20xf32> to vector<64x20xf32>
    %c0_2 = arith.constant 0 : index
    %c0_3 = arith.constant 0 : index
    %6 = vector.load %arg2[%c0_2, %c0_3] : memref<20x128xf32, #tpu.memory_space<vmem>>, vector<20x128xf32>
    %cst = arith.constant dense<0.000000e+00> : vector<64x128xf32>
    %7 = tpu.matmul %5, %6, %cst {dimension_numbers = #tpu.dot_dimension_numbers<[1], [0], [0], [1], [0, 0, 1, 1], [], []>} : vector<64x20xf32>, vector<20x128xf32>, vector<64x128xf32> -> vector<64x128xf32>
    %c0_4 = arith.constant 0 : index
    %c0_5 = arith.constant 0 : index
    %8 = vector.load %arg4[%c0_4, %c0_5] : memref<1x128xf32, #tpu.memory_space<vmem>>, vector<1x128xf32>
    %9 = vector.broadcast %8 : vector<1x128xf32> to vector<64x128xf32>
    %10 = arith.addf %7, %9 : vector<64x128xf32>
    %11 = vector.shape_cast %10 : vector<64x128xf32> to vector<8x8x128xf32>
    %c0_6 = arith.constant 0 : index
    %c0_7 = arith.constant 0 : index
    %c0_8 = arith.constant 0 : index
    %12 = vector.load %arg18[%c0_6, %c0_7, %c0_8] : memref<8x8x128xf32, #tpu.memory_space<vmem>>, vector<8x8x128xf32>
    tpu.vector_store %arg18[%c0_6, %c0_7, %c0_8], %11 {strides = array<i32>} : memref<8x8x128xf32, #tpu.memory_space<vmem>>, vector<8x8x128xf32>,
    %c0_9 = arith.constant 0 : index
    %c0_10 = arith.constant 0 : index
    %13 = vector.load %arg3[%c0_9, %c0_10] : memref<32x128xf32, #tpu.memory_space<vmem>>, vector<32x128xf32>
    %cst_11 = arith.constant 0.000000e+00 : f32
    %14 = vector.broadcast %cst_11 : f32 to vector<8x32xf32>
    %c0_i32_12 = arith.constant 0 : i32
    %15 = arith.index_cast %c0_i32_12 : i32 to index
    %c0_13 = arith.constant 0 : index
    %c0_14 = arith.constant 0 : index
    %16 = vector.load %arg18[%15, %c0_13, %c0_14] : memref<8x8x128xf32, #tpu.memory_space<vmem>>, vector<1x8x128xf32>
    %17 = vector.shape_cast %16 : vector<1x8x128xf32> to vector<8x128xf32>
    %cst_15 = arith.constant dense<0.000000e+00> : vector<8x128xf32>
    %18 = tpu.matmul %14, %13, %cst_15 {dimension_numbers = #tpu.dot_dimension_numbers<[1], [0], [0], [1], [0, 0, 1, 1], [], []>} : vector<8x32xf32>, vector<32x128xf32>, vector<8x128xf32> -> vector<8x128xf32>
    %19 = arith.addf %17, %18 : vector<8x128xf32>
    %20 = arith.negf %19 : vector<8x128xf32>
    %21 = math.exp %20 : vector<8x128xf32>
    %cst_16 = arith.constant 1.000000e+00 : f32
    %22 = vector.broadcast %cst_16 : f32 to vector<8x128xf32>
    %23 = arith.addf %22, %21 : vector<8x128xf32>
    %24 = arith.divf %22, %23 : vector<8x128xf32>
    %25 = vector.extract_strided_slice %24 {offsets = [0, 0], sizes = [8, 32], strides = [1, 1]} : vector<8x128xf32> to vector<8x32xf32>
    %26 = vector.extract_strided_slice %24 {offsets = [0, 32], sizes = [8, 32], strides = [1, 1]} : vector<8x128xf32> to vector<8x32xf32>
    %27 = vector.extract_strided_slice %24 {offsets = [0, 96], sizes = [8, 32], strides = [1, 1]} : vector<8x128xf32> to vector<8x32xf32>
    %28 = vector.extract_strided_slice %19 {offsets = [0, 64], sizes = [8, 32], strides = [1, 1]} : vector<8x128xf32> to vector<8x32xf32>
    %29 = math.tanh %28 : vector<8x32xf32>
    %30 = arith.mulf %26, %14 : vector<8x32xf32>
    %31 = arith.mulf %25, %29 : vector<8x32xf32>
    %32 = arith.addf %30, %31 : vector<8x32xf32>
    %33 = math.tanh %32 : vector<8x32xf32>
    %34 = arith.mulf %27, %33 : vector<8x32xf32>
    %35 = arith.index_cast %c0_i32_12 : i32 to index
    %c0_17 = arith.constant 0 : index
    %c0_18 = arith.constant 0 : index
    %36 = vector.load %arg19[%35, %c0_17, %c0_18] : memref<8x8x32xf32, #tpu.memory_space<vmem>>, vector<1x8x32xf32>
    %37 = vector.shape_cast %36 : vector<1x8x32xf32> to vector<8x32xf32>
    %38 = vector.shape_cast %34 : vector<8x32xf32> to vector<1x8x32xf32>
    tpu.vector_store %arg19[%35, %c0_17, %c0_18], %38 {strides = array<i32>} : memref<8x8x32xf32, #tpu.memory_space<vmem>>, vector<1x8x32xf32>,
    %c1_i32_19 = arith.constant 1 : i32
    %39 = arith.index_cast %c1_i32_19 : i32 to index
    %c0_20 = arith.constant 0 : index
    %c0_21 = arith.constant 0 : index
    %40 = vector.load %arg18[%39, %c0_20, %c0_21] : memref<8x8x128xf32, #tpu.memory_space<vmem>>, vector<1x8x128xf32>
    %41 = vector.shape_cast %40 : vector<1x8x128xf32> to vector<8x128xf32>
    %cst_22 = arith.constant dense<0.000000e+00> : vector<8x128xf32>
    %42 = tpu.matmul %34, %13, %cst_22 {dimension_numbers = #tpu.dot_dimension_numbers<[1], [0], [0], [1], [0, 0, 1, 1], [], []>} : vector<8x32xf32>, vector<32x128xf32>, vector<8x128xf32> -> vector<8x128xf32>
    %43 = arith.addf %41, %42 : vector<8x128xf32>
    %44 = arith.negf %43 : vector<8x128xf32>
    %45 = math.exp %44 : vector<8x128xf32>
    %cst_23 = arith.constant 1.000000e+00 : f32
    %46 = vector.broadcast %cst_23 : f32 to vector<8x128xf32>
    %47 = arith.addf %46, %45 : vector<8x128xf32>
    %48 = arith.divf %46, %47 : vector<8x128xf32>
    %49 = vector.extract_strided_slice %48 {offsets = [0, 0], sizes = [8, 32], strides = [1, 1]} : vector<8x128xf32> to vector<8x32xf32>
    %50 = vector.extract_strided_slice %48 {offsets = [0, 32], sizes = [8, 32], strides = [1, 1]} : vector<8x128xf32> to vector<8x32xf32>
    %51 = vector.extract_strided_slice %48 {offsets = [0, 96], sizes = [8, 32], strides = [1, 1]} : vector<8x128xf32> to vector<8x32xf32>
    %52 = vector.extract_strided_slice %43 {offsets = [0, 64], sizes = [8, 32], strides = [1, 1]} : vector<8x128xf32> to vector<8x32xf32>
    %53 = math.tanh %52 : vector<8x32xf32>
    %54 = arith.mulf %50, %32 : vector<8x32xf32>
    %55 = arith.mulf %49, %53 : vector<8x32xf32>
    %56 = arith.addf %54, %55 : vector<8x32xf32>
    %57 = math.tanh %56 : vector<8x32xf32>
    %58 = arith.mulf %51, %57 : vector<8x32xf32>
    %59 = arith.index_cast %c1_i32_19 : i32 to index
    %c0_24 = arith.constant 0 : index
    %c0_25 = arith.constant 0 : index
    %60 = vector.load %arg19[%59, %c0_24, %c0_25] : memref<8x8x32xf32, #tpu.memory_space<vmem>>, vector<1x8x32xf32>
    %61 = vector.shape_cast %60 : vector<1x8x32xf32> to vector<8x32xf32>
    %62 = vector.shape_cast %58 : vector<8x32xf32> to vector<1x8x32xf32>
    tpu.vector_store %arg19[%59, %c0_24, %c0_25], %62 {strides = array<i32>} : memref<8x8x32xf32, #tpu.memory_space<vmem>>, vector<1x8x32xf32>,
    %c2_i32 = arith.constant 2 : i32
    %63 = arith.index_cast %c2_i32 : i32 to index
    %c0_26 = arith.constant 0 : index
    %c0_27 = arith.constant 0 : index
    %64 = vector.load %arg18[%63, %c0_26, %c0_27] : memref<8x8x128xf32, #tpu.memory_space<vmem>>, vector<1x8x128xf32>
    %65 = vector.shape_cast %64 : vector<1x8x128xf32> to vector<8x128xf32>
    %cst_28 = arith.constant dense<0.000000e+00> : vector<8x128xf32>
    %66 = tpu.matmul %58, %13, %cst_28 {dimension_numbers = #tpu.dot_dimension_numbers<[1], [0], [0], [1], [0, 0, 1, 1], [], []>} : vector<8x32xf32>, vector<32x128xf32>, vector<8x128xf32> -> vector<8x128xf32>
    %67 = arith.addf %65, %66 : vector<8x128xf32>
    %68 = arith.negf %67 : vector<8x128xf32>
    %69 = math.exp %68 : vector<8x128xf32>
    %cst_29 = arith.constant 1.000000e+00 : f32
    %70 = vector.broadcast %cst_29 : f32 to vector<8x128xf32>
    %71 = arith.addf %70, %69 : vector<8x128xf32>
    %72 = arith.divf %70, %71 : vector<8x128xf32>
    %73 = vector.extract_strided_slice %72 {offsets = [0, 0], sizes = [8, 32], strides = [1, 1]} : vector<8x128xf32> to vector<8x32xf32>
    %74 = vector.extract_strided_slice %72 {offsets = [0, 32], sizes = [8, 32], strides = [1, 1]} : vector<8x128xf32> to vector<8x32xf32>
    %75 = vector.extract_strided_slice %72 {offsets = [0, 96], sizes = [8, 32], strides = [1, 1]} : vector<8x128xf32> to vector<8x32xf32>
    %76 = vector.extract_strided_slice %67 {offsets = [0, 64], sizes = [8, 32], strides = [1, 1]} : vector<8x128xf32> to vector<8x32xf32>
    %77 = math.tanh %76 : vector<8x32xf32>
    %78 = arith.mulf %74, %56 : vector<8x32xf32>
    %79 = arith.mulf %73, %77 : vector<8x32xf32>
    %80 = arith.addf %78, %79 : vector<8x32xf32>
    %81 = math.tanh %80 : vector<8x32xf32>
    %82 = arith.mulf %75, %81 : vector<8x32xf32>
    %83 = arith.index_cast %c2_i32 : i32 to index
    %c0_30 = arith.constant 0 : index
    %c0_31 = arith.constant 0 : index
    %84 = vector.load %arg19[%83, %c0_30, %c0_31] : memref<8x8x32xf32, #tpu.memory_space<vmem>>, vector<1x8x32xf32>
    %85 = vector.shape_cast %84 : vector<1x8x32xf32> to vector<8x32xf32>
    %86 = vector.shape_cast %82 : vector<8x32xf32> to vector<1x8x32xf32>
    tpu.vector_store %arg19[%83, %c0_30, %c0_31], %86 {strides = array<i32>} : memref<8x8x32xf32, #tpu.memory_space<vmem>>, vector<1x8x32xf32>,
    %c3_i32 = arith.constant 3 : i32
    %87 = arith.index_cast %c3_i32 : i32 to index
    %c0_32 = arith.constant 0 : index
    %c0_33 = arith.constant 0 : index
    %88 = vector.load %arg18[%87, %c0_32, %c0_33] : memref<8x8x128xf32, #tpu.memory_space<vmem>>, vector<1x8x128xf32>
    %89 = vector.shape_cast %88 : vector<1x8x128xf32> to vector<8x128xf32>
    %cst_34 = arith.constant dense<0.000000e+00> : vector<8x128xf32>
    %90 = tpu.matmul %82, %13, %cst_34 {dimension_numbers = #tpu.dot_dimension_numbers<[1], [0], [0], [1], [0, 0, 1, 1], [], []>} : vector<8x32xf32>, vector<32x128xf32>, vector<8x128xf32> -> vector<8x128xf32>
    %91 = arith.addf %89, %90 : vector<8x128xf32>
    %92 = arith.negf %91 : vector<8x128xf32>
    %93 = math.exp %92 : vector<8x128xf32>
    %cst_35 = arith.constant 1.000000e+00 : f32
    %94 = vector.broadcast %cst_35 : f32 to vector<8x128xf32>
    %95 = arith.addf %94, %93 : vector<8x128xf32>
    %96 = arith.divf %94, %95 : vector<8x128xf32>
    %97 = vector.extract_strided_slice %96 {offsets = [0, 0], sizes = [8, 32], strides = [1, 1]} : vector<8x128xf32> to vector<8x32xf32>
    %98 = vector.extract_strided_slice %96 {offsets = [0, 32], sizes = [8, 32], strides = [1, 1]} : vector<8x128xf32> to vector<8x32xf32>
    %99 = vector.extract_strided_slice %96 {offsets = [0, 96], sizes = [8, 32], strides = [1, 1]} : vector<8x128xf32> to vector<8x32xf32>
    %100 = vector.extract_strided_slice %91 {offsets = [0, 64], sizes = [8, 32], strides = [1, 1]} : vector<8x128xf32> to vector<8x32xf32>
    %101 = math.tanh %100 : vector<8x32xf32>
    %102 = arith.mulf %98, %80 : vector<8x32xf32>
    %103 = arith.mulf %97, %101 : vector<8x32xf32>
    %104 = arith.addf %102, %103 : vector<8x32xf32>
    %105 = math.tanh %104 : vector<8x32xf32>
    %106 = arith.mulf %99, %105 : vector<8x32xf32>
    %107 = arith.index_cast %c3_i32 : i32 to index
    %c0_36 = arith.constant 0 : index
    %c0_37 = arith.constant 0 : index
    %108 = vector.load %arg19[%107, %c0_36, %c0_37] : memref<8x8x32xf32, #tpu.memory_space<vmem>>, vector<1x8x32xf32>
    %109 = vector.shape_cast %108 : vector<1x8x32xf32> to vector<8x32xf32>
    %110 = vector.shape_cast %106 : vector<8x32xf32> to vector<1x8x32xf32>
    tpu.vector_store %arg19[%107, %c0_36, %c0_37], %110 {strides = array<i32>} : memref<8x8x32xf32, #tpu.memory_space<vmem>>, vector<1x8x32xf32>,
    %c4_i32 = arith.constant 4 : i32
    %111 = arith.index_cast %c4_i32 : i32 to index
    %c0_38 = arith.constant 0 : index
    %c0_39 = arith.constant 0 : index
    %112 = vector.load %arg18[%111, %c0_38, %c0_39] : memref<8x8x128xf32, #tpu.memory_space<vmem>>, vector<1x8x128xf32>
    %113 = vector.shape_cast %112 : vector<1x8x128xf32> to vector<8x128xf32>
    %cst_40 = arith.constant dense<0.000000e+00> : vector<8x128xf32>
    %114 = tpu.matmul %106, %13, %cst_40 {dimension_numbers = #tpu.dot_dimension_numbers<[1], [0], [0], [1], [0, 0, 1, 1], [], []>} : vector<8x32xf32>, vector<32x128xf32>, vector<8x128xf32> -> vector<8x128xf32>
    %115 = arith.addf %113, %114 : vector<8x128xf32>
    %116 = arith.negf %115 : vector<8x128xf32>
    %117 = math.exp %116 : vector<8x128xf32>
    %cst_41 = arith.constant 1.000000e+00 : f32
    %118 = vector.broadcast %cst_41 : f32 to vector<8x128xf32>
    %119 = arith.addf %118, %117 : vector<8x128xf32>
    %120 = arith.divf %118, %119 : vector<8x128xf32>
    %121 = vector.extract_strided_slice %120 {offsets = [0, 0], sizes = [8, 32], strides = [1, 1]} : vector<8x128xf32> to vector<8x32xf32>
    %122 = vector.extract_strided_slice %120 {offsets = [0, 32], sizes = [8, 32], strides = [1, 1]} : vector<8x128xf32> to vector<8x32xf32>
    %123 = vector.extract_strided_slice %120 {offsets = [0, 96], sizes = [8, 32], strides = [1, 1]} : vector<8x128xf32> to vector<8x32xf32>
    %124 = vector.extract_strided_slice %115 {offsets = [0, 64], sizes = [8, 32], strides = [1, 1]} : vector<8x128xf32> to vector<8x32xf32>
    %125 = math.tanh %124 : vector<8x32xf32>
    %126 = arith.mulf %122, %104 : vector<8x32xf32>
    %127 = arith.mulf %121, %125 : vector<8x32xf32>
    %128 = arith.addf %126, %127 : vector<8x32xf32>
    %129 = math.tanh %128 : vector<8x32xf32>
    %130 = arith.mulf %123, %129 : vector<8x32xf32>
    %131 = arith.index_cast %c4_i32 : i32 to index
    %c0_42 = arith.constant 0 : index
    %c0_43 = arith.constant 0 : index
    %132 = vector.load %arg19[%131, %c0_42, %c0_43] : memref<8x8x32xf32, #tpu.memory_space<vmem>>, vector<1x8x32xf32>
    %133 = vector.shape_cast %132 : vector<1x8x32xf32> to vector<8x32xf32>
    %134 = vector.shape_cast %130 : vector<8x32xf32> to vector<1x8x32xf32>
    tpu.vector_store %arg19[%131, %c0_42, %c0_43], %134 {strides = array<i32>} : memref<8x8x32xf32, #tpu.memory_space<vmem>>, vector<1x8x32xf32>,
    %c5_i32 = arith.constant 5 : i32
    %135 = arith.index_cast %c5_i32 : i32 to index
    %c0_44 = arith.constant 0 : index
    %c0_45 = arith.constant 0 : index
    %136 = vector.load %arg18[%135, %c0_44, %c0_45] : memref<8x8x128xf32, #tpu.memory_space<vmem>>, vector<1x8x128xf32>
    %137 = vector.shape_cast %136 : vector<1x8x128xf32> to vector<8x128xf32>
    %cst_46 = arith.constant dense<0.000000e+00> : vector<8x128xf32>
    %138 = tpu.matmul %130, %13, %cst_46 {dimension_numbers = #tpu.dot_dimension_numbers<[1], [0], [0], [1], [0, 0, 1, 1], [], []>} : vector<8x32xf32>, vector<32x128xf32>, vector<8x128xf32> -> vector<8x128xf32>
    %139 = arith.addf %137, %138 : vector<8x128xf32>
    %140 = arith.negf %139 : vector<8x128xf32>
    %141 = math.exp %140 : vector<8x128xf32>
    %cst_47 = arith.constant 1.000000e+00 : f32
    %142 = vector.broadcast %cst_47 : f32 to vector<8x128xf32>
    %143 = arith.addf %142, %141 : vector<8x128xf32>
    %144 = arith.divf %142, %143 : vector<8x128xf32>
    %145 = vector.extract_strided_slice %144 {offsets = [0, 0], sizes = [8, 32], strides = [1, 1]} : vector<8x128xf32> to vector<8x32xf32>
    %146 = vector.extract_strided_slice %144 {offsets = [0, 32], sizes = [8, 32], strides = [1, 1]} : vector<8x128xf32> to vector<8x32xf32>
    %147 = vector.extract_strided_slice %144 {offsets = [0, 96], sizes = [8, 32], strides = [1, 1]} : vector<8x128xf32> to vector<8x32xf32>
    %148 = vector.extract_strided_slice %139 {offsets = [0, 64], sizes = [8, 32], strides = [1, 1]} : vector<8x128xf32> to vector<8x32xf32>
    %149 = math.tanh %148 : vector<8x32xf32>
    %150 = arith.mulf %146, %128 : vector<8x32xf32>
    %151 = arith.mulf %145, %149 : vector<8x32xf32>
    %152 = arith.addf %150, %151 : vector<8x32xf32>
    %153 = math.tanh %152 : vector<8x32xf32>
    %154 = arith.mulf %147, %153 : vector<8x32xf32>
    %155 = arith.index_cast %c5_i32 : i32 to index
    %c0_48 = arith.constant 0 : index
    %c0_49 = arith.constant 0 : index
    %156 = vector.load %arg19[%155, %c0_48, %c0_49] : memref<8x8x32xf32, #tpu.memory_space<vmem>>, vector<1x8x32xf32>
    %157 = vector.shape_cast %156 : vector<1x8x32xf32> to vector<8x32xf32>
    %158 = vector.shape_cast %154 : vector<8x32xf32> to vector<1x8x32xf32>
    tpu.vector_store %arg19[%155, %c0_48, %c0_49], %158 {strides = array<i32>} : memref<8x8x32xf32, #tpu.memory_space<vmem>>, vector<1x8x32xf32>,
    %c6_i32 = arith.constant 6 : i32
    %159 = arith.index_cast %c6_i32 : i32 to index
    %c0_50 = arith.constant 0 : index
    %c0_51 = arith.constant 0 : index
    %160 = vector.load %arg18[%159, %c0_50, %c0_51] : memref<8x8x128xf32, #tpu.memory_space<vmem>>, vector<1x8x128xf32>
    %161 = vector.shape_cast %160 : vector<1x8x128xf32> to vector<8x128xf32>
    %cst_52 = arith.constant dense<0.000000e+00> : vector<8x128xf32>
    %162 = tpu.matmul %154, %13, %cst_52 {dimension_numbers = #tpu.dot_dimension_numbers<[1], [0], [0], [1], [0, 0, 1, 1], [], []>} : vector<8x32xf32>, vector<32x128xf32>, vector<8x128xf32> -> vector<8x128xf32>
    %163 = arith.addf %161, %162 : vector<8x128xf32>
    %164 = arith.negf %163 : vector<8x128xf32>
    %165 = math.exp %164 : vector<8x128xf32>
    %cst_53 = arith.constant 1.000000e+00 : f32
    %166 = vector.broadcast %cst_53 : f32 to vector<8x128xf32>
    %167 = arith.addf %166, %165 : vector<8x128xf32>
    %168 = arith.divf %166, %167 : vector<8x128xf32>
    %169 = vector.extract_strided_slice %168 {offsets = [0, 0], sizes = [8, 32], strides = [1, 1]} : vector<8x128xf32> to vector<8x32xf32>
    %170 = vector.extract_strided_slice %168 {offsets = [0, 32], sizes = [8, 32], strides = [1, 1]} : vector<8x128xf32> to vector<8x32xf32>
    %171 = vector.extract_strided_slice %168 {offsets = [0, 96], sizes = [8, 32], strides = [1, 1]} : vector<8x128xf32> to vector<8x32xf32>
    %172 = vector.extract_strided_slice %163 {offsets = [0, 64], sizes = [8, 32], strides = [1, 1]} : vector<8x128xf32> to vector<8x32xf32>
    %173 = math.tanh %172 : vector<8x32xf32>
    %174 = arith.mulf %170, %152 : vector<8x32xf32>
    %175 = arith.mulf %169, %173 : vector<8x32xf32>
    %176 = arith.addf %174, %175 : vector<8x32xf32>
    %177 = math.tanh %176 : vector<8x32xf32>
    %178 = arith.mulf %171, %177 : vector<8x32xf32>
    %179 = arith.index_cast %c6_i32 : i32 to index
    %c0_54 = arith.constant 0 : index
    %c0_55 = arith.constant 0 : index
    %180 = vector.load %arg19[%179, %c0_54, %c0_55] : memref<8x8x32xf32, #tpu.memory_space<vmem>>, vector<1x8x32xf32>
    %181 = vector.shape_cast %180 : vector<1x8x32xf32> to vector<8x32xf32>
    %182 = vector.shape_cast %178 : vector<8x32xf32> to vector<1x8x32xf32>
    tpu.vector_store %arg19[%179, %c0_54, %c0_55], %182 {strides = array<i32>} : memref<8x8x32xf32, #tpu.memory_space<vmem>>, vector<1x8x32xf32>,
    %c7_i32 = arith.constant 7 : i32
    %183 = arith.index_cast %c7_i32 : i32 to index
    %c0_56 = arith.constant 0 : index
    %c0_57 = arith.constant 0 : index
    %184 = vector.load %arg18[%183, %c0_56, %c0_57] : memref<8x8x128xf32, #tpu.memory_space<vmem>>, vector<1x8x128xf32>
    %185 = vector.shape_cast %184 : vector<1x8x128xf32> to vector<8x128xf32>
    %cst_58 = arith.constant dense<0.000000e+00> : vector<8x128xf32>
    %186 = tpu.matmul %178, %13, %cst_58 {dimension_numbers = #tpu.dot_dimension_numbers<[1], [0], [0], [1], [0, 0, 1, 1], [], []>} : vector<8x32xf32>, vector<32x128xf32>, vector<8x128xf32> -> vector<8x128xf32>
    %187 = arith.addf %185, %186 : vector<8x128xf32>
    %188 = arith.negf %187 : vector<8x128xf32>
    %189 = math.exp %188 : vector<8x128xf32>
    %cst_59 = arith.constant 1.000000e+00 : f32
    %190 = vector.broadcast %cst_59 : f32 to vector<8x128xf32>
    %191 = arith.addf %190, %189 : vector<8x128xf32>
    %192 = arith.divf %190, %191 : vector<8x128xf32>
    %193 = vector.extract_strided_slice %192 {offsets = [0, 0], sizes = [8, 32], strides = [1, 1]} : vector<8x128xf32> to vector<8x32xf32>
    %194 = vector.extract_strided_slice %192 {offsets = [0, 32], sizes = [8, 32], strides = [1, 1]} : vector<8x128xf32> to vector<8x32xf32>
    %195 = vector.extract_strided_slice %192 {offsets = [0, 96], sizes = [8, 32], strides = [1, 1]} : vector<8x128xf32> to vector<8x32xf32>
    %196 = vector.extract_strided_slice %187 {offsets = [0, 64], sizes = [8, 32], strides = [1, 1]} : vector<8x128xf32> to vector<8x32xf32>
    %197 = math.tanh %196 : vector<8x32xf32>
    %198 = arith.mulf %194, %176 : vector<8x32xf32>
    %199 = arith.mulf %193, %197 : vector<8x32xf32>
    %200 = arith.addf %198, %199 : vector<8x32xf32>
    %201 = math.tanh %200 : vector<8x32xf32>
    %202 = arith.mulf %195, %201 : vector<8x32xf32>
    %203 = arith.index_cast %c7_i32 : i32 to index
    %c0_60 = arith.constant 0 : index
    %c0_61 = arith.constant 0 : index
    %204 = vector.load %arg19[%203, %c0_60, %c0_61] : memref<8x8x32xf32, #tpu.memory_space<vmem>>, vector<1x8x32xf32>
    %205 = vector.shape_cast %204 : vector<1x8x32xf32> to vector<8x32xf32>
    %206 = vector.shape_cast %202 : vector<8x32xf32> to vector<1x8x32xf32>
    tpu.vector_store %arg19[%203, %c0_60, %c0_61], %206 {strides = array<i32>} : memref<8x8x32xf32, #tpu.memory_space<vmem>>, vector<1x8x32xf32>,
    %c8_i32 = arith.constant 8 : i32
    %c0_62 = arith.constant 0 : index
    %c0_63 = arith.constant 0 : index
    %c0_64 = arith.constant 0 : index
    %207 = vector.load %arg19[%c0_62, %c0_63, %c0_64] : memref<8x8x32xf32, #tpu.memory_space<vmem>>, vector<8x8x32xf32>
    %208 = vector.shape_cast %207 : vector<8x8x32xf32> to vector<64x32xf32>
    %c0_65 = arith.constant 0 : index
    %c0_66 = arith.constant 0 : index
    %209 = vector.load %arg5[%c0_65, %c0_66] : memref<32x128xf32, #tpu.memory_space<vmem>>, vector<32x128xf32>
    %cst_67 = arith.constant dense<0.000000e+00> : vector<64x128xf32>
    %210 = tpu.matmul %208, %209, %cst_67 {dimension_numbers = #tpu.dot_dimension_numbers<[1], [0], [0], [1], [0, 0, 1, 1], [], []>} : vector<64x32xf32>, vector<32x128xf32>, vector<64x128xf32> -> vector<64x128xf32>
    %c0_68 = arith.constant 0 : index
    %c0_69 = arith.constant 0 : index
    %211 = vector.load %arg7[%c0_68, %c0_69] : memref<1x128xf32, #tpu.memory_space<vmem>>, vector<1x128xf32>
    %212 = vector.broadcast %211 : vector<1x128xf32> to vector<64x128xf32>
    %213 = arith.addf %210, %212 : vector<64x128xf32>
    %214 = vector.shape_cast %213 : vector<64x128xf32> to vector<8x8x128xf32>
    %c0_70 = arith.constant 0 : index
    %c0_71 = arith.constant 0 : index
    %c0_72 = arith.constant 0 : index
    %215 = vector.load %arg18[%c0_70, %c0_71, %c0_72] : memref<8x8x128xf32, #tpu.memory_space<vmem>>, vector<8x8x128xf32>
    tpu.vector_store %arg18[%c0_70, %c0_71, %c0_72], %214 {strides = array<i32>} : memref<8x8x128xf32, #tpu.memory_space<vmem>>, vector<8x8x128xf32>,
    %c0_73 = arith.constant 0 : index
    %c0_74 = arith.constant 0 : index
    %216 = vector.load %arg6[%c0_73, %c0_74] : memref<32x128xf32, #tpu.memory_space<vmem>>, vector<32x128xf32>
    %cst_75 = arith.constant 0.000000e+00 : f32
    %217 = vector.broadcast %cst_75 : f32 to vector<8x32xf32>
    %c0_i32_76 = arith.constant 0 : i32
    %218 = arith.index_cast %c0_i32_76 : i32 to index
    %c0_77 = arith.constant 0 : index
    %c0_78 = arith.constant 0 : index
    %219 = vector.load %arg18[%218, %c0_77, %c0_78] : memref<8x8x128xf32, #tpu.memory_space<vmem>>, vector<1x8x128xf32>
    %220 = vector.shape_cast %219 : vector<1x8x128xf32> to vector<8x128xf32>
    %cst_79 = arith.constant dense<0.000000e+00> : vector<8x128xf32>
    %221 = tpu.matmul %217, %216, %cst_79 {dimension_numbers = #tpu.dot_dimension_numbers<[1], [0], [0], [1], [0, 0, 1, 1], [], []>} : vector<8x32xf32>, vector<32x128xf32>, vector<8x128xf32> -> vector<8x128xf32>
    %222 = arith.addf %220, %221 : vector<8x128xf32>
    %223 = arith.negf %222 : vector<8x128xf32>
    %224 = math.exp %223 : vector<8x128xf32>
    %cst_80 = arith.constant 1.000000e+00 : f32
    %225 = vector.broadcast %cst_80 : f32 to vector<8x128xf32>
    %226 = arith.addf %225, %224 : vector<8x128xf32>
    %227 = arith.divf %225, %226 : vector<8x128xf32>
    %228 = vector.extract_strided_slice %227 {offsets = [0, 0], sizes = [8, 32], strides = [1, 1]} : vector<8x128xf32> to vector<8x32xf32>
    %229 = vector.extract_strided_slice %227 {offsets = [0, 32], sizes = [8, 32], strides = [1, 1]} : vector<8x128xf32> to vector<8x32xf32>
    %230 = vector.extract_strided_slice %227 {offsets = [0, 96], sizes = [8, 32], strides = [1, 1]} : vector<8x128xf32> to vector<8x32xf32>
    %231 = vector.extract_strided_slice %222 {offsets = [0, 64], sizes = [8, 32], strides = [1, 1]} : vector<8x128xf32> to vector<8x32xf32>
    %232 = math.tanh %231 : vector<8x32xf32>
    %233 = arith.mulf %229, %217 : vector<8x32xf32>
    %234 = arith.mulf %228, %232 : vector<8x32xf32>
    %235 = arith.addf %233, %234 : vector<8x32xf32>
    %236 = math.tanh %235 : vector<8x32xf32>
    %237 = arith.mulf %230, %236 : vector<8x32xf32>
    %238 = arith.index_cast %c0_i32_76 : i32 to index
    %c0_81 = arith.constant 0 : index
    %c0_82 = arith.constant 0 : index
    %239 = vector.load %arg20[%238, %c0_81, %c0_82] : memref<8x8x32xf32, #tpu.memory_space<vmem>>, vector<1x8x32xf32>
    %240 = vector.shape_cast %239 : vector<1x8x32xf32> to vector<8x32xf32>
    %241 = vector.shape_cast %237 : vector<8x32xf32> to vector<1x8x32xf32>
    tpu.vector_store %arg20[%238, %c0_81, %c0_82], %241 {strides = array<i32>} : memref<8x8x32xf32, #tpu.memory_space<vmem>>, vector<1x8x32xf32>,
    %c1_i32_83 = arith.constant 1 : i32
    %242 = arith.index_cast %c1_i32_83 : i32 to index
    %c0_84 = arith.constant 0 : index
    %c0_85 = arith.constant 0 : index
    %243 = vector.load %arg18[%242, %c0_84, %c0_85] : memref<8x8x128xf32, #tpu.memory_space<vmem>>, vector<1x8x128xf32>
    %244 = vector.shape_cast %243 : vector<1x8x128xf32> to vector<8x128xf32>
    %cst_86 = arith.constant dense<0.000000e+00> : vector<8x128xf32>
    %245 = tpu.matmul %237, %216, %cst_86 {dimension_numbers = #tpu.dot_dimension_numbers<[1], [0], [0], [1], [0, 0, 1, 1], [], []>} : vector<8x32xf32>, vector<32x128xf32>, vector<8x128xf32> -> vector<8x128xf32>
    %246 = arith.addf %244, %245 : vector<8x128xf32>
    %247 = arith.negf %246 : vector<8x128xf32>
    %248 = math.exp %247 : vector<8x128xf32>
    %cst_87 = arith.constant 1.000000e+00 : f32
    %249 = vector.broadcast %cst_87 : f32 to vector<8x128xf32>
    %250 = arith.addf %249, %248 : vector<8x128xf32>
    %251 = arith.divf %249, %250 : vector<8x128xf32>
    %252 = vector.extract_strided_slice %251 {offsets = [0, 0], sizes = [8, 32], strides = [1, 1]} : vector<8x128xf32> to vector<8x32xf32>
    %253 = vector.extract_strided_slice %251 {offsets = [0, 32], sizes = [8, 32], strides = [1, 1]} : vector<8x128xf32> to vector<8x32xf32>
    %254 = vector.extract_strided_slice %251 {offsets = [0, 96], sizes = [8, 32], strides = [1, 1]} : vector<8x128xf32> to vector<8x32xf32>
    %255 = vector.extract_strided_slice %246 {offsets = [0, 64], sizes = [8, 32], strides = [1, 1]} : vector<8x128xf32> to vector<8x32xf32>
    %256 = math.tanh %255 : vector<8x32xf32>
    %257 = arith.mulf %253, %235 : vector<8x32xf32>
    %258 = arith.mulf %252, %256 : vector<8x32xf32>
    %259 = arith.addf %257, %258 : vector<8x32xf32>
    %260 = math.tanh %259 : vector<8x32xf32>
    %261 = arith.mulf %254, %260 : vector<8x32xf32>
    %262 = arith.index_cast %c1_i32_83 : i32 to index
    %c0_88 = arith.constant 0 : index
    %c0_89 = arith.constant 0 : index
    %263 = vector.load %arg20[%262, %c0_88, %c0_89] : memref<8x8x32xf32, #tpu.memory_space<vmem>>, vector<1x8x32xf32>
    %264 = vector.shape_cast %263 : vector<1x8x32xf32> to vector<8x32xf32>
    %265 = vector.shape_cast %261 : vector<8x32xf32> to vector<1x8x32xf32>
    tpu.vector_store %arg20[%262, %c0_88, %c0_89], %265 {strides = array<i32>} : memref<8x8x32xf32, #tpu.memory_space<vmem>>, vector<1x8x32xf32>,
    %c2_i32_90 = arith.constant 2 : i32
    %266 = arith.index_cast %c2_i32_90 : i32 to index
    %c0_91 = arith.constant 0 : index
    %c0_92 = arith.constant 0 : index
    %267 = vector.load %arg18[%266, %c0_91, %c0_92] : memref<8x8x128xf32, #tpu.memory_space<vmem>>, vector<1x8x128xf32>
    %268 = vector.shape_cast %267 : vector<1x8x128xf32> to vector<8x128xf32>
    %cst_93 = arith.constant dense<0.000000e+00> : vector<8x128xf32>
    %269 = tpu.matmul %261, %216, %cst_93 {dimension_numbers = #tpu.dot_dimension_numbers<[1], [0], [0], [1], [0, 0, 1, 1], [], []>} : vector<8x32xf32>, vector<32x128xf32>, vector<8x128xf32> -> vector<8x128xf32>
    %270 = arith.addf %268, %269 : vector<8x128xf32>
    %271 = arith.negf %270 : vector<8x128xf32>
    %272 = math.exp %271 : vector<8x128xf32>
    %cst_94 = arith.constant 1.000000e+00 : f32
    %273 = vector.broadcast %cst_94 : f32 to vector<8x128xf32>
    %274 = arith.addf %273, %272 : vector<8x128xf32>
    %275 = arith.divf %273, %274 : vector<8x128xf32>
    %276 = vector.extract_strided_slice %275 {offsets = [0, 0], sizes = [8, 32], strides = [1, 1]} : vector<8x128xf32> to vector<8x32xf32>
    %277 = vector.extract_strided_slice %275 {offsets = [0, 32], sizes = [8, 32], strides = [1, 1]} : vector<8x128xf32> to vector<8x32xf32>
    %278 = vector.extract_strided_slice %275 {offsets = [0, 96], sizes = [8, 32], strides = [1, 1]} : vector<8x128xf32> to vector<8x32xf32>
    %279 = vector.extract_strided_slice %270 {offsets = [0, 64], sizes = [8, 32], strides = [1, 1]} : vector<8x128xf32> to vector<8x32xf32>
    %280 = math.tanh %279 : vector<8x32xf32>
    %281 = arith.mulf %277, %259 : vector<8x32xf32>
    %282 = arith.mulf %276, %280 : vector<8x32xf32>
    %283 = arith.addf %281, %282 : vector<8x32xf32>
    %284 = math.tanh %283 : vector<8x32xf32>
    %285 = arith.mulf %278, %284 : vector<8x32xf32>
    %286 = arith.index_cast %c2_i32_90 : i32 to index
    %c0_95 = arith.constant 0 : index
    %c0_96 = arith.constant 0 : index
    %287 = vector.load %arg20[%286, %c0_95, %c0_96] : memref<8x8x32xf32, #tpu.memory_space<vmem>>, vector<1x8x32xf32>
    %288 = vector.shape_cast %287 : vector<1x8x32xf32> to vector<8x32xf32>
    %289 = vector.shape_cast %285 : vector<8x32xf32> to vector<1x8x32xf32>
    tpu.vector_store %arg20[%286, %c0_95, %c0_96], %289 {strides = array<i32>} : memref<8x8x32xf32, #tpu.memory_space<vmem>>, vector<1x8x32xf32>,
    %c3_i32_97 = arith.constant 3 : i32
    %290 = arith.index_cast %c3_i32_97 : i32 to index
    %c0_98 = arith.constant 0 : index
    %c0_99 = arith.constant 0 : index
    %291 = vector.load %arg18[%290, %c0_98, %c0_99] : memref<8x8x128xf32, #tpu.memory_space<vmem>>, vector<1x8x128xf32>
    %292 = vector.shape_cast %291 : vector<1x8x128xf32> to vector<8x128xf32>
    %cst_100 = arith.constant dense<0.000000e+00> : vector<8x128xf32>
    %293 = tpu.matmul %285, %216, %cst_100 {dimension_numbers = #tpu.dot_dimension_numbers<[1], [0], [0], [1], [0, 0, 1, 1], [], []>} : vector<8x32xf32>, vector<32x128xf32>, vector<8x128xf32> -> vector<8x128xf32>
    %294 = arith.addf %292, %293 : vector<8x128xf32>
    %295 = arith.negf %294 : vector<8x128xf32>
    %296 = math.exp %295 : vector<8x128xf32>
    %cst_101 = arith.constant 1.000000e+00 : f32
    %297 = vector.broadcast %cst_101 : f32 to vector<8x128xf32>
    %298 = arith.addf %297, %296 : vector<8x128xf32>
    %299 = arith.divf %297, %298 : vector<8x128xf32>
    %300 = vector.extract_strided_slice %299 {offsets = [0, 0], sizes = [8, 32], strides = [1, 1]} : vector<8x128xf32> to vector<8x32xf32>
    %301 = vector.extract_strided_slice %299 {offsets = [0, 32], sizes = [8, 32], strides = [1, 1]} : vector<8x128xf32> to vector<8x32xf32>
    %302 = vector.extract_strided_slice %299 {offsets = [0, 96], sizes = [8, 32], strides = [1, 1]} : vector<8x128xf32> to vector<8x32xf32>
    %303 = vector.extract_strided_slice %294 {offsets = [0, 64], sizes = [8, 32], strides = [1, 1]} : vector<8x128xf32> to vector<8x32xf32>
    %304 = math.tanh %303 : vector<8x32xf32>
    %305 = arith.mulf %301, %283 : vector<8x32xf32>
    %306 = arith.mulf %300, %304 : vector<8x32xf32>
    %307 = arith.addf %305, %306 : vector<8x32xf32>
    %308 = math.tanh %307 : vector<8x32xf32>
    %309 = arith.mulf %302, %308 : vector<8x32xf32>
    %310 = arith.index_cast %c3_i32_97 : i32 to index
    %c0_102 = arith.constant 0 : index
    %c0_103 = arith.constant 0 : index
    %311 = vector.load %arg20[%310, %c0_102, %c0_103] : memref<8x8x32xf32, #tpu.memory_space<vmem>>, vector<1x8x32xf32>
    %312 = vector.shape_cast %311 : vector<1x8x32xf32> to vector<8x32xf32>
    %313 = vector.shape_cast %309 : vector<8x32xf32> to vector<1x8x32xf32>
    tpu.vector_store %arg20[%310, %c0_102, %c0_103], %313 {strides = array<i32>} : memref<8x8x32xf32, #tpu.memory_space<vmem>>, vector<1x8x32xf32>,
    %c4_i32_104 = arith.constant 4 : i32
    %314 = arith.index_cast %c4_i32_104 : i32 to index
    %c0_105 = arith.constant 0 : index
    %c0_106 = arith.constant 0 : index
    %315 = vector.load %arg18[%314, %c0_105, %c0_106] : memref<8x8x128xf32, #tpu.memory_space<vmem>>, vector<1x8x128xf32>
    %316 = vector.shape_cast %315 : vector<1x8x128xf32> to vector<8x128xf32>
    %cst_107 = arith.constant dense<0.000000e+00> : vector<8x128xf32>
    %317 = tpu.matmul %309, %216, %cst_107 {dimension_numbers = #tpu.dot_dimension_numbers<[1], [0], [0], [1], [0, 0, 1, 1], [], []>} : vector<8x32xf32>, vector<32x128xf32>, vector<8x128xf32> -> vector<8x128xf32>
    %318 = arith.addf %316, %317 : vector<8x128xf32>
    %319 = arith.negf %318 : vector<8x128xf32>
    %320 = math.exp %319 : vector<8x128xf32>
    %cst_108 = arith.constant 1.000000e+00 : f32
    %321 = vector.broadcast %cst_108 : f32 to vector<8x128xf32>
    %322 = arith.addf %321, %320 : vector<8x128xf32>
    %323 = arith.divf %321, %322 : vector<8x128xf32>
    %324 = vector.extract_strided_slice %323 {offsets = [0, 0], sizes = [8, 32], strides = [1, 1]} : vector<8x128xf32> to vector<8x32xf32>
    %325 = vector.extract_strided_slice %323 {offsets = [0, 32], sizes = [8, 32], strides = [1, 1]} : vector<8x128xf32> to vector<8x32xf32>
    %326 = vector.extract_strided_slice %323 {offsets = [0, 96], sizes = [8, 32], strides = [1, 1]} : vector<8x128xf32> to vector<8x32xf32>
    %327 = vector.extract_strided_slice %318 {offsets = [0, 64], sizes = [8, 32], strides = [1, 1]} : vector<8x128xf32> to vector<8x32xf32>
    %328 = math.tanh %327 : vector<8x32xf32>
    %329 = arith.mulf %325, %307 : vector<8x32xf32>
    %330 = arith.mulf %324, %328 : vector<8x32xf32>
    %331 = arith.addf %329, %330 : vector<8x32xf32>
    %332 = math.tanh %331 : vector<8x32xf32>
    %333 = arith.mulf %326, %332 : vector<8x32xf32>
    %334 = arith.index_cast %c4_i32_104 : i32 to index
    %c0_109 = arith.constant 0 : index
    %c0_110 = arith.constant 0 : index
    %335 = vector.load %arg20[%334, %c0_109, %c0_110] : memref<8x8x32xf32, #tpu.memory_space<vmem>>, vector<1x8x32xf32>
    %336 = vector.shape_cast %335 : vector<1x8x32xf32> to vector<8x32xf32>
    %337 = vector.shape_cast %333 : vector<8x32xf32> to vector<1x8x32xf32>
    tpu.vector_store %arg20[%334, %c0_109, %c0_110], %337 {strides = array<i32>} : memref<8x8x32xf32, #tpu.memory_space<vmem>>, vector<1x8x32xf32>,
    %c5_i32_111 = arith.constant 5 : i32
    %338 = arith.index_cast %c5_i32_111 : i32 to index
    %c0_112 = arith.constant 0 : index
    %c0_113 = arith.constant 0 : index
    %339 = vector.load %arg18[%338, %c0_112, %c0_113] : memref<8x8x128xf32, #tpu.memory_space<vmem>>, vector<1x8x128xf32>
    %340 = vector.shape_cast %339 : vector<1x8x128xf32> to vector<8x128xf32>
    %cst_114 = arith.constant dense<0.000000e+00> : vector<8x128xf32>
    %341 = tpu.matmul %333, %216, %cst_114 {dimension_numbers = #tpu.dot_dimension_numbers<[1], [0], [0], [1], [0, 0, 1, 1], [], []>} : vector<8x32xf32>, vector<32x128xf32>, vector<8x128xf32> -> vector<8x128xf32>
    %342 = arith.addf %340, %341 : vector<8x128xf32>
    %343 = arith.negf %342 : vector<8x128xf32>
    %344 = math.exp %343 : vector<8x128xf32>
    %cst_115 = arith.constant 1.000000e+00 : f32
    %345 = vector.broadcast %cst_115 : f32 to vector<8x128xf32>
    %346 = arith.addf %345, %344 : vector<8x128xf32>
    %347 = arith.divf %345, %346 : vector<8x128xf32>
    %348 = vector.extract_strided_slice %347 {offsets = [0, 0], sizes = [8, 32], strides = [1, 1]} : vector<8x128xf32> to vector<8x32xf32>
    %349 = vector.extract_strided_slice %347 {offsets = [0, 32], sizes = [8, 32], strides = [1, 1]} : vector<8x128xf32> to vector<8x32xf32>
    %350 = vector.extract_strided_slice %347 {offsets = [0, 96], sizes = [8, 32], strides = [1, 1]} : vector<8x128xf32> to vector<8x32xf32>
    %351 = vector.extract_strided_slice %342 {offsets = [0, 64], sizes = [8, 32], strides = [1, 1]} : vector<8x128xf32> to vector<8x32xf32>
    %352 = math.tanh %351 : vector<8x32xf32>
    %353 = arith.mulf %349, %331 : vector<8x32xf32>
    %354 = arith.mulf %348, %352 : vector<8x32xf32>
    %355 = arith.addf %353, %354 : vector<8x32xf32>
    %356 = math.tanh %355 : vector<8x32xf32>
    %357 = arith.mulf %350, %356 : vector<8x32xf32>
    %358 = arith.index_cast %c5_i32_111 : i32 to index
    %c0_116 = arith.constant 0 : index
    %c0_117 = arith.constant 0 : index
    %359 = vector.load %arg20[%358, %c0_116, %c0_117] : memref<8x8x32xf32, #tpu.memory_space<vmem>>, vector<1x8x32xf32>
    %360 = vector.shape_cast %359 : vector<1x8x32xf32> to vector<8x32xf32>
    %361 = vector.shape_cast %357 : vector<8x32xf32> to vector<1x8x32xf32>
    tpu.vector_store %arg20[%358, %c0_116, %c0_117], %361 {strides = array<i32>} : memref<8x8x32xf32, #tpu.memory_space<vmem>>, vector<1x8x32xf32>,
    %c6_i32_118 = arith.constant 6 : i32
    %362 = arith.index_cast %c6_i32_118 : i32 to index
    %c0_119 = arith.constant 0 : index
    %c0_120 = arith.constant 0 : index
    %363 = vector.load %arg18[%362, %c0_119, %c0_120] : memref<8x8x128xf32, #tpu.memory_space<vmem>>, vector<1x8x128xf32>
    %364 = vector.shape_cast %363 : vector<1x8x128xf32> to vector<8x128xf32>
    %cst_121 = arith.constant dense<0.000000e+00> : vector<8x128xf32>
    %365 = tpu.matmul %357, %216, %cst_121 {dimension_numbers = #tpu.dot_dimension_numbers<[1], [0], [0], [1], [0, 0, 1, 1], [], []>} : vector<8x32xf32>, vector<32x128xf32>, vector<8x128xf32> -> vector<8x128xf32>
    %366 = arith.addf %364, %365 : vector<8x128xf32>
    %367 = arith.negf %366 : vector<8x128xf32>
    %368 = math.exp %367 : vector<8x128xf32>
    %cst_122 = arith.constant 1.000000e+00 : f32
    %369 = vector.broadcast %cst_122 : f32 to vector<8x128xf32>
    %370 = arith.addf %369, %368 : vector<8x128xf32>
    %371 = arith.divf %369, %370 : vector<8x128xf32>
    %372 = vector.extract_strided_slice %371 {offsets = [0, 0], sizes = [8, 32], strides = [1, 1]} : vector<8x128xf32> to vector<8x32xf32>
    %373 = vector.extract_strided_slice %371 {offsets = [0, 32], sizes = [8, 32], strides = [1, 1]} : vector<8x128xf32> to vector<8x32xf32>
    %374 = vector.extract_strided_slice %371 {offsets = [0, 96], sizes = [8, 32], strides = [1, 1]} : vector<8x128xf32> to vector<8x32xf32>
    %375 = vector.extract_strided_slice %366 {offsets = [0, 64], sizes = [8, 32], strides = [1, 1]} : vector<8x128xf32> to vector<8x32xf32>
    %376 = math.tanh %375 : vector<8x32xf32>
    %377 = arith.mulf %373, %355 : vector<8x32xf32>
    %378 = arith.mulf %372, %376 : vector<8x32xf32>
    %379 = arith.addf %377, %378 : vector<8x32xf32>
    %380 = math.tanh %379 : vector<8x32xf32>
    %381 = arith.mulf %374, %380 : vector<8x32xf32>
    %382 = arith.index_cast %c6_i32_118 : i32 to index
    %c0_123 = arith.constant 0 : index
    %c0_124 = arith.constant 0 : index
    %383 = vector.load %arg20[%382, %c0_123, %c0_124] : memref<8x8x32xf32, #tpu.memory_space<vmem>>, vector<1x8x32xf32>
    %384 = vector.shape_cast %383 : vector<1x8x32xf32> to vector<8x32xf32>
    %385 = vector.shape_cast %381 : vector<8x32xf32> to vector<1x8x32xf32>
    tpu.vector_store %arg20[%382, %c0_123, %c0_124], %385 {strides = array<i32>} : memref<8x8x32xf32, #tpu.memory_space<vmem>>, vector<1x8x32xf32>,
    %c7_i32_125 = arith.constant 7 : i32
    %386 = arith.index_cast %c7_i32_125 : i32 to index
    %c0_126 = arith.constant 0 : index
    %c0_127 = arith.constant 0 : index
    %387 = vector.load %arg18[%386, %c0_126, %c0_127] : memref<8x8x128xf32, #tpu.memory_space<vmem>>, vector<1x8x128xf32>
    %388 = vector.shape_cast %387 : vector<1x8x128xf32> to vector<8x128xf32>
    %cst_128 = arith.constant dense<0.000000e+00> : vector<8x128xf32>
    %389 = tpu.matmul %381, %216, %cst_128 {dimension_numbers = #tpu.dot_dimension_numbers<[1], [0], [0], [1], [0, 0, 1, 1], [], []>} : vector<8x32xf32>, vector<32x128xf32>, vector<8x128xf32> -> vector<8x128xf32>
    %390 = arith.addf %388, %389 : vector<8x128xf32>
    %391 = arith.negf %390 : vector<8x128xf32>
    %392 = math.exp %391 : vector<8x128xf32>
    %cst_129 = arith.constant 1.000000e+00 : f32
    %393 = vector.broadcast %cst_129 : f32 to vector<8x128xf32>
    %394 = arith.addf %393, %392 : vector<8x128xf32>
    %395 = arith.divf %393, %394 : vector<8x128xf32>
    %396 = vector.extract_strided_slice %395 {offsets = [0, 0], sizes = [8, 32], strides = [1, 1]} : vector<8x128xf32> to vector<8x32xf32>
    %397 = vector.extract_strided_slice %395 {offsets = [0, 32], sizes = [8, 32], strides = [1, 1]} : vector<8x128xf32> to vector<8x32xf32>
    %398 = vector.extract_strided_slice %395 {offsets = [0, 96], sizes = [8, 32], strides = [1, 1]} : vector<8x128xf32> to vector<8x32xf32>
    %399 = vector.extract_strided_slice %390 {offsets = [0, 64], sizes = [8, 32], strides = [1, 1]} : vector<8x128xf32> to vector<8x32xf32>
    %400 = math.tanh %399 : vector<8x32xf32>
    %401 = arith.mulf %397, %379 : vector<8x32xf32>
    %402 = arith.mulf %396, %400 : vector<8x32xf32>
    %403 = arith.addf %401, %402 : vector<8x32xf32>
    %404 = math.tanh %403 : vector<8x32xf32>
    %405 = arith.mulf %398, %404 : vector<8x32xf32>
    %406 = arith.index_cast %c7_i32_125 : i32 to index
    %c0_130 = arith.constant 0 : index
    %c0_131 = arith.constant 0 : index
    %407 = vector.load %arg20[%406, %c0_130, %c0_131] : memref<8x8x32xf32, #tpu.memory_space<vmem>>, vector<1x8x32xf32>
    %408 = vector.shape_cast %407 : vector<1x8x32xf32> to vector<8x32xf32>
    %409 = vector.shape_cast %405 : vector<8x32xf32> to vector<1x8x32xf32>
    tpu.vector_store %arg20[%406, %c0_130, %c0_131], %409 {strides = array<i32>} : memref<8x8x32xf32, #tpu.memory_space<vmem>>, vector<1x8x32xf32>,
    %c8_i32_132 = arith.constant 8 : i32
    %c0_133 = arith.constant 0 : index
    %c0_134 = arith.constant 0 : index
    %c0_135 = arith.constant 0 : index
    %410 = vector.load %arg20[%c0_133, %c0_134, %c0_135] : memref<8x8x32xf32, #tpu.memory_space<vmem>>, vector<8x8x32xf32>
    %411 = vector.shape_cast %410 : vector<8x8x32xf32> to vector<64x32xf32>
    %c0_136 = arith.constant 0 : index
    %c0_137 = arith.constant 0 : index
    %412 = vector.load %arg8[%c0_136, %c0_137] : memref<32x128xf32, #tpu.memory_space<vmem>>, vector<32x128xf32>
    %cst_138 = arith.constant dense<0.000000e+00> : vector<64x128xf32>
    %413 = tpu.matmul %411, %412, %cst_138 {dimension_numbers = #tpu.dot_dimension_numbers<[1], [0], [0], [1], [0, 0, 1, 1], [], []>} : vector<64x32xf32>, vector<32x128xf32>, vector<64x128xf32> -> vector<64x128xf32>
    %c0_139 = arith.constant 0 : index
    %c0_140 = arith.constant 0 : index
    %414 = vector.load %arg10[%c0_139, %c0_140] : memref<1x128xf32, #tpu.memory_space<vmem>>, vector<1x128xf32>
    %415 = vector.broadcast %414 : vector<1x128xf32> to vector<64x128xf32>
    %416 = arith.addf %413, %415 : vector<64x128xf32>
    %417 = vector.shape_cast %416 : vector<64x128xf32> to vector<8x8x128xf32>
    %c0_141 = arith.constant 0 : index
    %c0_142 = arith.constant 0 : index
    %c0_143 = arith.constant 0 : index
    %418 = vector.load %arg18[%c0_141, %c0_142, %c0_143] : memref<8x8x128xf32, #tpu.memory_space<vmem>>, vector<8x8x128xf32>
    tpu.vector_store %arg18[%c0_141, %c0_142, %c0_143], %417 {strides = array<i32>} : memref<8x8x128xf32, #tpu.memory_space<vmem>>, vector<8x8x128xf32>,
    %c0_144 = arith.constant 0 : index
    %c0_145 = arith.constant 0 : index
    %419 = vector.load %arg9[%c0_144, %c0_145] : memref<32x128xf32, #tpu.memory_space<vmem>>, vector<32x128xf32>
    %cst_146 = arith.constant 0.000000e+00 : f32
    %420 = vector.broadcast %cst_146 : f32 to vector<8x32xf32>
    %c0_i32_147 = arith.constant 0 : i32
    %421 = arith.index_cast %c0_i32_147 : i32 to index
    %c0_148 = arith.constant 0 : index
    %c0_149 = arith.constant 0 : index
    %422 = vector.load %arg18[%421, %c0_148, %c0_149] : memref<8x8x128xf32, #tpu.memory_space<vmem>>, vector<1x8x128xf32>
    %423 = vector.shape_cast %422 : vector<1x8x128xf32> to vector<8x128xf32>
    %cst_150 = arith.constant dense<0.000000e+00> : vector<8x128xf32>
    %424 = tpu.matmul %420, %419, %cst_150 {dimension_numbers = #tpu.dot_dimension_numbers<[1], [0], [0], [1], [0, 0, 1, 1], [], []>} : vector<8x32xf32>, vector<32x128xf32>, vector<8x128xf32> -> vector<8x128xf32>
    %425 = arith.addf %423, %424 : vector<8x128xf32>
    %426 = arith.negf %425 : vector<8x128xf32>
    %427 = math.exp %426 : vector<8x128xf32>
    %cst_151 = arith.constant 1.000000e+00 : f32
    %428 = vector.broadcast %cst_151 : f32 to vector<8x128xf32>
    %429 = arith.addf %428, %427 : vector<8x128xf32>
    %430 = arith.divf %428, %429 : vector<8x128xf32>
    %431 = vector.extract_strided_slice %430 {offsets = [0, 0], sizes = [8, 32], strides = [1, 1]} : vector<8x128xf32> to vector<8x32xf32>
    %432 = vector.extract_strided_slice %430 {offsets = [0, 32], sizes = [8, 32], strides = [1, 1]} : vector<8x128xf32> to vector<8x32xf32>
    %433 = vector.extract_strided_slice %430 {offsets = [0, 96], sizes = [8, 32], strides = [1, 1]} : vector<8x128xf32> to vector<8x32xf32>
    %434 = vector.extract_strided_slice %425 {offsets = [0, 64], sizes = [8, 32], strides = [1, 1]} : vector<8x128xf32> to vector<8x32xf32>
    %435 = math.tanh %434 : vector<8x32xf32>
    %436 = arith.mulf %432, %420 : vector<8x32xf32>
    %437 = arith.mulf %431, %435 : vector<8x32xf32>
    %438 = arith.addf %436, %437 : vector<8x32xf32>
    %439 = math.tanh %438 : vector<8x32xf32>
    %440 = arith.mulf %433, %439 : vector<8x32xf32>
    %441 = arith.index_cast %c0_i32_147 : i32 to index
    %c0_152 = arith.constant 0 : index
    %c0_153 = arith.constant 0 : index
    %442 = vector.load %arg19[%441, %c0_152, %c0_153] : memref<8x8x32xf32, #tpu.memory_space<vmem>>, vector<1x8x32xf32>
    %443 = vector.shape_cast %442 : vector<1x8x32xf32> to vector<8x32xf32>
    %444 = vector.shape_cast %440 : vector<8x32xf32> to vector<1x8x32xf32>
    tpu.vector_store %arg19[%441, %c0_152, %c0_153], %444 {strides = array<i32>} : memref<8x8x32xf32, #tpu.memory_space<vmem>>, vector<1x8x32xf32>,
    %c1_i32_154 = arith.constant 1 : i32
    %445 = arith.index_cast %c1_i32_154 : i32 to index
    %c0_155 = arith.constant 0 : index
    %c0_156 = arith.constant 0 : index
    %446 = vector.load %arg18[%445, %c0_155, %c0_156] : memref<8x8x128xf32, #tpu.memory_space<vmem>>, vector<1x8x128xf32>
    %447 = vector.shape_cast %446 : vector<1x8x128xf32> to vector<8x128xf32>
    %cst_157 = arith.constant dense<0.000000e+00> : vector<8x128xf32>
    %448 = tpu.matmul %440, %419, %cst_157 {dimension_numbers = #tpu.dot_dimension_numbers<[1], [0], [0], [1], [0, 0, 1, 1], [], []>} : vector<8x32xf32>, vector<32x128xf32>, vector<8x128xf32> -> vector<8x128xf32>
    %449 = arith.addf %447, %448 : vector<8x128xf32>
    %450 = arith.negf %449 : vector<8x128xf32>
    %451 = math.exp %450 : vector<8x128xf32>
    %cst_158 = arith.constant 1.000000e+00 : f32
    %452 = vector.broadcast %cst_158 : f32 to vector<8x128xf32>
    %453 = arith.addf %452, %451 : vector<8x128xf32>
    %454 = arith.divf %452, %453 : vector<8x128xf32>
    %455 = vector.extract_strided_slice %454 {offsets = [0, 0], sizes = [8, 32], strides = [1, 1]} : vector<8x128xf32> to vector<8x32xf32>
    %456 = vector.extract_strided_slice %454 {offsets = [0, 32], sizes = [8, 32], strides = [1, 1]} : vector<8x128xf32> to vector<8x32xf32>
    %457 = vector.extract_strided_slice %454 {offsets = [0, 96], sizes = [8, 32], strides = [1, 1]} : vector<8x128xf32> to vector<8x32xf32>
    %458 = vector.extract_strided_slice %449 {offsets = [0, 64], sizes = [8, 32], strides = [1, 1]} : vector<8x128xf32> to vector<8x32xf32>
    %459 = math.tanh %458 : vector<8x32xf32>
    %460 = arith.mulf %456, %438 : vector<8x32xf32>
    %461 = arith.mulf %455, %459 : vector<8x32xf32>
    %462 = arith.addf %460, %461 : vector<8x32xf32>
    %463 = math.tanh %462 : vector<8x32xf32>
    %464 = arith.mulf %457, %463 : vector<8x32xf32>
    %465 = arith.index_cast %c1_i32_154 : i32 to index
    %c0_159 = arith.constant 0 : index
    %c0_160 = arith.constant 0 : index
    %466 = vector.load %arg19[%465, %c0_159, %c0_160] : memref<8x8x32xf32, #tpu.memory_space<vmem>>, vector<1x8x32xf32>
    %467 = vector.shape_cast %466 : vector<1x8x32xf32> to vector<8x32xf32>
    %468 = vector.shape_cast %464 : vector<8x32xf32> to vector<1x8x32xf32>
    tpu.vector_store %arg19[%465, %c0_159, %c0_160], %468 {strides = array<i32>} : memref<8x8x32xf32, #tpu.memory_space<vmem>>, vector<1x8x32xf32>,
    %c2_i32_161 = arith.constant 2 : i32
    %469 = arith.index_cast %c2_i32_161 : i32 to index
    %c0_162 = arith.constant 0 : index
    %c0_163 = arith.constant 0 : index
    %470 = vector.load %arg18[%469, %c0_162, %c0_163] : memref<8x8x128xf32, #tpu.memory_space<vmem>>, vector<1x8x128xf32>
    %471 = vector.shape_cast %470 : vector<1x8x128xf32> to vector<8x128xf32>
    %cst_164 = arith.constant dense<0.000000e+00> : vector<8x128xf32>
    %472 = tpu.matmul %464, %419, %cst_164 {dimension_numbers = #tpu.dot_dimension_numbers<[1], [0], [0], [1], [0, 0, 1, 1], [], []>} : vector<8x32xf32>, vector<32x128xf32>, vector<8x128xf32> -> vector<8x128xf32>
    %473 = arith.addf %471, %472 : vector<8x128xf32>
    %474 = arith.negf %473 : vector<8x128xf32>
    %475 = math.exp %474 : vector<8x128xf32>
    %cst_165 = arith.constant 1.000000e+00 : f32
    %476 = vector.broadcast %cst_165 : f32 to vector<8x128xf32>
    %477 = arith.addf %476, %475 : vector<8x128xf32>
    %478 = arith.divf %476, %477 : vector<8x128xf32>
    %479 = vector.extract_strided_slice %478 {offsets = [0, 0], sizes = [8, 32], strides = [1, 1]} : vector<8x128xf32> to vector<8x32xf32>
    %480 = vector.extract_strided_slice %478 {offsets = [0, 32], sizes = [8, 32], strides = [1, 1]} : vector<8x128xf32> to vector<8x32xf32>
    %481 = vector.extract_strided_slice %478 {offsets = [0, 96], sizes = [8, 32], strides = [1, 1]} : vector<8x128xf32> to vector<8x32xf32>
    %482 = vector.extract_strided_slice %473 {offsets = [0, 64], sizes = [8, 32], strides = [1, 1]} : vector<8x128xf32> to vector<8x32xf32>
    %483 = math.tanh %482 : vector<8x32xf32>
    %484 = arith.mulf %480, %462 : vector<8x32xf32>
    %485 = arith.mulf %479, %483 : vector<8x32xf32>
    %486 = arith.addf %484, %485 : vector<8x32xf32>
    %487 = math.tanh %486 : vector<8x32xf32>
    %488 = arith.mulf %481, %487 : vector<8x32xf32>
    %489 = arith.index_cast %c2_i32_161 : i32 to index
    %c0_166 = arith.constant 0 : index
    %c0_167 = arith.constant 0 : index
    %490 = vector.load %arg19[%489, %c0_166, %c0_167] : memref<8x8x32xf32, #tpu.memory_space<vmem>>, vector<1x8x32xf32>
    %491 = vector.shape_cast %490 : vector<1x8x32xf32> to vector<8x32xf32>
    %492 = vector.shape_cast %488 : vector<8x32xf32> to vector<1x8x32xf32>
    tpu.vector_store %arg19[%489, %c0_166, %c0_167], %492 {strides = array<i32>} : memref<8x8x32xf32, #tpu.memory_space<vmem>>, vector<1x8x32xf32>,
    %c3_i32_168 = arith.constant 3 : i32
    %493 = arith.index_cast %c3_i32_168 : i32 to index
    %c0_169 = arith.constant 0 : index
    %c0_170 = arith.constant 0 : index
    %494 = vector.load %arg18[%493, %c0_169, %c0_170] : memref<8x8x128xf32, #tpu.memory_space<vmem>>, vector<1x8x128xf32>
    %495 = vector.shape_cast %494 : vector<1x8x128xf32> to vector<8x128xf32>
    %cst_171 = arith.constant dense<0.000000e+00> : vector<8x128xf32>
    %496 = tpu.matmul %488, %419, %cst_171 {dimension_numbers = #tpu.dot_dimension_numbers<[1], [0], [0], [1], [0, 0, 1, 1], [], []>} : vector<8x32xf32>, vector<32x128xf32>, vector<8x128xf32> -> vector<8x128xf32>
    %497 = arith.addf %495, %496 : vector<8x128xf32>
    %498 = arith.negf %497 : vector<8x128xf32>
    %499 = math.exp %498 : vector<8x128xf32>
    %cst_172 = arith.constant 1.000000e+00 : f32
    %500 = vector.broadcast %cst_172 : f32 to vector<8x128xf32>
    %501 = arith.addf %500, %499 : vector<8x128xf32>
    %502 = arith.divf %500, %501 : vector<8x128xf32>
    %503 = vector.extract_strided_slice %502 {offsets = [0, 0], sizes = [8, 32], strides = [1, 1]} : vector<8x128xf32> to vector<8x32xf32>
    %504 = vector.extract_strided_slice %502 {offsets = [0, 32], sizes = [8, 32], strides = [1, 1]} : vector<8x128xf32> to vector<8x32xf32>
    %505 = vector.extract_strided_slice %502 {offsets = [0, 96], sizes = [8, 32], strides = [1, 1]} : vector<8x128xf32> to vector<8x32xf32>
    %506 = vector.extract_strided_slice %497 {offsets = [0, 64], sizes = [8, 32], strides = [1, 1]} : vector<8x128xf32> to vector<8x32xf32>
    %507 = math.tanh %506 : vector<8x32xf32>
    %508 = arith.mulf %504, %486 : vector<8x32xf32>
    %509 = arith.mulf %503, %507 : vector<8x32xf32>
    %510 = arith.addf %508, %509 : vector<8x32xf32>
    %511 = math.tanh %510 : vector<8x32xf32>
    %512 = arith.mulf %505, %511 : vector<8x32xf32>
    %513 = arith.index_cast %c3_i32_168 : i32 to index
    %c0_173 = arith.constant 0 : index
    %c0_174 = arith.constant 0 : index
    %514 = vector.load %arg19[%513, %c0_173, %c0_174] : memref<8x8x32xf32, #tpu.memory_space<vmem>>, vector<1x8x32xf32>
    %515 = vector.shape_cast %514 : vector<1x8x32xf32> to vector<8x32xf32>
    %516 = vector.shape_cast %512 : vector<8x32xf32> to vector<1x8x32xf32>
    tpu.vector_store %arg19[%513, %c0_173, %c0_174], %516 {strides = array<i32>} : memref<8x8x32xf32, #tpu.memory_space<vmem>>, vector<1x8x32xf32>,
    %c4_i32_175 = arith.constant 4 : i32
    %517 = arith.index_cast %c4_i32_175 : i32 to index
    %c0_176 = arith.constant 0 : index
    %c0_177 = arith.constant 0 : index
    %518 = vector.load %arg18[%517, %c0_176, %c0_177] : memref<8x8x128xf32, #tpu.memory_space<vmem>>, vector<1x8x128xf32>
    %519 = vector.shape_cast %518 : vector<1x8x128xf32> to vector<8x128xf32>
    %cst_178 = arith.constant dense<0.000000e+00> : vector<8x128xf32>
    %520 = tpu.matmul %512, %419, %cst_178 {dimension_numbers = #tpu.dot_dimension_numbers<[1], [0], [0], [1], [0, 0, 1, 1], [], []>} : vector<8x32xf32>, vector<32x128xf32>, vector<8x128xf32> -> vector<8x128xf32>
    %521 = arith.addf %519, %520 : vector<8x128xf32>
    %522 = arith.negf %521 : vector<8x128xf32>
    %523 = math.exp %522 : vector<8x128xf32>
    %cst_179 = arith.constant 1.000000e+00 : f32
    %524 = vector.broadcast %cst_179 : f32 to vector<8x128xf32>
    %525 = arith.addf %524, %523 : vector<8x128xf32>
    %526 = arith.divf %524, %525 : vector<8x128xf32>
    %527 = vector.extract_strided_slice %526 {offsets = [0, 0], sizes = [8, 32], strides = [1, 1]} : vector<8x128xf32> to vector<8x32xf32>
    %528 = vector.extract_strided_slice %526 {offsets = [0, 32], sizes = [8, 32], strides = [1, 1]} : vector<8x128xf32> to vector<8x32xf32>
    %529 = vector.extract_strided_slice %526 {offsets = [0, 96], sizes = [8, 32], strides = [1, 1]} : vector<8x128xf32> to vector<8x32xf32>
    %530 = vector.extract_strided_slice %521 {offsets = [0, 64], sizes = [8, 32], strides = [1, 1]} : vector<8x128xf32> to vector<8x32xf32>
    %531 = math.tanh %530 : vector<8x32xf32>
    %532 = arith.mulf %528, %510 : vector<8x32xf32>
    %533 = arith.mulf %527, %531 : vector<8x32xf32>
    %534 = arith.addf %532, %533 : vector<8x32xf32>
    %535 = math.tanh %534 : vector<8x32xf32>
    %536 = arith.mulf %529, %535 : vector<8x32xf32>
    %537 = arith.index_cast %c4_i32_175 : i32 to index
    %c0_180 = arith.constant 0 : index
    %c0_181 = arith.constant 0 : index
    %538 = vector.load %arg19[%537, %c0_180, %c0_181] : memref<8x8x32xf32, #tpu.memory_space<vmem>>, vector<1x8x32xf32>
    %539 = vector.shape_cast %538 : vector<1x8x32xf32> to vector<8x32xf32>
    %540 = vector.shape_cast %536 : vector<8x32xf32> to vector<1x8x32xf32>
    tpu.vector_store %arg19[%537, %c0_180, %c0_181], %540 {strides = array<i32>} : memref<8x8x32xf32, #tpu.memory_space<vmem>>, vector<1x8x32xf32>,
    %c5_i32_182 = arith.constant 5 : i32
    %541 = arith.index_cast %c5_i32_182 : i32 to index
    %c0_183 = arith.constant 0 : index
    %c0_184 = arith.constant 0 : index
    %542 = vector.load %arg18[%541, %c0_183, %c0_184] : memref<8x8x128xf32, #tpu.memory_space<vmem>>, vector<1x8x128xf32>
    %543 = vector.shape_cast %542 : vector<1x8x128xf32> to vector<8x128xf32>
    %cst_185 = arith.constant dense<0.000000e+00> : vector<8x128xf32>
    %544 = tpu.matmul %536, %419, %cst_185 {dimension_numbers = #tpu.dot_dimension_numbers<[1], [0], [0], [1], [0, 0, 1, 1], [], []>} : vector<8x32xf32>, vector<32x128xf32>, vector<8x128xf32> -> vector<8x128xf32>
    %545 = arith.addf %543, %544 : vector<8x128xf32>
    %546 = arith.negf %545 : vector<8x128xf32>
    %547 = math.exp %546 : vector<8x128xf32>
    %cst_186 = arith.constant 1.000000e+00 : f32
    %548 = vector.broadcast %cst_186 : f32 to vector<8x128xf32>
    %549 = arith.addf %548, %547 : vector<8x128xf32>
    %550 = arith.divf %548, %549 : vector<8x128xf32>
    %551 = vector.extract_strided_slice %550 {offsets = [0, 0], sizes = [8, 32], strides = [1, 1]} : vector<8x128xf32> to vector<8x32xf32>
    %552 = vector.extract_strided_slice %550 {offsets = [0, 32], sizes = [8, 32], strides = [1, 1]} : vector<8x128xf32> to vector<8x32xf32>
    %553 = vector.extract_strided_slice %550 {offsets = [0, 96], sizes = [8, 32], strides = [1, 1]} : vector<8x128xf32> to vector<8x32xf32>
    %554 = vector.extract_strided_slice %545 {offsets = [0, 64], sizes = [8, 32], strides = [1, 1]} : vector<8x128xf32> to vector<8x32xf32>
    %555 = math.tanh %554 : vector<8x32xf32>
    %556 = arith.mulf %552, %534 : vector<8x32xf32>
    %557 = arith.mulf %551, %555 : vector<8x32xf32>
    %558 = arith.addf %556, %557 : vector<8x32xf32>
    %559 = math.tanh %558 : vector<8x32xf32>
    %560 = arith.mulf %553, %559 : vector<8x32xf32>
    %561 = arith.index_cast %c5_i32_182 : i32 to index
    %c0_187 = arith.constant 0 : index
    %c0_188 = arith.constant 0 : index
    %562 = vector.load %arg19[%561, %c0_187, %c0_188] : memref<8x8x32xf32, #tpu.memory_space<vmem>>, vector<1x8x32xf32>
    %563 = vector.shape_cast %562 : vector<1x8x32xf32> to vector<8x32xf32>
    %564 = vector.shape_cast %560 : vector<8x32xf32> to vector<1x8x32xf32>
    tpu.vector_store %arg19[%561, %c0_187, %c0_188], %564 {strides = array<i32>} : memref<8x8x32xf32, #tpu.memory_space<vmem>>, vector<1x8x32xf32>,
    %c6_i32_189 = arith.constant 6 : i32
    %565 = arith.index_cast %c6_i32_189 : i32 to index
    %c0_190 = arith.constant 0 : index
    %c0_191 = arith.constant 0 : index
    %566 = vector.load %arg18[%565, %c0_190, %c0_191] : memref<8x8x128xf32, #tpu.memory_space<vmem>>, vector<1x8x128xf32>
    %567 = vector.shape_cast %566 : vector<1x8x128xf32> to vector<8x128xf32>
    %cst_192 = arith.constant dense<0.000000e+00> : vector<8x128xf32>
    %568 = tpu.matmul %560, %419, %cst_192 {dimension_numbers = #tpu.dot_dimension_numbers<[1], [0], [0], [1], [0, 0, 1, 1], [], []>} : vector<8x32xf32>, vector<32x128xf32>, vector<8x128xf32> -> vector<8x128xf32>
    %569 = arith.addf %567, %568 : vector<8x128xf32>
    %570 = arith.negf %569 : vector<8x128xf32>
    %571 = math.exp %570 : vector<8x128xf32>
    %cst_193 = arith.constant 1.000000e+00 : f32
    %572 = vector.broadcast %cst_193 : f32 to vector<8x128xf32>
    %573 = arith.addf %572, %571 : vector<8x128xf32>
    %574 = arith.divf %572, %573 : vector<8x128xf32>
    %575 = vector.extract_strided_slice %574 {offsets = [0, 0], sizes = [8, 32], strides = [1, 1]} : vector<8x128xf32> to vector<8x32xf32>
    %576 = vector.extract_strided_slice %574 {offsets = [0, 32], sizes = [8, 32], strides = [1, 1]} : vector<8x128xf32> to vector<8x32xf32>
    %577 = vector.extract_strided_slice %574 {offsets = [0, 96], sizes = [8, 32], strides = [1, 1]} : vector<8x128xf32> to vector<8x32xf32>
    %578 = vector.extract_strided_slice %569 {offsets = [0, 64], sizes = [8, 32], strides = [1, 1]} : vector<8x128xf32> to vector<8x32xf32>
    %579 = math.tanh %578 : vector<8x32xf32>
    %580 = arith.mulf %576, %558 : vector<8x32xf32>
    %581 = arith.mulf %575, %579 : vector<8x32xf32>
    %582 = arith.addf %580, %581 : vector<8x32xf32>
    %583 = math.tanh %582 : vector<8x32xf32>
    %584 = arith.mulf %577, %583 : vector<8x32xf32>
    %585 = arith.index_cast %c6_i32_189 : i32 to index
    %c0_194 = arith.constant 0 : index
    %c0_195 = arith.constant 0 : index
    %586 = vector.load %arg19[%585, %c0_194, %c0_195] : memref<8x8x32xf32, #tpu.memory_space<vmem>>, vector<1x8x32xf32>
    %587 = vector.shape_cast %586 : vector<1x8x32xf32> to vector<8x32xf32>
    %588 = vector.shape_cast %584 : vector<8x32xf32> to vector<1x8x32xf32>
    tpu.vector_store %arg19[%585, %c0_194, %c0_195], %588 {strides = array<i32>} : memref<8x8x32xf32, #tpu.memory_space<vmem>>, vector<1x8x32xf32>,
    %c7_i32_196 = arith.constant 7 : i32
    %589 = arith.index_cast %c7_i32_196 : i32 to index
    %c0_197 = arith.constant 0 : index
    %c0_198 = arith.constant 0 : index
    %590 = vector.load %arg18[%589, %c0_197, %c0_198] : memref<8x8x128xf32, #tpu.memory_space<vmem>>, vector<1x8x128xf32>
    %591 = vector.shape_cast %590 : vector<1x8x128xf32> to vector<8x128xf32>
    %cst_199 = arith.constant dense<0.000000e+00> : vector<8x128xf32>
    %592 = tpu.matmul %584, %419, %cst_199 {dimension_numbers = #tpu.dot_dimension_numbers<[1], [0], [0], [1], [0, 0, 1, 1], [], []>} : vector<8x32xf32>, vector<32x128xf32>, vector<8x128xf32> -> vector<8x128xf32>
    %593 = arith.addf %591, %592 : vector<8x128xf32>
    %594 = arith.negf %593 : vector<8x128xf32>
    %595 = math.exp %594 : vector<8x128xf32>
    %cst_200 = arith.constant 1.000000e+00 : f32
    %596 = vector.broadcast %cst_200 : f32 to vector<8x128xf32>
    %597 = arith.addf %596, %595 : vector<8x128xf32>
    %598 = arith.divf %596, %597 : vector<8x128xf32>
    %599 = vector.extract_strided_slice %598 {offsets = [0, 0], sizes = [8, 32], strides = [1, 1]} : vector<8x128xf32> to vector<8x32xf32>
    %600 = vector.extract_strided_slice %598 {offsets = [0, 32], sizes = [8, 32], strides = [1, 1]} : vector<8x128xf32> to vector<8x32xf32>
    %601 = vector.extract_strided_slice %598 {offsets = [0, 96], sizes = [8, 32], strides = [1, 1]} : vector<8x128xf32> to vector<8x32xf32>
    %602 = vector.extract_strided_slice %593 {offsets = [0, 64], sizes = [8, 32], strides = [1, 1]} : vector<8x128xf32> to vector<8x32xf32>
    %603 = math.tanh %602 : vector<8x32xf32>
    %604 = arith.mulf %600, %582 : vector<8x32xf32>
    %605 = arith.mulf %599, %603 : vector<8x32xf32>
    %606 = arith.addf %604, %605 : vector<8x32xf32>
    %607 = math.tanh %606 : vector<8x32xf32>
    %608 = arith.mulf %601, %607 : vector<8x32xf32>
    %609 = arith.index_cast %c7_i32_196 : i32 to index
    %c0_201 = arith.constant 0 : index
    %c0_202 = arith.constant 0 : index
    %610 = vector.load %arg19[%609, %c0_201, %c0_202] : memref<8x8x32xf32, #tpu.memory_space<vmem>>, vector<1x8x32xf32>
    %611 = vector.shape_cast %610 : vector<1x8x32xf32> to vector<8x32xf32>
    %612 = vector.shape_cast %608 : vector<8x32xf32> to vector<1x8x32xf32>
    tpu.vector_store %arg19[%609, %c0_201, %c0_202], %612 {strides = array<i32>} : memref<8x8x32xf32, #tpu.memory_space<vmem>>, vector<1x8x32xf32>,
    %c8_i32_203 = arith.constant 8 : i32
    %c0_204 = arith.constant 0 : index
    %c0_205 = arith.constant 0 : index
    %c0_206 = arith.constant 0 : index
    %613 = vector.load %arg19[%c0_204, %c0_205, %c0_206] : memref<8x8x32xf32, #tpu.memory_space<vmem>>, vector<8x8x32xf32>
    %614 = vector.shape_cast %613 : vector<8x8x32xf32> to vector<64x32xf32>
    %615 = arith.truncf %614 : vector<64x32xf32> to vector<64x32xbf16>
    %c0_207 = arith.constant 0 : index
    %c0_208 = arith.constant 0 : index
    %616 = vector.load %arg11[%c0_207, %c0_208] : memref<32x512xbf16, #tpu.memory_space<vmem>>, vector<32x512xbf16>
    %cst_209 = arith.constant dense<0.000000e+00> : vector<64x512xf32>
    %617 = tpu.matmul %615, %616, %cst_209 {dimension_numbers = #tpu.dot_dimension_numbers<[1], [0], [0], [1], [0, 0, 1, 1], [], []>} : vector<64x32xbf16>, vector<32x512xbf16>, vector<64x512xf32> -> vector<64x512xf32>
    %c0_210 = arith.constant 0 : index
    %c0_211 = arith.constant 0 : index
    %618 = vector.load %arg12[%c0_210, %c0_211] : memref<1x512xf32, #tpu.memory_space<vmem>>, vector<1x512xf32>
    %619 = vector.broadcast %618 : vector<1x512xf32> to vector<64x512xf32>
    %620 = arith.addf %617, %619 : vector<64x512xf32>
    %cst_212 = arith.constant 0.000000e+00 : f32
    %621 = vector.broadcast %cst_212 : f32 to vector<64x512xf32>
    %622 = arith.maximumf %620, %621 : vector<64x512xf32>
    %c0_i32_213 = arith.constant 0 : i32
    %623 = tpu.memref_slice %arg23[%c0_i32_213] : memref<2x!tpu.dma_semaphore, #tpu.memory_space<semaphore_mem>> -> memref<1x!tpu.dma_semaphore, #tpu.memory_space<semaphore_mem>>
    %624 = tpu.memref_squeeze %623 : memref<1x!tpu.dma_semaphore, #tpu.memory_space<semaphore_mem>> -> memref<!tpu.dma_semaphore, #tpu.memory_space<semaphore_mem>>
    tpu.wait_dma2 semaphore(%624 : memref<!tpu.dma_semaphore, #tpu.memory_space<semaphore_mem>>) src(%arg13 : memref<512x1024xbf16, #tpu.memory_space<any>>) dst(%arg21 : memref<512x1024xbf16, #tpu.memory_space<vmem>>)
    %c1_i32_214 = arith.constant 1 : i32
    %625 = tpu.memref_slice %arg23[%c1_i32_214] : memref<2x!tpu.dma_semaphore, #tpu.memory_space<semaphore_mem>> -> memref<1x!tpu.dma_semaphore, #tpu.memory_space<semaphore_mem>>
    %626 = tpu.memref_squeeze %625 : memref<1x!tpu.dma_semaphore, #tpu.memory_space<semaphore_mem>> -> memref<!tpu.dma_semaphore, #tpu.memory_space<semaphore_mem>>
    tpu.wait_dma2 semaphore(%626 : memref<!tpu.dma_semaphore, #tpu.memory_space<semaphore_mem>>) src(%arg15 : memref<1024x128xbf16, #tpu.memory_space<any>>) dst(%arg22 : memref<1024x128xbf16, #tpu.memory_space<vmem>>)
    %627 = arith.truncf %622 : vector<64x512xf32> to vector<64x512xbf16>
    %c0_215 = arith.constant 0 : index
    %c0_216 = arith.constant 0 : index
    %628 = vector.load %arg21[%c0_215, %c0_216] : memref<512x1024xbf16, #tpu.memory_space<vmem>>, vector<512x1024xbf16>
    %cst_217 = arith.constant dense<0.000000e+00> : vector<64x1024xf32>
    %629 = tpu.matmul %627, %628, %cst_217 {dimension_numbers = #tpu.dot_dimension_numbers<[1], [0], [0], [1], [0, 0, 1, 1], [], []>} : vector<64x512xbf16>, vector<512x1024xbf16>, vector<64x1024xf32> -> vector<64x1024xf32>
    %c0_218 = arith.constant 0 : index
    %c0_219 = arith.constant 0 : index
    %630 = vector.load %arg14[%c0_218, %c0_219] : memref<1x1024xf32, #tpu.memory_space<vmem>>, vector<1x1024xf32>
    %631 = vector.broadcast %630 : vector<1x1024xf32> to vector<64x1024xf32>
    %632 = arith.addf %629, %631 : vector<64x1024xf32>
    %cst_220 = arith.constant 0.000000e+00 : f32
    %633 = vector.broadcast %cst_220 : f32 to vector<64x1024xf32>
    %634 = arith.maximumf %632, %633 : vector<64x1024xf32>
    %635 = arith.truncf %634 : vector<64x1024xf32> to vector<64x1024xbf16>
    %c0_221 = arith.constant 0 : index
    %c0_222 = arith.constant 0 : index
    %636 = vector.load %arg22[%c0_221, %c0_222] : memref<1024x128xbf16, #tpu.memory_space<vmem>>, vector<1024x128xbf16>
    %cst_223 = arith.constant dense<0.000000e+00> : vector<64x128xf32>
    %637 = tpu.matmul %635, %636, %cst_223 {dimension_numbers = #tpu.dot_dimension_numbers<[1], [0], [0], [1], [0, 0, 1, 1], [], []>} : vector<64x1024xbf16>, vector<1024x128xbf16>, vector<64x128xf32> -> vector<64x128xf32>
    %c0_224 = arith.constant 0 : index
    %c0_225 = arith.constant 0 : index
    %638 = vector.load %arg16[%c0_224, %c0_225] : memref<1x128xf32, #tpu.memory_space<vmem>>, vector<1x128xf32>
    %639 = vector.broadcast %638 : vector<1x128xf32> to vector<64x128xf32>
    %640 = arith.addf %637, %639 : vector<64x128xf32>
    %641 = vector.shape_cast %640 : vector<64x128xf32> to vector<8x8x128xf32>
    %c0_226 = arith.constant 0 : index
    %c0_227 = arith.constant 0 : index
    %c0_228 = arith.constant 0 : index
    %642 = vector.load %arg17[%c0_226, %c0_227, %c0_228] : memref<8x8x128xf32, #tpu.memory_space<vmem>>, vector<8x8x128xf32>
    tpu.vector_store %arg17[%c0_226, %c0_227, %c0_228], %641 {strides = array<i32>} : memref<8x8x128xf32, #tpu.memory_space<vmem>>, vector<8x8x128xf32>,
    return
  }
  func.func @transform_0(%arg0: i32) -> (i32, i32, i32) {
    %c0_i32 = arith.constant 0 : i32
    %c0_i32_0 = arith.constant 0 : i32
    %c0_i32_1 = arith.constant 0 : i32
    %c0_i32_2 = arith.constant 0 : i32
    return %c0_i32, %c0_i32_0, %c0_i32_1 : i32, i32, i32
  }
  func.func @transform_1(%arg0: i32) -> (i32, i32) {
    %c0_i32 = arith.constant 0 : i32
    %c0_i32_0 = arith.constant 0 : i32
    %c0_i32_1 = arith.constant 0 : i32
    return %c0_i32, %c0_i32_0 : i32, i32
  }
  func.func @transform_2(%arg0: i32) -> (i32, i32) {
    %c0_i32 = arith.constant 0 : i32
    %c0_i32_0 = arith.constant 0 : i32
    %c0_i32_1 = arith.constant 0 : i32
    return %c0_i32, %c0_i32_0 : i32, i32
  }
  func.func @transform_3(%arg0: i32) -> (i32, i32) {
    %c0_i32 = arith.constant 0 : i32
    %c0_i32_0 = arith.constant 0 : i32
    %c0_i32_1 = arith.constant 0 : i32
    return %c0_i32, %c0_i32_0 : i32, i32
  }
  func.func @transform_4(%arg0: i32) -> (i32, i32) {
    %c0_i32 = arith.constant 0 : i32
    %c0_i32_0 = arith.constant 0 : i32
    %c0_i32_1 = arith.constant 0 : i32
    return %c0_i32, %c0_i32_0 : i32, i32
  }
  func.func @transform_5(%arg0: i32) -> (i32, i32) {
    %c0_i32 = arith.constant 0 : i32
    %c0_i32_0 = arith.constant 0 : i32
    %c0_i32_1 = arith.constant 0 : i32
    return %c0_i32, %c0_i32_0 : i32, i32
  }
  func.func @transform_6(%arg0: i32) -> (i32, i32) {
    %c0_i32 = arith.constant 0 : i32
    %c0_i32_0 = arith.constant 0 : i32
    %c0_i32_1 = arith.constant 0 : i32
    return %c0_i32, %c0_i32_0 : i32, i32
  }
  func.func @transform_7(%arg0: i32) -> (i32, i32) {
    %c0_i32 = arith.constant 0 : i32
    %c0_i32_0 = arith.constant 0 : i32
    %c0_i32_1 = arith.constant 0 : i32
    return %c0_i32, %c0_i32_0 : i32, i32
  }
  func.func @transform_8(%arg0: i32) -> (i32, i32) {
    %c0_i32 = arith.constant 0 : i32
    %c0_i32_0 = arith.constant 0 : i32
    %c0_i32_1 = arith.constant 0 : i32
    return %c0_i32, %c0_i32_0 : i32, i32
  }
  func.func @transform_9(%arg0: i32) -> (i32, i32) {
    %c0_i32 = arith.constant 0 : i32
    %c0_i32_0 = arith.constant 0 : i32
    %c0_i32_1 = arith.constant 0 : i32
    return %c0_i32, %c0_i32_0 : i32, i32
  }
  func.func @transform_10(%arg0: i32) -> (i32, i32) {
    %c0_i32 = arith.constant 0 : i32
    %c0_i32_0 = arith.constant 0 : i32
    %c0_i32_1 = arith.constant 0 : i32
    return %c0_i32, %c0_i32_0 : i32, i32
  }
  func.func @transform_11(%arg0: i32) -> (i32, i32) {
    %c0_i32 = arith.constant 0 : i32
    %c0_i32_0 = arith.constant 0 : i32
    %c0_i32_1 = arith.constant 0 : i32
    return %c0_i32, %c0_i32_0 : i32, i32
  }
  func.func @transform_13(%arg0: i32) -> (i32, i32) {
    %c0_i32 = arith.constant 0 : i32
    %c0_i32_0 = arith.constant 0 : i32
    %c0_i32_1 = arith.constant 0 : i32
    return %c0_i32, %c0_i32_0 : i32, i32
  }
  func.func @transform_15(%arg0: i32) -> (i32, i32) {
    %c0_i32 = arith.constant 0 : i32
    %c0_i32_0 = arith.constant 0 : i32
    %c0_i32_1 = arith.constant 0 : i32
    return %c0_i32, %c0_i32_0 : i32, i32
  }
  func.func @transform_16(%arg0: i32) -> (i32, i32, i32) {
    %c0_i32 = arith.constant 0 : i32
    %c0_i32_0 = arith.constant 0 : i32
    %c0_i32_1 = arith.constant 0 : i32
    %c0_i32_2 = arith.constant 0 : i32
    return %c0_i32, %c0_i32_0, %c0_i32_1 : i32, i32, i32
  }
}

</mosaic_0001>

<llo_original>
// kernel: kinematics_lstm_forward.1
$region0: #{kinematics_lstm_forward.1}
  #allocation0 [shape = 'u32[]', space=smem, size = 0x4, offset = 0x4, fixed_abs, tag = 'smem constant byte address 0x4 - core index']
  #allocation1 [shape = 'u32[144,128]{1,0:T(1,128)}', space=vmem, size = 0x12000, scoped, tag = 'internal scratch']
  #allocation2 [shape = 'f32[8,8,128]{2,1,0:T(8,128)}', space=vmem, size = 0x8000, scoped, tag = 'scratch operand']
  #allocation3 [shape = 'f32[8,8,32]{2,1,0:T(8,128)}', space=vmem, size = 0x8000, scoped, tag = 'scratch operand']
  #allocation4 [shape = 'f32[8,8,32]{2,1,0:T(8,128)}', space=vmem, size = 0x8000, scoped, tag = 'scratch operand']
  #allocation5 [shape = 'bf16[512,1024]{1,0:T(8,128)(2,1)}', space=vmem, size = 0x100000, scoped, tag = 'scratch operand']
  #allocation6 [shape = 'bf16[1024,128]{1,0:T(8,128)(2,1)}', space=vmem, size = 0x40000, scoped, tag = 'scratch operand']
  #allocation7 [shape = 's32[2]{0}', space=sflag, size = 0x8, scoped, tag = 'scratch operand']
  #allocation18 [shape = 's32[]', space=sflag, size = 0x4, offset = 0, fixed_abs, tag = 'sflag constant byte address 0x0 - dummy sync flag']
  #allocation19 [shape = 's32[]', space=sflag, size = 0x4, offset = 0, fixed_abs, tag = 'sflag constant byte address 0x0 - dummy sync flag']
  #allocation20 [shape = 'u32[]', space=smem, size = 0x4, offset = 0x44, fixed_abs, tag = 'smem constant byte address 0x44 - assertion arg 0']
  #allocation21 [shape = 'u32[]', space=smem, size = 0x4, offset = 0x48, fixed_abs, tag = 'smem constant byte address 0x48 - assertion arg 1']
  #allocation22 [shape = 's32[]', space=sflag, size = 0x4, offset = 0, fixed_abs, tag = 'sflag constant byte address 0x0 - dummy sync flag']
  #allocation23 [shape = 's32[]', space=sflag, size = 0x4, offset = 0, fixed_abs, tag = 'sflag constant byte address 0x0 - dummy sync flag']
  %s0 = inlined_call_operand.vmem [shape: f32[8,8,20], index: 0, kind: input, shape index: {}]
  %s1 = inlined_call_operand.hbm [shape: f32[20,128], index: 1, kind: input, shape index: {}]
  %s2 = inlined_call_operand.vmem [shape: f32[32,128], index: 2, kind: input, shape index: {}]
  %s3 = inlined_call_operand.vmem [shape: f32[1,128], index: 3, kind: input, shape index: {}]
  %s4 = inlined_call_operand.vmem [shape: f32[32,128], index: 4, kind: input, shape index: {}]
  %s5 = inlined_call_operand.hbm [shape: f32[32,128], index: 5, kind: input, shape index: {}]
  %s6 = inlined_call_operand.vmem [shape: f32[1,128], index: 6, kind: input, shape index: {}]
  %s7 = inlined_call_operand.hbm [shape: f32[32,128], index: 7, kind: input, shape index: {}]
  %s8 = inlined_call_operand.hbm [shape: f32[32,128], index: 8, kind: input, shape index: {}]
  %s9 = inlined_call_operand.vmem [shape: f32[1,128], index: 9, kind: input, shape index: {}]
  %s10 = inlined_call_operand.vmem [shape: bf16[32,512], index: 10, kind: input, shape index: {}]
  %s11 = inlined_call_operand.hbm [shape: f32[1,512], index: 11, kind: input, shape index: {}]
  %s12 = inlined_call_operand.hbm [shape: bf16[512,1024], index: 12, kind: input, shape index: {}]
  %s13 = inlined_call_operand.hbm [shape: f32[1,1024], index: 13, kind: input, shape index: {}]
  %s14 = inlined_call_operand.hbm [shape: bf16[1024,128], index: 14, kind: input, shape index: {}]
  %s15 = inlined_call_operand.vmem [shape: f32[1,128], index: 15, kind: input, shape index: {}]
  %s16 = inlined_call_operand.vmem [shape: f32[8,8,128], index: 16, kind: output, shape index: {}]
  %s17 = sld [smem:[#allocation0]]
  $region98: #{kinematics_lstm_forward.1} parent=0
    _
  %s19 = ssub.s32 1, %s17
  %s20 = scalar_select 0, %s19, %s17
  $region1: #{kinematics_lstm_forward.1} parent=0
    #allocation8 [shape = 'u8[12288]{0}', space=vmem, size = 0x3000, scoped, tag = 'input window, operand 1, single buffered']
    #allocation9 [shape = 's32[1]{0}', space=sflag, size = 0x4, scoped, tag = 'scoped memory for kinematics_lstm_forward.1']
    #allocation10 [shape = 'u8[16384]{0}', space=vmem, size = 0x4000, scoped, tag = 'input window, operand 5, single buffered']
    #allocation11 [shape = 's32[1]{0}', space=sflag, size = 0x4, scoped, tag = 'scoped memory for kinematics_lstm_forward.1']
    #allocation12 [shape = 'u8[16384]{0}', space=vmem, size = 0x4000, scoped, tag = 'input window, operand 7, single buffered']
    #allocation13 [shape = 'u8[16384]{0}', space=vmem, size = 0x4000, scoped, tag = 'input window, operand 8, single buffered']
    #allocation14 [shape = 's32[1]{0}', space=sflag, size = 0x4, scoped, tag = 'scoped memory for kinematics_lstm_forward.1']
    #allocation15 [shape = 'u8[2048]{0}', space=vmem, size = 0x800, scoped, tag = 'input window, operand 11, single buffered']
    #allocation16 [shape = 'u8[4096]{0}', space=vmem, size = 0x1000, scoped, tag = 'input window, operand 13, single buffered']
    #allocation17 [shape = 's32[1]{0}', space=sflag, size = 0x4, scoped, tag = 'scoped memory for kinematics_lstm_forward.1']
    %21 = vsyncpa [#allocation9], 0
    %22 = vsyncpa [#allocation11], 0
    %23 = vsyncpa [#allocation14], 0
    %24 = vsyncpa [#allocation17], 0
    // Predicated region
    $region2: #{kinematics_lstm_forward.1} parent=1 // pred_check
      _
    $region3: #{kinematics_lstm_forward.1} parent=1 // pred_check_branch
      %26 = sbr.rel (0) target = $region5
    $region4: #{kinematics_lstm_forward.1} parent=1 // pred_region
      _
    $region5: #{kinematics_lstm_forward.1} parent=1 // pred_fallthru
      _
    // Predicated region
    $region6: #{kinematics_lstm_forward.1} parent=1 // pred_check
      _
    $region7: #{kinematics_lstm_forward.1} parent=1 // pred_check_branch
      %28 = sbr.rel (0) target = $region9
    $region8: #{kinematics_lstm_forward.1} parent=1 // pred_region
      %s30 = ssub.s32 384, 384
      %31 = vsyncadd [#allocation9], %s30
      %s32 = sshll.u32 [#allocation8], 4
      %s33 = int_to_ptr.vmem [resolvable:$true] %s32
      %38 = dma.hbm_to_vmem [thread:$0]  %s1, 384, %s33, [#allocation9], 128, 128, 8
    $region9: #{kinematics_lstm_forward.1} parent=1 // pred_fallthru
      _
    // Predicated region
    $region10: #{kinematics_lstm_forward.1} parent=1 // pred_check
      _
    $region11: #{kinematics_lstm_forward.1} parent=1 // pred_check_branch
      %40 = sbr.rel (0) target = $region13
    $region12: #{kinematics_lstm_forward.1} parent=1 // pred_region
      _
    $region13: #{kinematics_lstm_forward.1} parent=1 // pred_fallthru
      _
    // Predicated region
    $region14: #{kinematics_lstm_forward.1} parent=1 // pred_check
      _
    $region15: #{kinematics_lstm_forward.1} parent=1 // pred_check_branch
      %42 = sbr.rel (0) target = $region17
    $region16: #{kinematics_lstm_forward.1} parent=1 // pred_region
      _
    $region17: #{kinematics_lstm_forward.1} parent=1 // pred_fallthru
      _
    // Predicated region
    $region18: #{kinematics_lstm_forward.1} parent=1 // pred_check
      _
    $region19: #{kinematics_lstm_forward.1} parent=1 // pred_check_branch
      %44 = sbr.rel (0) target = $region21
    $region20: #{kinematics_lstm_forward.1} parent=1 // pred_region
      _
    $region21: #{kinematics_lstm_forward.1} parent=1 // pred_fallthru
      _
    // Predicated region
    $region22: #{kinematics_lstm_forward.1} parent=1 // pred_check
      _
    $region23: #{kinematics_lstm_forward.1} parent=1 // pred_check_branch
      %46 = sbr.rel (0) target = $region25
    $region24: #{kinematics_lstm_forward.1} parent=1 // pred_region
      %s48 = ssub.s32 512, 512
      %49 = vsyncadd [#allocation11], %s48
      %s50 = sshll.u32 [#allocation10], 4
      %s51 = int_to_ptr.vmem [resolvable:$true] %s50
      %56 = dma.hbm_to_vmem [thread:$0]  %s5, 512, %s51, [#allocation11], 128, 128, 8
    $region25: #{kinematics_lstm_forward.1} parent=1 // pred_fallthru
      _
    // Predicated region
    $region26: #{kinematics_lstm_forward.1} parent=1 // pred_check
      _
    $region27: #{kinematics_lstm_forward.1} parent=1 // pred_check_branch
      %58 = sbr.rel (0) target = $region29
    $region28: #{kinematics_lstm_forward.1} parent=1 // pred_region
      _
    $region29: #{kinematics_lstm_forward.1} parent=1 // pred_fallthru
      _
    // Predicated region
    $region30: #{kinematics_lstm_forward.1} parent=1 // pred_check
      _
    $region31: #{kinematics_lstm_forward.1} parent=1 // pred_check_branch
      %60 = sbr.rel (0) target = $region33
    $region32: #{kinematics_lstm_forward.1} parent=1 // pred_region
      %s62 = ssub.s32 512, 512
      %63 = vsyncadd [#allocation11], %s62
      %s64 = sshll.u32 [#allocation12], 4
      %s65 = int_to_ptr.vmem [resolvable:$true] %s64
      %70 = dma.hbm_to_vmem [thread:$0]  %s7, 512, %s65, [#allocation11], 128, 128, 8
    $region33: #{kinematics_lstm_forward.1} parent=1 // pred_fallthru
      _
    // Predicated region
    $region34: #{kinematics_lstm_forward.1} parent=1 // pred_check
      _
    $region35: #{kinematics_lstm_forward.1} parent=1 // pred_check_branch
      %72 = sbr.rel (0) target = $region37
    $region36: #{kinematics_lstm_forward.1} parent=1 // pred_region
      %s74 = ssub.s32 512, 512
      %75 = vsyncadd [#allocation14], %s74
      %s76 = sshll.u32 [#allocation13], 4
      %s77 = int_to_ptr.vmem [resolvable:$true] %s76
      %82 = dma.hbm_to_vmem [thread:$0]  %s8, 512, %s77, [#allocation14], 128, 128, 8
    $region37: #{kinematics_lstm_forward.1} parent=1 // pred_fallthru
      _
    // Predicated region
    $region38: #{kinematics_lstm_forward.1} parent=1 // pred_check
      _
    $region39: #{kinematics_lstm_forward.1} parent=1 // pred_check_branch
      %84 = sbr.rel (0) target = $region41
    $region40: #{kinematics_lstm_forward.1} parent=1 // pred_region
      _
    $region41: #{kinematics_lstm_forward.1} parent=1 // pred_fallthru
      _
    // Predicated region
    $region42: #{kinematics_lstm_forward.1} parent=1 // pred_check
      _
    $region43: #{kinematics_lstm_forward.1} parent=1 // pred_check_branch
      %86 = sbr.rel (0) target = $region45
    $region44: #{kinematics_lstm_forward.1} parent=1 // pred_region
      _
    $region45: #{kinematics_lstm_forward.1} parent=1 // pred_fallthru
      _
    // Predicated region
    $region46: #{kinematics_lstm_forward.1} parent=1 // pred_check
      _
    $region47: #{kinematics_lstm_forward.1} parent=1 // pred_check_branch
      %88 = sbr.rel (0) target = $region49
    $region48: #{kinematics_lstm_forward.1} parent=1 // pred_region
      %s90 = ssub.s32 64, 64
      %91 = vsyncadd [#allocation14], %s90
      %s93 = sshll.u32 [#allocation15], 4
      %s94 = int_to_ptr.vmem [resolvable:$true] %s93
      %96 = dma.hbm_to_vmem [thread:$0]  %s11, 64, %s94, [#allocation14]
    $region49: #{kinematics_lstm_forward.1} parent=1 // pred_fallthru
      _
    // Predicated region
    $region50: #{kinematics_lstm_forward.1} parent=1 // pred_check
      _
    $region51: #{kinematics_lstm_forward.1} parent=1 // pred_check_branch
      %98 = sbr.rel (0) target = $region53
    $region52: #{kinematics_lstm_forward.1} parent=1 // pred_region
      %s100 = ssub.s32 128, 128
      %101 = vsyncadd [#allocation17], %s100
      %s103 = sshll.u32 [#allocation16], 4
      %s104 = int_to_ptr.vmem [resolvable:$true] %s103
      %106 = dma.hbm_to_vmem [thread:$0]  %s13, 128, %s104, [#allocation17]
    $region53: #{kinematics_lstm_forward.1} parent=1 // pred_fallthru
      _
    // Predicated region
    $region54: #{kinematics_lstm_forward.1} parent=1 // pred_check
      _
    $region55: #{kinematics_lstm_forward.1} parent=1 // pred_check_branch
      %108 = sbr.rel (0) target = $region57
    $region56: #{kinematics_lstm_forward.1} parent=1 // pred_region
      _
    $region57: #{kinematics_lstm_forward.1} parent=1 // pred_fallthru
      _
    // Predicated region
    $region58: #{kinematics_lstm_forward.1} parent=1 // pred_check
      _
    $region59: #{kinematics_lstm_forward.1} parent=1 // pred_check_branch
      %110 = sbr.rel (0) target = $region61
    $region60: #{kinematics_lstm_forward.1} parent=1 // pred_region
      %111 = dma.done [#allocation9], 384
    $region61: #{kinematics_lstm_forward.1} parent=1 // pred_fallthru
      _
    // Predicated region
    $region62: #{kinematics_lstm_forward.1} parent=1 // pred_check
      _
    $region63: #{kinematics_lstm_forward.1} parent=1 // pred_check_branch
      %113 = sbr.rel (0) target = $region65
    $region64: #{kinematics_lstm_forward.1} parent=1 // pred_region
      %114 = dma.done [#allocation11], 512
    $region65: #{kinematics_lstm_forward.1} parent=1 // pred_fallthru
      _
    // Predicated region
    $region66: #{kinematics_lstm_forward.1} parent=1 // pred_check
      _
    $region67: #{kinematics_lstm_forward.1} parent=1 // pred_check_branch
      %116 = sbr.rel (0) target = $region69
    $region68: #{kinematics_lstm_forward.1} parent=1 // pred_region
      %117 = dma.done [#allocation11], 512
    $region69: #{kinematics_lstm_forward.1} parent=1 // pred_fallthru
      _
    // Predicated region
    $region70: #{kinematics_lstm_forward.1} parent=1 // pred_check
      _
    $region71: #{kinematics_lstm_forward.1} parent=1 // pred_check_branch
      %119 = sbr.rel (0) target = $region73
    $region72: #{kinematics_lstm_forward.1} parent=1 // pred_region
      %120 = dma.done [#allocation14], 512
    $region73: #{kinematics_lstm_forward.1} parent=1 // pred_fallthru
      _
    // Predicated region
    $region74: #{kinematics_lstm_forward.1} parent=1 // pred_check
      _
    $region75: #{kinematics_lstm_forward.1} parent=1 // pred_check_branch
      %122 = sbr.rel (0) target = $region77
    $region76: #{kinematics_lstm_forward.1} parent=1 // pred_region
      %123 = dma.done [#allocation14], 64
    $region77: #{kinematics_lstm_forward.1} parent=1 // pred_fallthru
      _
    // Predicated region
    $region78: #{kinematics_lstm_forward.1} parent=1 // pred_check
      _
    $region79: #{kinematics_lstm_forward.1} parent=1 // pred_check_branch
      %125 = sbr.rel (0) target = $region81
    $region80: #{kinematics_lstm_forward.1} parent=1 // pred_region
      %126 = dma.done [#allocation17], 128
    $region81: #{kinematics_lstm_forward.1} parent=1 // pred_fallthru
      _
    // Predicated region
    $region82: #{kinematics_lstm_forward.1} parent=1 // pred_check
      _
    $region83: #{kinematics_lstm_forward.1} parent=1 // pred_check_branch
      %129 = sbr.rel target = $region85
    $region84: #{kinematics_lstm_forward.1} parent=1 // pred_region
      %130 = sst [smem:[#allocation20]] [#allocation19]
      %131 = sst [smem:[#allocation21]] [#allocation18]
    $region85: #{kinematics_lstm_forward.1} parent=1 // pred_fallthru
      _
    %133 = shalt.err (0)
    %s135 = sshll.u32 [#allocation5], 4
    %s136 = int_to_ptr.vmem [resolvable:$true] %s135
    %138 = dma.hbm_to_vmem [thread:$0]  %s12, 32768, %s136, [#allocation7]
    %s139 = scalar_lea.sflag [#allocation7], 1
    // Predicated region
    $region86: #{kinematics_lstm_forward.1} parent=1 // pred_check
      _
    $region87: #{kinematics_lstm_forward.1} parent=1 // pred_check_branch
      %141 = sbr.rel target = $region89
    $region88: #{kinematics_lstm_forward.1} parent=1 // pred_region
      %142 = sst [smem:[#allocation20]] [#allocation23]
      %143 = sst [smem:[#allocation21]] [#allocation22]
    $region89: #{kinematics_lstm_forward.1} parent=1 // pred_fallthru
      _
    %145 = shalt.err (0)
    %s147 = sshll.u32 [#allocation6], 4
    %s148 = int_to_ptr.vmem [resolvable:$true] %s147
    %150 = dma.hbm_to_vmem [thread:$0]  %s14, 8192, %s148, %s139
    %v151 = vld [vmem:[%s0] sm:$0xff]
    %v152 = vld [vmem:[%s0 + $0x8] sm:$0xff]
    %v153 = vld [vmem:[%s0 + $0x10] sm:$0xff]
    %v154 = vld [vmem:[%s0 + $0x18] sm:$0xff]
    %v155 = vld [vmem:[%s0 + $0x20] sm:$0xff]
    %v156 = vld [vmem:[%s0 + $0x28] sm:$0xff]
    %v157 = vld [vmem:[%s0 + $0x30] sm:$0xff]
    %v158 = vld [vmem:[%s0 + $0x38] sm:$0xff]
    %v159 = vld [vmem:[#allocation8] sm:$0xff]
    %v160 = vld [vmem:[#allocation8 + $0x8] sm:$0xff]
    %v161 = vld [vmem:[#allocation8 + $0x10] sm:$0xf]
    %v162 = vld [vmem:[%s3] sm:$0x1]
    %v164 = vlaneseq
    %v165 = vshrl.u32 %v164, 7
    %v166 = vsub.s32 0, %v165
    %v167 = vrot.slane %v162, %v166
    %vm169 = vcmask 162816
    %v171 = vsel %vm169, %v151, 0
    %v174 = vsel %vm169, %v152, 0
    %v177 = vsel %vm169, %v153, 0
    %v180 = vsel %vm169, %v154, 0
    %v183 = vsel %vm169, %v155, 0
    %v186 = vsel %vm169, %v156, 0
    %v189 = vsel %vm169, %v157, 0
    %v192 = vsel %vm169, %v158, 0
    %vm194 = vcmask 1043456
    %v196 = vsel %vm194, %v161, 0
    %198 = vmatprep.subr.mxu0 0.0
    %199 = vmatpush1.msra.mxu0 0.0
    %200 = vmatprep.subr.mxu0 0.0
    %201 = vmatpush1.msra.mxu0 0.0
    %202 = vmatprep.subr.mxu0 0.0
    %203 = vmatpush1.msra.mxu0 0.0
    %204 = vmatprep.subr.mxu0 0.0
    %205 = vmatpush1.msra.mxu0 0.0
    %206 = vmatprep.subr.mxu0 0.0
    %207 = vmatpush1.msra.mxu0 0.0
    %208 = vmatprep.subr.mxu0 0.0
    %209 = vmatpush1.msra.mxu0 0.0
    %210 = vmatprep.subr.mxu0 0.0
    %211 = vmatpush1.msra.mxu0 0.0
    %212 = vmatprep.subr.mxu0 0.0
    %213 = vmatpush1.msra.mxu0 0.0
    %214 = vmatprep.subr.mxu0 0.0
    %215 = vmatpush1.msra.mxu0 0.0
    %216 = vmatprep.subr.mxu0 0.0
    %217 = vmatpush1.msra.mxu0 0.0
    %218 = vmatprep.subr.mxu0 0.0
    %219 = vmatpush1.msra.mxu0 0.0
    %220 = vmatprep.subr.mxu0 0.0
    %221 = vmatpush1.msra.mxu0 0.0
    %222 = vmatprep.subr.mxu0 0.0
    %223 = vmatpush1.msra.mxu0 0.0
    %224 = vmatprep.subr.mxu0 0.0
    %225 = vmatpush1.msra.mxu0 %v196
    %226 = vmatprep.subr.mxu0 0.0
    %227 = vmatpush1.msra.mxu0 %v160
    %228 = vmatprep.subr.mxu0 0.0
    %229 = vmatpush1.msra.mxu0 %v159
    %230 = vmatprep.subr.mxu0 0.0
    %231 = vmatpush2.msra.mxu0 0.0
    %232 = vmatprep.subr.mxu0 0.0
    %233 = vmatpush2.msra.mxu0 0.0
    %234 = vmatprep.subr.mxu0 0.0
    %235 = vmatpush2.msra.mxu0 0.0
    %236 = vmatprep.subr.mxu0 0.0
    %237 = vmatpush2.msra.mxu0 0.0
    %238 = vmatprep.subr.mxu0 0.0
    %239 = vmatpush2.msra.mxu0 0.0
    %240 = vmatprep.subr.mxu0 0.0
    %241 = vmatpush2.msra.mxu0 0.0
    %242 = vmatprep.subr.mxu0 0.0
    %243 = vmatpush2.msra.mxu0 0.0
    %244 = vmatprep.subr.mxu0 0.0
    %245 = vmatpush2.msra.mxu0 0.0
    %246 = vmatprep.subr.mxu0 0.0
    %247 = vmatpush2.msra.mxu0 0.0
    %248 = vmatprep.subr.mxu0 0.0
    %249 = vmatpush2.msra.mxu0 0.0
    %250 = vmatprep.subr.mxu0 0.0
    %251 = vmatpush2.msra.mxu0 0.0
    %252 = vmatprep.subr.mxu0 0.0
    %253 = vmatpush2.msra.mxu0 0.0
    %254 = vmatprep.subr.mxu0 0.0
    %255 = vmatpush2.msra.mxu0 0.0
    %256 = vmatprep.subr.mxu0 0.0
    %257 = vmatpush2.msra.mxu0 0.0
    %258 = vmatprep.subr.mxu0 0.0
    %259 = vmatpush2.msra.mxu0 0.0
    %260 = vmatprep.subr.mxu0 0.0
    %261 = vmatpush2.msra.mxu0 0.0
    %262 = vmatprep.mubr.f32.mxu0 0.0
    %263 = vmatmul.mubr.f32.gmra.mxu0 %v171
    %v264 = vpop.f32.mrf.mxu0
    %v265 = vadd.f32 %v167, %v264
    %v266 = vpop.f32.mrf.mxu0
    %267 = vmatprep.mubr.f32.mxu0 0.0
    %268 = vmatmul.mubr.f32.gmra.mxu0 %v174
    %v269 = vpop.f32.mrf.mxu0
    %v270 = vadd.f32 %v167, %v269
    %v271 = vpop.f32.mrf.mxu0
    %272 = vmatprep.mubr.f32.mxu0 0.0
    %273 = vmatmul.mubr.f32.gmra.mxu0 %v177
    %v274 = vpop.f32.mrf.mxu0
    %v275 = vadd.f32 %v167, %v274
    %v276 = vpop.f32.mrf.mxu0
    %277 = vmatprep.mubr.f32.mxu0 0.0
    %278 = vmatmul.mubr.f32.gmra.mxu0 %v180
    %v279 = vpop.f32.mrf.mxu0
    %v280 = vadd.f32 %v167, %v279
    %v281 = vpop.f32.mrf.mxu0
    %282 = vmatprep.mubr.f32.mxu0 0.0
    %283 = vmatmul.mubr.f32.gmra.mxu0 %v183
    %v284 = vpop.f32.mrf.mxu0
    %v285 = vadd.f32 %v167, %v284
    %v286 = vpop.f32.mrf.mxu0
    %287 = vmatprep.mubr.f32.mxu0 0.0
    %288 = vmatmul.mubr.f32.gmra.mxu0 %v186
    %v289 = vpop.f32.mrf.mxu0
    %v290 = vadd.f32 %v167, %v289
    %v291 = vpop.f32.mrf.mxu0
    %292 = vmatprep.mubr.f32.mxu0 0.0
    %293 = vmatmul.mubr.f32.gmra.mxu0 %v189
    %v294 = vpop.f32.mrf.mxu0
    %v295 = vadd.f32 %v167, %v294
    %v296 = vpop.f32.mrf.mxu0
    %297 = vmatprep.mubr.f32.mxu0 0.0
    %298 = vmatmul.mubr.f32.gmra.mxu0 %v192
    %v299 = vpop.f32.mrf.mxu0
    %v300 = vadd.f32 %v167, %v299
    %v301 = vpop.f32.mrf.mxu0
    %302 = vdwg.mxu0
    %303 = vst [vmem:[#allocation2] sm:$0xff] %v265
    %304 = vst [vmem:[#allocation2 + $0x8] sm:$0xff] %v270
    %305 = vst [vmem:[#allocation2 + $0x10] sm:$0xff] %v275
    %306 = vst [vmem:[#allocation2 + $0x18] sm:$0xff] %v280
    %307 = vst [vmem:[#allocation2 + $0x20] sm:$0xff] %v285
    %308 = vst [vmem:[#allocation2 + $0x28] sm:$0xff] %v290
    %309 = vst [vmem:[#allocation2 + $0x30] sm:$0xff] %v295
    %310 = vst [vmem:[#allocation2 + $0x38] sm:$0xff] %v300
    %v311 = vld [vmem:[%s2] sm:$0xff]
    %v312 = vld [vmem:[%s2 + $0x8] sm:$0xff]
    %v313 = vld [vmem:[%s2 + $0x10] sm:$0xff]
    %v314 = vld [vmem:[%s2 + $0x18] sm:$0xff]
    %v315 = vld [vmem:[#allocation2] sm:$0xff]
    %vm316 = vcmask 261120
    %v318 = vsel %vm316, 0.0, 0
    %320 = vmatprep.subr.mxu0 0.0
    %321 = vmatpush1.msra.mxu0 0.0
    %322 = vmatprep.subr.mxu0 0.0
    %323 = vmatpush1.msra.mxu0 0.0
    %324 = vmatprep.subr.mxu0 0.0
    %325 = vmatpush1.msra.mxu0 0.0
    %326 = vmatprep.subr.mxu0 0.0
    %327 = vmatpush1.msra.mxu0 0.0
    %328 = vmatprep.subr.mxu0 0.0
    %329 = vmatpush1.msra.mxu0 0.0
    %330 = vmatprep.subr.mxu0 0.0
    %331 = vmatpush1.msra.mxu0 0.0
    %332 = vmatprep.subr.mxu0 0.0
    %333 = vmatpush1.msra.mxu0 0.0
    %334 = vmatprep.subr.mxu0 0.0
    %335 = vmatpush1.msra.mxu0 0.0
    %336 = vmatprep.subr.mxu0 0.0
    %337 = vmatpush1.msra.mxu0 0.0
    %338 = vmatprep.subr.mxu0 0.0
    %339 = vmatpush1.msra.mxu0 0.0
    %340 = vmatprep.subr.mxu0 0.0
    %341 = vmatpush1.msra.mxu0 0.0
    %342 = vmatprep.subr.mxu0 0.0
    %343 = vmatpush1.msra.mxu0 0.0
    %344 = vmatprep.subr.mxu0 0.0
    %345 = vmatpush1.msra.mxu0 %v314
    %346 = vmatprep.subr.mxu0 0.0
    %347 = vmatpush1.msra.mxu0 %v313
    %348 = vmatprep.subr.mxu0 0.0
    %349 = vmatpush1.msra.mxu0 %v312
    %350 = vmatprep.subr.mxu0 0.0
    %351 = vmatpush1.msra.mxu0 %v311
    %352 = vmatprep.subr.mxu0 0.0
    %353 = vmatpush2.msra.mxu0 0.0
    %354 = vmatprep.subr.mxu0 0.0
    %355 = vmatpush2.msra.mxu0 0.0
    %356 = vmatprep.subr.mxu0 0.0
    %357 = vmatpush2.msra.mxu0 0.0
    %358 = vmatprep.subr.mxu0 0.0
    %359 = vmatpush2.msra.mxu0 0.0
    %360 = vmatprep.subr.mxu0 0.0
    %361 = vmatpush2.msra.mxu0 0.0
    %362 = vmatprep.subr.mxu0 0.0
    %363 = vmatpush2.msra.mxu0 0.0
    %364 = vmatprep.subr.mxu0 0.0
    %365 = vmatpush2.msra.mxu0 0.0
    %366 = vmatprep.subr.mxu0 0.0
    %367 = vmatpush2.msra.mxu0 0.0
    %368 = vmatprep.subr.mxu0 0.0
    %369 = vmatpush2.msra.mxu0 0.0
    %370 = vmatprep.subr.mxu0 0.0
    %371 = vmatpush2.msra.mxu0 0.0
    %372 = vmatprep.subr.mxu0 0.0
    %373 = vmatpush2.msra.mxu0 0.0
    %374 = vmatprep.subr.mxu0 0.0
    %375 = vmatpush2.msra.mxu0 0.0
    %376 = vmatprep.subr.mxu0 0.0
    %377 = vmatpush2.msra.mxu0 0.0
    %378 = vmatprep.subr.mxu0 0.0
    %379 = vmatpush2.msra.mxu0 0.0
    %380 = vmatprep.subr.mxu0 0.0
    %381 = vmatpush2.msra.mxu0 0.0
    %382 = vmatprep.subr.mxu0 0.0
    %383 = vmatpush2.msra.mxu0 0.0
    %384 = vmatprep.mubr.f32.mxu0 0.0
    %385 = vmatmul.mubr.f32.gmra.mxu0 %v318
    %v386 = vpop.f32.mrf.mxu0
    %v387 = vadd.f32 0.0, %v386
    %v388 = vpop.f32.mrf.mxu0
    %389 = vdwg.mxu0
    %v390 = vadd.f32 %v315, %v387
    %v391 = vxor.u32 %v390, 2147483648
    %v392 = vmul.f32 %v391, 1.442695
    %v393 = vpow.pop %v392
    %v394 = vadd.f32 %v393, 1.0
    %v395 = vrcp.pop %v394
    %v396 = vmul.f32 1.0, %v395
    %v397 = vtanh.pop %v390
    %v398 = vmul.f32 %v396, 0.0
    %400 = vrot.lane.b32.xlu0 %v397, 64
    %v401 = vpop.permute.xlu0 %400
    %v403 = vmul.f32 %v396, %v401
    %405 = vrot.lane.b32.xlu0 %v403, 32
    %v406 = vpop.permute.xlu0 %405
    %v408 = vadd.f32 %v398, %v406
    %v409 = vtanh.pop %v408
    %411 = vrot.lane.b32.xlu0 %v409, 64
    %v412 = vpop.permute.xlu0 %411
    %v414 = vmul.f32 %v396, %v412
    %416 = vrot.lane.b32.xlu0 %v414, 32
    %v417 = vpop.permute.xlu0 %416
    %419 = vst.msk [vmem:[#allocation3] sm:$0xff] %vm316, %v417
    %s420 = scalar_lea.vmem [#allocation2], 8
    %v421 = vld [vmem:[%s420] sm:$0xff]
    %v422 = vsel %vm316, %v417, 0
    %424 = vmatprep.subr.mxu0 0.0
    %425 = vmatpush1.msra.mxu0 0.0
    %426 = vmatprep.subr.mxu0 0.0
    %427 = vmatpush1.msra.mxu0 0.0
    %428 = vmatprep.subr.mxu0 0.0
    %429 = vmatpush1.msra.mxu0 0.0
    %430 = vmatprep.subr.mxu0 0.0
    %431 = vmatpush1.msra.mxu0 0.0
    %432 = vmatprep.subr.mxu0 0.0
    %433 = vmatpush1.msra.mxu0 0.0
    %434 = vmatprep.subr.mxu0 0.0
    %435 = vmatpush1.msra.mxu0 0.0
    %436 = vmatprep.subr.mxu0 0.0
    %437 = vmatpush1.msra.mxu0 0.0
    %438 = vmatprep.subr.mxu0 0.0
    %439 = vmatpush1.msra.mxu0 0.0
    %440 = vmatprep.subr.mxu0 0.0
    %441 = vmatpush1.msra.mxu0 0.0
    %442 = vmatprep.subr.mxu0 0.0
    %443 = vmatpush1.msra.mxu0 0.0
    %444 = vmatprep.subr.mxu0 0.0
    %445 = vmatpush1.msra.mxu0 0.0
    %446 = vmatprep.subr.mxu0 0.0
    %447 = vmatpush1.msra.mxu0 0.0
    %448 = vmatprep.subr.mxu0 0.0
    %449 = vmatpush1.msra.mxu0 %v314
    %450 = vmatprep.subr.mxu0 0.0
    %451 = vmatpush1.msra.mxu0 %v313
    %452 = vmatprep.subr.mxu0 0.0
    %453 = vmatpush1.msra.mxu0 %v312
    %454 = vmatprep.subr.mxu0 0.0
    %455 = vmatpush1.msra.mxu0 %v311
    %456 = vmatprep.subr.mxu0 0.0
    %457 = vmatpush2.msra.mxu0 0.0
    %458 = vmatprep.subr.mxu0 0.0
    %459 = vmatpush2.msra.mxu0 0.0
    %460 = vmatprep.subr.mxu0 0.0
    %461 = vmatpush2.msra.mxu0 0.0
    %462 = vmatprep.subr.mxu0 0.0
    %463 = vmatpush2.msra.mxu0 0.0
    %464 = vmatprep.subr.mxu0 0.0
    %465 = vmatpush2.msra.mxu0 0.0
    %466 = vmatprep.subr.mxu0 0.0
    %467 = vmatpush2.msra.mxu0 0.0
    %468 = vmatprep.subr.mxu0 0.0
    %469 = vmatpush2.msra.mxu0 0.0
    %470 = vmatprep.subr.mxu0 0.0
    %471 = vmatpush2.msra.mxu0 0.0
    %472 = vmatprep.subr.mxu0 0.0
    %473 = vmatpush2.msra.mxu0 0.0
    %474 = vmatprep.subr.mxu0 0.0
    %475 = vmatpush2.msra.mxu0 0.0
    %476 = vmatprep.subr.mxu0 0.0
    %477 = vmatpush2.msra.mxu0 0.0
    %478 = vmatprep.subr.mxu0 0.0
    %479 = vmatpush2.msra.mxu0 0.0
    %480 = vmatprep.subr.mxu0 0.0
    %481 = vmatpush2.msra.mxu0 0.0
    %482 = vmatprep.subr.mxu0 0.0
    %483 = vmatpush2.msra.mxu0 0.0
    %484 = vmatprep.subr.mxu0 0.0
    %485 = vmatpush2.msra.mxu0 0.0
    %486 = vmatprep.subr.mxu0 0.0
    %487 = vmatpush2.msra.mxu0 0.0
    %488 = vmatprep.mubr.f32.mxu0 0.0
    %489 = vmatmul.mubr.f32.gmra.mxu0 %v422
    %v490 = vpop.f32.mrf.mxu0
    %v491 = vadd.f32 0.0, %v490
    %v492 = vpop.f32.mrf.mxu0
    %493 = vdwg.mxu0
    %v494 = vadd.f32 %v421, %v491
    %v495 = vxor.u32 %v494, 2147483648
    %v496 = vmul.f32 %v495, 1.442695
    %v497 = vpow.pop %v496
    %v498 = vadd.f32 %v497, 1.0
    %v499 = vrcp.pop %v498
    %v500 = vmul.f32 1.0, %v499
    %v501 = vtanh.pop %v494
    %v502 = vmul.f32 %v500, %v408
    %504 = vrot.lane.b32.xlu0 %v501, 64
    %v505 = vpop.permute.xlu0 %504
    %v507 = vmul.f32 %v500, %v505
    %509 = vrot.lane.b32.xlu0 %v507, 32
    %v510 = vpop.permute.xlu0 %509
    %v512 = vadd.f32 %v502, %v510
    %v513 = vtanh.pop %v512
    %515 = vrot.lane.b32.xlu0 %v513, 64
    %v516 = vpop.permute.xlu0 %515
    %v518 = vmul.f32 %v500, %v516
    %520 = vrot.lane.b32.xlu0 %v518, 32
    %v521 = vpop.permute.xlu0 %520
    %s523 = scalar_lea.vmem [#allocation3], 8
    %524 = vst.msk [vmem:[%s523] sm:$0xff] %vm316, %v521
    %s525 = scalar_lea.vmem [#allocation2], 16
    %v526 = vld [vmem:[%s525] sm:$0xff]
    %v527 = vsel %vm316, %v521, 0
    %529 = vmatprep.subr.mxu0 0.0
    %530 = vmatpush1.msra.mxu0 0.0
    %531 = vmatprep.subr.mxu0 0.0
    %532 = vmatpush1.msra.mxu0 0.0
    %533 = vmatprep.subr.mxu0 0.0
    %534 = vmatpush1.msra.mxu0 0.0
    %535 = vmatprep.subr.mxu0 0.0
    %536 = vmatpush1.msra.mxu0 0.0
    %537 = vmatprep.subr.mxu0 0.0
    %538 = vmatpush1.msra.mxu0 0.0
    %539 = vmatprep.subr.mxu0 0.0
    %540 = vmatpush1.msra.mxu0 0.0
    %541 = vmatprep.subr.mxu0 0.0
    %542 = vmatpush1.msra.mxu0 0.0
    %543 = vmatprep.subr.mxu0 0.0
    %544 = vmatpush1.msra.mxu0 0.0
    %545 = vmatprep.subr.mxu0 0.0
    %546 = vmatpush1.msra.mxu0 0.0
    %547 = vmatprep.subr.mxu0 0.0
    %548 = vmatpush1.msra.mxu0 0.0
    %549 = vmatprep.subr.mxu0 0.0
    %550 = vmatpush1.msra.mxu0 0.0
    %551 = vmatprep.subr.mxu0 0.0
    %552 = vmatpush1.msra.mxu0 0.0
    %553 = vmatprep.subr.mxu0 0.0
    %554 = vmatpush1.msra.mxu0 %v314
    %555 = vmatprep.subr.mxu0 0.0
    %556 = vmatpush1.msra.mxu0 %v313
    %557 = vmatprep.subr.mxu0 0.0
    %558 = vmatpush1.msra.mxu0 %v312
    %559 = vmatprep.subr.mxu0 0.0
    %560 = vmatpush1.msra.mxu0 %v311
    %561 = vmatprep.subr.mxu0 0.0
    %562 = vmatpush2.msra.mxu0 0.0
    %563 = vmatprep.subr.mxu0 0.0
    %564 = vmatpush2.msra.mxu0 0.0
    %565 = vmatprep.subr.mxu0 0.0
    %566 = vmatpush2.msra.mxu0 0.0
    %567 = vmatprep.subr.mxu0 0.0
    %568 = vmatpush2.msra.mxu0 0.0
    %569 = vmatprep.subr.mxu0 0.0
    %570 = vmatpush2.msra.mxu0 0.0
    %571 = vmatprep.subr.mxu0 0.0
    %572 = vmatpush2.msra.mxu0 0.0
    %573 = vmatprep.subr.mxu0 0.0
    %574 = vmatpush2.msra.mxu0 0.0
    %575 = vmatprep.subr.mxu0 0.0
    %576 = vmatpush2.msra.mxu0 0.0
    %577 = vmatprep.subr.mxu0 0.0
    %578 = vmatpush2.msra.mxu0 0.0
    %579 = vmatprep.subr.mxu0 0.0
    %580 = vmatpush2.msra.mxu0 0.0
    %581 = vmatprep.subr.mxu0 0.0
    %582 = vmatpush2.msra.mxu0 0.0
    %583 = vmatprep.subr.mxu0 0.0
    %584 = vmatpush2.msra.mxu0 0.0
    %585 = vmatprep.subr.mxu0 0.0
    %586 = vmatpush2.msra.mxu0 0.0
    %587 = vmatprep.subr.mxu0 0.0
    %588 = vmatpush2.msra.mxu0 0.0
    %589 = vmatprep.subr.mxu0 0.0
    %590 = vmatpush2.msra.mxu0 0.0
    %591 = vmatprep.subr.mxu0 0.0
    %592 = vmatpush2.msra.mxu0 0.0
    %593 = vmatprep.mubr.f32.mxu0 0.0
    %594 = vmatmul.mubr.f32.gmra.mxu0 %v527
    %v595 = vpop.f32.mrf.mxu0
    %v596 = vadd.f32 0.0, %v595
    %v597 = vpop.f32.mrf.mxu0
    %598 = vdwg.mxu0
    %v599 = vadd.f32 %v526, %v596
    %v600 = vxor.u32 %v599, 2147483648
    %v601 = vmul.f32 %v600, 1.442695
    %v602 = vpow.pop %v601
    %v603 = vadd.f32 %v602, 1.0
    %v604 = vrcp.pop %v603
    %v605 = vmul.f32 1.0, %v604
    %v606 = vtanh.pop %v599
    %v607 = vmul.f32 %v605, %v512
    %609 = vrot.lane.b32.xlu0 %v606, 64
    %v610 = vpop.permute.xlu0 %609
    %v612 = vmul.f32 %v605, %v610
    %614 = vrot.lane.b32.xlu0 %v612, 32
    %v615 = vpop.permute.xlu0 %614
    %v617 = vadd.f32 %v607, %v615
    %v618 = vtanh.pop %v617
    %620 = vrot.lane.b32.xlu0 %v618, 64
    %v621 = vpop.permute.xlu0 %620
    %v623 = vmul.f32 %v605, %v621
    %625 = vrot.lane.b32.xlu0 %v623, 32
    %v626 = vpop.permute.xlu0 %625
    %s628 = scalar_lea.vmem [#allocation3], 16
    %629 = vst.msk [vmem:[%s628] sm:$0xff] %vm316, %v626
    %s630 = scalar_lea.vmem [#allocation2], 24
    %v631 = vld [vmem:[%s630] sm:$0xff]
    %v632 = vsel %vm316, %v626, 0
    %634 = vmatprep.subr.mxu0 0.0
    %635 = vmatpush1.msra.mxu0 0.0
    %636 = vmatprep.subr.mxu0 0.0
    %637 = vmatpush1.msra.mxu0 0.0
    %638 = vmatprep.subr.mxu0 0.0
    %639 = vmatpush1.msra.mxu0 0.0
    %640 = vmatprep.subr.mxu0 0.0
    %641 = vmatpush1.msra.mxu0 0.0
    %642 = vmatprep.subr.mxu0 0.0
    %643 = vmatpush1.msra.mxu0 0.0
    %644 = vmatprep.subr.mxu0 0.0
    %645 = vmatpush1.msra.mxu0 0.0
    %646 = vmatprep.subr.mxu0 0.0
    %647 = vmatpush1.msra.mxu0 0.0
    %648 = vmatprep.subr.mxu0 0.0
    %649 = vmatpush1.msra.mxu0 0.0
    %650 = vmatprep.subr.mxu0 0.0
    %651 = vmatpush1.msra.mxu0 0.0
    %652 = vmatprep.subr.mxu0 0.0
    %653 = vmatpush1.msra.mxu0 0.0
    %654 = vmatprep.subr.mxu0 0.0
    %655 = vmatpush1.msra.mxu0 0.0
    %656 = vmatprep.subr.mxu0 0.0
    %657 = vmatpush1.msra.mxu0 0.0
    %658 = vmatprep.subr.mxu0 0.0
    %659 = vmatpush1.msra.mxu0 %v314
    %660 = vmatprep.subr.mxu0 0.0
    %661 = vmatpush1.msra.mxu0 %v313
    %662 = vmatprep.subr.mxu0 0.0
    %663 = vmatpush1.msra.mxu0 %v312
    %664 = vmatprep.subr.mxu0 0.0
    %665 = vmatpush1.msra.mxu0 %v311
    %666 = vmatprep.subr.mxu0 0.0
    %667 = vmatpush2.msra.mxu0 0.0
    %668 = vmatprep.subr.mxu0 0.0
    %669 = vmatpush2.msra.mxu0 0.0
    %670 = vmatprep.subr.mxu0 0.0
    %671 = vmatpush2.msra.mxu0 0.0
    %672 = vmatprep.subr.mxu0 0.0
    %673 = vmatpush2.msra.mxu0 0.0
    %674 = vmatprep.subr.mxu0 0.0
    %675 = vmatpush2.msra.mxu0 0.0
    %676 = vmatprep.subr.mxu0 0.0
    %677 = vmatpush2.msra.mxu0 0.0
    %678 = vmatprep.subr.mxu0 0.0
    %679 = vmatpush2.msra.mxu0 0.0
    %680 = vmatprep.subr.mxu0 0.0
    %681 = vmatpush2.msra.mxu0 0.0
    %682 = vmatprep.subr.mxu0 0.0
    %683 = vmatpush2.msra.mxu0 0.0
    %684 = vmatprep.subr.mxu0 0.0
    %685 = vmatpush2.msra.mxu0 0.0
    %686 = vmatprep.subr.mxu0 0.0
    %687 = vmatpush2.msra.mxu0 0.0
    %688 = vmatprep.subr.mxu0 0.0
    %689 = vmatpush2.msra.mxu0 0.0
    %690 = vmatprep.subr.mxu0 0.0
    %691 = vmatpush2.msra.mxu0 0.0
    %692 = vmatprep.subr.mxu0 0.0
    %693 = vmatpush2.msra.mxu0 0.0
    %694 = vmatprep.subr.mxu0 0.0
    %695 = vmatpush2.msra.mxu0 0.0
    %696 = vmatprep.subr.mxu0 0.0
    %697 = vmatpush2.msra.mxu0 0.0
    %698 = vmatprep.mubr.f32.mxu0 0.0
    %699 = vmatmul.mubr.f32.gmra.mxu0 %v632
    %v700 = vpop.f32.mrf.mxu0
    %v701 = vadd.f32 0.0, %v700
    %v702 = vpop.f32.mrf.mxu0
    %703 = vdwg.mxu0
    %v704 = vadd.f32 %v631, %v701
    %v705 = vxor.u32 %v704, 2147483648
    %v706 = vmul.f32 %v705, 1.442695
    %v707 = vpow.pop %v706
    %v708 = vadd.f32 %v707, 1.0
    %v709 = vrcp.pop %v708
    %v710 = vmul.f32 1.0, %v709
    %v711 = vtanh.pop %v704
    %v712 = vmul.f32 %v710, %v617
    %714 = vrot.lane.b32.xlu0 %v711, 64
    %v715 = vpop.permute.xlu0 %714
    %v717 = vmul.f32 %v710, %v715
    %719 = vrot.lane.b32.xlu0 %v717, 32
    %v720 = vpop.permute.xlu0 %719
    %v722 = vadd.f32 %v712, %v720
    %v723 = vtanh.pop %v722
    %725 = vrot.lane.b32.xlu0 %v723, 64
    %v726 = vpop.permute.xlu0 %725
    %v728 = vmul.f32 %v710, %v726
    %730 = vrot.lane.b32.xlu0 %v728, 32
    %v731 = vpop.permute.xlu0 %730
    %s733 = scalar_lea.vmem [#allocation3], 24
    %734 = vst.msk [vmem:[%s733] sm:$0xff] %vm316, %v731
    %s735 = scalar_lea.vmem [#allocation2], 32
    %v736 = vld [vmem:[%s735] sm:$0xff]
    %v737 = vsel %vm316, %v731, 0
    %739 = vmatprep.subr.mxu0 0.0
    %740 = vmatpush1.msra.mxu0 0.0
    %741 = vmatprep.subr.mxu0 0.0
    %742 = vmatpush1.msra.mxu0 0.0
    %743 = vmatprep.subr.mxu0 0.0
    %744 = vmatpush1.msra.mxu0 0.0
    %745 = vmatprep.subr.mxu0 0.0
    %746 = vmatpush1.msra.mxu0 0.0
    %747 = vmatprep.subr.mxu0 0.0
    %748 = vmatpush1.msra.mxu0 0.0
    %749 = vmatprep.subr.mxu0 0.0
    %750 = vmatpush1.msra.mxu0 0.0
    %751 = vmatprep.subr.mxu0 0.0
    %752 = vmatpush1.msra.mxu0 0.0
    %753 = vmatprep.subr.mxu0 0.0
    %754 = vmatpush1.msra.mxu0 0.0
    %755 = vmatprep.subr.mxu0 0.0
    %756 = vmatpush1.msra.mxu0 0.0
    %757 = vmatprep.subr.mxu0 0.0
    %758 = vmatpush1.msra.mxu0 0.0
    %759 = vmatprep.subr.mxu0 0.0
    %760 = vmatpush1.msra.mxu0 0.0
    %761 = vmatprep.subr.mxu0 0.0
    %762 = vmatpush1.msra.mxu0 0.0
    %763 = vmatprep.subr.mxu0 0.0
    %764 = vmatpush1.msra.mxu0 %v314
    %765 = vmatprep.subr.mxu0 0.0
    %766 = vmatpush1.msra.mxu0 %v313
    %767 = vmatprep.subr.mxu0 0.0
    %768 = vmatpush1.msra.mxu0 %v312
    %769 = vmatprep.subr.mxu0 0.0
    %770 = vmatpush1.msra.mxu0 %v311
    %771 = vmatprep.subr.mxu0 0.0
    %772 = vmatpush2.msra.mxu0 0.0
    %773 = vmatprep.subr.mxu0 0.0
    %774 = vmatpush2.msra.mxu0 0.0
    %775 = vmatprep.subr.mxu0 0.0
    %776 = vmatpush2.msra.mxu0 0.0
    %777 = vmatprep.subr.mxu0 0.0
    %778 = vmatpush2.msra.mxu0 0.0
    %779 = vmatprep.subr.mxu0 0.0
    %780 = vmatpush2.msra.mxu0 0.0
    %781 = vmatprep.subr.mxu0 0.0
    %782 = vmatpush2.msra.mxu0 0.0
    %783 = vmatprep.subr.mxu0 0.0
    %784 = vmatpush2.msra.mxu0 0.0
    %785 = vmatprep.subr.mxu0 0.0
    %786 = vmatpush2.msra.mxu0 0.0
    %787 = vmatprep.subr.mxu0 0.0
    %788 = vmatpush2.msra.mxu0 0.0
    %789 = vmatprep.subr.mxu0 0.0
    %790 = vmatpush2.msra.mxu0 0.0
    %791 = vmatprep.subr.mxu0 0.0
    %792 = vmatpush2.msra.mxu0 0.0
    %793 = vmatprep.subr.mxu0 0.0
    %794 = vmatpush2.msra.mxu0 0.0
    %795 = vmatprep.subr.mxu0 0.0
    %796 = vmatpush2.msra.mxu0 0.0
    %797 = vmatprep.subr.mxu0 0.0
    %798 = vmatpush2.msra.mxu0 0.0
    %799 = vmatprep.subr.mxu0 0.0
    %800 = vmatpush2.msra.mxu0 0.0
    %801 = vmatprep.subr.mxu0 0.0
    %802 = vmatpush2.msra.mxu0 0.0
    %803 = vmatprep.mubr.f32.mxu0 0.0
    %804 = vmatmul.mubr.f32.gmra.mxu0 %v737
    %v805 = vpop.f32.mrf.mxu0
    %v806 = vadd.f32 0.0, %v805
    %v807 = vpop.f32.mrf.mxu0
    %808 = vdwg.mxu0
    %v809 = vadd.f32 %v736, %v806
    %v810 = vxor.u32 %v809, 2147483648
    %v811 = vmul.f32 %v810, 1.442695
    %v812 = vpow.pop %v811
    %v813 = vadd.f32 %v812, 1.0
    %v814 = vrcp.pop %v813
    %v815 = vmul.f32 1.0, %v814
    %v816 = vtanh.pop %v809
    %v817 = vmul.f32 %v815, %v722
    %819 = vrot.lane.b32.xlu0 %v816, 64
    %v820 = vpop.permute.xlu0 %819
    %v822 = vmul.f32 %v815, %v820
    %824 = vrot.lane.b32.xlu0 %v822, 32
    %v825 = vpop.permute.xlu0 %824
    %v827 = vadd.f32 %v817, %v825
    %v828 = vtanh.pop %v827
    %830 = vrot.lane.b32.xlu0 %v828, 64
    %v831 = vpop.permute.xlu0 %830
    %v833 = vmul.f32 %v815, %v831
    %835 = vrot.lane.b32.xlu0 %v833, 32
    %v836 = vpop.permute.xlu0 %835
    %s838 = scalar_lea.vmem [#allocation3], 32
    %839 = vst.msk [vmem:[%s838] sm:$0xff] %vm316, %v836
    %s840 = scalar_lea.vmem [#allocation2], 40
    %v841 = vld [vmem:[%s840] sm:$0xff]
    %v842 = vsel %vm316, %v836, 0
    %844 = vmatprep.subr.mxu0 0.0
    %845 = vmatpush1.msra.mxu0 0.0
    %846 = vmatprep.subr.mxu0 0.0
    %847 = vmatpush1.msra.mxu0 0.0
    %848 = vmatprep.subr.mxu0 0.0
    %849 = vmatpush1.msra.mxu0 0.0
    %850 = vmatprep.subr.mxu0 0.0
    %851 = vmatpush1.msra.mxu0 0.0
    %852 = vmatprep.subr.mxu0 0.0
    %853 = vmatpush1.msra.mxu0 0.0
    %854 = vmatprep.subr.mxu0 0.0
    %855 = vmatpush1.msra.mxu0 0.0
    %856 = vmatprep.subr.mxu0 0.0
    %857 = vmatpush1.msra.mxu0 0.0
    %858 = vmatprep.subr.mxu0 0.0
    %859 = vmatpush1.msra.mxu0 0.0
    %860 = vmatprep.subr.mxu0 0.0
    %861 = vmatpush1.msra.mxu0 0.0
    %862 = vmatprep.subr.mxu0 0.0
    %863 = vmatpush1.msra.mxu0 0.0
    %864 = vmatprep.subr.mxu0 0.0
    %865 = vmatpush1.msra.mxu0 0.0
    %866 = vmatprep.subr.mxu0 0.0
    %867 = vmatpush1.msra.mxu0 0.0
    %868 = vmatprep.subr.mxu0 0.0
    %869 = vmatpush1.msra.mxu0 %v314
    %870 = vmatprep.subr.mxu0 0.0
    %871 = vmatpush1.msra.mxu0 %v313
    %872 = vmatprep.subr.mxu0 0.0
    %873 = vmatpush1.msra.mxu0 %v312
    %874 = vmatprep.subr.mxu0 0.0
    %875 = vmatpush1.msra.mxu0 %v311
    %876 = vmatprep.subr.mxu0 0.0
    %877 = vmatpush2.msra.mxu0 0.0
    %878 = vmatprep.subr.mxu0 0.0
    %879 = vmatpush2.msra.mxu0 0.0
    %880 = vmatprep.subr.mxu0 0.0
    %881 = vmatpush2.msra.mxu0 0.0
    %882 = vmatprep.subr.mxu0 0.0
    %883 = vmatpush2.msra.mxu0 0.0
    %884 = vmatprep.subr.mxu0 0.0
    %885 = vmatpush2.msra.mxu0 0.0
    %886 = vmatprep.subr.mxu0 0.0
    %887 = vmatpush2.msra.mxu0 0.0
    %888 = vmatprep.subr.mxu0 0.0
    %889 = vmatpush2.msra.mxu0 0.0
    %890 = vmatprep.subr.mxu0 0.0
    %891 = vmatpush2.msra.mxu0 0.0
    %892 = vmatprep.subr.mxu0 0.0
    %893 = vmatpush2.msra.mxu0 0.0
    %894 = vmatprep.subr.mxu0 0.0
    %895 = vmatpush2.msra.mxu0 0.0
    %896 = vmatprep.subr.mxu0 0.0
    %897 = vmatpush2.msra.mxu0 0.0
    %898 = vmatprep.subr.mxu0 0.0
    %899 = vmatpush2.msra.mxu0 0.0
    %900 = vmatprep.subr.mxu0 0.0
    %901 = vmatpush2.msra.mxu0 0.0
    %902 = vmatprep.subr.mxu0 0.0
    %903 = vmatpush2.msra.mxu0 0.0
    %904 = vmatprep.subr.mxu0 0.0
    %905 = vmatpush2.msra.mxu0 0.0
    %906 = vmatprep.subr.mxu0 0.0
    %907 = vmatpush2.msra.mxu0 0.0
    %908 = vmatprep.mubr.f32.mxu0 0.0
    %909 = vmatmul.mubr.f32.gmra.mxu0 %v842
    %v910 = vpop.f32.mrf.mxu0
    %v911 = vadd.f32 0.0, %v910
    %v912 = vpop.f32.mrf.mxu0
    %913 = vdwg.mxu0
    %v914 = vadd.f32 %v841, %v911
    %v915 = vxor.u32 %v914, 2147483648
    %v916 = vmul.f32 %v915, 1.442695
    %v917 = vpow.pop %v916
    %v918 = vadd.f32 %v917, 1.0
    %v919 = vrcp.pop %v918
    %v920 = vmul.f32 1.0, %v919
    %v921 = vtanh.pop %v914
    %v922 = vmul.f32 %v920, %v827
    %924 = vrot.lane.b32.xlu0 %v921, 64
    %v925 = vpop.permute.xlu0 %924
    %v927 = vmul.f32 %v920, %v925
    %929 = vrot.lane.b32.xlu0 %v927, 32
    %v930 = vpop.permute.xlu0 %929
    %v932 = vadd.f32 %v922, %v930
    %v933 = vtanh.pop %v932
    %935 = vrot.lane.b32.xlu0 %v933, 64
    %v936 = vpop.permute.xlu0 %935
    %v938 = vmul.f32 %v920, %v936
    %940 = vrot.lane.b32.xlu0 %v938, 32
    %v941 = vpop.permute.xlu0 %940
    %s943 = scalar_lea.vmem [#allocation3], 40
    %944 = vst.msk [vmem:[%s943] sm:$0xff] %vm316, %v941
    %s945 = scalar_lea.vmem [#allocation2], 48
    %v946 = vld [vmem:[%s945] sm:$0xff]
    %v947 = vsel %vm316, %v941, 0
    %949 = vmatprep.subr.mxu0 0.0
    %950 = vmatpush1.msra.mxu0 0.0
    %951 = vmatprep.subr.mxu0 0.0
    %952 = vmatpush1.msra.mxu0 0.0
    %953 = vmatprep.subr.mxu0 0.0
    %954 = vmatpush1.msra.mxu0 0.0
    %955 = vmatprep.subr.mxu0 0.0
    %956 = vmatpush1.msra.mxu0 0.0
    %957 = vmatprep.subr.mxu0 0.0
    %958 = vmatpush1.msra.mxu0 0.0
    %959 = vmatprep.subr.mxu0 0.0
    %960 = vmatpush1.msra.mxu0 0.0
    %961 = vmatprep.subr.mxu0 0.0
    %962 = vmatpush1.msra.mxu0 0.0
    %963 = vmatprep.subr.mxu0 0.0
    %964 = vmatpush1.msra.mxu0 0.0
    %965 = vmatprep.subr.mxu0 0.0
    %966 = vmatpush1.msra.mxu0 0.0
    %967 = vmatprep.subr.mxu0 0.0
    %968 = vmatpush1.msra.mxu0 0.0
    %969 = vmatprep.subr.mxu0 0.0
    %970 = vmatpush1.msra.mxu0 0.0
    %971 = vmatprep.subr.mxu0 0.0
    %972 = vmatpush1.msra.mxu0 0.0
    %973 = vmatprep.subr.mxu0 0.0
    %974 = vmatpush1.msra.mxu0 %v314
    %975 = vmatprep.subr.mxu0 0.0
    %976 = vmatpush1.msra.mxu0 %v313
    %977 = vmatprep.subr.mxu0 0.0
    %978 = vmatpush1.msra.mxu0 %v312
    %979 = vmatprep.subr.mxu0 0.0
    %980 = vmatpush1.msra.mxu0 %v311
    %981 = vmatprep.subr.mxu0 0.0
    %982 = vmatpush2.msra.mxu0 0.0
    %983 = vmatprep.subr.mxu0 0.0
    %984 = vmatpush2.msra.mxu0 0.0
    %985 = vmatprep.subr.mxu0 0.0
    %986 = vmatpush2.msra.mxu0 0.0
    %987 = vmatprep.subr.mxu0 0.0
    %988 = vmatpush2.msra.mxu0 0.0
    %989 = vmatprep.subr.mxu0 0.0
    %990 = vmatpush2.msra.mxu0 0.0
    %991 = vmatprep.subr.mxu0 0.0
    %992 = vmatpush2.msra.mxu0 0.0
    %993 = vmatprep.subr.mxu0 0.0
    %994 = vmatpush2.msra.mxu0 0.0
    %995 = vmatprep.subr.mxu0 0.0
    %996 = vmatpush2.msra.mxu0 0.0
    %997 = vmatprep.subr.mxu0 0.0
    %998 = vmatpush2.msra.mxu0 0.0
    %999 = vmatprep.subr.mxu0 0.0
    %1000 = vmatpush2.msra.mxu0 0.0
    %1001 = vmatprep.subr.mxu0 0.0
    %1002 = vmatpush2.msra.mxu0 0.0
    %1003 = vmatprep.subr.mxu0 0.0
    %1004 = vmatpush2.msra.mxu0 0.0
    %1005 = vmatprep.subr.mxu0 0.0
    %1006 = vmatpush2.msra.mxu0 0.0
    %1007 = vmatprep.subr.mxu0 0.0
    %1008 = vmatpush2.msra.mxu0 0.0
    %1009 = vmatprep.subr.mxu0 0.0
    %1010 = vmatpush2.msra.mxu0 0.0
    %1011 = vmatprep.subr.mxu0 0.0
    %1012 = vmatpush2.msra.mxu0 0.0
    %1013 = vmatprep.mubr.f32.mxu0 0.0
    %1014 = vmatmul.mubr.f32.gmra.mxu0 %v947
    %v1015 = vpop.f32.mrf.mxu0
    %v1016 = vadd.f32 0.0, %v1015
    %v1017 = vpop.f32.mrf.mxu0
    %1018 = vdwg.mxu0
    %v1019 = vadd.f32 %v946, %v1016
    %v1020 = vxor.u32 %v1019, 2147483648
    %v1021 = vmul.f32 %v1020, 1.442695
    %v1022 = vpow.pop %v1021
    %v1023 = vadd.f32 %v1022, 1.0
    %v1024 = vrcp.pop %v1023
    %v1025 = vmul.f32 1.0, %v1024
    %v1026 = vtanh.pop %v1019
    %v1027 = vmul.f32 %v1025, %v932
    %1029 = vrot.lane.b32.xlu0 %v1026, 64
    %v1030 = vpop.permute.xlu0 %1029
    %v1032 = vmul.f32 %v1025, %v1030
    %1034 = vrot.lane.b32.xlu0 %v1032, 32
    %v1035 = vpop.permute.xlu0 %1034
    %v1037 = vadd.f32 %v1027, %v1035
    %v1038 = vtanh.pop %v1037
    %1040 = vrot.lane.b32.xlu0 %v1038, 64
    %v1041 = vpop.permute.xlu0 %1040
    %v1043 = vmul.f32 %v1025, %v1041
    %1045 = vrot.lane.b32.xlu0 %v1043, 32
    %v1046 = vpop.permute.xlu0 %1045
    %s1048 = scalar_lea.vmem [#allocation3], 48
    %1049 = vst.msk [vmem:[%s1048] sm:$0xff] %vm316, %v1046
    %s1050 = scalar_lea.vmem [#allocation2], 56
    %v1051 = vld [vmem:[%s1050] sm:$0xff]
    %v1052 = vsel %vm316, %v1046, 0
    %1054 = vmatprep.subr.mxu0 0.0
    %1055 = vmatpush1.msra.mxu0 0.0
    %1056 = vmatprep.subr.mxu0 0.0
    %1057 = vmatpush1.msra.mxu0 0.0
    %1058 = vmatprep.subr.mxu0 0.0
    %1059 = vmatpush1.msra.mxu0 0.0
    %1060 = vmatprep.subr.mxu0 0.0
    %1061 = vmatpush1.msra.mxu0 0.0
    %1062 = vmatprep.subr.mxu0 0.0
    %1063 = vmatpush1.msra.mxu0 0.0
    %1064 = vmatprep.subr.mxu0 0.0
    %1065 = vmatpush1.msra.mxu0 0.0
    %1066 = vmatprep.subr.mxu0 0.0
    %1067 = vmatpush1.msra.mxu0 0.0
    %1068 = vmatprep.subr.mxu0 0.0
    %1069 = vmatpush1.msra.mxu0 0.0
    %1070 = vmatprep.subr.mxu0 0.0
    %1071 = vmatpush1.msra.mxu0 0.0
    %1072 = vmatprep.subr.mxu0 0.0
    %1073 = vmatpush1.msra.mxu0 0.0
    %1074 = vmatprep.subr.mxu0 0.0
    %1075 = vmatpush1.msra.mxu0 0.0
    %1076 = vmatprep.subr.mxu0 0.0
    %1077 = vmatpush1.msra.mxu0 0.0
    %1078 = vmatprep.subr.mxu0 0.0
    %1079 = vmatpush1.msra.mxu0 %v314
    %1080 = vmatprep.subr.mxu0 0.0
    %1081 = vmatpush1.msra.mxu0 %v313
    %1082 = vmatprep.subr.mxu0 0.0
    %1083 = vmatpush1.msra.mxu0 %v312
    %1084 = vmatprep.subr.mxu0 0.0
    %1085 = vmatpush1.msra.mxu0 %v311
    %1086 = vmatprep.subr.mxu0 0.0
    %1087 = vmatpush2.msra.mxu0 0.0
    %1088 = vmatprep.subr.mxu0 0.0
    %1089 = vmatpush2.msra.mxu0 0.0
    %1090 = vmatprep.subr.mxu0 0.0
    %1091 = vmatpush2.msra.mxu0 0.0
    %1092 = vmatprep.subr.mxu0 0.0
    %1093 = vmatpush2.msra.mxu0 0.0
    %1094 = vmatprep.subr.mxu0 0.0
    %1095 = vmatpush2.msra.mxu0 0.0
    %1096 = vmatprep.subr.mxu0 0.0
    %1097 = vmatpush2.msra.mxu0 0.0
    %1098 = vmatprep.subr.mxu0 0.0
    %1099 = vmatpush2.msra.mxu0 0.0
    %1100 = vmatprep.subr.mxu0 0.0
    %1101 = vmatpush2.msra.mxu0 0.0
    %1102 = vmatprep.subr.mxu0 0.0
    %1103 = vmatpush2.msra.mxu0 0.0
    %1104 = vmatprep.subr.mxu0 0.0
    %1105 = vmatpush2.msra.mxu0 0.0
    %1106 = vmatprep.subr.mxu0 0.0
    %1107 = vmatpush2.msra.mxu0 0.0
    %1108 = vmatprep.subr.mxu0 0.0
    %1109 = vmatpush2.msra.mxu0 0.0
    %1110 = vmatprep.subr.mxu0 0.0
    %1111 = vmatpush2.msra.mxu0 0.0
    %1112 = vmatprep.subr.mxu0 0.0
    %1113 = vmatpush2.msra.mxu0 0.0
    %1114 = vmatprep.subr.mxu0 0.0
    %1115 = vmatpush2.msra.mxu0 0.0
    %1116 = vmatprep.subr.mxu0 0.0
    %1117 = vmatpush2.msra.mxu0 0.0
    %1118 = vmatprep.mubr.f32.mxu0 0.0
    %1119 = vmatmul.mubr.f32.gmra.mxu0 %v1052
    %v1120 = vpop.f32.mrf.mxu0
    %v1121 = vadd.f32 0.0, %v1120
    %v1122 = vpop.f32.mrf.mxu0
    %1123 = vdwg.mxu0
    %v1124 = vadd.f32 %v1051, %v1121
    %v1125 = vxor.u32 %v1124, 2147483648
    %v1126 = vmul.f32 %v1125, 1.442695
    %v1127 = vpow.pop %v1126
    %v1128 = vadd.f32 %v1127, 1.0
    %v1129 = vrcp.pop %v1128
    %v1130 = vmul.f32 1.0, %v1129
    %v1131 = vtanh.pop %v1124
    %v1132 = vmul.f32 %v1130, %v1037
    %1134 = vrot.lane.b32.xlu0 %v1131, 64
    %v1135 = vpop.permute.xlu0 %1134
    %v1137 = vmul.f32 %v1130, %v1135
    %1139 = vrot.lane.b32.xlu0 %v1137, 32
    %v1140 = vpop.permute.xlu0 %1139
    %v1142 = vadd.f32 %v1132, %v1140
    %v1143 = vtanh.pop %v1142
    %1145 = vrot.lane.b32.xlu0 %v1143, 64
    %v1146 = vpop.permute.xlu0 %1145
    %v1148 = vmul.f32 %v1130, %v1146
    %1150 = vrot.lane.b32.xlu0 %v1148, 32
    %v1151 = vpop.permute.xlu0 %1150
    %s1153 = scalar_lea.vmem [#allocation3], 56
    %1154 = vst.msk [vmem:[%s1153] sm:$0xff] %vm316, %v1151
    %v1155 = vld [vmem:[#allocation3] sm:$0xff]
    %v1156 = vld [vmem:[#allocation3 + $0x8] sm:$0xff]
    %v1157 = vld [vmem:[#allocation3 + $0x10] sm:$0xff]
    %v1158 = vld [vmem:[#allocation3 + $0x18] sm:$0xff]
    %v1159 = vld [vmem:[#allocation3 + $0x20] sm:$0xff]
    %v1160 = vld [vmem:[#allocation3 + $0x28] sm:$0xff]
    %v1161 = vld [vmem:[#allocation3 + $0x30] sm:$0xff]
    %v1162 = vld [vmem:[#allocation3 + $0x38] sm:$0xff]
    %v1163 = vld [vmem:[%s4] sm:$0xff]
    %v1164 = vld [vmem:[%s4 + $0x8] sm:$0xff]
    %v1165 = vld [vmem:[%s4 + $0x10] sm:$0xff]
    %v1166 = vld [vmem:[%s4 + $0x18] sm:$0xff]
    %v1167 = vld [vmem:[%s6] sm:$0x1]
    %v1169 = vlaneseq
    %v1170 = vshrl.u32 %v1169, 7
    %v1171 = vsub.s32 0, %v1170
    %v1172 = vrot.slane %v1167, %v1171
    %v1175 = vsel %vm316, %v1155, 0
    %v1178 = vsel %vm316, %v1156, 0
    %v1181 = vsel %vm316, %v1157, 0
    %v1184 = vsel %vm316, %v1158, 0
    %v1187 = vsel %vm316, %v1159, 0
    %v1190 = vsel %vm316, %v1160, 0
    %v1193 = vsel %vm316, %v1161, 0
    %v1196 = vsel %vm316, %v1162, 0
    %1198 = vmatprep.subr.mxu0 0.0
    %1199 = vmatpush1.msra.mxu0 0.0
    %1200 = vmatprep.subr.mxu0 0.0
    %1201 = vmatpush1.msra.mxu0 0.0
    %1202 = vmatprep.subr.mxu0 0.0
    %1203 = vmatpush1.msra.mxu0 0.0
    %1204 = vmatprep.subr.mxu0 0.0
    %1205 = vmatpush1.msra.mxu0 0.0
    %1206 = vmatprep.subr.mxu0 0.0
    %1207 = vmatpush1.msra.mxu0 0.0
    %1208 = vmatprep.subr.mxu0 0.0
    %1209 = vmatpush1.msra.mxu0 0.0
    %1210 = vmatprep.subr.mxu0 0.0
    %1211 = vmatpush1.msra.mxu0 0.0
    %1212 = vmatprep.subr.mxu0 0.0
    %1213 = vmatpush1.msra.mxu0 0.0
    %1214 = vmatprep.subr.mxu0 0.0
    %1215 = vmatpush1.msra.mxu0 0.0
    %1216 = vmatprep.subr.mxu0 0.0
    %1217 = vmatpush1.msra.mxu0 0.0
    %1218 = vmatprep.subr.mxu0 0.0
    %1219 = vmatpush1.msra.mxu0 0.0
    %1220 = vmatprep.subr.mxu0 0.0
    %1221 = vmatpush1.msra.mxu0 0.0
    %1222 = vmatprep.subr.mxu0 0.0
    %1223 = vmatpush1.msra.mxu0 %v1166
    %1224 = vmatprep.subr.mxu0 0.0
    %1225 = vmatpush1.msra.mxu0 %v1165
    %1226 = vmatprep.subr.mxu0 0.0
    %1227 = vmatpush1.msra.mxu0 %v1164
    %1228 = vmatprep.subr.mxu0 0.0
    %1229 = vmatpush1.msra.mxu0 %v1163
    %1230 = vmatprep.subr.mxu0 0.0
    %1231 = vmatpush2.msra.mxu0 0.0
    %1232 = vmatprep.subr.mxu0 0.0
    %1233 = vmatpush2.msra.mxu0 0.0
    %1234 = vmatprep.subr.mxu0 0.0
    %1235 = vmatpush2.msra.mxu0 0.0
    %1236 = vmatprep.subr.mxu0 0.0
    %1237 = vmatpush2.msra.mxu0 0.0
    %1238 = vmatprep.subr.mxu0 0.0
    %1239 = vmatpush2.msra.mxu0 0.0
    %1240 = vmatprep.subr.mxu0 0.0
    %1241 = vmatpush2.msra.mxu0 0.0
    %1242 = vmatprep.subr.mxu0 0.0
    %1243 = vmatpush2.msra.mxu0 0.0
    %1244 = vmatprep.subr.mxu0 0.0
    %1245 = vmatpush2.msra.mxu0 0.0
    %1246 = vmatprep.subr.mxu0 0.0
    %1247 = vmatpush2.msra.mxu0 0.0
    %1248 = vmatprep.subr.mxu0 0.0
    %1249 = vmatpush2.msra.mxu0 0.0
    %1250 = vmatprep.subr.mxu0 0.0
    %1251 = vmatpush2.msra.mxu0 0.0
    %1252 = vmatprep.subr.mxu0 0.0
    %1253 = vmatpush2.msra.mxu0 0.0
    %1254 = vmatprep.subr.mxu0 0.0
    %1255 = vmatpush2.msra.mxu0 0.0
    %1256 = vmatprep.subr.mxu0 0.0
    %1257 = vmatpush2.msra.mxu0 0.0
    %1258 = vmatprep.subr.mxu0 0.0
    %1259 = vmatpush2.msra.mxu0 0.0
    %1260 = vmatprep.subr.mxu0 0.0
    %1261 = vmatpush2.msra.mxu0 0.0
    %1262 = vmatprep.mubr.f32.mxu0 0.0
    %1263 = vmatmul.mubr.f32.gmra.mxu0 %v1175
    %v1264 = vpop.f32.mrf.mxu0
    %v1265 = vadd.f32 %v1172, %v1264
    %v1266 = vpop.f32.mrf.mxu0
    %1267 = vmatprep.mubr.f32.mxu0 0.0
    %1268 = vmatmul.mubr.f32.gmra.mxu0 %v1178
    %v1269 = vpop.f32.mrf.mxu0
    %v1270 = vadd.f32 %v1172, %v1269
    %v1271 = vpop.f32.mrf.mxu0
    %1272 = vmatprep.mubr.f32.mxu0 0.0
    %1273 = vmatmul.mubr.f32.gmra.mxu0 %v1181
    %v1274 = vpop.f32.mrf.mxu0
    %v1275 = vadd.f32 %v1172, %v1274
    %v1276 = vpop.f32.mrf.mxu0
    %1277 = vmatprep.mubr.f32.mxu0 0.0
    %1278 = vmatmul.mubr.f32.gmra.mxu0 %v1184
    %v1279 = vpop.f32.mrf.mxu0
    %v1280 = vadd.f32 %v1172, %v1279
    %v1281 = vpop.f32.mrf.mxu0
    %1282 = vmatprep.mubr.f32.mxu0 0.0
    %1283 = vmatmul.mubr.f32.gmra.mxu0 %v1187
    %v1284 = vpop.f32.mrf.mxu0
    %v1285 = vadd.f32 %v1172, %v1284
    %v1286 = vpop.f32.mrf.mxu0
    %1287 = vmatprep.mubr.f32.mxu0 0.0
    %1288 = vmatmul.mubr.f32.gmra.mxu0 %v1190
    %v1289 = vpop.f32.mrf.mxu0
    %v1290 = vadd.f32 %v1172, %v1289
    %v1291 = vpop.f32.mrf.mxu0
    %1292 = vmatprep.mubr.f32.mxu0 0.0
    %1293 = vmatmul.mubr.f32.gmra.mxu0 %v1193
    %v1294 = vpop.f32.mrf.mxu0
    %v1295 = vadd.f32 %v1172, %v1294
    %v1296 = vpop.f32.mrf.mxu0
    %1297 = vmatprep.mubr.f32.mxu0 0.0
    %1298 = vmatmul.mubr.f32.gmra.mxu0 %v1196
    %v1299 = vpop.f32.mrf.mxu0
    %v1300 = vadd.f32 %v1172, %v1299
    %v1301 = vpop.f32.mrf.mxu0
    %1302 = vdwg.mxu0
    %1303 = vst [vmem:[#allocation2] sm:$0xff] %v1265
    %1304 = vst [vmem:[#allocation2 + $0x8] sm:$0xff] %v1270
    %1305 = vst [vmem:[#allocation2 + $0x10] sm:$0xff] %v1275
    %1306 = vst [vmem:[#allocation2 + $0x18] sm:$0xff] %v1280
    %1307 = vst [vmem:[#allocation2 + $0x20] sm:$0xff] %v1285
    %1308 = vst [vmem:[#allocation2 + $0x28] sm:$0xff] %v1290
    %1309 = vst [vmem:[#allocation2 + $0x30] sm:$0xff] %v1295
    %1310 = vst [vmem:[#allocation2 + $0x38] sm:$0xff] %v1300
    %v1311 = vld [vmem:[#allocation10] sm:$0xff]
    %v1312 = vld [vmem:[#allocation10 + $0x8] sm:$0xff]
    %v1313 = vld [vmem:[#allocation10 + $0x10] sm:$0xff]
    %v1314 = vld [vmem:[#allocation10 + $0x18] sm:$0xff]
    %v1315 = vld [vmem:[#allocation2] sm:$0xff]
    %1316 = vmatprep.subr.mxu0 0.0
    %1317 = vmatpush1.msra.mxu0 0.0
    %1318 = vmatprep.subr.mxu0 0.0
    %1319 = vmatpush1.msra.mxu0 0.0
    %1320 = vmatprep.subr.mxu0 0.0
    %1321 = vmatpush1.msra.mxu0 0.0
    %1322 = vmatprep.subr.mxu0 0.0
    %1323 = vmatpush1.msra.mxu0 0.0
    %1324 = vmatprep.subr.mxu0 0.0
    %1325 = vmatpush1.msra.mxu0 0.0
    %1326 = vmatprep.subr.mxu0 0.0
    %1327 = vmatpush1.msra.mxu0 0.0
    %1328 = vmatprep.subr.mxu0 0.0
    %1329 = vmatpush1.msra.mxu0 0.0
    %1330 = vmatprep.subr.mxu0 0.0
    %1331 = vmatpush1.msra.mxu0 0.0
    %1332 = vmatprep.subr.mxu0 0.0
    %1333 = vmatpush1.msra.mxu0 0.0
    %1334 = vmatprep.subr.mxu0 0.0
    %1335 = vmatpush1.msra.mxu0 0.0
    %1336 = vmatprep.subr.mxu0 0.0
    %1337 = vmatpush1.msra.mxu0 0.0
    %1338 = vmatprep.subr.mxu0 0.0
    %1339 = vmatpush1.msra.mxu0 0.0
    %1340 = vmatprep.subr.mxu0 0.0
    %1341 = vmatpush1.msra.mxu0 %v1314
    %1342 = vmatprep.subr.mxu0 0.0
    %1343 = vmatpush1.msra.mxu0 %v1313
    %1344 = vmatprep.subr.mxu0 0.0
    %1345 = vmatpush1.msra.mxu0 %v1312
    %1346 = vmatprep.subr.mxu0 0.0
    %1347 = vmatpush1.msra.mxu0 %v1311
    %1348 = vmatprep.subr.mxu0 0.0
    %1349 = vmatpush2.msra.mxu0 0.0
    %1350 = vmatprep.subr.mxu0 0.0
    %1351 = vmatpush2.msra.mxu0 0.0
    %1352 = vmatprep.subr.mxu0 0.0
    %1353 = vmatpush2.msra.mxu0 0.0
    %1354 = vmatprep.subr.mxu0 0.0
    %1355 = vmatpush2.msra.mxu0 0.0
    %1356 = vmatprep.subr.mxu0 0.0
    %1357 = vmatpush2.msra.mxu0 0.0
    %1358 = vmatprep.subr.mxu0 0.0
    %1359 = vmatpush2.msra.mxu0 0.0
    %1360 = vmatprep.subr.mxu0 0.0
    %1361 = vmatpush2.msra.mxu0 0.0
    %1362 = vmatprep.subr.mxu0 0.0
    %1363 = vmatpush2.msra.mxu0 0.0
    %1364 = vmatprep.subr.mxu0 0.0
    %1365 = vmatpush2.msra.mxu0 0.0
    %1366 = vmatprep.subr.mxu0 0.0
    %1367 = vmatpush2.msra.mxu0 0.0
    %1368 = vmatprep.subr.mxu0 0.0
    %1369 = vmatpush2.msra.mxu0 0.0
    %1370 = vmatprep.subr.mxu0 0.0
    %1371 = vmatpush2.msra.mxu0 0.0
    %1372 = vmatprep.subr.mxu0 0.0
    %1373 = vmatpush2.msra.mxu0 0.0
    %1374 = vmatprep.subr.mxu0 0.0
    %1375 = vmatpush2.msra.mxu0 0.0
    %1376 = vmatprep.subr.mxu0 0.0
    %1377 = vmatpush2.msra.mxu0 0.0
    %1378 = vmatprep.subr.mxu0 0.0
    %1379 = vmatpush2.msra.mxu0 0.0
    %1380 = vmatprep.mubr.f32.mxu0 0.0
    %1381 = vmatmul.mubr.f32.gmra.mxu0 %v318
    %v1382 = vpop.f32.mrf.mxu0
    %v1383 = vadd.f32 0.0, %v1382
    %v1384 = vpop.f32.mrf.mxu0
    %1385 = vdwg.mxu0
    %v1386 = vadd.f32 %v1315, %v1383
    %v1387 = vxor.u32 %v1386, 2147483648
    %v1388 = vmul.f32 %v1387, 1.442695
    %v1389 = vpow.pop %v1388
    %v1390 = vadd.f32 %v1389, 1.0
    %v1391 = vrcp.pop %v1390
    %v1392 = vmul.f32 1.0, %v1391
    %v1393 = vtanh.pop %v1386
    %v1394 = vmul.f32 %v1392, 0.0
    %1396 = vrot.lane.b32.xlu0 %v1393, 64
    %v1397 = vpop.permute.xlu0 %1396
    %v1399 = vmul.f32 %v1392, %v1397
    %1401 = vrot.lane.b32.xlu0 %v1399, 32
    %v1402 = vpop.permute.xlu0 %1401
    %v1404 = vadd.f32 %v1394, %v1402
    %v1405 = vtanh.pop %v1404
    %1407 = vrot.lane.b32.xlu0 %v1405, 64
    %v1408 = vpop.permute.xlu0 %1407
    %v1410 = vmul.f32 %v1392, %v1408
    %1412 = vrot.lane.b32.xlu0 %v1410, 32
    %v1413 = vpop.permute.xlu0 %1412
    %1415 = vst.msk [vmem:[#allocation4] sm:$0xff] %vm316, %v1413
    %v1416 = vld [vmem:[%s420] sm:$0xff]
    %v1417 = vsel %vm316, %v1413, 0
    %1419 = vmatprep.subr.mxu0 0.0
    %1420 = vmatpush1.msra.mxu0 0.0
    %1421 = vmatprep.subr.mxu0 0.0
    %1422 = vmatpush1.msra.mxu0 0.0
    %1423 = vmatprep.subr.mxu0 0.0
    %1424 = vmatpush1.msra.mxu0 0.0
    %1425 = vmatprep.subr.mxu0 0.0
    %1426 = vmatpush1.msra.mxu0 0.0
    %1427 = vmatprep.subr.mxu0 0.0
    %1428 = vmatpush1.msra.mxu0 0.0
    %1429 = vmatprep.subr.mxu0 0.0
    %1430 = vmatpush1.msra.mxu0 0.0
    %1431 = vmatprep.subr.mxu0 0.0
    %1432 = vmatpush1.msra.mxu0 0.0
    %1433 = vmatprep.subr.mxu0 0.0
    %1434 = vmatpush1.msra.mxu0 0.0
    %1435 = vmatprep.subr.mxu0 0.0
    %1436 = vmatpush1.msra.mxu0 0.0
    %1437 = vmatprep.subr.mxu0 0.0
    %1438 = vmatpush1.msra.mxu0 0.0
    %1439 = vmatprep.subr.mxu0 0.0
    %1440 = vmatpush1.msra.mxu0 0.0
    %1441 = vmatprep.subr.mxu0 0.0
    %1442 = vmatpush1.msra.mxu0 0.0
    %1443 = vmatprep.subr.mxu0 0.0
    %1444 = vmatpush1.msra.mxu0 %v1314
    %1445 = vmatprep.subr.mxu0 0.0
    %1446 = vmatpush1.msra.mxu0 %v1313
    %1447 = vmatprep.subr.mxu0 0.0
    %1448 = vmatpush1.msra.mxu0 %v1312
    %1449 = vmatprep.subr.mxu0 0.0
    %1450 = vmatpush1.msra.mxu0 %v1311
    %1451 = vmatprep.subr.mxu0 0.0
    %1452 = vmatpush2.msra.mxu0 0.0
    %1453 = vmatprep.subr.mxu0 0.0
    %1454 = vmatpush2.msra.mxu0 0.0
    %1455 = vmatprep.subr.mxu0 0.0
    %1456 = vmatpush2.msra.mxu0 0.0
    %1457 = vmatprep.subr.mxu0 0.0
    %1458 = vmatpush2.msra.mxu0 0.0
    %1459 = vmatprep.subr.mxu0 0.0
    %1460 = vmatpush2.msra.mxu0 0.0
    %1461 = vmatprep.subr.mxu0 0.0
    %1462 = vmatpush2.msra.mxu0 0.0
    %1463 = vmatprep.subr.mxu0 0.0
    %1464 = vmatpush2.msra.mxu0 0.0
    %1465 = vmatprep.subr.mxu0 0.0
    %1466 = vmatpush2.msra.mxu0 0.0
    %1467 = vmatprep.subr.mxu0 0.0
    %1468 = vmatpush2.msra.mxu0 0.0
    %1469 = vmatprep.subr.mxu0 0.0
    %1470 = vmatpush2.msra.mxu0 0.0
    %1471 = vmatprep.subr.mxu0 0.0
    %1472 = vmatpush2.msra.mxu0 0.0
    %1473 = vmatprep.subr.mxu0 0.0
    %1474 = vmatpush2.msra.mxu0 0.0
    %1475 = vmatprep.subr.mxu0 0.0
    %1476 = vmatpush2.msra.mxu0 0.0
    %1477 = vmatprep.subr.mxu0 0.0
    %1478 = vmatpush2.msra.mxu0 0.0
    %1479 = vmatprep.subr.mxu0 0.0
    %1480 = vmatpush2.msra.mxu0 0.0
    %1481 = vmatprep.subr.mxu0 0.0
    %1482 = vmatpush2.msra.mxu0 0.0
    %1483 = vmatprep.mubr.f32.mxu0 0.0
    %1484 = vmatmul.mubr.f32.gmra.mxu0 %v1417
    %v1485 = vpop.f32.mrf.mxu0
    %v1486 = vadd.f32 0.0, %v1485
    %v1487 = vpop.f32.mrf.mxu0
    %1488 = vdwg.mxu0
    %v1489 = vadd.f32 %v1416, %v1486
    %v1490 = vxor.u32 %v1489, 2147483648
    %v1491 = vmul.f32 %v1490, 1.442695
    %v1492 = vpow.pop %v1491
    %v1493 = vadd.f32 %v1492, 1.0
    %v1494 = vrcp.pop %v1493
    %v1495 = vmul.f32 1.0, %v1494
    %v1496 = vtanh.pop %v1489
    %v1497 = vmul.f32 %v1495, %v1404
    %1499 = vrot.lane.b32.xlu0 %v1496, 64
    %v1500 = vpop.permute.xlu0 %1499
    %v1502 = vmul.f32 %v1495, %v1500
    %1504 = vrot.lane.b32.xlu0 %v1502, 32
    %v1505 = vpop.permute.xlu0 %1504
    %v1507 = vadd.f32 %v1497, %v1505
    %v1508 = vtanh.pop %v1507
    %1510 = vrot.lane.b32.xlu0 %v1508, 64
    %v1511 = vpop.permute.xlu0 %1510
    %v1513 = vmul.f32 %v1495, %v1511
    %1515 = vrot.lane.b32.xlu0 %v1513, 32
    %v1516 = vpop.permute.xlu0 %1515
    %s1518 = scalar_lea.vmem [#allocation4], 8
    %1519 = vst.msk [vmem:[%s1518] sm:$0xff] %vm316, %v1516
    %v1520 = vld [vmem:[%s525] sm:$0xff]
    %v1521 = vsel %vm316, %v1516, 0
    %1523 = vmatprep.subr.mxu0 0.0
    %1524 = vmatpush1.msra.mxu0 0.0
    %1525 = vmatprep.subr.mxu0 0.0
    %1526 = vmatpush1.msra.mxu0 0.0
    %1527 = vmatprep.subr.mxu0 0.0
    %1528 = vmatpush1.msra.mxu0 0.0
    %1529 = vmatprep.subr.mxu0 0.0
    %1530 = vmatpush1.msra.mxu0 0.0
    %1531 = vmatprep.subr.mxu0 0.0
    %1532 = vmatpush1.msra.mxu0 0.0
    %1533 = vmatprep.subr.mxu0 0.0
    %1534 = vmatpush1.msra.mxu0 0.0
    %1535 = vmatprep.subr.mxu0 0.0
    %1536 = vmatpush1.msra.mxu0 0.0
    %1537 = vmatprep.subr.mxu0 0.0
    %1538 = vmatpush1.msra.mxu0 0.0
    %1539 = vmatprep.subr.mxu0 0.0
    %1540 = vmatpush1.msra.mxu0 0.0
    %1541 = vmatprep.subr.mxu0 0.0
    %1542 = vmatpush1.msra.mxu0 0.0
    %1543 = vmatprep.subr.mxu0 0.0
    %1544 = vmatpush1.msra.mxu0 0.0
    %1545 = vmatprep.subr.mxu0 0.0
    %1546 = vmatpush1.msra.mxu0 0.0
    %1547 = vmatprep.subr.mxu0 0.0
    %1548 = vmatpush1.msra.mxu0 %v1314
    %1549 = vmatprep.subr.mxu0 0.0
    %1550 = vmatpush1.msra.mxu0 %v1313
    %1551 = vmatprep.subr.mxu0 0.0
    %1552 = vmatpush1.msra.mxu0 %v1312
    %1553 = vmatprep.subr.mxu0 0.0
    %1554 = vmatpush1.msra.mxu0 %v1311
    %1555 = vmatprep.subr.mxu0 0.0
    %1556 = vmatpush2.msra.mxu0 0.0
    %1557 = vmatprep.subr.mxu0 0.0
    %1558 = vmatpush2.msra.mxu0 0.0
    %1559 = vmatprep.subr.mxu0 0.0
    %1560 = vmatpush2.msra.mxu0 0.0
    %1561 = vmatprep.subr.mxu0 0.0
    %1562 = vmatpush2.msra.mxu0 0.0
    %1563 = vmatprep.subr.mxu0 0.0
    %1564 = vmatpush2.msra.mxu0 0.0
    %1565 = vmatprep.subr.mxu0 0.0
    %1566 = vmatpush2.msra.mxu0 0.0
    %1567 = vmatprep.subr.mxu0 0.0
    %1568 = vmatpush2.msra.mxu0 0.0
    %1569 = vmatprep.subr.mxu0 0.0
    %1570 = vmatpush2.msra.mxu0 0.0
    %1571 = vmatprep.subr.mxu0 0.0
    %1572 = vmatpush2.msra.mxu0 0.0
    %1573 = vmatprep.subr.mxu0 0.0
    %1574 = vmatpush2.msra.mxu0 0.0
    %1575 = vmatprep.subr.mxu0 0.0
    %1576 = vmatpush2.msra.mxu0 0.0
    %1577 = vmatprep.subr.mxu0 0.0
    %1578 = vmatpush2.msra.mxu0 0.0
    %1579 = vmatprep.subr.mxu0 0.0
    %1580 = vmatpush2.msra.mxu0 0.0
    %1581 = vmatprep.subr.mxu0 0.0
    %1582 = vmatpush2.msra.mxu0 0.0
    %1583 = vmatprep.subr.mxu0 0.0
    %1584 = vmatpush2.msra.mxu0 0.0
    %1585 = vmatprep.subr.mxu0 0.0
    %1586 = vmatpush2.msra.mxu0 0.0
    %1587 = vmatprep.mubr.f32.mxu0 0.0
    %1588 = vmatmul.mubr.f32.gmra.mxu0 %v1521
    %v1589 = vpop.f32.mrf.mxu0
    %v1590 = vadd.f32 0.0, %v1589
    %v1591 = vpop.f32.mrf.mxu0
    %1592 = vdwg.mxu0
    %v1593 = vadd.f32 %v1520, %v1590
    %v1594 = vxor.u32 %v1593, 2147483648
    %v1595 = vmul.f32 %v1594, 1.442695
    %v1596 = vpow.pop %v1595
    %v1597 = vadd.f32 %v1596, 1.0
    %v1598 = vrcp.pop %v1597
    %v1599 = vmul.f32 1.0, %v1598
    %v1600 = vtanh.pop %v1593
    %v1601 = vmul.f32 %v1599, %v1507
    %1603 = vrot.lane.b32.xlu0 %v1600, 64
    %v1604 = vpop.permute.xlu0 %1603
    %v1606 = vmul.f32 %v1599, %v1604
    %1608 = vrot.lane.b32.xlu0 %v1606, 32
    %v1609 = vpop.permute.xlu0 %1608
    %v1611 = vadd.f32 %v1601, %v1609
    %v1612 = vtanh.pop %v1611
    %1614 = vrot.lane.b32.xlu0 %v1612, 64
    %v1615 = vpop.permute.xlu0 %1614
    %v1617 = vmul.f32 %v1599, %v1615
    %1619 = vrot.lane.b32.xlu0 %v1617, 32
    %v1620 = vpop.permute.xlu0 %1619
    %s1622 = scalar_lea.vmem [#allocation4], 16
    %1623 = vst.msk [vmem:[%s1622] sm:$0xff] %vm316, %v1620
    %v1624 = vld [vmem:[%s630] sm:$0xff]
    %v1625 = vsel %vm316, %v1620, 0
    %1627 = vmatprep.subr.mxu0 0.0
    %1628 = vmatpush1.msra.mxu0 0.0
    %1629 = vmatprep.subr.mxu0 0.0
    %1630 = vmatpush1.msra.mxu0 0.0
    %1631 = vmatprep.subr.mxu0 0.0
    %1632 = vmatpush1.msra.mxu0 0.0
    %1633 = vmatprep.subr.mxu0 0.0
    %1634 = vmatpush1.msra.mxu0 0.0
    %1635 = vmatprep.subr.mxu0 0.0
    %1636 = vmatpush1.msra.mxu0 0.0
    %1637 = vmatprep.subr.mxu0 0.0
    %1638 = vmatpush1.msra.mxu0 0.0
    %1639 = vmatprep.subr.mxu0 0.0
    %1640 = vmatpush1.msra.mxu0 0.0
    %1641 = vmatprep.subr.mxu0 0.0
    %1642 = vmatpush1.msra.mxu0 0.0
    %1643 = vmatprep.subr.mxu0 0.0
    %1644 = vmatpush1.msra.mxu0 0.0
    %1645 = vmatprep.subr.mxu0 0.0
    %1646 = vmatpush1.msra.mxu0 0.0
    %1647 = vmatprep.subr.mxu0 0.0
    %1648 = vmatpush1.msra.mxu0 0.0
    %1649 = vmatprep.subr.mxu0 0.0
    %1650 = vmatpush1.msra.mxu0 0.0
    %1651 = vmatprep.subr.mxu0 0.0
    %1652 = vmatpush1.msra.mxu0 %v1314
    %1653 = vmatprep.subr.mxu0 0.0
    %1654 = vmatpush1.msra.mxu0 %v1313
    %1655 = vmatprep.subr.mxu0 0.0
    %1656 = vmatpush1.msra.mxu0 %v1312
    %1657 = vmatprep.subr.mxu0 0.0
    %1658 = vmatpush1.msra.mxu0 %v1311
    %1659 = vmatprep.subr.mxu0 0.0
    %1660 = vmatpush2.msra.mxu0 0.0
    %1661 = vmatprep.subr.mxu0 0.0
    %1662 = vmatpush2.msra.mxu0 0.0
    %1663 = vmatprep.subr.mxu0 0.0
    %1664 = vmatpush2.msra.mxu0 0.0
    %1665 = vmatprep.subr.mxu0 0.0
    %1666 = vmatpush2.msra.mxu0 0.0
    %1667 = vmatprep.subr.mxu0 0.0
    %1668 = vmatpush2.msra.mxu0 0.0
    %1669 = vmatprep.subr.mxu0 0.0
    %1670 = vmatpush2.msra.mxu0 0.0
    %1671 = vmatprep.subr.mxu0 0.0
    %1672 = vmatpush2.msra.mxu0 0.0
    %1673 = vmatprep.subr.mxu0 0.0
    %1674 = vmatpush2.msra.mxu0 0.0
    %1675 = vmatprep.subr.mxu0 0.0
    %1676 = vmatpush2.msra.mxu0 0.0
    %1677 = vmatprep.subr.mxu0 0.0
    %1678 = vmatpush2.msra.mxu0 0.0
    %1679 = vmatprep.subr.mxu0 0.0
    %1680 = vmatpush2.msra.mxu0 0.0
    %1681 = vmatprep.subr.mxu0 0.0
    %1682 = vmatpush2.msra.mxu0 0.0
    %1683 = vmatprep.subr.mxu0 0.0
    %1684 = vmatpush2.msra.mxu0 0.0
    %1685 = vmatprep.subr.mxu0 0.0
    %1686 = vmatpush2.msra.mxu0 0.0
    %1687 = vmatprep.subr.mxu0 0.0
    %1688 = vmatpush2.msra.mxu0 0.0
    %1689 = vmatprep.subr.mxu0 0.0
    %1690 = vmatpush2.msra.mxu0 0.0
    %1691 = vmatprep.mubr.f32.mxu0 0.0
    %1692 = vmatmul.mubr.f32.gmra.mxu0 %v1625
    %v1693 = vpop.f32.mrf.mxu0
    %v1694 = vadd.f32 0.0, %v1693
    %v1695 = vpop.f32.mrf.mxu0
    %1696 = vdwg.mxu0
    %v1697 = vadd.f32 %v1624, %v1694
    %v1698 = vxor.u32 %v1697, 2147483648
    %v1699 = vmul.f32 %v1698, 1.442695
    %v1700 = vpow.pop %v1699
    %v1701 = vadd.f32 %v1700, 1.0
    %v1702 = vrcp.pop %v1701
    %v1703 = vmul.f32 1.0, %v1702
    %v1704 = vtanh.pop %v1697
    %v1705 = vmul.f32 %v1703, %v1611
    %1707 = vrot.lane.b32.xlu0 %v1704, 64
    %v1708 = vpop.permute.xlu0 %1707
    %v1710 = vmul.f32 %v1703, %v1708
    %1712 = vrot.lane.b32.xlu0 %v1710, 32
    %v1713 = vpop.permute.xlu0 %1712
    %v1715 = vadd.f32 %v1705, %v1713
    %v1716 = vtanh.pop %v1715
    %1718 = vrot.lane.b32.xlu0 %v1716, 64
    %v1719 = vpop.permute.xlu0 %1718
    %v1721 = vmul.f32 %v1703, %v1719
    %1723 = vrot.lane.b32.xlu0 %v1721, 32
    %v1724 = vpop.permute.xlu0 %1723
    %s1726 = scalar_lea.vmem [#allocation4], 24
    %1727 = vst.msk [vmem:[%s1726] sm:$0xff] %vm316, %v1724
    %v1728 = vld [vmem:[%s735] sm:$0xff]
    %v1729 = vsel %vm316, %v1724, 0
    %1731 = vmatprep.subr.mxu0 0.0
    %1732 = vmatpush1.msra.mxu0 0.0
    %1733 = vmatprep.subr.mxu0 0.0
    %1734 = vmatpush1.msra.mxu0 0.0
    %1735 = vmatprep.subr.mxu0 0.0
    %1736 = vmatpush1.msra.mxu0 0.0
    %1737 = vmatprep.subr.mxu0 0.0
    %1738 = vmatpush1.msra.mxu0 0.0
    %1739 = vmatprep.subr.mxu0 0.0
    %1740 = vmatpush1.msra.mxu0 0.0
    %1741 = vmatprep.subr.mxu0 0.0
    %1742 = vmatpush1.msra.mxu0 0.0
    %1743 = vmatprep.subr.mxu0 0.0
    %1744 = vmatpush1.msra.mxu0 0.0
    %1745 = vmatprep.subr.mxu0 0.0
    %1746 = vmatpush1.msra.mxu0 0.0
    %1747 = vmatprep.subr.mxu0 0.0
    %1748 = vmatpush1.msra.mxu0 0.0
    %1749 = vmatprep.subr.mxu0 0.0
    %1750 = vmatpush1.msra.mxu0 0.0
    %1751 = vmatprep.subr.mxu0 0.0
    %1752 = vmatpush1.msra.mxu0 0.0
    %1753 = vmatprep.subr.mxu0 0.0
    %1754 = vmatpush1.msra.mxu0 0.0
    %1755 = vmatprep.subr.mxu0 0.0
    %1756 = vmatpush1.msra.mxu0 %v1314
    %1757 = vmatprep.subr.mxu0 0.0
    %1758 = vmatpush1.msra.mxu0 %v1313
    %1759 = vmatprep.subr.mxu0 0.0
    %1760 = vmatpush1.msra.mxu0 %v1312
    %1761 = vmatprep.subr.mxu0 0.0
    %1762 = vmatpush1.msra.mxu0 %v1311
    %1763 = vmatprep.subr.mxu0 0.0
    %1764 = vmatpush2.msra.mxu0 0.0
    %1765 = vmatprep.subr.mxu0 0.0
    %1766 = vmatpush2.msra.mxu0 0.0
    %1767 = vmatprep.subr.mxu0 0.0
    %1768 = vmatpush2.msra.mxu0 0.0
    %1769 = vmatprep.subr.mxu0 0.0
    %1770 = vmatpush2.msra.mxu0 0.0
    %1771 = vmatprep.subr.mxu0 0.0
    %1772 = vmatpush2.msra.mxu0 0.0
    %1773 = vmatprep.subr.mxu0 0.0
    %1774 = vmatpush2.msra.mxu0 0.0
    %1775 = vmatprep.subr.mxu0 0.0
    %1776 = vmatpush2.msra.mxu0 0.0
    %1777 = vmatprep.subr.mxu0 0.0
    %1778 = vmatpush2.msra.mxu0 0.0
    %1779 = vmatprep.subr.mxu0 0.0
    %1780 = vmatpush2.msra.mxu0 0.0
    %1781 = vmatprep.subr.mxu0 0.0
    %1782 = vmatpush2.msra.mxu0 0.0
    %1783 = vmatprep.subr.mxu0 0.0
    %1784 = vmatpush2.msra.mxu0 0.0
    %1785 = vmatprep.subr.mxu0 0.0
    %1786 = vmatpush2.msra.mxu0 0.0
    %1787 = vmatprep.subr.mxu0 0.0
    %1788 = vmatpush2.msra.mxu0 0.0
    %1789 = vmatprep.subr.mxu0 0.0
    %1790 = vmatpush2.msra.mxu0 0.0
    %1791 = vmatprep.subr.mxu0 0.0
    %1792 = vmatpush2.msra.mxu0 0.0
    %1793 = vmatprep.subr.mxu0 0.0
    %1794 = vmatpush2.msra.mxu0 0.0
    %1795 = vmatprep.mubr.f32.mxu0 0.0
    %1796 = vmatmul.mubr.f32.gmra.mxu0 %v1729
    %v1797 = vpop.f32.mrf.mxu0
    %v1798 = vadd.f32 0.0, %v1797
    %v1799 = vpop.f32.mrf.mxu0
    %1800 = vdwg.mxu0
    %v1801 = vadd.f32 %v1728, %v1798
    %v1802 = vxor.u32 %v1801, 2147483648
    %v1803 = vmul.f32 %v1802, 1.442695
    %v1804 = vpow.pop %v1803
    %v1805 = vadd.f32 %v1804, 1.0
    %v1806 = vrcp.pop %v1805
    %v1807 = vmul.f32 1.0, %v1806
    %v1808 = vtanh.pop %v1801
    %v1809 = vmul.f32 %v1807, %v1715
    %1811 = vrot.lane.b32.xlu0 %v1808, 64
    %v1812 = vpop.permute.xlu0 %1811
    %v1814 = vmul.f32 %v1807, %v1812
    %1816 = vrot.lane.b32.xlu0 %v1814, 32
    %v1817 = vpop.permute.xlu0 %1816
    %v1819 = vadd.f32 %v1809, %v1817
    %v1820 = vtanh.pop %v1819
    %1822 = vrot.lane.b32.xlu0 %v1820, 64
    %v1823 = vpop.permute.xlu0 %1822
    %v1825 = vmul.f32 %v1807, %v1823
    %1827 = vrot.lane.b32.xlu0 %v1825, 32
    %v1828 = vpop.permute.xlu0 %1827
    %s1830 = scalar_lea.vmem [#allocation4], 32
    %1831 = vst.msk [vmem:[%s1830] sm:$0xff] %vm316, %v1828
    %v1832 = vld [vmem:[%s840] sm:$0xff]
    %v1833 = vsel %vm316, %v1828, 0
    %1835 = vmatprep.subr.mxu0 0.0
    %1836 = vmatpush1.msra.mxu0 0.0
    %1837 = vmatprep.subr.mxu0 0.0
    %1838 = vmatpush1.msra.mxu0 0.0
    %1839 = vmatprep.subr.mxu0 0.0
    %1840 = vmatpush1.msra.mxu0 0.0
    %1841 = vmatprep.subr.mxu0 0.0
    %1842 = vmatpush1.msra.mxu0 0.0
    %1843 = vmatprep.subr.mxu0 0.0
    %1844 = vmatpush1.msra.mxu0 0.0
    %1845 = vmatprep.subr.mxu0 0.0
    %1846 = vmatpush1.msra.mxu0 0.0
    %1847 = vmatprep.subr.mxu0 0.0
    %1848 = vmatpush1.msra.mxu0 0.0
    %1849 = vmatprep.subr.mxu0 0.0
    %1850 = vmatpush1.msra.mxu0 0.0
    %1851 = vmatprep.subr.mxu0 0.0
    %1852 = vmatpush1.msra.mxu0 0.0
    %1853 = vmatprep.subr.mxu0 0.0
    %1854 = vmatpush1.msra.mxu0 0.0
    %1855 = vmatprep.subr.mxu0 0.0
    %1856 = vmatpush1.msra.mxu0 0.0
    %1857 = vmatprep.subr.mxu0 0.0
    %1858 = vmatpush1.msra.mxu0 0.0
    %1859 = vmatprep.subr.mxu0 0.0
    %1860 = vmatpush1.msra.mxu0 %v1314
    %1861 = vmatprep.subr.mxu0 0.0
    %1862 = vmatpush1.msra.mxu0 %v1313
    %1863 = vmatprep.subr.mxu0 0.0
    %1864 = vmatpush1.msra.mxu0 %v1312
    %1865 = vmatprep.subr.mxu0 0.0
    %1866 = vmatpush1.msra.mxu0 %v1311
    %1867 = vmatprep.subr.mxu0 0.0
    %1868 = vmatpush2.msra.mxu0 0.0
    %1869 = vmatprep.subr.mxu0 0.0
    %1870 = vmatpush2.msra.mxu0 0.0
    %1871 = vmatprep.subr.mxu0 0.0
    %1872 = vmatpush2.msra.mxu0 0.0
    %1873 = vmatprep.subr.mxu0 0.0
    %1874 = vmatpush2.msra.mxu0 0.0
    %1875 = vmatprep.subr.mxu0 0.0
    %1876 = vmatpush2.msra.mxu0 0.0
    %1877 = vmatprep.subr.mxu0 0.0
    %1878 = vmatpush2.msra.mxu0 0.0
    %1879 = vmatprep.subr.mxu0 0.0
    %1880 = vmatpush2.msra.mxu0 0.0
    %1881 = vmatprep.subr.mxu0 0.0
    %1882 = vmatpush2.msra.mxu0 0.0
    %1883 = vmatprep.subr.mxu0 0.0
    %1884 = vmatpush2.msra.mxu0 0.0
    %1885 = vmatprep.subr.mxu0 0.0
    %1886 = vmatpush2.msra.mxu0 0.0
    %1887 = vmatprep.subr.mxu0 0.0
    %1888 = vmatpush2.msra.mxu0 0.0
    %1889 = vmatprep.subr.mxu0 0.0
    %1890 = vmatpush2.msra.mxu0 0.0
    %1891 = vmatprep.subr.mxu0 0.0
    %1892 = vmatpush2.msra.mxu0 0.0
    %1893 = vmatprep.subr.mxu0 0.0
    %1894 = vmatpush2.msra.mxu0 0.0
    %1895 = vmatprep.subr.mxu0 0.0
    %1896 = vmatpush2.msra.mxu0 0.0
    %1897 = vmatprep.subr.mxu0 0.0
    %1898 = vmatpush2.msra.mxu0 0.0
    %1899 = vmatprep.mubr.f32.mxu0 0.0
    %1900 = vmatmul.mubr.f32.gmra.mxu0 %v1833
    %v1901 = vpop.f32.mrf.mxu0
    %v1902 = vadd.f32 0.0, %v1901
    %v1903 = vpop.f32.mrf.mxu0
    %1904 = vdwg.mxu0
    %v1905 = vadd.f32 %v1832, %v1902
    %v1906 = vxor.u32 %v1905, 2147483648
    %v1907 = vmul.f32 %v1906, 1.442695
    %v1908 = vpow.pop %v1907
    %v1909 = vadd.f32 %v1908, 1.0
    %v1910 = vrcp.pop %v1909
    %v1911 = vmul.f32 1.0, %v1910
    %v1912 = vtanh.pop %v1905
    %v1913 = vmul.f32 %v1911, %v1819
    %1915 = vrot.lane.b32.xlu0 %v1912, 64
    %v1916 = vpop.permute.xlu0 %1915
    %v1918 = vmul.f32 %v1911, %v1916
    %1920 = vrot.lane.b32.xlu0 %v1918, 32
    %v1921 = vpop.permute.xlu0 %1920
    %v1923 = vadd.f32 %v1913, %v1921
    %v1924 = vtanh.pop %v1923
    %1926 = vrot.lane.b32.xlu0 %v1924, 64
    %v1927 = vpop.permute.xlu0 %1926
    %v1929 = vmul.f32 %v1911, %v1927
    %1931 = vrot.lane.b32.xlu0 %v1929, 32
    %v1932 = vpop.permute.xlu0 %1931
    %s1934 = scalar_lea.vmem [#allocation4], 40
    %1935 = vst.msk [vmem:[%s1934] sm:$0xff] %vm316, %v1932
    %v1936 = vld [vmem:[%s945] sm:$0xff]
    %v1937 = vsel %vm316, %v1932, 0
    %1939 = vmatprep.subr.mxu0 0.0
    %1940 = vmatpush1.msra.mxu0 0.0
    %1941 = vmatprep.subr.mxu0 0.0
    %1942 = vmatpush1.msra.mxu0 0.0
    %1943 = vmatprep.subr.mxu0 0.0
    %1944 = vmatpush1.msra.mxu0 0.0
    %1945 = vmatprep.subr.mxu0 0.0
    %1946 = vmatpush1.msra.mxu0 0.0
    %1947 = vmatprep.subr.mxu0 0.0
    %1948 = vmatpush1.msra.mxu0 0.0
    %1949 = vmatprep.subr.mxu0 0.0
    %1950 = vmatpush1.msra.mxu0 0.0
    %1951 = vmatprep.subr.mxu0 0.0
    %1952 = vmatpush1.msra.mxu0 0.0
    %1953 = vmatprep.subr.mxu0 0.0
    %1954 = vmatpush1.msra.mxu0 0.0
    %1955 = vmatprep.subr.mxu0 0.0
    %1956 = vmatpush1.msra.mxu0 0.0
    %1957 = vmatprep.subr.mxu0 0.0
    %1958 = vmatpush1.msra.mxu0 0.0
    %1959 = vmatprep.subr.mxu0 0.0
    %1960 = vmatpush1.msra.mxu0 0.0
    %1961 = vmatprep.subr.mxu0 0.0
    %1962 = vmatpush1.msra.mxu0 0.0
    %1963 = vmatprep.subr.mxu0 0.0
    %1964 = vmatpush1.msra.mxu0 %v1314
    %1965 = vmatprep.subr.mxu0 0.0
    %1966 = vmatpush1.msra.mxu0 %v1313
    %1967 = vmatprep.subr.mxu0 0.0
    %1968 = vmatpush1.msra.mxu0 %v1312
    %1969 = vmatprep.subr.mxu0 0.0
    %1970 = vmatpush1.msra.mxu0 %v1311
    %1971 = vmatprep.subr.mxu0 0.0
    %1972 = vmatpush2.msra.mxu0 0.0
    %1973 = vmatprep.subr.mxu0 0.0
    %1974 = vmatpush2.msra.mxu0 0.0
    %1975 = vmatprep.subr.mxu0 0.0
    %1976 = vmatpush2.msra.mxu0 0.0
    %1977 = vmatprep.subr.mxu0 0.0
    %1978 = vmatpush2.msra.mxu0 0.0
    %1979 = vmatprep.subr.mxu0 0.0
    %1980 = vmatpush2.msra.mxu0 0.0
    %1981 = vmatprep.subr.mxu0 0.0
    %1982 = vmatpush2.msra.mxu0 0.0
    %1983 = vmatprep.subr.mxu0 0.0
    %1984 = vmatpush2.msra.mxu0 0.0
    %1985 = vmatprep.subr.mxu0 0.0
    %1986 = vmatpush2.msra.mxu0 0.0
    %1987 = vmatprep.subr.mxu0 0.0
    %1988 = vmatpush2.msra.mxu0 0.0
    %1989 = vmatprep.subr.mxu0 0.0
    %1990 = vmatpush2.msra.mxu0 0.0
    %1991 = vmatprep.subr.mxu0 0.0
    %1992 = vmatpush2.msra.mxu0 0.0
    %1993 = vmatprep.subr.mxu0 0.0
    %1994 = vmatpush2.msra.mxu0 0.0
    %1995 = vmatprep.subr.mxu0 0.0
    %1996 = vmatpush2.msra.mxu0 0.0
    %1997 = vmatprep.subr.mxu0 0.0
    %1998 = vmatpush2.msra.mxu0 0.0
    %1999 = vmatprep.subr.mxu0 0.0
    %2000 = vmatpush2.msra.mxu0 0.0
    %2001 = vmatprep.subr.mxu0 0.0
    %2002 = vmatpush2.msra.mxu0 0.0
    %2003 = vmatprep.mubr.f32.mxu0 0.0
    %2004 = vmatmul.mubr.f32.gmra.mxu0 %v1937
    %v2005 = vpop.f32.mrf.mxu0
    %v2006 = vadd.f32 0.0, %v2005
    %v2007 = vpop.f32.mrf.mxu0
    %2008 = vdwg.mxu0
    %v2009 = vadd.f32 %v1936, %v2006
    %v2010 = vxor.u32 %v2009, 2147483648
    %v2011 = vmul.f32 %v2010, 1.442695
    %v2012 = vpow.pop %v2011
    %v2013 = vadd.f32 %v2012, 1.0
    %v2014 = vrcp.pop %v2013
    %v2015 = vmul.f32 1.0, %v2014
    %v2016 = vtanh.pop %v2009
    %v2017 = vmul.f32 %v2015, %v1923
    %2019 = vrot.lane.b32.xlu0 %v2016, 64
    %v2020 = vpop.permute.xlu0 %2019
    %v2022 = vmul.f32 %v2015, %v2020
    %2024 = vrot.lane.b32.xlu0 %v2022, 32
    %v2025 = vpop.permute.xlu0 %2024
    %v2027 = vadd.f32 %v2017, %v2025
    %v2028 = vtanh.pop %v2027
    %2030 = vrot.lane.b32.xlu0 %v2028, 64
    %v2031 = vpop.permute.xlu0 %2030
    %v2033 = vmul.f32 %v2015, %v2031
    %2035 = vrot.lane.b32.xlu0 %v2033, 32
    %v2036 = vpop.permute.xlu0 %2035
    %s2038 = scalar_lea.vmem [#allocation4], 48
    %2039 = vst.msk [vmem:[%s2038] sm:$0xff] %vm316, %v2036
    %v2040 = vld [vmem:[%s1050] sm:$0xff]
    %v2041 = vsel %vm316, %v2036, 0
    %2043 = vmatprep.subr.mxu0 0.0
    %2044 = vmatpush1.msra.mxu0 0.0
    %2045 = vmatprep.subr.mxu0 0.0
    %2046 = vmatpush1.msra.mxu0 0.0
    %2047 = vmatprep.subr.mxu0 0.0
    %2048 = vmatpush1.msra.mxu0 0.0
    %2049 = vmatprep.subr.mxu0 0.0
    %2050 = vmatpush1.msra.mxu0 0.0
    %2051 = vmatprep.subr.mxu0 0.0
    %2052 = vmatpush1.msra.mxu0 0.0
    %2053 = vmatprep.subr.mxu0 0.0
    %2054 = vmatpush1.msra.mxu0 0.0
    %2055 = vmatprep.subr.mxu0 0.0
    %2056 = vmatpush1.msra.mxu0 0.0
    %2057 = vmatprep.subr.mxu0 0.0
    %2058 = vmatpush1.msra.mxu0 0.0
    %2059 = vmatprep.subr.mxu0 0.0
    %2060 = vmatpush1.msra.mxu0 0.0
    %2061 = vmatprep.subr.mxu0 0.0
    %2062 = vmatpush1.msra.mxu0 0.0
    %2063 = vmatprep.subr.mxu0 0.0
    %2064 = vmatpush1.msra.mxu0 0.0
    %2065 = vmatprep.subr.mxu0 0.0
    %2066 = vmatpush1.msra.mxu0 0.0
    %2067 = vmatprep.subr.mxu0 0.0
    %2068 = vmatpush1.msra.mxu0 %v1314
    %2069 = vmatprep.subr.mxu0 0.0
    %2070 = vmatpush1.msra.mxu0 %v1313
    %2071 = vmatprep.subr.mxu0 0.0
    %2072 = vmatpush1.msra.mxu0 %v1312
    %2073 = vmatprep.subr.mxu0 0.0
    %2074 = vmatpush1.msra.mxu0 %v1311
    %2075 = vmatprep.subr.mxu0 0.0
    %2076 = vmatpush2.msra.mxu0 0.0
    %2077 = vmatprep.subr.mxu0 0.0
    %2078 = vmatpush2.msra.mxu0 0.0
    %2079 = vmatprep.subr.mxu0 0.0
    %2080 = vmatpush2.msra.mxu0 0.0
    %2081 = vmatprep.subr.mxu0 0.0
    %2082 = vmatpush2.msra.mxu0 0.0
    %2083 = vmatprep.subr.mxu0 0.0
    %2084 = vmatpush2.msra.mxu0 0.0
    %2085 = vmatprep.subr.mxu0 0.0
    %2086 = vmatpush2.msra.mxu0 0.0
    %2087 = vmatprep.subr.mxu0 0.0
    %2088 = vmatpush2.msra.mxu0 0.0
    %2089 = vmatprep.subr.mxu0 0.0
    %2090 = vmatpush2.msra.mxu0 0.0
    %2091 = vmatprep.subr.mxu0 0.0
    %2092 = vmatpush2.msra.mxu0 0.0
    %2093 = vmatprep.subr.mxu0 0.0
    %2094 = vmatpush2.msra.mxu0 0.0
    %2095 = vmatprep.subr.mxu0 0.0
    %2096 = vmatpush2.msra.mxu0 0.0
    %2097 = vmatprep.subr.mxu0 0.0
    %2098 = vmatpush2.msra.mxu0 0.0
    %2099 = vmatprep.subr.mxu0 0.0
    %2100 = vmatpush2.msra.mxu0 0.0
    %2101 = vmatprep.subr.mxu0 0.0
    %2102 = vmatpush2.msra.mxu0 0.0
    %2103 = vmatprep.subr.mxu0 0.0
    %2104 = vmatpush2.msra.mxu0 0.0
    %2105 = vmatprep.subr.mxu0 0.0
    %2106 = vmatpush2.msra.mxu0 0.0
    %2107 = vmatprep.mubr.f32.mxu0 0.0
    %2108 = vmatmul.mubr.f32.gmra.mxu0 %v2041
    %v2109 = vpop.f32.mrf.mxu0
    %v2110 = vadd.f32 0.0, %v2109
    %v2111 = vpop.f32.mrf.mxu0
    %2112 = vdwg.mxu0
    %v2113 = vadd.f32 %v2040, %v2110
    %v2114 = vxor.u32 %v2113, 2147483648
    %v2115 = vmul.f32 %v2114, 1.442695
    %v2116 = vpow.pop %v2115
    %v2117 = vadd.f32 %v2116, 1.0
    %v2118 = vrcp.pop %v2117
    %v2119 = vmul.f32 1.0, %v2118
    %v2120 = vtanh.pop %v2113
    %v2121 = vmul.f32 %v2119, %v2027
    %2123 = vrot.lane.b32.xlu0 %v2120, 64
    %v2124 = vpop.permute.xlu0 %2123
    %v2126 = vmul.f32 %v2119, %v2124
    %2128 = vrot.lane.b32.xlu0 %v2126, 32
    %v2129 = vpop.permute.xlu0 %2128
    %v2131 = vadd.f32 %v2121, %v2129
    %v2132 = vtanh.pop %v2131
    %2134 = vrot.lane.b32.xlu0 %v2132, 64
    %v2135 = vpop.permute.xlu0 %2134
    %v2137 = vmul.f32 %v2119, %v2135
    %2139 = vrot.lane.b32.xlu0 %v2137, 32
    %v2140 = vpop.permute.xlu0 %2139
    %s2142 = scalar_lea.vmem [#allocation4], 56
    %2143 = vst.msk [vmem:[%s2142] sm:$0xff] %vm316, %v2140
    %v2144 = vld [vmem:[#allocation4] sm:$0xff]
    %v2145 = vld [vmem:[#allocation4 + $0x8] sm:$0xff]
    %v2146 = vld [vmem:[#allocation4 + $0x10] sm:$0xff]
    %v2147 = vld [vmem:[#allocation4 + $0x18] sm:$0xff]
    %v2148 = vld [vmem:[#allocation4 + $0x20] sm:$0xff]
    %v2149 = vld [vmem:[#allocation4 + $0x28] sm:$0xff]
    %v2150 = vld [vmem:[#allocation4 + $0x30] sm:$0xff]
    %v2151 = vld [vmem:[#allocation4 + $0x38] sm:$0xff]
    %v2152 = vld [vmem:[#allocation12] sm:$0xff]
    %v2153 = vld [vmem:[#allocation12 + $0x8] sm:$0xff]
    %v2154 = vld [vmem:[#allocation12 + $0x10] sm:$0xff]
    %v2155 = vld [vmem:[#allocation12 + $0x18] sm:$0xff]
    %v2156 = vld [vmem:[%s9] sm:$0x1]
    %v2158 = vlaneseq
    %v2159 = vshrl.u32 %v2158, 7
    %v2160 = vsub.s32 0, %v2159
    %v2161 = vrot.slane %v2156, %v2160
    %v2164 = vsel %vm316, %v2144, 0
    %v2167 = vsel %vm316, %v2145, 0
    %v2170 = vsel %vm316, %v2146, 0
    %v2173 = vsel %vm316, %v2147, 0
    %v2176 = vsel %vm316, %v2148, 0
    %v2179 = vsel %vm316, %v2149, 0
    %v2182 = vsel %vm316, %v2150, 0
    %v2185 = vsel %vm316, %v2151, 0
    %2187 = vmatprep.subr.mxu0 0.0
    %2188 = vmatpush1.msra.mxu0 0.0
    %2189 = vmatprep.subr.mxu0 0.0
    %2190 = vmatpush1.msra.mxu0 0.0
    %2191 = vmatprep.subr.mxu0 0.0
    %2192 = vmatpush1.msra.mxu0 0.0
    %2193 = vmatprep.subr.mxu0 0.0
    %2194 = vmatpush1.msra.mxu0 0.0
    %2195 = vmatprep.subr.mxu0 0.0
    %2196 = vmatpush1.msra.mxu0 0.0
    %2197 = vmatprep.subr.mxu0 0.0
    %2198 = vmatpush1.msra.mxu0 0.0
    %2199 = vmatprep.subr.mxu0 0.0
    %2200 = vmatpush1.msra.mxu0 0.0
    %2201 = vmatprep.subr.mxu0 0.0
    %2202 = vmatpush1.msra.mxu0 0.0
    %2203 = vmatprep.subr.mxu0 0.0
    %2204 = vmatpush1.msra.mxu0 0.0
    %2205 = vmatprep.subr.mxu0 0.0
    %2206 = vmatpush1.msra.mxu0 0.0
    %2207 = vmatprep.subr.mxu0 0.0
    %2208 = vmatpush1.msra.mxu0 0.0
    %2209 = vmatprep.subr.mxu0 0.0
    %2210 = vmatpush1.msra.mxu0 0.0
    %2211 = vmatprep.subr.mxu0 0.0
    %2212 = vmatpush1.msra.mxu0 %v2155
    %2213 = vmatprep.subr.mxu0 0.0
    %2214 = vmatpush1.msra.mxu0 %v2154
    %2215 = vmatprep.subr.mxu0 0.0
    %2216 = vmatpush1.msra.mxu0 %v2153
    %2217 = vmatprep.subr.mxu0 0.0
    %2218 = vmatpush1.msra.mxu0 %v2152
    %2219 = vmatprep.subr.mxu0 0.0
    %2220 = vmatpush2.msra.mxu0 0.0
    %2221 = vmatprep.subr.mxu0 0.0
    %2222 = vmatpush2.msra.mxu0 0.0
    %2223 = vmatprep.subr.mxu0 0.0
    %2224 = vmatpush2.msra.mxu0 0.0
    %2225 = vmatprep.subr.mxu0 0.0
    %2226 = vmatpush2.msra.mxu0 0.0
    %2227 = vmatprep.subr.mxu0 0.0
    %2228 = vmatpush2.msra.mxu0 0.0
    %2229 = vmatprep.subr.mxu0 0.0
    %2230 = vmatpush2.msra.mxu0 0.0
    %2231 = vmatprep.subr.mxu0 0.0
    %2232 = vmatpush2.msra.mxu0 0.0
    %2233 = vmatprep.subr.mxu0 0.0
    %2234 = vmatpush2.msra.mxu0 0.0
    %2235 = vmatprep.subr.mxu0 0.0
    %2236 = vmatpush2.msra.mxu0 0.0
    %2237 = vmatprep.subr.mxu0 0.0
    %2238 = vmatpush2.msra.mxu0 0.0
    %2239 = vmatprep.subr.mxu0 0.0
    %2240 = vmatpush2.msra.mxu0 0.0
    %2241 = vmatprep.subr.mxu0 0.0
    %2242 = vmatpush2.msra.mxu0 0.0
    %2243 = vmatprep.subr.mxu0 0.0
    %2244 = vmatpush2.msra.mxu0 0.0
    %2245 = vmatprep.subr.mxu0 0.0
    %2246 = vmatpush2.msra.mxu0 0.0
    %2247 = vmatprep.subr.mxu0 0.0
    %2248 = vmatpush2.msra.mxu0 0.0
    %2249 = vmatprep.subr.mxu0 0.0
    %2250 = vmatpush2.msra.mxu0 0.0
    %2251 = vmatprep.mubr.f32.mxu0 0.0
    %2252 = vmatmul.mubr.f32.gmra.mxu0 %v2164
    %v2253 = vpop.f32.mrf.mxu0
    %v2254 = vadd.f32 %v2161, %v2253
    %v2255 = vpop.f32.mrf.mxu0
    %2256 = vmatprep.mubr.f32.mxu0 0.0
    %2257 = vmatmul.mubr.f32.gmra.mxu0 %v2167
    %v2258 = vpop.f32.mrf.mxu0
    %v2259 = vadd.f32 %v2161, %v2258
    %v2260 = vpop.f32.mrf.mxu0
    %2261 = vmatprep.mubr.f32.mxu0 0.0
    %2262 = vmatmul.mubr.f32.gmra.mxu0 %v2170
    %v2263 = vpop.f32.mrf.mxu0
    %v2264 = vadd.f32 %v2161, %v2263
    %v2265 = vpop.f32.mrf.mxu0
    %2266 = vmatprep.mubr.f32.mxu0 0.0
    %2267 = vmatmul.mubr.f32.gmra.mxu0 %v2173
    %v2268 = vpop.f32.mrf.mxu0
    %v2269 = vadd.f32 %v2161, %v2268
    %v2270 = vpop.f32.mrf.mxu0
    %2271 = vmatprep.mubr.f32.mxu0 0.0
    %2272 = vmatmul.mubr.f32.gmra.mxu0 %v2176
    %v2273 = vpop.f32.mrf.mxu0
    %v2274 = vadd.f32 %v2161, %v2273
    %v2275 = vpop.f32.mrf.mxu0
    %2276 = vmatprep.mubr.f32.mxu0 0.0
    %2277 = vmatmul.mubr.f32.gmra.mxu0 %v2179
    %v2278 = vpop.f32.mrf.mxu0
    %v2279 = vadd.f32 %v2161, %v2278
    %v2280 = vpop.f32.mrf.mxu0
    %2281 = vmatprep.mubr.f32.mxu0 0.0
    %2282 = vmatmul.mubr.f32.gmra.mxu0 %v2182
    %v2283 = vpop.f32.mrf.mxu0
    %v2284 = vadd.f32 %v2161, %v2283
    %v2285 = vpop.f32.mrf.mxu0
    %2286 = vmatprep.mubr.f32.mxu0 0.0
    %2287 = vmatmul.mubr.f32.gmra.mxu0 %v2185
    %v2288 = vpop.f32.mrf.mxu0
    %v2289 = vadd.f32 %v2161, %v2288
    %v2290 = vpop.f32.mrf.mxu0
    %2291 = vdwg.mxu0
    %2292 = vst [vmem:[#allocation2] sm:$0xff] %v2254
    %2293 = vst [vmem:[#allocation2 + $0x8] sm:$0xff] %v2259
    %2294 = vst [vmem:[#allocation2 + $0x10] sm:$0xff] %v2264
    %2295 = vst [vmem:[#allocation2 + $0x18] sm:$0xff] %v2269
    %2296 = vst [vmem:[#allocation2 + $0x20] sm:$0xff] %v2274
    %2297 = vst [vmem:[#allocation2 + $0x28] sm:$0xff] %v2279
    %2298 = vst [vmem:[#allocation2 + $0x30] sm:$0xff] %v2284
    %2299 = vst [vmem:[#allocation2 + $0x38] sm:$0xff] %v2289
    %v2300 = vld [vmem:[#allocation13] sm:$0xff]
    %v2301 = vld [vmem:[#allocation13 + $0x8] sm:$0xff]
    %v2302 = vld [vmem:[#allocation13 + $0x10] sm:$0xff]
    %v2303 = vld [vmem:[#allocation13 + $0x18] sm:$0xff]
    %v2304 = vld [vmem:[#allocation2] sm:$0xff]
    %2305 = vmatprep.subr.mxu0 0.0
    %2306 = vmatpush1.msra.mxu0 0.0
    %2307 = vmatprep.subr.mxu0 0.0
    %2308 = vmatpush1.msra.mxu0 0.0
    %2309 = vmatprep.subr.mxu0 0.0
    %2310 = vmatpush1.msra.mxu0 0.0
    %2311 = vmatprep.subr.mxu0 0.0
    %2312 = vmatpush1.msra.mxu0 0.0
    %2313 = vmatprep.subr.mxu0 0.0
    %2314 = vmatpush1.msra.mxu0 0.0
    %2315 = vmatprep.subr.mxu0 0.0
    %2316 = vmatpush1.msra.mxu0 0.0
    %2317 = vmatprep.subr.mxu0 0.0
    %2318 = vmatpush1.msra.mxu0 0.0
    %2319 = vmatprep.subr.mxu0 0.0
    %2320 = vmatpush1.msra.mxu0 0.0
    %2321 = vmatprep.subr.mxu0 0.0
    %2322 = vmatpush1.msra.mxu0 0.0
    %2323 = vmatprep.subr.mxu0 0.0
    %2324 = vmatpush1.msra.mxu0 0.0
    %2325 = vmatprep.subr.mxu0 0.0
    %2326 = vmatpush1.msra.mxu0 0.0
    %2327 = vmatprep.subr.mxu0 0.0
    %2328 = vmatpush1.msra.mxu0 0.0
    %2329 = vmatprep.subr.mxu0 0.0
    %2330 = vmatpush1.msra.mxu0 %v2303
    %2331 = vmatprep.subr.mxu0 0.0
    %2332 = vmatpush1.msra.mxu0 %v2302
    %2333 = vmatprep.subr.mxu0 0.0
    %2334 = vmatpush1.msra.mxu0 %v2301
    %2335 = vmatprep.subr.mxu0 0.0
    %2336 = vmatpush1.msra.mxu0 %v2300
    %2337 = vmatprep.subr.mxu0 0.0
    %2338 = vmatpush2.msra.mxu0 0.0
    %2339 = vmatprep.subr.mxu0 0.0
    %2340 = vmatpush2.msra.mxu0 0.0
    %2341 = vmatprep.subr.mxu0 0.0
    %2342 = vmatpush2.msra.mxu0 0.0
    %2343 = vmatprep.subr.mxu0 0.0
    %2344 = vmatpush2.msra.mxu0 0.0
    %2345 = vmatprep.subr.mxu0 0.0
    %2346 = vmatpush2.msra.mxu0 0.0
    %2347 = vmatprep.subr.mxu0 0.0
    %2348 = vmatpush2.msra.mxu0 0.0
    %2349 = vmatprep.subr.mxu0 0.0
    %2350 = vmatpush2.msra.mxu0 0.0
    %2351 = vmatprep.subr.mxu0 0.0
    %2352 = vmatpush2.msra.mxu0 0.0
    %2353 = vmatprep.subr.mxu0 0.0
    %2354 = vmatpush2.msra.mxu0 0.0
    %2355 = vmatprep.subr.mxu0 0.0
    %2356 = vmatpush2.msra.mxu0 0.0
    %2357 = vmatprep.subr.mxu0 0.0
    %2358 = vmatpush2.msra.mxu0 0.0
    %2359 = vmatprep.subr.mxu0 0.0
    %2360 = vmatpush2.msra.mxu0 0.0
    %2361 = vmatprep.subr.mxu0 0.0
    %2362 = vmatpush2.msra.mxu0 0.0
    %2363 = vmatprep.subr.mxu0 0.0
    %2364 = vmatpush2.msra.mxu0 0.0
    %2365 = vmatprep.subr.mxu0 0.0
    %2366 = vmatpush2.msra.mxu0 0.0
    %2367 = vmatprep.subr.mxu0 0.0
    %2368 = vmatpush2.msra.mxu0 0.0
    %2369 = vmatprep.mubr.f32.mxu0 0.0
    %2370 = vmatmul.mubr.f32.gmra.mxu0 %v318
    %v2371 = vpop.f32.mrf.mxu0
    %v2372 = vadd.f32 0.0, %v2371
    %v2373 = vpop.f32.mrf.mxu0
    %2374 = vdwg.mxu0
    %v2375 = vadd.f32 %v2304, %v2372
    %v2376 = vxor.u32 %v2375, 2147483648
    %v2377 = vmul.f32 %v2376, 1.442695
    %v2378 = vpow.pop %v2377
    %v2379 = vadd.f32 %v2378, 1.0
    %v2380 = vrcp.pop %v2379
    %v2381 = vmul.f32 1.0, %v2380
    %v2382 = vtanh.pop %v2375
    %v2383 = vmul.f32 %v2381, 0.0
    %2385 = vrot.lane.b32.xlu0 %v2382, 64
    %v2386 = vpop.permute.xlu0 %2385
    %v2388 = vmul.f32 %v2381, %v2386
    %2390 = vrot.lane.b32.xlu0 %v2388, 32
    %v2391 = vpop.permute.xlu0 %2390
    %v2393 = vadd.f32 %v2383, %v2391
    %v2394 = vtanh.pop %v2393
    %2396 = vrot.lane.b32.xlu0 %v2394, 64
    %v2397 = vpop.permute.xlu0 %2396
    %v2399 = vmul.f32 %v2381, %v2397
    %2401 = vrot.lane.b32.xlu0 %v2399, 32
    %v2402 = vpop.permute.xlu0 %2401
    %2404 = vst.msk [vmem:[#allocation3] sm:$0xff] %vm316, %v2402
    %v2405 = vld [vmem:[%s420] sm:$0xff]
    %v2406 = vsel %vm316, %v2402, 0
    %2408 = vmatprep.subr.mxu0 0.0
    %2409 = vmatpush1.msra.mxu0 0.0
    %2410 = vmatprep.subr.mxu0 0.0
    %2411 = vmatpush1.msra.mxu0 0.0
    %2412 = vmatprep.subr.mxu0 0.0
    %2413 = vmatpush1.msra.mxu0 0.0
    %2414 = vmatprep.subr.mxu0 0.0
    %2415 = vmatpush1.msra.mxu0 0.0
    %2416 = vmatprep.subr.mxu0 0.0
    %2417 = vmatpush1.msra.mxu0 0.0
    %2418 = vmatprep.subr.mxu0 0.0
    %2419 = vmatpush1.msra.mxu0 0.0
    %2420 = vmatprep.subr.mxu0 0.0
    %2421 = vmatpush1.msra.mxu0 0.0
    %2422 = vmatprep.subr.mxu0 0.0
    %2423 = vmatpush1.msra.mxu0 0.0
    %2424 = vmatprep.subr.mxu0 0.0
    %2425 = vmatpush1.msra.mxu0 0.0
    %2426 = vmatprep.subr.mxu0 0.0
    %2427 = vmatpush1.msra.mxu0 0.0
    %2428 = vmatprep.subr.mxu0 0.0
    %2429 = vmatpush1.msra.mxu0 0.0
    %2430 = vmatprep.subr.mxu0 0.0
    %2431 = vmatpush1.msra.mxu0 0.0
    %2432 = vmatprep.subr.mxu0 0.0
    %2433 = vmatpush1.msra.mxu0 %v2303
    %2434 = vmatprep.subr.mxu0 0.0
    %2435 = vmatpush1.msra.mxu0 %v2302
    %2436 = vmatprep.subr.mxu0 0.0
    %2437 = vmatpush1.msra.mxu0 %v2301
    %2438 = vmatprep.subr.mxu0 0.0
    %2439 = vmatpush1.msra.mxu0 %v2300
    %2440 = vmatprep.subr.mxu0 0.0
    %2441 = vmatpush2.msra.mxu0 0.0
    %2442 = vmatprep.subr.mxu0 0.0
    %2443 = vmatpush2.msra.mxu0 0.0
    %2444 = vmatprep.subr.mxu0 0.0
    %2445 = vmatpush2.msra.mxu0 0.0
    %2446 = vmatprep.subr.mxu0 0.0
    %2447 = vmatpush2.msra.mxu0 0.0
    %2448 = vmatprep.subr.mxu0 0.0
    %2449 = vmatpush2.msra.mxu0 0.0
    %2450 = vmatprep.subr.mxu0 0.0
    %2451 = vmatpush2.msra.mxu0 0.0
    %2452 = vmatprep.subr.mxu0 0.0
    %2453 = vmatpush2.msra.mxu0 0.0
    %2454 = vmatprep.subr.mxu0 0.0
    %2455 = vmatpush2.msra.mxu0 0.0
    %2456 = vmatprep.subr.mxu0 0.0
    %2457 = vmatpush2.msra.mxu0 0.0
    %2458 = vmatprep.subr.mxu0 0.0
    %2459 = vmatpush2.msra.mxu0 0.0
    %2460 = vmatprep.subr.mxu0 0.0
    %2461 = vmatpush2.msra.mxu0 0.0
    %2462 = vmatprep.subr.mxu0 0.0
    %2463 = vmatpush2.msra.mxu0 0.0
    %2464 = vmatprep.subr.mxu0 0.0
    %2465 = vmatpush2.msra.mxu0 0.0
    %2466 = vmatprep.subr.mxu0 0.0
    %2467 = vmatpush2.msra.mxu0 0.0
    %2468 = vmatprep.subr.mxu0 0.0
    %2469 = vmatpush2.msra.mxu0 0.0
    %2470 = vmatprep.subr.mxu0 0.0
    %2471 = vmatpush2.msra.mxu0 0.0
    %2472 = vmatprep.mubr.f32.mxu0 0.0
    %2473 = vmatmul.mubr.f32.gmra.mxu0 %v2406
    %v2474 = vpop.f32.mrf.mxu0
    %v2475 = vadd.f32 0.0, %v2474
    %v2476 = vpop.f32.mrf.mxu0
    %2477 = vdwg.mxu0
    %v2478 = vadd.f32 %v2405, %v2475
    %v2479 = vxor.u32 %v2478, 2147483648
    %v2480 = vmul.f32 %v2479, 1.442695
    %v2481 = vpow.pop %v2480
    %v2482 = vadd.f32 %v2481, 1.0
    %v2483 = vrcp.pop %v2482
    %v2484 = vmul.f32 1.0, %v2483
    %v2485 = vtanh.pop %v2478
    %v2486 = vmul.f32 %v2484, %v2393
    %2488 = vrot.lane.b32.xlu0 %v2485, 64
    %v2489 = vpop.permute.xlu0 %2488
    %v2491 = vmul.f32 %v2484, %v2489
    %2493 = vrot.lane.b32.xlu0 %v2491, 32
    %v2494 = vpop.permute.xlu0 %2493
    %v2496 = vadd.f32 %v2486, %v2494
    %v2497 = vtanh.pop %v2496
    %2499 = vrot.lane.b32.xlu0 %v2497, 64
    %v2500 = vpop.permute.xlu0 %2499
    %v2502 = vmul.f32 %v2484, %v2500
    %2504 = vrot.lane.b32.xlu0 %v2502, 32
    %v2505 = vpop.permute.xlu0 %2504
    %2507 = vst.msk [vmem:[%s523] sm:$0xff] %vm316, %v2505
    %v2508 = vld [vmem:[%s525] sm:$0xff]
    %v2509 = vsel %vm316, %v2505, 0
    %2511 = vmatprep.subr.mxu0 0.0
    %2512 = vmatpush1.msra.mxu0 0.0
    %2513 = vmatprep.subr.mxu0 0.0
    %2514 = vmatpush1.msra.mxu0 0.0
    %2515 = vmatprep.subr.mxu0 0.0
    %2516 = vmatpush1.msra.mxu0 0.0
    %2517 = vmatprep.subr.mxu0 0.0
    %2518 = vmatpush1.msra.mxu0 0.0
    %2519 = vmatprep.subr.mxu0 0.0
    %2520 = vmatpush1.msra.mxu0 0.0
    %2521 = vmatprep.subr.mxu0 0.0
    %2522 = vmatpush1.msra.mxu0 0.0
    %2523 = vmatprep.subr.mxu0 0.0
    %2524 = vmatpush1.msra.mxu0 0.0
    %2525 = vmatprep.subr.mxu0 0.0
    %2526 = vmatpush1.msra.mxu0 0.0
    %2527 = vmatprep.subr.mxu0 0.0
    %2528 = vmatpush1.msra.mxu0 0.0
    %2529 = vmatprep.subr.mxu0 0.0
    %2530 = vmatpush1.msra.mxu0 0.0
    %2531 = vmatprep.subr.mxu0 0.0
    %2532 = vmatpush1.msra.mxu0 0.0
    %2533 = vmatprep.subr.mxu0 0.0
    %2534 = vmatpush1.msra.mxu0 0.0
    %2535 = vmatprep.subr.mxu0 0.0
    %2536 = vmatpush1.msra.mxu0 %v2303
    %2537 = vmatprep.subr.mxu0 0.0
    %2538 = vmatpush1.msra.mxu0 %v2302
    %2539 = vmatprep.subr.mxu0 0.0
    %2540 = vmatpush1.msra.mxu0 %v2301
    %2541 = vmatprep.subr.mxu0 0.0
    %2542 = vmatpush1.msra.mxu0 %v2300
    %2543 = vmatprep.subr.mxu0 0.0
    %2544 = vmatpush2.msra.mxu0 0.0
    %2545 = vmatprep.subr.mxu0 0.0
    %2546 = vmatpush2.msra.mxu0 0.0
    %2547 = vmatprep.subr.mxu0 0.0
    %2548 = vmatpush2.msra.mxu0 0.0
    %2549 = vmatprep.subr.mxu0 0.0
    %2550 = vmatpush2.msra.mxu0 0.0
    %2551 = vmatprep.subr.mxu0 0.0
    %2552 = vmatpush2.msra.mxu0 0.0
    %2553 = vmatprep.subr.mxu0 0.0
    %2554 = vmatpush2.msra.mxu0 0.0
    %2555 = vmatprep.subr.mxu0 0.0
    %2556 = vmatpush2.msra.mxu0 0.0
    %2557 = vmatprep.subr.mxu0 0.0
    %2558 = vmatpush2.msra.mxu0 0.0
    %2559 = vmatprep.subr.mxu0 0.0
    %2560 = vmatpush2.msra.mxu0 0.0
    %2561 = vmatprep.subr.mxu0 0.0
    %2562 = vmatpush2.msra.mxu0 0.0
    %2563 = vmatprep.subr.mxu0 0.0
    %2564 = vmatpush2.msra.mxu0 0.0
    %2565 = vmatprep.subr.mxu0 0.0
    %2566 = vmatpush2.msra.mxu0 0.0
    %2567 = vmatprep.subr.mxu0 0.0
    %2568 = vmatpush2.msra.mxu0 0.0
    %2569 = vmatprep.subr.mxu0 0.0
    %2570 = vmatpush2.msra.mxu0 0.0
    %2571 = vmatprep.subr.mxu0 0.0
    %2572 = vmatpush2.msra.mxu0 0.0
    %2573 = vmatprep.subr.mxu0 0.0
    %2574 = vmatpush2.msra.mxu0 0.0
    %2575 = vmatprep.mubr.f32.mxu0 0.0
    %2576 = vmatmul.mubr.f32.gmra.mxu0 %v2509
    %v2577 = vpop.f32.mrf.mxu0
    %v2578 = vadd.f32 0.0, %v2577
    %v2579 = vpop.f32.mrf.mxu0
    %2580 = vdwg.mxu0
    %v2581 = vadd.f32 %v2508, %v2578
    %v2582 = vxor.u32 %v2581, 2147483648
    %v2583 = vmul.f32 %v2582, 1.442695
    %v2584 = vpow.pop %v2583
    %v2585 = vadd.f32 %v2584, 1.0
    %v2586 = vrcp.pop %v2585
    %v2587 = vmul.f32 1.0, %v2586
    %v2588 = vtanh.pop %v2581
    %v2589 = vmul.f32 %v2587, %v2496
    %2591 = vrot.lane.b32.xlu0 %v2588, 64
    %v2592 = vpop.permute.xlu0 %2591
    %v2594 = vmul.f32 %v2587, %v2592
    %2596 = vrot.lane.b32.xlu0 %v2594, 32
    %v2597 = vpop.permute.xlu0 %2596
    %v2599 = vadd.f32 %v2589, %v2597
    %v2600 = vtanh.pop %v2599
    %2602 = vrot.lane.b32.xlu0 %v2600, 64
    %v2603 = vpop.permute.xlu0 %2602
    %v2605 = vmul.f32 %v2587, %v2603
    %2607 = vrot.lane.b32.xlu0 %v2605, 32
    %v2608 = vpop.permute.xlu0 %2607
    %2610 = vst.msk [vmem:[%s628] sm:$0xff] %vm316, %v2608
    %v2611 = vld [vmem:[%s630] sm:$0xff]
    %v2612 = vsel %vm316, %v2608, 0
    %2614 = vmatprep.subr.mxu0 0.0
    %2615 = vmatpush1.msra.mxu0 0.0
    %2616 = vmatprep.subr.mxu0 0.0
    %2617 = vmatpush1.msra.mxu0 0.0
    %2618 = vmatprep.subr.mxu0 0.0
    %2619 = vmatpush1.msra.mxu0 0.0
    %2620 = vmatprep.subr.mxu0 0.0
    %2621 = vmatpush1.msra.mxu0 0.0
    %2622 = vmatprep.subr.mxu0 0.0
    %2623 = vmatpush1.msra.mxu0 0.0
    %2624 = vmatprep.subr.mxu0 0.0
    %2625 = vmatpush1.msra.mxu0 0.0
    %2626 = vmatprep.subr.mxu0 0.0
    %2627 = vmatpush1.msra.mxu0 0.0
    %2628 = vmatprep.subr.mxu0 0.0
    %2629 = vmatpush1.msra.mxu0 0.0
    %2630 = vmatprep.subr.mxu0 0.0
    %2631 = vmatpush1.msra.mxu0 0.0
    %2632 = vmatprep.subr.mxu0 0.0
    %2633 = vmatpush1.msra.mxu0 0.0
    %2634 = vmatprep.subr.mxu0 0.0
    %2635 = vmatpush1.msra.mxu0 0.0
    %2636 = vmatprep.subr.mxu0 0.0
    %2637 = vmatpush1.msra.mxu0 0.0
    %2638 = vmatprep.subr.mxu0 0.0
    %2639 = vmatpush1.msra.mxu0 %v2303
    %2640 = vmatprep.subr.mxu0 0.0
    %2641 = vmatpush1.msra.mxu0 %v2302
    %2642 = vmatprep.subr.mxu0 0.0
    %2643 = vmatpush1.msra.mxu0 %v2301
    %2644 = vmatprep.subr.mxu0 0.0
    %2645 = vmatpush1.msra.mxu0 %v2300
    %2646 = vmatprep.subr.mxu0 0.0
    %2647 = vmatpush2.msra.mxu0 0.0
    %2648 = vmatprep.subr.mxu0 0.0
    %2649 = vmatpush2.msra.mxu0 0.0
    %2650 = vmatprep.subr.mxu0 0.0
    %2651 = vmatpush2.msra.mxu0 0.0
    %2652 = vmatprep.subr.mxu0 0.0
    %2653 = vmatpush2.msra.mxu0 0.0
    %2654 = vmatprep.subr.mxu0 0.0
    %2655 = vmatpush2.msra.mxu0 0.0
    %2656 = vmatprep.subr.mxu0 0.0
    %2657 = vmatpush2.msra.mxu0 0.0
    %2658 = vmatprep.subr.mxu0 0.0
    %2659 = vmatpush2.msra.mxu0 0.0
    %2660 = vmatprep.subr.mxu0 0.0
    %2661 = vmatpush2.msra.mxu0 0.0
    %2662 = vmatprep.subr.mxu0 0.0
    %2663 = vmatpush2.msra.mxu0 0.0
    %2664 = vmatprep.subr.mxu0 0.0
    %2665 = vmatpush2.msra.mxu0 0.0
    %2666 = vmatprep.subr.mxu0 0.0
    %2667 = vmatpush2.msra.mxu0 0.0
    %2668 = vmatprep.subr.mxu0 0.0
    %2669 = vmatpush2.msra.mxu0 0.0
    %2670 = vmatprep.subr.mxu0 0.0
    %2671 = vmatpush2.msra.mxu0 0.0
    %2672 = vmatprep.subr.mxu0 0.0
    %2673 = vmatpush2.msra.mxu0 0.0
    %2674 = vmatprep.subr.mxu0 0.0
    %2675 = vmatpush2.msra.mxu0 0.0
    %2676 = vmatprep.subr.mxu0 0.0
    %2677 = vmatpush2.msra.mxu0 0.0
    %2678 = vmatprep.mubr.f32.mxu0 0.0
    %2679 = vmatmul.mubr.f32.gmra.mxu0 %v2612
    %v2680 = vpop.f32.mrf.mxu0
    %v2681 = vadd.f32 0.0, %v2680
    %v2682 = vpop.f32.mrf.mxu0
    %2683 = vdwg.mxu0
    %v2684 = vadd.f32 %v2611, %v2681
    %v2685 = vxor.u32 %v2684, 2147483648
    %v2686 = vmul.f32 %v2685, 1.442695
    %v2687 = vpow.pop %v2686
    %v2688 = vadd.f32 %v2687, 1.0
    %v2689 = vrcp.pop %v2688
    %v2690 = vmul.f32 1.0, %v2689
    %v2691 = vtanh.pop %v2684
    %v2692 = vmul.f32 %v2690, %v2599
    %2694 = vrot.lane.b32.xlu0 %v2691, 64
    %v2695 = vpop.permute.xlu0 %2694
    %v2697 = vmul.f32 %v2690, %v2695
    %2699 = vrot.lane.b32.xlu0 %v2697, 32
    %v2700 = vpop.permute.xlu0 %2699
    %v2702 = vadd.f32 %v2692, %v2700
    %v2703 = vtanh.pop %v2702
    %2705 = vrot.lane.b32.xlu0 %v2703, 64
    %v2706 = vpop.permute.xlu0 %2705
    %v2708 = vmul.f32 %v2690, %v2706
    %2710 = vrot.lane.b32.xlu0 %v2708, 32
    %v2711 = vpop.permute.xlu0 %2710
    %2713 = vst.msk [vmem:[%s733] sm:$0xff] %vm316, %v2711
    %v2714 = vld [vmem:[%s735] sm:$0xff]
    %v2715 = vsel %vm316, %v2711, 0
    %2717 = vmatprep.subr.mxu0 0.0
    %2718 = vmatpush1.msra.mxu0 0.0
    %2719 = vmatprep.subr.mxu0 0.0
    %2720 = vmatpush1.msra.mxu0 0.0
    %2721 = vmatprep.subr.mxu0 0.0
    %2722 = vmatpush1.msra.mxu0 0.0
    %2723 = vmatprep.subr.mxu0 0.0
    %2724 = vmatpush1.msra.mxu0 0.0
    %2725 = vmatprep.subr.mxu0 0.0
    %2726 = vmatpush1.msra.mxu0 0.0
    %2727 = vmatprep.subr.mxu0 0.0
    %2728 = vmatpush1.msra.mxu0 0.0
    %2729 = vmatprep.subr.mxu0 0.0
    %2730 = vmatpush1.msra.mxu0 0.0
    %2731 = vmatprep.subr.mxu0 0.0
    %2732 = vmatpush1.msra.mxu0 0.0
    %2733 = vmatprep.subr.mxu0 0.0
    %2734 = vmatpush1.msra.mxu0 0.0
    %2735 = vmatprep.subr.mxu0 0.0
    %2736 = vmatpush1.msra.mxu0 0.0
    %2737 = vmatprep.subr.mxu0 0.0
    %2738 = vmatpush1.msra.mxu0 0.0
    %2739 = vmatprep.subr.mxu0 0.0
    %2740 = vmatpush1.msra.mxu0 0.0
    %2741 = vmatprep.subr.mxu0 0.0
    %2742 = vmatpush1.msra.mxu0 %v2303
    %2743 = vmatprep.subr.mxu0 0.0
    %2744 = vmatpush1.msra.mxu0 %v2302
    %2745 = vmatprep.subr.mxu0 0.0
    %2746 = vmatpush1.msra.mxu0 %v2301
    %2747 = vmatprep.subr.mxu0 0.0
    %2748 = vmatpush1.msra.mxu0 %v2300
    %2749 = vmatprep.subr.mxu0 0.0
    %2750 = vmatpush2.msra.mxu0 0.0
    %2751 = vmatprep.subr.mxu0 0.0
    %2752 = vmatpush2.msra.mxu0 0.0
    %2753 = vmatprep.subr.mxu0 0.0
    %2754 = vmatpush2.msra.mxu0 0.0
    %2755 = vmatprep.subr.mxu0 0.0
    %2756 = vmatpush2.msra.mxu0 0.0
    %2757 = vmatprep.subr.mxu0 0.0
    %2758 = vmatpush2.msra.mxu0 0.0
    %2759 = vmatprep.subr.mxu0 0.0
    %2760 = vmatpush2.msra.mxu0 0.0
    %2761 = vmatprep.subr.mxu0 0.0
    %2762 = vmatpush2.msra.mxu0 0.0
    %2763 = vmatprep.subr.mxu0 0.0
    %2764 = vmatpush2.msra.mxu0 0.0
    %2765 = vmatprep.subr.mxu0 0.0
    %2766 = vmatpush2.msra.mxu0 0.0
    %2767 = vmatprep.subr.mxu0 0.0
    %2768 = vmatpush2.msra.mxu0 0.0
    %2769 = vmatprep.subr.mxu0 0.0
    %2770 = vmatpush2.msra.mxu0 0.0
    %2771 = vmatprep.subr.mxu0 0.0
    %2772 = vmatpush2.msra.mxu0 0.0
    %2773 = vmatprep.subr.mxu0 0.0
    %2774 = vmatpush2.msra.mxu0 0.0
    %2775 = vmatprep.subr.mxu0 0.0
    %2776 = vmatpush2.msra.mxu0 0.0
    %2777 = vmatprep.subr.mxu0 0.0
    %2778 = vmatpush2.msra.mxu0 0.0
    %2779 = vmatprep.subr.mxu0 0.0
    %2780 = vmatpush2.msra.mxu0 0.0
    %2781 = vmatprep.mubr.f32.mxu0 0.0
    %2782 = vmatmul.mubr.f32.gmra.mxu0 %v2715
    %v2783 = vpop.f32.mrf.mxu0
    %v2784 = vadd.f32 0.0, %v2783
    %v2785 = vpop.f32.mrf.mxu0
    %2786 = vdwg.mxu0
    %v2787 = vadd.f32 %v2714, %v2784
    %v2788 = vxor.u32 %v2787, 2147483648
    %v2789 = vmul.f32 %v2788, 1.442695
    %v2790 = vpow.pop %v2789
    %v2791 = vadd.f32 %v2790, 1.0
    %v2792 = vrcp.pop %v2791
    %v2793 = vmul.f32 1.0, %v2792
    %v2794 = vtanh.pop %v2787
    %v2795 = vmul.f32 %v2793, %v2702
    %2797 = vrot.lane.b32.xlu0 %v2794, 64
    %v2798 = vpop.permute.xlu0 %2797
    %v2800 = vmul.f32 %v2793, %v2798
    %2802 = vrot.lane.b32.xlu0 %v2800, 32
    %v2803 = vpop.permute.xlu0 %2802
    %v2805 = vadd.f32 %v2795, %v2803
    %v2806 = vtanh.pop %v2805
    %2808 = vrot.lane.b32.xlu0 %v2806, 64
    %v2809 = vpop.permute.xlu0 %2808
    %v2811 = vmul.f32 %v2793, %v2809
    %2813 = vrot.lane.b32.xlu0 %v2811, 32
    %v2814 = vpop.permute.xlu0 %2813
    %2816 = vst.msk [vmem:[%s838] sm:$0xff] %vm316, %v2814
    %v2817 = vld [vmem:[%s840] sm:$0xff]
    %v2818 = vsel %vm316, %v2814, 0
    %2820 = vmatprep.subr.mxu0 0.0
    %2821 = vmatpush1.msra.mxu0 0.0
    %2822 = vmatprep.subr.mxu0 0.0
    %2823 = vmatpush1.msra.mxu0 0.0
    %2824 = vmatprep.subr.mxu0 0.0
    %2825 = vmatpush1.msra.mxu0 0.0
    %2826 = vmatprep.subr.mxu0 0.0
    %2827 = vmatpush1.msra.mxu0 0.0
    %2828 = vmatprep.subr.mxu0 0.0
    %2829 = vmatpush1.msra.mxu0 0.0
    %2830 = vmatprep.subr.mxu0 0.0
    %2831 = vmatpush1.msra.mxu0 0.0
    %2832 = vmatprep.subr.mxu0 0.0
    %2833 = vmatpush1.msra.mxu0 0.0
    %2834 = vmatprep.subr.mxu0 0.0
    %2835 = vmatpush1.msra.mxu0 0.0
    %2836 = vmatprep.subr.mxu0 0.0
    %2837 = vmatpush1.msra.mxu0 0.0
    %2838 = vmatprep.subr.mxu0 0.0
    %2839 = vmatpush1.msra.mxu0 0.0
    %2840 = vmatprep.subr.mxu0 0.0
    %2841 = vmatpush1.msra.mxu0 0.0
    %2842 = vmatprep.subr.mxu0 0.0
    %2843 = vmatpush1.msra.mxu0 0.0
    %2844 = vmatprep.subr.mxu0 0.0
    %2845 = vmatpush1.msra.mxu0 %v2303
    %2846 = vmatprep.subr.mxu0 0.0
    %2847 = vmatpush1.msra.mxu0 %v2302
    %2848 = vmatprep.subr.mxu0 0.0
    %2849 = vmatpush1.msra.mxu0 %v2301
    %2850 = vmatprep.subr.mxu0 0.0
    %2851 = vmatpush1.msra.mxu0 %v2300
    %2852 = vmatprep.subr.mxu0 0.0
    %2853 = vmatpush2.msra.mxu0 0.0
    %2854 = vmatprep.subr.mxu0 0.0
    %2855 = vmatpush2.msra.mxu0 0.0
    %2856 = vmatprep.subr.mxu0 0.0
    %2857 = vmatpush2.msra.mxu0 0.0
    %2858 = vmatprep.subr.mxu0 0.0
    %2859 = vmatpush2.msra.mxu0 0.0
    %2860 = vmatprep.subr.mxu0 0.0
    %2861 = vmatpush2.msra.mxu0 0.0
    %2862 = vmatprep.subr.mxu0 0.0
    %2863 = vmatpush2.msra.mxu0 0.0
    %2864 = vmatprep.subr.mxu0 0.0
    %2865 = vmatpush2.msra.mxu0 0.0
    %2866 = vmatprep.subr.mxu0 0.0
    %2867 = vmatpush2.msra.mxu0 0.0
    %2868 = vmatprep.subr.mxu0 0.0
    %2869 = vmatpush2.msra.mxu0 0.0
    %2870 = vmatprep.subr.mxu0 0.0
    %2871 = vmatpush2.msra.mxu0 0.0
    %2872 = vmatprep.subr.mxu0 0.0
    %2873 = vmatpush2.msra.mxu0 0.0
    %2874 = vmatprep.subr.mxu0 0.0
    %2875 = vmatpush2.msra.mxu0 0.0
    %2876 = vmatprep.subr.mxu0 0.0
    %2877 = vmatpush2.msra.mxu0 0.0
    %2878 = vmatprep.subr.mxu0 0.0
    %2879 = vmatpush2.msra.mxu0 0.0
    %2880 = vmatprep.subr.mxu0 0.0
    %2881 = vmatpush2.msra.mxu0 0.0
    %2882 = vmatprep.subr.mxu0 0.0
    %2883 = vmatpush2.msra.mxu0 0.0
    %2884 = vmatprep.mubr.f32.mxu0 0.0
    %2885 = vmatmul.mubr.f32.gmra.mxu0 %v2818
    %v2886 = vpop.f32.mrf.mxu0
    %v2887 = vadd.f32 0.0, %v2886
    %v2888 = vpop.f32.mrf.mxu0
    %2889 = vdwg.mxu0
    %v2890 = vadd.f32 %v2817, %v2887
    %v2891 = vxor.u32 %v2890, 2147483648
    %v2892 = vmul.f32 %v2891, 1.442695
    %v2893 = vpow.pop %v2892
    %v2894 = vadd.f32 %v2893, 1.0
    %v2895 = vrcp.pop %v2894
    %v2896 = vmul.f32 1.0, %v2895
    %v2897 = vtanh.pop %v2890
    %v2898 = vmul.f32 %v2896, %v2805
    %2900 = vrot.lane.b32.xlu0 %v2897, 64
    %v2901 = vpop.permute.xlu0 %2900
    %v2903 = vmul.f32 %v2896, %v2901
    %2905 = vrot.lane.b32.xlu0 %v2903, 32
    %v2906 = vpop.permute.xlu0 %2905
    %v2908 = vadd.f32 %v2898, %v2906
    %v2909 = vtanh.pop %v2908
    %2911 = vrot.lane.b32.xlu0 %v2909, 64
    %v2912 = vpop.permute.xlu0 %2911
    %v2914 = vmul.f32 %v2896, %v2912
    %2916 = vrot.lane.b32.xlu0 %v2914, 32
    %v2917 = vpop.permute.xlu0 %2916
    %2919 = vst.msk [vmem:[%s943] sm:$0xff] %vm316, %v2917
    %v2920 = vld [vmem:[%s945] sm:$0xff]
    %v2921 = vsel %vm316, %v2917, 0
    %2923 = vmatprep.subr.mxu0 0.0
    %2924 = vmatpush1.msra.mxu0 0.0
    %2925 = vmatprep.subr.mxu0 0.0
    %2926 = vmatpush1.msra.mxu0 0.0
    %2927 = vmatprep.subr.mxu0 0.0
    %2928 = vmatpush1.msra.mxu0 0.0
    %2929 = vmatprep.subr.mxu0 0.0
    %2930 = vmatpush1.msra.mxu0 0.0
    %2931 = vmatprep.subr.mxu0 0.0
    %2932 = vmatpush1.msra.mxu0 0.0
    %2933 = vmatprep.subr.mxu0 0.0
    %2934 = vmatpush1.msra.mxu0 0.0
    %2935 = vmatprep.subr.mxu0 0.0
    %2936 = vmatpush1.msra.mxu0 0.0
    %2937 = vmatprep.subr.mxu0 0.0
    %2938 = vmatpush1.msra.mxu0 0.0
    %2939 = vmatprep.subr.mxu0 0.0
    %2940 = vmatpush1.msra.mxu0 0.0
    %2941 = vmatprep.subr.mxu0 0.0
    %2942 = vmatpush1.msra.mxu0 0.0
    %2943 = vmatprep.subr.mxu0 0.0
    %2944 = vmatpush1.msra.mxu0 0.0
    %2945 = vmatprep.subr.mxu0 0.0
    %2946 = vmatpush1.msra.mxu0 0.0
    %2947 = vmatprep.subr.mxu0 0.0
    %2948 = vmatpush1.msra.mxu0 %v2303
    %2949 = vmatprep.subr.mxu0 0.0
    %2950 = vmatpush1.msra.mxu0 %v2302
    %2951 = vmatprep.subr.mxu0 0.0
    %2952 = vmatpush1.msra.mxu0 %v2301
    %2953 = vmatprep.subr.mxu0 0.0
    %2954 = vmatpush1.msra.mxu0 %v2300
    %2955 = vmatprep.subr.mxu0 0.0
    %2956 = vmatpush2.msra.mxu0 0.0
    %2957 = vmatprep.subr.mxu0 0.0
    %2958 = vmatpush2.msra.mxu0 0.0
    %2959 = vmatprep.subr.mxu0 0.0
    %2960 = vmatpush2.msra.mxu0 0.0
    %2961 = vmatprep.subr.mxu0 0.0
    %2962 = vmatpush2.msra.mxu0 0.0
    %2963 = vmatprep.subr.mxu0 0.0
    %2964 = vmatpush2.msra.mxu0 0.0
    %2965 = vmatprep.subr.mxu0 0.0
    %2966 = vmatpush2.msra.mxu0 0.0
    %2967 = vmatprep.subr.mxu0 0.0
    %2968 = vmatpush2.msra.mxu0 0.0
    %2969 = vmatprep.subr.mxu0 0.0
    %2970 = vmatpush2.msra.mxu0 0.0
    %2971 = vmatprep.subr.mxu0 0.0
    %2972 = vmatpush2.msra.mxu0 0.0
    %2973 = vmatprep.subr.mxu0 0.0
    %2974 = vmatpush2.msra.mxu0 0.0
    %2975 = vmatprep.subr.mxu0 0.0
    %2976 = vmatpush2.msra.mxu0 0.0
    %2977 = vmatprep.subr.mxu0 0.0
    %2978 = vmatpush2.msra.mxu0 0.0
    %2979 = vmatprep.subr.mxu0 0.0
    %2980 = vmatpush2.msra.mxu0 0.0
    %2981 = vmatprep.subr.mxu0 0.0
    %2982 = vmatpush2.msra.mxu0 0.0
    %2983 = vmatprep.subr.mxu0 0.0
    %2984 = vmatpush2.msra.mxu0 0.0
    %2985 = vmatprep.subr.mxu0 0.0
    %2986 = vmatpush2.msra.mxu0 0.0
    %2987 = vmatprep.mubr.f32.mxu0 0.0
    %2988 = vmatmul.mubr.f32.gmra.mxu0 %v2921
    %v2989 = vpop.f32.mrf.mxu0
    %v2990 = vadd.f32 0.0, %v2989
    %v2991 = vpop.f32.mrf.mxu0
    %2992 = vdwg.mxu0
    %v2993 = vadd.f32 %v2920, %v2990
    %v2994 = vxor.u32 %v2993, 2147483648
    %v2995 = vmul.f32 %v2994, 1.442695
    %v2996 = vpow.pop %v2995
    %v2997 = vadd.f32 %v2996, 1.0
    %v2998 = vrcp.pop %v2997
    %v2999 = vmul.f32 1.0, %v2998
    %v3000 = vtanh.pop %v2993
    %v3001 = vmul.f32 %v2999, %v2908
    %3003 = vrot.lane.b32.xlu0 %v3000, 64
    %v3004 = vpop.permute.xlu0 %3003
    %v3006 = vmul.f32 %v2999, %v3004
    %3008 = vrot.lane.b32.xlu0 %v3006, 32
    %v3009 = vpop.permute.xlu0 %3008
    %v3011 = vadd.f32 %v3001, %v3009
    %v3012 = vtanh.pop %v3011
    %3014 = vrot.lane.b32.xlu0 %v3012, 64
    %v3015 = vpop.permute.xlu0 %3014
    %v3017 = vmul.f32 %v2999, %v3015
    %3019 = vrot.lane.b32.xlu0 %v3017, 32
    %v3020 = vpop.permute.xlu0 %3019
    %3022 = vst.msk [vmem:[%s1048] sm:$0xff] %vm316, %v3020
    %v3023 = vld [vmem:[%s1050] sm:$0xff]
    %v3024 = vsel %vm316, %v3020, 0
    %3026 = vmatprep.subr.mxu0 0.0
    %3027 = vmatpush1.msra.mxu0 0.0
    %3028 = vmatprep.subr.mxu0 0.0
    %3029 = vmatpush1.msra.mxu0 0.0
    %3030 = vmatprep.subr.mxu0 0.0
    %3031 = vmatpush1.msra.mxu0 0.0
    %3032 = vmatprep.subr.mxu0 0.0
    %3033 = vmatpush1.msra.mxu0 0.0
    %3034 = vmatprep.subr.mxu0 0.0
    %3035 = vmatpush1.msra.mxu0 0.0
    %3036 = vmatprep.subr.mxu0 0.0
    %3037 = vmatpush1.msra.mxu0 0.0
    %3038 = vmatprep.subr.mxu0 0.0
    %3039 = vmatpush1.msra.mxu0 0.0
    %3040 = vmatprep.subr.mxu0 0.0
    %3041 = vmatpush1.msra.mxu0 0.0
    %3042 = vmatprep.subr.mxu0 0.0
    %3043 = vmatpush1.msra.mxu0 0.0
    %3044 = vmatprep.subr.mxu0 0.0
    %3045 = vmatpush1.msra.mxu0 0.0
    %3046 = vmatprep.subr.mxu0 0.0
    %3047 = vmatpush1.msra.mxu0 0.0
    %3048 = vmatprep.subr.mxu0 0.0
    %3049 = vmatpush1.msra.mxu0 0.0
    %3050 = vmatprep.subr.mxu0 0.0
    %3051 = vmatpush1.msra.mxu0 %v2303
    %3052 = vmatprep.subr.mxu0 0.0
    %3053 = vmatpush1.msra.mxu0 %v2302
    %3054 = vmatprep.subr.mxu0 0.0
    %3055 = vmatpush1.msra.mxu0 %v2301
    %3056 = vmatprep.subr.mxu0 0.0
    %3057 = vmatpush1.msra.mxu0 %v2300
    %3058 = vmatprep.subr.mxu0 0.0
    %3059 = vmatpush2.msra.mxu0 0.0
    %3060 = vmatprep.subr.mxu0 0.0
    %3061 = vmatpush2.msra.mxu0 0.0
    %3062 = vmatprep.subr.mxu0 0.0
    %3063 = vmatpush2.msra.mxu0 0.0
    %3064 = vmatprep.subr.mxu0 0.0
    %3065 = vmatpush2.msra.mxu0 0.0
    %3066 = vmatprep.subr.mxu0 0.0
    %3067 = vmatpush2.msra.mxu0 0.0
    %3068 = vmatprep.subr.mxu0 0.0
    %3069 = vmatpush2.msra.mxu0 0.0
    %3070 = vmatprep.subr.mxu0 0.0
    %3071 = vmatpush2.msra.mxu0 0.0
    %3072 = vmatprep.subr.mxu0 0.0
    %3073 = vmatpush2.msra.mxu0 0.0
    %3074 = vmatprep.subr.mxu0 0.0
    %3075 = vmatpush2.msra.mxu0 0.0
    %3076 = vmatprep.subr.mxu0 0.0
    %3077 = vmatpush2.msra.mxu0 0.0
    %3078 = vmatprep.subr.mxu0 0.0
    %3079 = vmatpush2.msra.mxu0 0.0
    %3080 = vmatprep.subr.mxu0 0.0
    %3081 = vmatpush2.msra.mxu0 0.0
    %3082 = vmatprep.subr.mxu0 0.0
    %3083 = vmatpush2.msra.mxu0 0.0
    %3084 = vmatprep.subr.mxu0 0.0
    %3085 = vmatpush2.msra.mxu0 0.0
    %3086 = vmatprep.subr.mxu0 0.0
    %3087 = vmatpush2.msra.mxu0 0.0
    %3088 = vmatprep.subr.mxu0 0.0
    %3089 = vmatpush2.msra.mxu0 0.0
    %3090 = vmatprep.mubr.f32.mxu0 0.0
    %3091 = vmatmul.mubr.f32.gmra.mxu0 %v3024
    %v3092 = vpop.f32.mrf.mxu0
    %v3093 = vadd.f32 0.0, %v3092
    %v3094 = vpop.f32.mrf.mxu0
    %3095 = vdwg.mxu0
    %v3096 = vadd.f32 %v3023, %v3093
    %v3097 = vxor.u32 %v3096, 2147483648
    %v3098 = vmul.f32 %v3097, 1.442695
    %v3099 = vpow.pop %v3098
    %v3100 = vadd.f32 %v3099, 1.0
    %v3101 = vrcp.pop %v3100
    %v3102 = vmul.f32 1.0, %v3101
    %v3103 = vtanh.pop %v3096
    %v3104 = vmul.f32 %v3102, %v3011
    %3106 = vrot.lane.b32.xlu0 %v3103, 64
    %v3107 = vpop.permute.xlu0 %3106
    %v3109 = vmul.f32 %v3102, %v3107
    %3111 = vrot.lane.b32.xlu0 %v3109, 32
    %v3112 = vpop.permute.xlu0 %3111
    %v3114 = vadd.f32 %v3104, %v3112
    %v3115 = vtanh.pop %v3114
    %3117 = vrot.lane.b32.xlu0 %v3115, 64
    %v3118 = vpop.permute.xlu0 %3117
    %v3120 = vmul.f32 %v3102, %v3118
    %3122 = vrot.lane.b32.xlu0 %v3120, 32
    %v3123 = vpop.permute.xlu0 %3122
    %3125 = vst.msk [vmem:[%s1153] sm:$0xff] %vm316, %v3123
    %v3126 = vld [vmem:[#allocation3] sm:$0xff]
    %v3127 = vld [vmem:[#allocation3 + $0x8] sm:$0xff]
    %v3128 = vld [vmem:[#allocation3 + $0x10] sm:$0xff]
    %v3129 = vld [vmem:[#allocation3 + $0x18] sm:$0xff]
    %v3130 = vld [vmem:[#allocation3 + $0x20] sm:$0xff]
    %v3131 = vld [vmem:[#allocation3 + $0x28] sm:$0xff]
    %v3132 = vld [vmem:[#allocation3 + $0x30] sm:$0xff]
    %v3133 = vld [vmem:[#allocation3 + $0x38] sm:$0xff]
    %v3134 = vpack.c.bf16 %v3127, %v3126
    %v3135 = vpack.c.bf16 %v3129, %v3128
    %v3136 = vpack.c.bf16 %v3131, %v3130
    %v3137 = vpack.c.bf16 %v3133, %v3132
    %v3138 = vld [vmem:[%s10] sm:$0xff]
    %v3139 = vld [vmem:[%s10 + $0x8] sm:$0xff]
    %v3140 = vld [vmem:[%s10 + $0x10] sm:$0xff]
    %v3141 = vld [vmem:[%s10 + $0x18] sm:$0xff]
    %v3142 = vld [vmem:[%s10 + $0x20] sm:$0xff]
    %v3143 = vld [vmem:[%s10 + $0x28] sm:$0xff]
    %v3144 = vld [vmem:[%s10 + $0x30] sm:$0xff]
    %v3145 = vld [vmem:[%s10 + $0x38] sm:$0xff]
    %v3146 = vld [vmem:[#allocation15] sm:$0xf]
    %v3148 = vlaneseq
    %v3149 = vshrl.u32 %v3148, 7
    %v3150 = vsub.s32 0, %v3149
    %v3151 = vrot.slane %v3146, %v3150
    %v3152 = vlaneseq
    %v3153 = vshrl.u32 %v3152, 7
    %v3154 = vsub.s32 1, %v3153
    %v3155 = vrot.slane %v3146, %v3154
    %v3156 = vlaneseq
    %v3157 = vshrl.u32 %v3156, 7
    %v3158 = vsub.s32 2, %v3157
    %v3159 = vrot.slane %v3146, %v3158
    %v3160 = vlaneseq
    %v3161 = vshrl.u32 %v3160, 7
    %v3162 = vsub.s32 3, %v3161
    %v3163 = vrot.slane %v3146, %v3162
    %v3176 = vunpack.c.l.b16 %v3138
    %v3177 = vunpack.c.h.b16 %v3138
    %v3178 = vunpack.c.l.b16 %v3139
    %v3179 = vunpack.c.h.b16 %v3139
    %v3180 = vunpack.c.l.b16 %v3140
    %v3181 = vunpack.c.h.b16 %v3140
    %v3182 = vunpack.c.l.b16 %v3141
    %v3183 = vunpack.c.h.b16 %v3141
    %v3184 = vunpack.c.l.b16 %v3142
    %v3185 = vunpack.c.h.b16 %v3142
    %v3186 = vunpack.c.l.b16 %v3143
    %v3187 = vunpack.c.h.b16 %v3143
    %v3188 = vunpack.c.l.b16 %v3144
    %v3189 = vunpack.c.h.b16 %v3144
    %v3190 = vunpack.c.l.b16 %v3145
    %v3191 = vunpack.c.h.b16 %v3145
    %v3192 = vpack.c.b16 %v3180, %v3176
    %v3193 = vpack.c.b16 %v3181, %v3177
    %v3194 = vpack.c.b16 %v3182, %v3178
    %v3195 = vpack.c.b16 %v3183, %v3179
    %v3196 = vpack.c.b16 %v3188, %v3184
    %v3197 = vpack.c.b16 %v3189, %v3185
    %v3198 = vpack.c.b16 %v3190, %v3186
    %v3199 = vpack.c.b16 %v3191, %v3187
    %v3209 = vsel %vm316, %v3134, 0
    %v3212 = vsel %vm316, %v3135, 0
    %v3215 = vsel %vm316, %v3136, 0
    %v3218 = vsel %vm316, %v3137, 0
    %3220 = vmatprep.subr.bf16.mxu0 0
    %3221 = vmatpush1.bf16.msra.mxu0 0
    %3222 = vmatprep.subr.bf16.mxu0 0
    %3223 = vmatpush1.bf16.msra.mxu0 0
    %3224 = vmatprep.subr.bf16.mxu0 0
    %3225 = vmatpush1.bf16.msra.mxu0 0
    %3226 = vmatprep.subr.bf16.mxu0 0
    %3227 = vmatpush1.bf16.msra.mxu0 0
    %3228 = vmatprep.subr.bf16.mxu0 0
    %3229 = vmatpush1.bf16.msra.mxu0 0
    %3230 = vmatprep.subr.bf16.mxu0 0
    %3231 = vmatpush1.bf16.msra.mxu0 0
    %3232 = vmatprep.subr.bf16.mxu0 %v3197
    %3233 = vmatpush1.bf16.msra.mxu0 %v3196
    %3234 = vmatprep.subr.bf16.mxu0 %v3193
    %3235 = vmatpush1.bf16.msra.mxu0 %v3192
    %3236 = vmatprep.subr.bf16.mxu0 0
    %3237 = vmatpush2.bf16.msra.mxu0 0
    %3238 = vmatprep.subr.bf16.mxu0 0
    %3239 = vmatpush2.bf16.msra.mxu0 0
    %3240 = vmatprep.subr.bf16.mxu0 0
    %3241 = vmatpush2.bf16.msra.mxu0 0
    %3242 = vmatprep.subr.bf16.mxu0 0
    %3243 = vmatpush2.bf16.msra.mxu0 0
    %3244 = vmatprep.subr.bf16.mxu0 0
    %3245 = vmatpush2.bf16.msra.mxu0 0
    %3246 = vmatprep.subr.bf16.mxu0 0
    %3247 = vmatpush2.bf16.msra.mxu0 0
    %3248 = vmatprep.subr.bf16.mxu0 0
    %3249 = vmatpush2.bf16.msra.mxu0 0
    %3250 = vmatprep.subr.bf16.mxu0 0
    %3251 = vmatpush2.bf16.msra.mxu0 0
    %3252 = vmatprep.mubr.bf16.mxu0 0
    %3253 = vmatmul.mubr.bf16.gmra.mxu0 %v3209
    %v3254 = vpop.f32.mrf.mxu0
    %v3255 = vadd.f32 %v3151, %v3254
    %v3256 = vpop.f32.mrf.mxu0
    %v3257 = vadd.f32 %v3155, %v3256
    %v3258 = vpop.f32.mrf.mxu0
    %v3259 = vadd.f32 %v3151, %v3258
    %v3260 = vpop.f32.mrf.mxu0
    %v3261 = vadd.f32 %v3155, %v3260
    %3262 = vmatprep.mubr.bf16.mxu0 0
    %3263 = vmatmul.mubr.bf16.gmra.mxu0 %v3212
    %v3264 = vpop.f32.mrf.mxu0
    %v3265 = vadd.f32 %v3151, %v3264
    %v3266 = vpop.f32.mrf.mxu0
    %v3267 = vadd.f32 %v3155, %v3266
    %v3268 = vpop.f32.mrf.mxu0
    %v3269 = vadd.f32 %v3151, %v3268
    %v3270 = vpop.f32.mrf.mxu0
    %v3271 = vadd.f32 %v3155, %v3270
    %3272 = vmatprep.mubr.bf16.mxu0 0
    %3273 = vmatmul.mubr.bf16.gmra.mxu0 %v3215
    %v3274 = vpop.f32.mrf.mxu0
    %v3275 = vadd.f32 %v3151, %v3274
    %v3276 = vpop.f32.mrf.mxu0
    %v3277 = vadd.f32 %v3155, %v3276
    %v3278 = vpop.f32.mrf.mxu0
    %v3279 = vadd.f32 %v3151, %v3278
    %v3280 = vpop.f32.mrf.mxu0
    %v3281 = vadd.f32 %v3155, %v3280
    %3282 = vmatprep.mubr.bf16.mxu0 0
    %3283 = vmatmul.mubr.bf16.gmra.mxu0 %v3218
    %v3284 = vpop.f32.mrf.mxu0
    %v3285 = vadd.f32 %v3151, %v3284
    %v3286 = vpop.f32.mrf.mxu0
    %v3287 = vadd.f32 %v3155, %v3286
    %v3288 = vpop.f32.mrf.mxu0
    %v3289 = vadd.f32 %v3151, %v3288
    %v3290 = vpop.f32.mrf.mxu0
    %v3291 = vadd.f32 %v3155, %v3290
    %3292 = vdwg.mxu0
    %3293 = vmatprep.subr.bf16.mxu0 0
    %3294 = vmatpush1.bf16.msra.mxu0 0
    %3295 = vmatprep.subr.bf16.mxu0 0
    %3296 = vmatpush1.bf16.msra.mxu0 0
    %3297 = vmatprep.subr.bf16.mxu0 0
    %3298 = vmatpush1.bf16.msra.mxu0 0
    %3299 = vmatprep.subr.bf16.mxu0 0
    %3300 = vmatpush1.bf16.msra.mxu0 0
    %3301 = vmatprep.subr.bf16.mxu0 0
    %3302 = vmatpush1.bf16.msra.mxu0 0
    %3303 = vmatprep.subr.bf16.mxu0 0
    %3304 = vmatpush1.bf16.msra.mxu0 0
    %3305 = vmatprep.subr.bf16.mxu0 %v3199
    %3306 = vmatpush1.bf16.msra.mxu0 %v3198
    %3307 = vmatprep.subr.bf16.mxu0 %v3195
    %3308 = vmatpush1.bf16.msra.mxu0 %v3194
    %3309 = vmatprep.subr.bf16.mxu0 0
    %3310 = vmatpush2.bf16.msra.mxu0 0
    %3311 = vmatprep.subr.bf16.mxu0 0
    %3312 = vmatpush2.bf16.msra.mxu0 0
    %3313 = vmatprep.subr.bf16.mxu0 0
    %3314 = vmatpush2.bf16.msra.mxu0 0
    %3315 = vmatprep.subr.bf16.mxu0 0
    %3316 = vmatpush2.bf16.msra.mxu0 0
    %3317 = vmatprep.subr.bf16.mxu0 0
    %3318 = vmatpush2.bf16.msra.mxu0 0
    %3319 = vmatprep.subr.bf16.mxu0 0
    %3320 = vmatpush2.bf16.msra.mxu0 0
    %3321 = vmatprep.subr.bf16.mxu0 0
    %3322 = vmatpush2.bf16.msra.mxu0 0
    %3323 = vmatprep.subr.bf16.mxu0 0
    %3324 = vmatpush2.bf16.msra.mxu0 0
    %3325 = vmatprep.mubr.bf16.mxu0 0
    %3326 = vmatmul.mubr.bf16.gmra.mxu0 %v3209
    %v3327 = vpop.f32.mrf.mxu0
    %v3328 = vadd.f32 %v3159, %v3327
    %v3329 = vpop.f32.mrf.mxu0
    %v3330 = vadd.f32 %v3163, %v3329
    %v3331 = vpop.f32.mrf.mxu0
    %v3332 = vadd.f32 %v3159, %v3331
    %v3333 = vpop.f32.mrf.mxu0
    %v3334 = vadd.f32 %v3163, %v3333
    %3335 = vmatprep.mubr.bf16.mxu0 0
    %3336 = vmatmul.mubr.bf16.gmra.mxu0 %v3212
    %v3337 = vpop.f32.mrf.mxu0
    %v3338 = vadd.f32 %v3159, %v3337
    %v3339 = vpop.f32.mrf.mxu0
    %v3340 = vadd.f32 %v3163, %v3339
    %v3341 = vpop.f32.mrf.mxu0
    %v3342 = vadd.f32 %v3159, %v3341
    %v3343 = vpop.f32.mrf.mxu0
    %v3344 = vadd.f32 %v3163, %v3343
    %3345 = vmatprep.mubr.bf16.mxu0 0
    %3346 = vmatmul.mubr.bf16.gmra.mxu0 %v3215
    %v3347 = vpop.f32.mrf.mxu0
    %v3348 = vadd.f32 %v3159, %v3347
    %v3349 = vpop.f32.mrf.mxu0
    %v3350 = vadd.f32 %v3163, %v3349
    %v3351 = vpop.f32.mrf.mxu0
    %v3352 = vadd.f32 %v3159, %v3351
    %v3353 = vpop.f32.mrf.mxu0
    %v3354 = vadd.f32 %v3163, %v3353
    %3355 = vmatprep.mubr.bf16.mxu0 0
    %3356 = vmatmul.mubr.bf16.gmra.mxu0 %v3218
    %v3357 = vpop.f32.mrf.mxu0
    %v3358 = vadd.f32 %v3159, %v3357
    %v3359 = vpop.f32.mrf.mxu0
    %v3360 = vadd.f32 %v3163, %v3359
    %v3361 = vpop.f32.mrf.mxu0
    %v3362 = vadd.f32 %v3159, %v3361
    %v3363 = vpop.f32.mrf.mxu0
    %v3364 = vadd.f32 %v3163, %v3363
    %3365 = vdwg.mxu0
    %v3366 = vmax.f32 %v3255, 0.0
    %v3367 = vmax.f32 %v3257, 0.0
    %v3368 = vmax.f32 %v3328, 0.0
    %v3369 = vmax.f32 %v3330, 0.0
    %v3370 = vmax.f32 %v3259, 0.0
    %v3371 = vmax.f32 %v3261, 0.0
    %v3372 = vmax.f32 %v3332, 0.0
    %v3373 = vmax.f32 %v3334, 0.0
    %v3374 = vmax.f32 %v3265, 0.0
    %v3375 = vmax.f32 %v3267, 0.0
    %v3376 = vmax.f32 %v3338, 0.0
    %v3377 = vmax.f32 %v3340, 0.0
    %v3378 = vmax.f32 %v3269, 0.0
    %v3379 = vmax.f32 %v3271, 0.0
    %v3380 = vmax.f32 %v3342, 0.0
    %v3381 = vmax.f32 %v3344, 0.0
    %v3382 = vmax.f32 %v3275, 0.0
    %v3383 = vmax.f32 %v3277, 0.0
    %v3384 = vmax.f32 %v3348, 0.0
    %v3385 = vmax.f32 %v3350, 0.0
    %v3386 = vmax.f32 %v3279, 0.0
    %v3387 = vmax.f32 %v3281, 0.0
    %v3388 = vmax.f32 %v3352, 0.0
    %v3389 = vmax.f32 %v3354, 0.0
    %v3390 = vmax.f32 %v3285, 0.0
    %v3391 = vmax.f32 %v3287, 0.0
    %v3392 = vmax.f32 %v3358, 0.0
    %v3393 = vmax.f32 %v3360, 0.0
    %v3394 = vmax.f32 %v3289, 0.0
    %v3395 = vmax.f32 %v3291, 0.0
    %v3396 = vmax.f32 %v3362, 0.0
    %v3397 = vmax.f32 %v3364, 0.0
    %s3398 = smul.u32 4, 64
    %s3399 = smul.u32 %s3398, 8
    %s3400 = sshll.u32 %s3399, 4
    %3401 = dma.done [#allocation7], %s3400
    %s3402 = smul.u32 4, 128
    %s3403 = smul.u32 %s3402, 1
    %s3404 = sshll.u32 %s3403, 4
    %3405 = dma.done %s139, %s3404
    %v3406 = vpack.c.bf16 %v3370, %v3366
    %v3407 = vpack.c.bf16 %v3371, %v3367
    %v3408 = vpack.c.bf16 %v3372, %v3368
    %v3409 = vpack.c.bf16 %v3373, %v3369
    %v3410 = vpack.c.bf16 %v3378, %v3374
    %v3411 = vpack.c.bf16 %v3379, %v3375
    %v3412 = vpack.c.bf16 %v3380, %v3376
    %v3413 = vpack.c.bf16 %v3381, %v3377
    %v3414 = vpack.c.bf16 %v3386, %v3382
    %v3415 = vpack.c.bf16 %v3387, %v3383
    %v3416 = vpack.c.bf16 %v3388, %v3384
    %v3417 = vpack.c.bf16 %v3389, %v3385
    %v3418 = vpack.c.bf16 %v3394, %v3390
    %v3419 = vpack.c.bf16 %v3395, %v3391
    %v3420 = vpack.c.bf16 %v3396, %v3392
    %v3421 = vpack.c.bf16 %v3397, %v3393
    %v3422 = vld [vmem:[#allocation5] sm:$0xff]
    %v3423 = vld [vmem:[#allocation5 + $0x8] sm:$0xff]
    %v3424 = vld [vmem:[#allocation5 + $0x10] sm:$0xff]
    %v3425 = vld [vmem:[#allocation5 + $0x18] sm:$0xff]
    %v3426 = vld [vmem:[#allocation5 + $0x20] sm:$0xff]
    %v3427 = vld [vmem:[#allocation5 + $0x28] sm:$0xff]
    %v3428 = vld [vmem:[#allocation5 + $0x30] sm:$0xff]
    %v3429 = vld [vmem:[#allocation5 + $0x38] sm:$0xff]
    %v3430 = vld [vmem:[#allocation5 + $0x40] sm:$0xff]
    %v3431 = vld [vmem:[#allocation5 + $0x48] sm:$0xff]
    %v3432 = vld [vmem:[#allocation5 + $0x50] sm:$0xff]
    %v3433 = vld [vmem:[#allocation5 + $0x58] sm:$0xff]
    %v3434 = vld [vmem:[#allocation5 + $0x60] sm:$0xff]
    %v3435 = vld [vmem:[#allocation5 + $0x68] sm:$0xff]
    %v3436 = vld [vmem:[#allocation5 + $0x70] sm:$0xff]
    %v3437 = vld [vmem:[#allocation5 + $0x78] sm:$0xff]
    %v3438 = vld [vmem:[#allocation5 + $0x80] sm:$0xff]
    %v3439 = vld [vmem:[#allocation5 + $0x88] sm:$0xff]
    %v3440 = vld [vmem:[#allocation5 + $0x90] sm:$0xff]
    %v3441 = vld [vmem:[#allocation5 + $0x98] sm:$0xff]
    %v3442 = vld [vmem:[#allocation5 + $0xa0] sm:$0xff]
    %v3443 = vld [vmem:[#allocation5 + $0xa8] sm:$0xff]
    %v3444 = vld [vmem:[#allocation5 + $0xb0] sm:$0xff]
    %v3445 = vld [vmem:[#allocation5 + $0xb8] sm:$0xff]
    %v3446 = vld [vmem:[#allocation5 + $0xc0] sm:$0xff]
    %v3447 = vld [vmem:[#allocation5 + $0xc8] sm:$0xff]
    %v3448 = vld [vmem:[#allocation5 + $0xd0] sm:$0xff]
    %v3449 = vld [vmem:[#allocation5 + $0xd8] sm:$0xff]
    %v3450 = vld [vmem:[#allocation5 + $0xe0] sm:$0xff]
    %v3451 = vld [vmem:[#allocation5 + $0xe8] sm:$0xff]
    %v3452 = vld [vmem:[#allocation5 + $0xf0] sm:$0xff]
    %v3453 = vld [vmem:[#allocation5 + $0xf8] sm:$0xff]
    %v3454 = vld [vmem:[#allocation5 + $0x100] sm:$0xff]
    %v3455 = vld [vmem:[#allocation5 + $0x108] sm:$0xff]
    %v3456 = vld [vmem:[#allocation5 + $0x110] sm:$0xff]
    %v3457 = vld [vmem:[#allocation5 + $0x118] sm:$0xff]
    %v3458 = vld [vmem:[#allocation5 + $0x120] sm:$0xff]
    %v3459 = vld [vmem:[#allocation5 + $0x128] sm:$0xff]
    %v3460 = vld [vmem:[#allocation5 + $0x130] sm:$0xff]
    %v3461 = vld [vmem:[#allocation5 + $0x138] sm:$0xff]
    %v3462 = vld [vmem:[#allocation5 + $0x140] sm:$0xff]
    %v3463 = vld [vmem:[#allocation5 + $0x148] sm:$0xff]
    %v3464 = vld [vmem:[#allocation5 + $0x150] sm:$0xff]
    %v3465 = vld [vmem:[#allocation5 + $0x158] sm:$0xff]
    %v3466 = vld [vmem:[#allocation5 + $0x160] sm:$0xff]
    %v3467 = vld [vmem:[#allocation5 + $0x168] sm:$0xff]
    %v3468 = vld [vmem:[#allocation5 + $0x170] sm:$0xff]
    %v3469 = vld [vmem:[#allocation5 + $0x178] sm:$0xff]
    %v3470 = vld [vmem:[#allocation5 + $0x180] sm:$0xff]
    %v3471 = vld [vmem:[#allocation5 + $0x188] sm:$0xff]
    %v3472 = vld [vmem:[#allocation5 + $0x190] sm:$0xff]
    %v3473 = vld [vmem:[#allocation5 + $0x198] sm:$0xff]
    %v3474 = vld [vmem:[#allocation5 + $0x1a0] sm:$0xff]
    %v3475 = vld [vmem:[#allocation5 + $0x1a8] sm:$0xff]
    %v3476 = vld [vmem:[#allocation5 + $0x1b0] sm:$0xff]
    %v3477 = vld [vmem:[#allocation5 + $0x1b8] sm:$0xff]
    %v3478 = vld [vmem:[#allocation5 + $0x1c0] sm:$0xff]
    %v3479 = vld [vmem:[#allocation5 + $0x1c8] sm:$0xff]
    %v3480 = vld [vmem:[#allocation5 + $0x1d0] sm:$0xff]
    %v3481 = vld [vmem:[#allocation5 + $0x1d8] sm:$0xff]
    %v3482 = vld [vmem:[#allocation5 + $0x1e0] sm:$0xff]
    %v3483 = vld [vmem:[#allocation5 + $0x1e8] sm:$0xff]
    %v3484 = vld [vmem:[#allocation5 + $0x1f0] sm:$0xff]
    %v3485 = vld [vmem:[#allocation5 + $0x1f8] sm:$0xff]
    %v3486 = vld [vmem:[#allocation5 + $0x200] sm:$0xff]
    %v3487 = vld [vmem:[#allocation5 + $0x208] sm:$0xff]
    %v3488 = vld [vmem:[#allocation5 + $0x210] sm:$0xff]
    %v3489 = vld [vmem:[#allocation5 + $0x218] sm:$0xff]
    %v3490 = vld [vmem:[#allocation5 + $0x220] sm:$0xff]
    %v3491 = vld [vmem:[#allocation5 + $0x228] sm:$0xff]
    %v3492 = vld [vmem:[#allocation5 + $0x230] sm:$0xff]
    %v3493 = vld [vmem:[#allocation5 + $0x238] sm:$0xff]
    %v3494 = vld [vmem:[#allocation5 + $0x240] sm:$0xff]
    %v3495 = vld [vmem:[#allocation5 + $0x248] sm:$0xff]
    %v3496 = vld [vmem:[#allocation5 + $0x250] sm:$0xff]
    %v3497 = vld [vmem:[#allocation5 + $0x258] sm:$0xff]
    %v3498 = vld [vmem:[#allocation5 + $0x260] sm:$0xff]
    %v3499 = vld [vmem:[#allocation5 + $0x268] sm:$0xff]
    %v3500 = vld [vmem:[#allocation5 + $0x270] sm:$0xff]
    %v3501 = vld [vmem:[#allocation5 + $0x278] sm:$0xff]
    %v3502 = vld [vmem:[#allocation5 + $0x280] sm:$0xff]
    %v3503 = vld [vmem:[#allocation5 + $0x288] sm:$0xff]
    %v3504 = vld [vmem:[#allocation5 + $0x290] sm:$0xff]
    %v3505 = vld [vmem:[#allocation5 + $0x298] sm:$0xff]
    %v3506 = vld [vmem:[#allocation5 + $0x2a0] sm:$0xff]
    %v3507 = vld [vmem:[#allocation5 + $0x2a8] sm:$0xff]
    %v3508 = vld [vmem:[#allocation5 + $0x2b0] sm:$0xff]
    %v3509 = vld [vmem:[#allocation5 + $0x2b8] sm:$0xff]
    %v3510 = vld [vmem:[#allocation5 + $0x2c0] sm:$0xff]
    %v3511 = vld [vmem:[#allocation5 + $0x2c8] sm:$0xff]
    %v3512 = vld [vmem:[#allocation5 + $0x2d0] sm:$0xff]
    %v3513 = vld [vmem:[#allocation5 + $0x2d8] sm:$0xff]
    %v3514 = vld [vmem:[#allocation5 + $0x2e0] sm:$0xff]
    %v3515 = vld [vmem:[#allocation5 + $0x2e8] sm:$0xff]
    %v3516 = vld [vmem:[#allocation5 + $0x2f0] sm:$0xff]
    %v3517 = vld [vmem:[#allocation5 + $0x2f8] sm:$0xff]
    %v3518 = vld [vmem:[#allocation5 + $0x300] sm:$0xff]
    %v3519 = vld [vmem:[#allocation5 + $0x308] sm:$0xff]
    %v3520 = vld [vmem:[#allocation5 + $0x310] sm:$0xff]
    %v3521 = vld [vmem:[#allocation5 + $0x318] sm:$0xff]
    %v3522 = vld [vmem:[#allocation5 + $0x320] sm:$0xff]
    %v3523 = vld [vmem:[#allocation5 + $0x328] sm:$0xff]
    %v3524 = vld [vmem:[#allocation5 + $0x330] sm:$0xff]
    %v3525 = vld [vmem:[#allocation5 + $0x338] sm:$0xff]
    %v3526 = vld [vmem:[#allocation5 + $0x340] sm:$0xff]
    %v3527 = vld [vmem:[#allocation5 + $0x348] sm:$0xff]
    %v3528 = vld [vmem:[#allocation5 + $0x350] sm:$0xff]
    %v3529 = vld [vmem:[#allocation5 + $0x358] sm:$0xff]
    %v3530 = vld [vmem:[#allocation5 + $0x360] sm:$0xff]
    %v3531 = vld [vmem:[#allocation5 + $0x368] sm:$0xff]
    %v3532 = vld [vmem:[#allocation5 + $0x370] sm:$0xff]
    %v3533 = vld [vmem:[#allocation5 + $0x378] sm:$0xff]
    %v3534 = vld [vmem:[#allocation5 + $0x380] sm:$0xff]
    %v3535 = vld [vmem:[#allocation5 + $0x388] sm:$0xff]
    %v3536 = vld [vmem:[#allocation5 + $0x390] sm:$0xff]
    %v3537 = vld [vmem:[#allocation5 + $0x398] sm:$0xff]
    %v3538 = vld [vmem:[#allocation5 + $0x3a0] sm:$0xff]
    %v3539 = vld [vmem:[#allocation5 + $0x3a8] sm:$0xff]
    %v3540 = vld [vmem:[#allocation5 + $0x3b0] sm:$0xff]
    %v3541 = vld [vmem:[#allocation5 + $0x3b8] sm:$0xff]
    %v3542 = vld [vmem:[#allocation5 + $0x3c0] sm:$0xff]
    %v3543 = vld [vmem:[#allocation5 + $0x3c8] sm:$0xff]
    %v3544 = vld [vmem:[#allocation5 + $0x3d0] sm:$0xff]
    %v3545 = vld [vmem:[#allocation5 + $0x3d8] sm:$0xff]
    %v3546 = vld [vmem:[#allocation5 + $0x3e0] sm:$0xff]
    %v3547 = vld [vmem:[#allocation5 + $0x3e8] sm:$0xff]
    %v3548 = vld [vmem:[#allocation5 + $0x3f0] sm:$0xff]
    %v3549 = vld [vmem:[#allocation5 + $0x3f8] sm:$0xff]
    %v3550 = vld [vmem:[#allocation5 + $0x400] sm:$0xff]
    %v3551 = vld [vmem:[#allocation5 + $0x408] sm:$0xff]
    %v3552 = vld [vmem:[#allocation5 + $0x410] sm:$0xff]
    %v3553 = vld [vmem:[#allocation5 + $0x418] sm:$0xff]
    %v3554 = vld [vmem:[#allocation5 + $0x420] sm:$0xff]
    %v3555 = vld [vmem:[#allocation5 + $0x428] sm:$0xff]
    %v3556 = vld [vmem:[#allocation5 + $0x430] sm:$0xff]
    %v3557 = vld [vmem:[#allocation5 + $0x438] sm:$0xff]
    %v3558 = vld [vmem:[#allocation5 + $0x440] sm:$0xff]
    %v3559 = vld [vmem:[#allocation5 + $0x448] sm:$0xff]
    %v3560 = vld [vmem:[#allocation5 + $0x450] sm:$0xff]
    %v3561 = vld [vmem:[#allocation5 + $0x458] sm:$0xff]
    %v3562 = vld [vmem:[#allocation5 + $0x460] sm:$0xff]
    %v3563 = vld [vmem:[#allocation5 + $0x468] sm:$0xff]
    %v3564 = vld [vmem:[#allocation5 + $0x470] sm:$0xff]
    %v3565 = vld [vmem:[#allocation5 + $0x478] sm:$0xff]
    %v3566 = vld [vmem:[#allocation5 + $0x480] sm:$0xff]
    %v3567 = vld [vmem:[#allocation5 + $0x488] sm:$0xff]
    %v3568 = vld [vmem:[#allocation5 + $0x490] sm:$0xff]
    %v3569 = vld [vmem:[#allocation5 + $0x498] sm:$0xff]
    %v3570 = vld [vmem:[#allocation5 + $0x4a0] sm:$0xff]
    %v3571 = vld [vmem:[#allocation5 + $0x4a8] sm:$0xff]
    %v3572 = vld [vmem:[#allocation5 + $0x4b0] sm:$0xff]
    %v3573 = vld [vmem:[#allocation5 + $0x4b8] sm:$0xff]
    %v3574 = vld [vmem:[#allocation5 + $0x4c0] sm:$0xff]
    %v3575 = vld [vmem:[#allocation5 + $0x4c8] sm:$0xff]
    %v3576 = vld [vmem:[#allocation5 + $0x4d0] sm:$0xff]
    %v3577 = vld [vmem:[#allocation5 + $0x4d8] sm:$0xff]
    %v3578 = vld [vmem:[#allocation5 + $0x4e0] sm:$0xff]
    %v3579 = vld [vmem:[#allocation5 + $0x4e8] sm:$0xff]
    %v3580 = vld [vmem:[#allocation5 + $0x4f0] sm:$0xff]
    %v3581 = vld [vmem:[#allocation5 + $0x4f8] sm:$0xff]
    %v3582 = vld [vmem:[#allocation5 + $0x500] sm:$0xff]
    %v3583 = vld [vmem:[#allocation5 + $0x508] sm:$0xff]
    %v3584 = vld [vmem:[#allocation5 + $0x510] sm:$0xff]
    %v3585 = vld [vmem:[#allocation5 + $0x518] sm:$0xff]
    %v3586 = vld [vmem:[#allocation5 + $0x520] sm:$0xff]
    %v3587 = vld [vmem:[#allocation5 + $0x528] sm:$0xff]
    %v3588 = vld [vmem:[#allocation5 + $0x530] sm:$0xff]
    %v3589 = vld [vmem:[#allocation5 + $0x538] sm:$0xff]
    %v3590 = vld [vmem:[#allocation5 + $0x540] sm:$0xff]
    %v3591 = vld [vmem:[#allocation5 + $0x548] sm:$0xff]
    %v3592 = vld [vmem:[#allocation5 + $0x550] sm:$0xff]
    %v3593 = vld [vmem:[#allocation5 + $0x558] sm:$0xff]
    %v3594 = vld [vmem:[#allocation5 + $0x560] sm:$0xff]
    %v3595 = vld [vmem:[#allocation5 + $0x568] sm:$0xff]
    %v3596 = vld [vmem:[#allocation5 + $0x570] sm:$0xff]
    %v3597 = vld [vmem:[#allocation5 + $0x578] sm:$0xff]
    %v3598 = vld [vmem:[#allocation5 + $0x580] sm:$0xff]
    %v3599 = vld [vmem:[#allocation5 + $0x588] sm:$0xff]
    %v3600 = vld [vmem:[#allocation5 + $0x590] sm:$0xff]
    %v3601 = vld [vmem:[#allocation5 + $0x598] sm:$0xff]
    %v3602 = vld [vmem:[#allocation5 + $0x5a0] sm:$0xff]
    %v3603 = vld [vmem:[#allocation5 + $0x5a8] sm:$0xff]
    %v3604 = vld [vmem:[#allocation5 + $0x5b0] sm:$0xff]
    %v3605 = vld [vmem:[#allocation5 + $0x5b8] sm:$0xff]
    %v3606 = vld [vmem:[#allocation5 + $0x5c0] sm:$0xff]
    %v3607 = vld [vmem:[#allocation5 + $0x5c8] sm:$0xff]
    %v3608 = vld [vmem:[#allocation5 + $0x5d0] sm:$0xff]
    %v3609 = vld [vmem:[#allocation5 + $0x5d8] sm:$0xff]
    %v3610 = vld [vmem:[#allocation5 + $0x5e0] sm:$0xff]
    %v3611 = vld [vmem:[#allocation5 + $0x5e8] sm:$0xff]
    %v3612 = vld [vmem:[#allocation5 + $0x5f0] sm:$0xff]
    %v3613 = vld [vmem:[#allocation5 + $0x5f8] sm:$0xff]
    %v3614 = vld [vmem:[#allocation5 + $0x600] sm:$0xff]
    %v3615 = vld [vmem:[#allocation5 + $0x608] sm:$0xff]
    %v3616 = vld [vmem:[#allocation5 + $0x610] sm:$0xff]
    %v3617 = vld [vmem:[#allocation5 + $0x618] sm:$0xff]
    %v3618 = vld [vmem:[#allocation5 + $0x620] sm:$0xff]
    %v3619 = vld [vmem:[#allocation5 + $0x628] sm:$0xff]
    %v3620 = vld [vmem:[#allocation5 + $0x630] sm:$0xff]
    %v3621 = vld [vmem:[#allocation5 + $0x638] sm:$0xff]
    %v3622 = vld [vmem:[#allocation5 + $0x640] sm:$0xff]
    %v3623 = vld [vmem:[#allocation5 + $0x648] sm:$0xff]
    %v3624 = vld [vmem:[#allocation5 + $0x650] sm:$0xff]
    %v3625 = vld [vmem:[#allocation5 + $0x658] sm:$0xff]
    %v3626 = vld [vmem:[#allocation5 + $0x660] sm:$0xff]
    %v3627 = vld [vmem:[#allocation5 + $0x668] sm:$0xff]
    %v3628 = vld [vmem:[#allocation5 + $0x670] sm:$0xff]
    %v3629 = vld [vmem:[#allocation5 + $0x678] sm:$0xff]
    %v3630 = vld [vmem:[#allocation5 + $0x680] sm:$0xff]
    %v3631 = vld [vmem:[#allocation5 + $0x688] sm:$0xff]
    %v3632 = vld [vmem:[#allocation5 + $0x690] sm:$0xff]
    %v3633 = vld [vmem:[#allocation5 + $0x698] sm:$0xff]
    %v3634 = vld [vmem:[#allocation5 + $0x6a0] sm:$0xff]
    %v3635 = vld [vmem:[#allocation5 + $0x6a8] sm:$0xff]
    %v3636 = vld [vmem:[#allocation5 + $0x6b0] sm:$0xff]
    %v3637 = vld [vmem:[#allocation5 + $0x6b8] sm:$0xff]
    %v3638 = vld [vmem:[#allocation5 + $0x6c0] sm:$0xff]
    %v3639 = vld [vmem:[#allocation5 + $0x6c8] sm:$0xff]
    %v3640 = vld [vmem:[#allocation5 + $0x6d0] sm:$0xff]
    %v3641 = vld [vmem:[#allocation5 + $0x6d8] sm:$0xff]
    %v3642 = vld [vmem:[#allocation5 + $0x6e0] sm:$0xff]
    %v3643 = vld [vmem:[#allocation5 + $0x6e8] sm:$0xff]
    %v3644 = vld [vmem:[#allocation5 + $0x6f0] sm:$0xff]
    %v3645 = vld [vmem:[#allocation5 + $0x6f8] sm:$0xff]
    %v3646 = vld [vmem:[#allocation5 + $0x700] sm:$0xff]
    %v3647 = vld [vmem:[#allocation5 + $0x708] sm:$0xff]
    %v3648 = vld [vmem:[#allocation5 + $0x710] sm:$0xff]
    %v3649 = vld [vmem:[#allocation5 + $0x718] sm:$0xff]
    %v3650 = vld [vmem:[#allocation5 + $0x720] sm:$0xff]
    %v3651 = vld [vmem:[#allocation5 + $0x728] sm:$0xff]
    %v3652 = vld [vmem:[#allocation5 + $0x730] sm:$0xff]
    %v3653 = vld [vmem:[#allocation5 + $0x738] sm:$0xff]
    %v3654 = vld [vmem:[#allocation5 + $0x740] sm:$0xff]
    %v3655 = vld [vmem:[#allocation5 + $0x748] sm:$0xff]
    %v3656 = vld [vmem:[#allocation5 + $0x750] sm:$0xff]
    %v3657 = vld [vmem:[#allocation5 + $0x758] sm:$0xff]
    %v3658 = vld [vmem:[#allocation5 + $0x760] sm:$0xff]
    %v3659 = vld [vmem:[#allocation5 + $0x768] sm:$0xff]
    %v3660 = vld [vmem:[#allocation5 + $0x770] sm:$0xff]
    %v3661 = vld [vmem:[#allocation5 + $0x778] sm:$0xff]
    %v3662 = vld [vmem:[#allocation5 + $0x780] sm:$0xff]
    %v3663 = vld [vmem:[#allocation5 + $0x788] sm:$0xff]
    %v3664 = vld [vmem:[#allocation5 + $0x790] sm:$0xff]
    %v3665 = vld [vmem:[#allocation5 + $0x798] sm:$0xff]
    %v3666 = vld [vmem:[#allocation5 + $0x7a0] sm:$0xff]
    %v3667 = vld [vmem:[#allocation5 + $0x7a8] sm:$0xff]
    %v3668 = vld [vmem:[#allocation5 + $0x7b0] sm:$0xff]
    %v3669 = vld [vmem:[#allocation5 + $0x7b8] sm:$0xff]
    %v3670 = vld [vmem:[#allocation5 + $0x7c0] sm:$0xff]
    %v3671 = vld [vmem:[#allocation5 + $0x7c8] sm:$0xff]
    %v3672 = vld [vmem:[#allocation5 + $0x7d0] sm:$0xff]
    %v3673 = vld [vmem:[#allocation5 + $0x7d8] sm:$0xff]
    %v3674 = vld [vmem:[#allocation5 + $0x7e0] sm:$0xff]
    %v3675 = vld [vmem:[#allocation5 + $0x7e8] sm:$0xff]
    %v3676 = vld [vmem:[#allocation5 + $0x7f0] sm:$0xff]
    %v3677 = vld [vmem:[#allocation5 + $0x7f8] sm:$0xff]
    %v3678 = vld [vmem:[#allocation16] sm:$0xff]
    %v3680 = vlaneseq
    %v3681 = vshrl.u32 %v3680, 7
    %v3682 = vsub.s32 0, %v3681
    %v3683 = vrot.slane %v3678, %v3682
    %v3684 = vlaneseq
    %v3685 = vshrl.u32 %v3684, 7
    %v3686 = vsub.s32 1, %v3685
    %v3687 = vrot.slane %v3678, %v3686
    %v3688 = vlaneseq
    %v3689 = vshrl.u32 %v3688, 7
    %v3690 = vsub.s32 2, %v3689
    %v3691 = vrot.slane %v3678, %v3690
    %v3692 = vlaneseq
    %v3693 = vshrl.u32 %v3692, 7
    %v3694 = vsub.s32 3, %v3693
    %v3695 = vrot.slane %v3678, %v3694
    %v3696 = vlaneseq
    %v3697 = vshrl.u32 %v3696, 7
    %v3698 = vsub.s32 4, %v3697
    %v3699 = vrot.slane %v3678, %v3698
    %v3700 = vlaneseq
    %v3701 = vshrl.u32 %v3700, 7
    %v3702 = vsub.s32 5, %v3701
    %v3703 = vrot.slane %v3678, %v3702
    %v3704 = vlaneseq
    %v3705 = vshrl.u32 %v3704, 7
    %v3706 = vsub.s32 6, %v3705
    %v3707 = vrot.slane %v3678, %v3706
    %v3708 = vlaneseq
    %v3709 = vshrl.u32 %v3708, 7
    %v3710 = vsub.s32 7, %v3709
    %v3711 = vrot.slane %v3678, %v3710
    %v3976 = vunpack.c.l.b16 %v3422
    %v3977 = vunpack.c.h.b16 %v3422
    %v3978 = vunpack.c.l.b16 %v3423
    %v3979 = vunpack.c.h.b16 %v3423
    %v3980 = vunpack.c.l.b16 %v3424
    %v3981 = vunpack.c.h.b16 %v3424
    %v3982 = vunpack.c.l.b16 %v3425
    %v3983 = vunpack.c.h.b16 %v3425
    %v3984 = vunpack.c.l.b16 %v3426
    %v3985 = vunpack.c.h.b16 %v3426
    %v3986 = vunpack.c.l.b16 %v3427
    %v3987 = vunpack.c.h.b16 %v3427
    %v3988 = vunpack.c.l.b16 %v3428
    %v3989 = vunpack.c.h.b16 %v3428
    %v3990 = vunpack.c.l.b16 %v3429
    %v3991 = vunpack.c.h.b16 %v3429
    %v3992 = vunpack.c.l.b16 %v3430
    %v3993 = vunpack.c.h.b16 %v3430
    %v3994 = vunpack.c.l.b16 %v3431
    %v3995 = vunpack.c.h.b16 %v3431
    %v3996 = vunpack.c.l.b16 %v3432
    %v3997 = vunpack.c.h.b16 %v3432
    %v3998 = vunpack.c.l.b16 %v3433
    %v3999 = vunpack.c.h.b16 %v3433
    %v4000 = vunpack.c.l.b16 %v3434
    %v4001 = vunpack.c.h.b16 %v3434
    %v4002 = vunpack.c.l.b16 %v3435
    %v4003 = vunpack.c.h.b16 %v3435
    %v4004 = vunpack.c.l.b16 %v3436
    %v4005 = vunpack.c.h.b16 %v3436
    %v4006 = vunpack.c.l.b16 %v3437
    %v4007 = vunpack.c.h.b16 %v3437
    %v4008 = vunpack.c.l.b16 %v3438
    %v4009 = vunpack.c.h.b16 %v3438
    %v4010 = vunpack.c.l.b16 %v3439
    %v4011 = vunpack.c.h.b16 %v3439
    %v4012 = vunpack.c.l.b16 %v3440
    %v4013 = vunpack.c.h.b16 %v3440
    %v4014 = vunpack.c.l.b16 %v3441
    %v4015 = vunpack.c.h.b16 %v3441
    %v4016 = vunpack.c.l.b16 %v3442
    %v4017 = vunpack.c.h.b16 %v3442
    %v4018 = vunpack.c.l.b16 %v3443
    %v4019 = vunpack.c.h.b16 %v3443
    %v4020 = vunpack.c.l.b16 %v3444
    %v4021 = vunpack.c.h.b16 %v3444
    %v4022 = vunpack.c.l.b16 %v3445
    %v4023 = vunpack.c.h.b16 %v3445
    %v4024 = vunpack.c.l.b16 %v3446
    %v4025 = vunpack.c.h.b16 %v3446
    %v4026 = vunpack.c.l.b16 %v3447
    %v4027 = vunpack.c.h.b16 %v3447
    %v4028 = vunpack.c.l.b16 %v3448
    %v4029 = vunpack.c.h.b16 %v3448
    %v4030 = vunpack.c.l.b16 %v3449
    %v4031 = vunpack.c.h.b16 %v3449
    %v4032 = vunpack.c.l.b16 %v3450
    %v4033 = vunpack.c.h.b16 %v3450
    %v4034 = vunpack.c.l.b16 %v3451
    %v4035 = vunpack.c.h.b16 %v3451
    %v4036 = vunpack.c.l.b16 %v3452
    %v4037 = vunpack.c.h.b16 %v3452
    %v4038 = vunpack.c.l.b16 %v3453
    %v4039 = vunpack.c.h.b16 %v3453
    %v4040 = vunpack.c.l.b16 %v3454
    %v4041 = vunpack.c.h.b16 %v3454
    %v4042 = vunpack.c.l.b16 %v3455
    %v4043 = vunpack.c.h.b16 %v3455
    %v4044 = vunpack.c.l.b16 %v3456
    %v4045 = vunpack.c.h.b16 %v3456
    %v4046 = vunpack.c.l.b16 %v3457
    %v4047 = vunpack.c.h.b16 %v3457
    %v4048 = vunpack.c.l.b16 %v3458
    %v4049 = vunpack.c.h.b16 %v3458
    %v4050 = vunpack.c.l.b16 %v3459
    %v4051 = vunpack.c.h.b16 %v3459
    %v4052 = vunpack.c.l.b16 %v3460
    %v4053 = vunpack.c.h.b16 %v3460
    %v4054 = vunpack.c.l.b16 %v3461
    %v4055 = vunpack.c.h.b16 %v3461
    %v4056 = vunpack.c.l.b16 %v3462
    %v4057 = vunpack.c.h.b16 %v3462
    %v4058 = vunpack.c.l.b16 %v3463
    %v4059 = vunpack.c.h.b16 %v3463
    %v4060 = vunpack.c.l.b16 %v3464
    %v4061 = vunpack.c.h.b16 %v3464
    %v4062 = vunpack.c.l.b16 %v3465
    %v4063 = vunpack.c.h.b16 %v3465
    %v4064 = vunpack.c.l.b16 %v3466
    %v4065 = vunpack.c.h.b16 %v3466
    %v4066 = vunpack.c.l.b16 %v3467
    %v4067 = vunpack.c.h.b16 %v3467
    %v4068 = vunpack.c.l.b16 %v3468
    %v4069 = vunpack.c.h.b16 %v3468
    %v4070 = vunpack.c.l.b16 %v3469
    %v4071 = vunpack.c.h.b16 %v3469
    %v4072 = vunpack.c.l.b16 %v3470
    %v4073 = vunpack.c.h.b16 %v3470
    %v4074 = vunpack.c.l.b16 %v3471
    %v4075 = vunpack.c.h.b16 %v3471
    %v4076 = vunpack.c.l.b16 %v3472
    %v4077 = vunpack.c.h.b16 %v3472
    %v4078 = vunpack.c.l.b16 %v3473
    %v4079 = vunpack.c.h.b16 %v3473
    %v4080 = vunpack.c.l.b16 %v3474
    %v4081 = vunpack.c.h.b16 %v3474
    %v4082 = vunpack.c.l.b16 %v3475
    %v4083 = vunpack.c.h.b16 %v3475
    %v4084 = vunpack.c.l.b16 %v3476
    %v4085 = vunpack.c.h.b16 %v3476
    %v4086 = vunpack.c.l.b16 %v3477
    %v4087 = vunpack.c.h.b16 %v3477
    %v4088 = vunpack.c.l.b16 %v3478
    %v4089 = vunpack.c.h.b16 %v3478
    %v4090 = vunpack.c.l.b16 %v3479
    %v4091 = vunpack.c.h.b16 %v3479
    %v4092 = vunpack.c.l.b16 %v3480
    %v4093 = vunpack.c.h.b16 %v3480
    %v4094 = vunpack.c.l.b16 %v3481
    %v4095 = vunpack.c.h.b16 %v3481
    %v4096 = vunpack.c.l.b16 %v3482
    %v4097 = vunpack.c.h.b16 %v3482
    %v4098 = vunpack.c.l.b16 %v3483
    %v4099 = vunpack.c.h.b16 %v3483
    %v4100 = vunpack.c.l.b16 %v3484
    %v4101 = vunpack.c.h.b16 %v3484
    %v4102 = vunpack.c.l.b16 %v3485
    %v4103 = vunpack.c.h.b16 %v3485
    %v4104 = vunpack.c.l.b16 %v3486
    %v4105 = vunpack.c.h.b16 %v3486
    %v4106 = vunpack.c.l.b16 %v3487
    %v4107 = vunpack.c.h.b16 %v3487
    %v4108 = vunpack.c.l.b16 %v3488
    %v4109 = vunpack.c.h.b16 %v3488
    %v4110 = vunpack.c.l.b16 %v3489
    %v4111 = vunpack.c.h.b16 %v3489
    %v4112 = vunpack.c.l.b16 %v3490
    %v4113 = vunpack.c.h.b16 %v3490
    %v4114 = vunpack.c.l.b16 %v3491
    %v4115 = vunpack.c.h.b16 %v3491
    %v4116 = vunpack.c.l.b16 %v3492
    %v4117 = vunpack.c.h.b16 %v3492
    %v4118 = vunpack.c.l.b16 %v3493
    %v4119 = vunpack.c.h.b16 %v3493
    %v4120 = vunpack.c.l.b16 %v3494
    %v4121 = vunpack.c.h.b16 %v3494
    %v4122 = vunpack.c.l.b16 %v3495
    %v4123 = vunpack.c.h.b16 %v3495
    %v4124 = vunpack.c.l.b16 %v3496
    %v4125 = vunpack.c.h.b16 %v3496
    %v4126 = vunpack.c.l.b16 %v3497
    %v4127 = vunpack.c.h.b16 %v3497
    %v4128 = vunpack.c.l.b16 %v3498
    %v4129 = vunpack.c.h.b16 %v3498
    %v4130 = vunpack.c.l.b16 %v3499
    %v4131 = vunpack.c.h.b16 %v3499
    %v4132 = vunpack.c.l.b16 %v3500
    %v4133 = vunpack.c.h.b16 %v3500
    %v4134 = vunpack.c.l.b16 %v3501
    %v4135 = vunpack.c.h.b16 %v3501
    %v4136 = vunpack.c.l.b16 %v3502
    %v4137 = vunpack.c.h.b16 %v3502
    %v4138 = vunpack.c.l.b16 %v3503
    %v4139 = vunpack.c.h.b16 %v3503
    %v4140 = vunpack.c.l.b16 %v3504
    %v4141 = vunpack.c.h.b16 %v3504
    %v4142 = vunpack.c.l.b16 %v3505
    %v4143 = vunpack.c.h.b16 %v3505
    %v4144 = vunpack.c.l.b16 %v3506
    %v4145 = vunpack.c.h.b16 %v3506
    %v4146 = vunpack.c.l.b16 %v3507
    %v4147 = vunpack.c.h.b16 %v3507
    %v4148 = vunpack.c.l.b16 %v3508
    %v4149 = vunpack.c.h.b16 %v3508
    %v4150 = vunpack.c.l.b16 %v3509
    %v4151 = vunpack.c.h.b16 %v3509
    %v4152 = vunpack.c.l.b16 %v3510
    %v4153 = vunpack.c.h.b16 %v3510
    %v4154 = vunpack.c.l.b16 %v3511
    %v4155 = vunpack.c.h.b16 %v3511
    %v4156 = vunpack.c.l.b16 %v3512
    %v4157 = vunpack.c.h.b16 %v3512
    %v4158 = vunpack.c.l.b16 %v3513
    %v4159 = vunpack.c.h.b16 %v3513
    %v4160 = vunpack.c.l.b16 %v3514
    %v4161 = vunpack.c.h.b16 %v3514
    %v4162 = vunpack.c.l.b16 %v3515
    %v4163 = vunpack.c.h.b16 %v3515
    %v4164 = vunpack.c.l.b16 %v3516
    %v4165 = vunpack.c.h.b16 %v3516
    %v4166 = vunpack.c.l.b16 %v3517
    %v4167 = vunpack.c.h.b16 %v3517
    %v4168 = vunpack.c.l.b16 %v3518
    %v4169 = vunpack.c.h.b16 %v3518
    %v4170 = vunpack.c.l.b16 %v3519
    %v4171 = vunpack.c.h.b16 %v3519
    %v4172 = vunpack.c.l.b16 %v3520
    %v4173 = vunpack.c.h.b16 %v3520
    %v4174 = vunpack.c.l.b16 %v3521
    %v4175 = vunpack.c.h.b16 %v3521
    %v4176 = vunpack.c.l.b16 %v3522
    %v4177 = vunpack.c.h.b16 %v3522
    %v4178 = vunpack.c.l.b16 %v3523
    %v4179 = vunpack.c.h.b16 %v3523
    %v4180 = vunpack.c.l.b16 %v3524
    %v4181 = vunpack.c.h.b16 %v3524
    %v4182 = vunpack.c.l.b16 %v3525
    %v4183 = vunpack.c.h.b16 %v3525
    %v4184 = vunpack.c.l.b16 %v3526
    %v4185 = vunpack.c.h.b16 %v3526
    %v4186 = vunpack.c.l.b16 %v3527
    %v4187 = vunpack.c.h.b16 %v3527
    %v4188 = vunpack.c.l.b16 %v3528
    %v4189 = vunpack.c.h.b16 %v3528
    %v4190 = vunpack.c.l.b16 %v3529
    %v4191 = vunpack.c.h.b16 %v3529
    %v4192 = vunpack.c.l.b16 %v3530
    %v4193 = vunpack.c.h.b16 %v3530
    %v4194 = vunpack.c.l.b16 %v3531
    %v4195 = vunpack.c.h.b16 %v3531
    %v4196 = vunpack.c.l.b16 %v3532
    %v4197 = vunpack.c.h.b16 %v3532
    %v4198 = vunpack.c.l.b16 %v3533
    %v4199 = vunpack.c.h.b16 %v3533
    %v4200 = vunpack.c.l.b16 %v3534
    %v4201 = vunpack.c.h.b16 %v3534
    %v4202 = vunpack.c.l.b16 %v3535
    %v4203 = vunpack.c.h.b16 %v3535
    %v4204 = vunpack.c.l.b16 %v3536
    %v4205 = vunpack.c.h.b16 %v3536
    %v4206 = vunpack.c.l.b16 %v3537
    %v4207 = vunpack.c.h.b16 %v3537
    %v4208 = vunpack.c.l.b16 %v3538
    %v4209 = vunpack.c.h.b16 %v3538
    %v4210 = vunpack.c.l.b16 %v3539
    %v4211 = vunpack.c.h.b16 %v3539
    %v4212 = vunpack.c.l.b16 %v3540
    %v4213 = vunpack.c.h.b16 %v3540
    %v4214 = vunpack.c.l.b16 %v3541
    %v4215 = vunpack.c.h.b16 %v3541
    %v4216 = vunpack.c.l.b16 %v3542
    %v4217 = vunpack.c.h.b16 %v3542
    %v4218 = vunpack.c.l.b16 %v3543
    %v4219 = vunpack.c.h.b16 %v3543
    %v4220 = vunpack.c.l.b16 %v3544
    %v4221 = vunpack.c.h.b16 %v3544
    %v4222 = vunpack.c.l.b16 %v3545
    %v4223 = vunpack.c.h.b16 %v3545
    %v4224 = vunpack.c.l.b16 %v3546
    %v4225 = vunpack.c.h.b16 %v3546
    %v4226 = vunpack.c.l.b16 %v3547
    %v4227 = vunpack.c.h.b16 %v3547
    %v4228 = vunpack.c.l.b16 %v3548
    %v4229 = vunpack.c.h.b16 %v3548
    %v4230 = vunpack.c.l.b16 %v3549
    %v4231 = vunpack.c.h.b16 %v3549
    %v4232 = vunpack.c.l.b16 %v3550
    %v4233 = vunpack.c.h.b16 %v3550
    %v4234 = vunpack.c.l.b16 %v3551
    %v4235 = vunpack.c.h.b16 %v3551
    %v4236 = vunpack.c.l.b16 %v3552
    %v4237 = vunpack.c.h.b16 %v3552
    %v4238 = vunpack.c.l.b16 %v3553
    %v4239 = vunpack.c.h.b16 %v3553
    %v4240 = vunpack.c.l.b16 %v3554
    %v4241 = vunpack.c.h.b16 %v3554
    %v4242 = vunpack.c.l.b16 %v3555
    %v4243 = vunpack.c.h.b16 %v3555
    %v4244 = vunpack.c.l.b16 %v3556
    %v4245 = vunpack.c.h.b16 %v3556
    %v4246 = vunpack.c.l.b16 %v3557
    %v4247 = vunpack.c.h.b16 %v3557
    %v4248 = vunpack.c.l.b16 %v3558
    %v4249 = vunpack.c.h.b16 %v3558
    %v4250 = vunpack.c.l.b16 %v3559
    %v4251 = vunpack.c.h.b16 %v3559
    %v4252 = vunpack.c.l.b16 %v3560
    %v4253 = vunpack.c.h.b16 %v3560
    %v4254 = vunpack.c.l.b16 %v3561
    %v4255 = vunpack.c.h.b16 %v3561
    %v4256 = vunpack.c.l.b16 %v3562
    %v4257 = vunpack.c.h.b16 %v3562
    %v4258 = vunpack.c.l.b16 %v3563
    %v4259 = vunpack.c.h.b16 %v3563
    %v4260 = vunpack.c.l.b16 %v3564
    %v4261 = vunpack.c.h.b16 %v3564
    %v4262 = vunpack.c.l.b16 %v3565
    %v4263 = vunpack.c.h.b16 %v3565
    %v4264 = vunpack.c.l.b16 %v3566
    %v4265 = vunpack.c.h.b16 %v3566
    %v4266 = vunpack.c.l.b16 %v3567
    %v4267 = vunpack.c.h.b16 %v3567
    %v4268 = vunpack.c.l.b16 %v3568
    %v4269 = vunpack.c.h.b16 %v3568
    %v4270 = vunpack.c.l.b16 %v3569
    %v4271 = vunpack.c.h.b16 %v3569
    %v4272 = vunpack.c.l.b16 %v3570
    %v4273 = vunpack.c.h.b16 %v3570
    %v4274 = vunpack.c.l.b16 %v3571
    %v4275 = vunpack.c.h.b16 %v3571
    %v4276 = vunpack.c.l.b16 %v3572
    %v4277 = vunpack.c.h.b16 %v3572
    %v4278 = vunpack.c.l.b16 %v3573
    %v4279 = vunpack.c.h.b16 %v3573
    %v4280 = vunpack.c.l.b16 %v3574
    %v4281 = vunpack.c.h.b16 %v3574
    %v4282 = vunpack.c.l.b16 %v3575
    %v4283 = vunpack.c.h.b16 %v3575
    %v4284 = vunpack.c.l.b16 %v3576
    %v4285 = vunpack.c.h.b16 %v3576
    %v4286 = vunpack.c.l.b16 %v3577
    %v4287 = vunpack.c.h.b16 %v3577
    %v4288 = vunpack.c.l.b16 %v3578
    %v4289 = vunpack.c.h.b16 %v3578
    %v4290 = vunpack.c.l.b16 %v3579
    %v4291 = vunpack.c.h.b16 %v3579
    %v4292 = vunpack.c.l.b16 %v3580
    %v4293 = vunpack.c.h.b16 %v3580
    %v4294 = vunpack.c.l.b16 %v3581
    %v4295 = vunpack.c.h.b16 %v3581
    %v4296 = vunpack.c.l.b16 %v3582
    %v4297 = vunpack.c.h.b16 %v3582
    %v4298 = vunpack.c.l.b16 %v3583
    %v4299 = vunpack.c.h.b16 %v3583
    %v4300 = vunpack.c.l.b16 %v3584
    %v4301 = vunpack.c.h.b16 %v3584
    %v4302 = vunpack.c.l.b16 %v3585
    %v4303 = vunpack.c.h.b16 %v3585
    %v4304 = vunpack.c.l.b16 %v3586
    %v4305 = vunpack.c.h.b16 %v3586
    %v4306 = vunpack.c.l.b16 %v3587
    %v4307 = vunpack.c.h.b16 %v3587
    %v4308 = vunpack.c.l.b16 %v3588
    %v4309 = vunpack.c.h.b16 %v3588
    %v4310 = vunpack.c.l.b16 %v3589
    %v4311 = vunpack.c.h.b16 %v3589
    %v4312 = vunpack.c.l.b16 %v3590
    %v4313 = vunpack.c.h.b16 %v3590
    %v4314 = vunpack.c.l.b16 %v3591
    %v4315 = vunpack.c.h.b16 %v3591
    %v4316 = vunpack.c.l.b16 %v3592
    %v4317 = vunpack.c.h.b16 %v3592
    %v4318 = vunpack.c.l.b16 %v3593
    %v4319 = vunpack.c.h.b16 %v3593
    %v4320 = vunpack.c.l.b16 %v3594
    %v4321 = vunpack.c.h.b16 %v3594
    %v4322 = vunpack.c.l.b16 %v3595
    %v4323 = vunpack.c.h.b16 %v3595
    %v4324 = vunpack.c.l.b16 %v3596
    %v4325 = vunpack.c.h.b16 %v3596
    %v4326 = vunpack.c.l.b16 %v3597
    %v4327 = vunpack.c.h.b16 %v3597
    %v4328 = vunpack.c.l.b16 %v3598
    %v4329 = vunpack.c.h.b16 %v3598
    %v4330 = vunpack.c.l.b16 %v3599
    %v4331 = vunpack.c.h.b16 %v3599
    %v4332 = vunpack.c.l.b16 %v3600
    %v4333 = vunpack.c.h.b16 %v3600
    %v4334 = vunpack.c.l.b16 %v3601
    %v4335 = vunpack.c.h.b16 %v3601
    %v4336 = vunpack.c.l.b16 %v3602
    %v4337 = vunpack.c.h.b16 %v3602
    %v4338 = vunpack.c.l.b16 %v3603
    %v4339 = vunpack.c.h.b16 %v3603
    %v4340 = vunpack.c.l.b16 %v3604
    %v4341 = vunpack.c.h.b16 %v3604
    %v4342 = vunpack.c.l.b16 %v3605
    %v4343 = vunpack.c.h.b16 %v3605
    %v4344 = vunpack.c.l.b16 %v3606
    %v4345 = vunpack.c.h.b16 %v3606
    %v4346 = vunpack.c.l.b16 %v3607
    %v4347 = vunpack.c.h.b16 %v3607
    %v4348 = vunpack.c.l.b16 %v3608
    %v4349 = vunpack.c.h.b16 %v3608
    %v4350 = vunpack.c.l.b16 %v3609
    %v4351 = vunpack.c.h.b16 %v3609
    %v4352 = vunpack.c.l.b16 %v3610
    %v4353 = vunpack.c.h.b16 %v3610
    %v4354 = vunpack.c.l.b16 %v3611
    %v4355 = vunpack.c.h.b16 %v3611
    %v4356 = vunpack.c.l.b16 %v3612
    %v4357 = vunpack.c.h.b16 %v3612
    %v4358 = vunpack.c.l.b16 %v3613
    %v4359 = vunpack.c.h.b16 %v3613
    %v4360 = vunpack.c.l.b16 %v3614
    %v4361 = vunpack.c.h.b16 %v3614
    %v4362 = vunpack.c.l.b16 %v3615
    %v4363 = vunpack.c.h.b16 %v3615
    %v4364 = vunpack.c.l.b16 %v3616
    %v4365 = vunpack.c.h.b16 %v3616
    %v4366 = vunpack.c.l.b16 %v3617
    %v4367 = vunpack.c.h.b16 %v3617
    %v4368 = vunpack.c.l.b16 %v3618
    %v4369 = vunpack.c.h.b16 %v3618
    %v4370 = vunpack.c.l.b16 %v3619
    %v4371 = vunpack.c.h.b16 %v3619
    %v4372 = vunpack.c.l.b16 %v3620
    %v4373 = vunpack.c.h.b16 %v3620
    %v4374 = vunpack.c.l.b16 %v3621
    %v4375 = vunpack.c.h.b16 %v3621
    %v4376 = vunpack.c.l.b16 %v3622
    %v4377 = vunpack.c.h.b16 %v3622
    %v4378 = vunpack.c.l.b16 %v3623
    %v4379 = vunpack.c.h.b16 %v3623
    %v4380 = vunpack.c.l.b16 %v3624
    %v4381 = vunpack.c.h.b16 %v3624
    %v4382 = vunpack.c.l.b16 %v3625
    %v4383 = vunpack.c.h.b16 %v3625
    %v4384 = vunpack.c.l.b16 %v3626
    %v4385 = vunpack.c.h.b16 %v3626
    %v4386 = vunpack.c.l.b16 %v3627
    %v4387 = vunpack.c.h.b16 %v3627
    %v4388 = vunpack.c.l.b16 %v3628
    %v4389 = vunpack.c.h.b16 %v3628
    %v4390 = vunpack.c.l.b16 %v3629
    %v4391 = vunpack.c.h.b16 %v3629
    %v4392 = vunpack.c.l.b16 %v3630
    %v4393 = vunpack.c.h.b16 %v3630
    %v4394 = vunpack.c.l.b16 %v3631
    %v4395 = vunpack.c.h.b16 %v3631
    %v4396 = vunpack.c.l.b16 %v3632
    %v4397 = vunpack.c.h.b16 %v3632
    %v4398 = vunpack.c.l.b16 %v3633
    %v4399 = vunpack.c.h.b16 %v3633
    %v4400 = vunpack.c.l.b16 %v3634
    %v4401 = vunpack.c.h.b16 %v3634
    %v4402 = vunpack.c.l.b16 %v3635
    %v4403 = vunpack.c.h.b16 %v3635
    %v4404 = vunpack.c.l.b16 %v3636
    %v4405 = vunpack.c.h.b16 %v3636
    %v4406 = vunpack.c.l.b16 %v3637
    %v4407 = vunpack.c.h.b16 %v3637
    %v4408 = vunpack.c.l.b16 %v3638
    %v4409 = vunpack.c.h.b16 %v3638
    %v4410 = vunpack.c.l.b16 %v3639
    %v4411 = vunpack.c.h.b16 %v3639
    %v4412 = vunpack.c.l.b16 %v3640
    %v4413 = vunpack.c.h.b16 %v3640
    %v4414 = vunpack.c.l.b16 %v3641
    %v4415 = vunpack.c.h.b16 %v3641
    %v4416 = vunpack.c.l.b16 %v3642
    %v4417 = vunpack.c.h.b16 %v3642
    %v4418 = vunpack.c.l.b16 %v3643
    %v4419 = vunpack.c.h.b16 %v3643
    %v4420 = vunpack.c.l.b16 %v3644
    %v4421 = vunpack.c.h.b16 %v3644
    %v4422 = vunpack.c.l.b16 %v3645
    %v4423 = vunpack.c.h.b16 %v3645
    %v4424 = vunpack.c.l.b16 %v3646
    %v4425 = vunpack.c.h.b16 %v3646
    %v4426 = vunpack.c.l.b16 %v3647
    %v4427 = vunpack.c.h.b16 %v3647
    %v4428 = vunpack.c.l.b16 %v3648
    %v4429 = vunpack.c.h.b16 %v3648
    %v4430 = vunpack.c.l.b16 %v3649
    %v4431 = vunpack.c.h.b16 %v3649
    %v4432 = vunpack.c.l.b16 %v3650
    %v4433 = vunpack.c.h.b16 %v3650
    %v4434 = vunpack.c.l.b16 %v3651
    %v4435 = vunpack.c.h.b16 %v3651
    %v4436 = vunpack.c.l.b16 %v3652
    %v4437 = vunpack.c.h.b16 %v3652
    %v4438 = vunpack.c.l.b16 %v3653
    %v4439 = vunpack.c.h.b16 %v3653
    %v4440 = vunpack.c.l.b16 %v3654
    %v4441 = vunpack.c.h.b16 %v3654
    %v4442 = vunpack.c.l.b16 %v3655
    %v4443 = vunpack.c.h.b16 %v3655
    %v4444 = vunpack.c.l.b16 %v3656
    %v4445 = vunpack.c.h.b16 %v3656
    %v4446 = vunpack.c.l.b16 %v3657
    %v4447 = vunpack.c.h.b16 %v3657
    %v4448 = vunpack.c.l.b16 %v3658
    %v4449 = vunpack.c.h.b16 %v3658
    %v4450 = vunpack.c.l.b16 %v3659
    %v4451 = vunpack.c.h.b16 %v3659
    %v4452 = vunpack.c.l.b16 %v3660
    %v4453 = vunpack.c.h.b16 %v3660
    %v4454 = vunpack.c.l.b16 %v3661
    %v4455 = vunpack.c.h.b16 %v3661
    %v4456 = vunpack.c.l.b16 %v3662
    %v4457 = vunpack.c.h.b16 %v3662
    %v4458 = vunpack.c.l.b16 %v3663
    %v4459 = vunpack.c.h.b16 %v3663
    %v4460 = vunpack.c.l.b16 %v3664
    %v4461 = vunpack.c.h.b16 %v3664
    %v4462 = vunpack.c.l.b16 %v3665
    %v4463 = vunpack.c.h.b16 %v3665
    %v4464 = vunpack.c.l.b16 %v3666
    %v4465 = vunpack.c.h.b16 %v3666
    %v4466 = vunpack.c.l.b16 %v3667
    %v4467 = vunpack.c.h.b16 %v3667
    %v4468 = vunpack.c.l.b16 %v3668
    %v4469 = vunpack.c.h.b16 %v3668
    %v4470 = vunpack.c.l.b16 %v3669
    %v4471 = vunpack.c.h.b16 %v3669
    %v4472 = vunpack.c.l.b16 %v3670
    %v4473 = vunpack.c.h.b16 %v3670
    %v4474 = vunpack.c.l.b16 %v3671
    %v4475 = vunpack.c.h.b16 %v3671
    %v4476 = vunpack.c.l.b16 %v3672
    %v4477 = vunpack.c.h.b16 %v3672
    %v4478 = vunpack.c.l.b16 %v3673
    %v4479 = vunpack.c.h.b16 %v3673
    %v4480 = vunpack.c.l.b16 %v3674
    %v4481 = vunpack.c.h.b16 %v3674
    %v4482 = vunpack.c.l.b16 %v3675
    %v4483 = vunpack.c.h.b16 %v3675
    %v4484 = vunpack.c.l.b16 %v3676
    %v4485 = vunpack.c.h.b16 %v3676
    %v4486 = vunpack.c.l.b16 %v3677
    %v4487 = vunpack.c.h.b16 %v3677
    %v4488 = vpack.c.b16 %v3984, %v3976
    %v4489 = vpack.c.b16 %v3985, %v3977
    %v4490 = vpack.c.b16 %v3986, %v3978
    %v4491 = vpack.c.b16 %v3987, %v3979
    %v4492 = vpack.c.b16 %v3988, %v3980
    %v4493 = vpack.c.b16 %v3989, %v3981
    %v4494 = vpack.c.b16 %v3990, %v3982
    %v4495 = vpack.c.b16 %v3991, %v3983
    %v4496 = vpack.c.b16 %v4000, %v3992
    %v4497 = vpack.c.b16 %v4001, %v3993
    %v4498 = vpack.c.b16 %v4002, %v3994
    %v4499 = vpack.c.b16 %v4003, %v3995
    %v4500 = vpack.c.b16 %v4004, %v3996
    %v4501 = vpack.c.b16 %v4005, %v3997
    %v4502 = vpack.c.b16 %v4006, %v3998
    %v4503 = vpack.c.b16 %v4007, %v3999
    %v4504 = vpack.c.b16 %v4016, %v4008
    %v4505 = vpack.c.b16 %v4017, %v4009
    %v4506 = vpack.c.b16 %v4018, %v4010
    %v4507 = vpack.c.b16 %v4019, %v4011
    %v4508 = vpack.c.b16 %v4020, %v4012
    %v4509 = vpack.c.b16 %v4021, %v4013
    %v4510 = vpack.c.b16 %v4022, %v4014
    %v4511 = vpack.c.b16 %v4023, %v4015
    %v4512 = vpack.c.b16 %v4032, %v4024
    %v4513 = vpack.c.b16 %v4033, %v4025
    %v4514 = vpack.c.b16 %v4034, %v4026
    %v4515 = vpack.c.b16 %v4035, %v4027
    %v4516 = vpack.c.b16 %v4036, %v4028
    %v4517 = vpack.c.b16 %v4037, %v4029
    %v4518 = vpack.c.b16 %v4038, %v4030
    %v4519 = vpack.c.b16 %v4039, %v4031
    %v4520 = vpack.c.b16 %v4048, %v4040
    %v4521 = vpack.c.b16 %v4049, %v4041
    %v4522 = vpack.c.b16 %v4050, %v4042
    %v4523 = vpack.c.b16 %v4051, %v4043
    %v4524 = vpack.c.b16 %v4052, %v4044
    %v4525 = vpack.c.b16 %v4053, %v4045
    %v4526 = vpack.c.b16 %v4054, %v4046
    %v4527 = vpack.c.b16 %v4055, %v4047
    %v4528 = vpack.c.b16 %v4064, %v4056
    %v4529 = vpack.c.b16 %v4065, %v4057
    %v4530 = vpack.c.b16 %v4066, %v4058
    %v4531 = vpack.c.b16 %v4067, %v4059
    %v4532 = vpack.c.b16 %v4068, %v4060
    %v4533 = vpack.c.b16 %v4069, %v4061
    %v4534 = vpack.c.b16 %v4070, %v4062
    %v4535 = vpack.c.b16 %v4071, %v4063
    %v4536 = vpack.c.b16 %v4080, %v4072
    %v4537 = vpack.c.b16 %v4081, %v4073
    %v4538 = vpack.c.b16 %v4082, %v4074
    %v4539 = vpack.c.b16 %v4083, %v4075
    %v4540 = vpack.c.b16 %v4084, %v4076
    %v4541 = vpack.c.b16 %v4085, %v4077
    %v4542 = vpack.c.b16 %v4086, %v4078
    %v4543 = vpack.c.b16 %v4087, %v4079
    %v4544 = vpack.c.b16 %v4096, %v4088
    %v4545 = vpack.c.b16 %v4097, %v4089
    %v4546 = vpack.c.b16 %v4098, %v4090
    %v4547 = vpack.c.b16 %v4099, %v4091
    %v4548 = vpack.c.b16 %v4100, %v4092
    %v4549 = vpack.c.b16 %v4101, %v4093
    %v4550 = vpack.c.b16 %v4102, %v4094
    %v4551 = vpack.c.b16 %v4103, %v4095
    %v4552 = vpack.c.b16 %v4112, %v4104
    %v4553 = vpack.c.b16 %v4113, %v4105
    %v4554 = vpack.c.b16 %v4114, %v4106
    %v4555 = vpack.c.b16 %v4115, %v4107
    %v4556 = vpack.c.b16 %v4116, %v4108
    %v4557 = vpack.c.b16 %v4117, %v4109
    %v4558 = vpack.c.b16 %v4118, %v4110
    %v4559 = vpack.c.b16 %v4119, %v4111
    %v4560 = vpack.c.b16 %v4128, %v4120
    %v4561 = vpack.c.b16 %v4129, %v4121
    %v4562 = vpack.c.b16 %v4130, %v4122
    %v4563 = vpack.c.b16 %v4131, %v4123
    %v4564 = vpack.c.b16 %v4132, %v4124
    %v4565 = vpack.c.b16 %v4133, %v4125
    %v4566 = vpack.c.b16 %v4134, %v4126
    %v4567 = vpack.c.b16 %v4135, %v4127
    %v4568 = vpack.c.b16 %v4144, %v4136
    %v4569 = vpack.c.b16 %v4145, %v4137
    %v4570 = vpack.c.b16 %v4146, %v4138
    %v4571 = vpack.c.b16 %v4147, %v4139
    %v4572 = vpack.c.b16 %v4148, %v4140
    %v4573 = vpack.c.b16 %v4149, %v4141
    %v4574 = vpack.c.b16 %v4150, %v4142
    %v4575 = vpack.c.b16 %v4151, %v4143
    %v4576 = vpack.c.b16 %v4160, %v4152
    %v4577 = vpack.c.b16 %v4161, %v4153
    %v4578 = vpack.c.b16 %v4162, %v4154
    %v4579 = vpack.c.b16 %v4163, %v4155
    %v4580 = vpack.c.b16 %v4164, %v4156
    %v4581 = vpack.c.b16 %v4165, %v4157
    %v4582 = vpack.c.b16 %v4166, %v4158
    %v4583 = vpack.c.b16 %v4167, %v4159
    %v4584 = vpack.c.b16 %v4176, %v4168
    %v4585 = vpack.c.b16 %v4177, %v4169
    %v4586 = vpack.c.b16 %v4178, %v4170
    %v4587 = vpack.c.b16 %v4179, %v4171
    %v4588 = vpack.c.b16 %v4180, %v4172
    %v4589 = vpack.c.b16 %v4181, %v4173
    %v4590 = vpack.c.b16 %v4182, %v4174
    %v4591 = vpack.c.b16 %v4183, %v4175
    %v4592 = vpack.c.b16 %v4192, %v4184
    %v4593 = vpack.c.b16 %v4193, %v4185
    %v4594 = vpack.c.b16 %v4194, %v4186
    %v4595 = vpack.c.b16 %v4195, %v4187
    %v4596 = vpack.c.b16 %v4196, %v4188
    %v4597 = vpack.c.b16 %v4197, %v4189
    %v4598 = vpack.c.b16 %v4198, %v4190
    %v4599 = vpack.c.b16 %v4199, %v4191
    %v4600 = vpack.c.b16 %v4208, %v4200
    %v4601 = vpack.c.b16 %v4209, %v4201
    %v4602 = vpack.c.b16 %v4210, %v4202
    %v4603 = vpack.c.b16 %v4211, %v4203
    %v4604 = vpack.c.b16 %v4212, %v4204
    %v4605 = vpack.c.b16 %v4213, %v4205
    %v4606 = vpack.c.b16 %v4214, %v4206
    %v4607 = vpack.c.b16 %v4215, %v4207
    %v4608 = vpack.c.b16 %v4224, %v4216
    %v4609 = vpack.c.b16 %v4225, %v4217
    %v4610 = vpack.c.b16 %v4226, %v4218
    %v4611 = vpack.c.b16 %v4227, %v4219
    %v4612 = vpack.c.b16 %v4228, %v4220
    %v4613 = vpack.c.b16 %v4229, %v4221
    %v4614 = vpack.c.b16 %v4230, %v4222
    %v4615 = vpack.c.b16 %v4231, %v4223
    %v4616 = vpack.c.b16 %v4240, %v4232
    %v4617 = vpack.c.b16 %v4241, %v4233
    %v4618 = vpack.c.b16 %v4242, %v4234
    %v4619 = vpack.c.b16 %v4243, %v4235
    %v4620 = vpack.c.b16 %v4244, %v4236
    %v4621 = vpack.c.b16 %v4245, %v4237
    %v4622 = vpack.c.b16 %v4246, %v4238
    %v4623 = vpack.c.b16 %v4247, %v4239
    %v4624 = vpack.c.b16 %v4256, %v4248
    %v4625 = vpack.c.b16 %v4257, %v4249
    %v4626 = vpack.c.b16 %v4258, %v4250
    %v4627 = vpack.c.b16 %v4259, %v4251
    %v4628 = vpack.c.b16 %v4260, %v4252
    %v4629 = vpack.c.b16 %v4261, %v4253
    %v4630 = vpack.c.b16 %v4262, %v4254
    %v4631 = vpack.c.b16 %v4263, %v4255
    %v4632 = vpack.c.b16 %v4272, %v4264
    %v4633 = vpack.c.b16 %v4273, %v4265
    %v4634 = vpack.c.b16 %v4274, %v4266
    %v4635 = vpack.c.b16 %v4275, %v4267
    %v4636 = vpack.c.b16 %v4276, %v4268
    %v4637 = vpack.c.b16 %v4277, %v4269
    %v4638 = vpack.c.b16 %v4278, %v4270
    %v4639 = vpack.c.b16 %v4279, %v4271
    %v4640 = vpack.c.b16 %v4288, %v4280
    %v4641 = vpack.c.b16 %v4289, %v4281
    %v4642 = vpack.c.b16 %v4290, %v4282
    %v4643 = vpack.c.b16 %v4291, %v4283
    %v4644 = vpack.c.b16 %v4292, %v4284
    %v4645 = vpack.c.b16 %v4293, %v4285
    %v4646 = vpack.c.b16 %v4294, %v4286
    %v4647 = vpack.c.b16 %v4295, %v4287
    %v4648 = vpack.c.b16 %v4304, %v4296
    %v4649 = vpack.c.b16 %v4305, %v4297
    %v4650 = vpack.c.b16 %v4306, %v4298
    %v4651 = vpack.c.b16 %v4307, %v4299
    %v4652 = vpack.c.b16 %v4308, %v4300
    %v4653 = vpack.c.b16 %v4309, %v4301
    %v4654 = vpack.c.b16 %v4310, %v4302
    %v4655 = vpack.c.b16 %v4311, %v4303
    %v4656 = vpack.c.b16 %v4320, %v4312
    %v4657 = vpack.c.b16 %v4321, %v4313
    %v4658 = vpack.c.b16 %v4322, %v4314
    %v4659 = vpack.c.b16 %v4323, %v4315
    %v4660 = vpack.c.b16 %v4324, %v4316
    %v4661 = vpack.c.b16 %v4325, %v4317
    %v4662 = vpack.c.b16 %v4326, %v4318
    %v4663 = vpack.c.b16 %v4327, %v4319
    %v4664 = vpack.c.b16 %v4336, %v4328
    %v4665 = vpack.c.b16 %v4337, %v4329
    %v4666 = vpack.c.b16 %v4338, %v4330
    %v4667 = vpack.c.b16 %v4339, %v4331
    %v4668 = vpack.c.b16 %v4340, %v4332
    %v4669 = vpack.c.b16 %v4341, %v4333
    %v4670 = vpack.c.b16 %v4342, %v4334
    %v4671 = vpack.c.b16 %v4343, %v4335
    %v4672 = vpack.c.b16 %v4352, %v4344
    %v4673 = vpack.c.b16 %v4353, %v4345
    %v4674 = vpack.c.b16 %v4354, %v4346
    %v4675 = vpack.c.b16 %v4355, %v4347
    %v4676 = vpack.c.b16 %v4356, %v4348
    %v4677 = vpack.c.b16 %v4357, %v4349
    %v4678 = vpack.c.b16 %v4358, %v4350
    %v4679 = vpack.c.b16 %v4359, %v4351
    %v4680 = vpack.c.b16 %v4368, %v4360
    %v4681 = vpack.c.b16 %v4369, %v4361
    %v4682 = vpack.c.b16 %v4370, %v4362
    %v4683 = vpack.c.b16 %v4371, %v4363
    %v4684 = vpack.c.b16 %v4372, %v4364
    %v4685 = vpack.c.b16 %v4373, %v4365
    %v4686 = vpack.c.b16 %v4374, %v4366
    %v4687 = vpack.c.b16 %v4375, %v4367
    %v4688 = vpack.c.b16 %v4384, %v4376
    %v4689 = vpack.c.b16 %v4385, %v4377
    %v4690 = vpack.c.b16 %v4386, %v4378
    %v4691 = vpack.c.b16 %v4387, %v4379
    %v4692 = vpack.c.b16 %v4388, %v4380
    %v4693 = vpack.c.b16 %v4389, %v4381
    %v4694 = vpack.c.b16 %v4390, %v4382
    %v4695 = vpack.c.b16 %v4391, %v4383
    %v4696 = vpack.c.b16 %v4400, %v4392
    %v4697 = vpack.c.b16 %v4401, %v4393
    %v4698 = vpack.c.b16 %v4402, %v4394
    %v4699 = vpack.c.b16 %v4403, %v4395
    %v4700 = vpack.c.b16 %v4404, %v4396
    %v4701 = vpack.c.b16 %v4405, %v4397
    %v4702 = vpack.c.b16 %v4406, %v4398
    %v4703 = vpack.c.b16 %v4407, %v4399
    %v4704 = vpack.c.b16 %v4416, %v4408
    %v4705 = vpack.c.b16 %v4417, %v4409
    %v4706 = vpack.c.b16 %v4418, %v4410
    %v4707 = vpack.c.b16 %v4419, %v4411
    %v4708 = vpack.c.b16 %v4420, %v4412
    %v4709 = vpack.c.b16 %v4421, %v4413
    %v4710 = vpack.c.b16 %v4422, %v4414
    %v4711 = vpack.c.b16 %v4423, %v4415
    %v4712 = vpack.c.b16 %v4432, %v4424
    %v4713 = vpack.c.b16 %v4433, %v4425
    %v4714 = vpack.c.b16 %v4434, %v4426
    %v4715 = vpack.c.b16 %v4435, %v4427
    %v4716 = vpack.c.b16 %v4436, %v4428
    %v4717 = vpack.c.b16 %v4437, %v4429
    %v4718 = vpack.c.b16 %v4438, %v4430
    %v4719 = vpack.c.b16 %v4439, %v4431
    %v4720 = vpack.c.b16 %v4448, %v4440
    %v4721 = vpack.c.b16 %v4449, %v4441
    %v4722 = vpack.c.b16 %v4450, %v4442
    %v4723 = vpack.c.b16 %v4451, %v4443
    %v4724 = vpack.c.b16 %v4452, %v4444
    %v4725 = vpack.c.b16 %v4453, %v4445
    %v4726 = vpack.c.b16 %v4454, %v4446
    %v4727 = vpack.c.b16 %v4455, %v4447
    %v4728 = vpack.c.b16 %v4464, %v4456
    %v4729 = vpack.c.b16 %v4465, %v4457
    %v4730 = vpack.c.b16 %v4466, %v4458
    %v4731 = vpack.c.b16 %v4467, %v4459
    %v4732 = vpack.c.b16 %v4468, %v4460
    %v4733 = vpack.c.b16 %v4469, %v4461
    %v4734 = vpack.c.b16 %v4470, %v4462
    %v4735 = vpack.c.b16 %v4471, %v4463
    %v4736 = vpack.c.b16 %v4480, %v4472
    %v4737 = vpack.c.b16 %v4481, %v4473
    %v4738 = vpack.c.b16 %v4482, %v4474
    %v4739 = vpack.c.b16 %v4483, %v4475
    %v4740 = vpack.c.b16 %v4484, %v4476
    %v4741 = vpack.c.b16 %v4485, %v4477
    %v4742 = vpack.c.b16 %v4486, %v4478
    %v4743 = vpack.c.b16 %v4487, %v4479
    %5000 = vmatprep.subr.bf16.mxu0 %v4545
    %5001 = vmatpush1.bf16.msra.mxu0 %v4544
    %5002 = vmatprep.subr.bf16.mxu0 %v4537
    %5003 = vmatpush1.bf16.msra.mxu0 %v4536
    %5004 = vmatprep.subr.bf16.mxu0 %v4529
    %5005 = vmatpush1.bf16.msra.mxu0 %v4528
    %5006 = vmatprep.subr.bf16.mxu0 %v4521
    %5007 = vmatpush1.bf16.msra.mxu0 %v4520
    %5008 = vmatprep.subr.bf16.mxu0 %v4513
    %5009 = vmatpush1.bf16.msra.mxu0 %v4512
    %5010 = vmatprep.subr.bf16.mxu0 %v4505
    %5011 = vmatpush1.bf16.msra.mxu0 %v4504
    %5012 = vmatprep.subr.bf16.mxu0 %v4497
    %5013 = vmatpush1.bf16.msra.mxu0 %v4496
    %5014 = vmatprep.subr.bf16.mxu0 %v4489
    %5015 = vmatpush1.bf16.msra.mxu0 %v4488
    %5016 = vmatprep.subr.bf16.mxu0 %v4609
    %5017 = vmatpush2.bf16.msra.mxu0 %v4608
    %5018 = vmatprep.subr.bf16.mxu0 %v4601
    %5019 = vmatpush2.bf16.msra.mxu0 %v4600
    %5020 = vmatprep.subr.bf16.mxu0 %v4593
    %5021 = vmatpush2.bf16.msra.mxu0 %v4592
    %5022 = vmatprep.subr.bf16.mxu0 %v4585
    %5023 = vmatpush2.bf16.msra.mxu0 %v4584
    %5024 = vmatprep.subr.bf16.mxu0 %v4577
    %5025 = vmatpush2.bf16.msra.mxu0 %v4576
    %5026 = vmatprep.subr.bf16.mxu0 %v4569
    %5027 = vmatpush2.bf16.msra.mxu0 %v4568
    %5028 = vmatprep.subr.bf16.mxu0 %v4561
    %5029 = vmatpush2.bf16.msra.mxu0 %v4560
    %5030 = vmatprep.subr.bf16.mxu0 %v4553
    %5031 = vmatpush2.bf16.msra.mxu0 %v4552
    %5032 = vmatprep.mubr.bf16.mxu0 %v3407
    %5033 = vmatmul.mubr.bf16.gmra.mxu0 %v3406
    %v5034 = vpop.f32.mrf.mxu0
    %v5035 = vadd.f32 %v3683, %v5034
    %v5036 = vpop.f32.mrf.mxu0
    %v5037 = vadd.f32 %v3687, %v5036
    %v5038 = vpop.f32.mrf.mxu0
    %v5039 = vadd.f32 %v3683, %v5038
    %v5040 = vpop.f32.mrf.mxu0
    %v5041 = vadd.f32 %v3687, %v5040
    %5042 = vmatprep.mubr.bf16.mxu0 %v3411
    %5043 = vmatmul.mubr.bf16.gmra.mxu0 %v3410
    %v5044 = vpop.f32.mrf.mxu0
    %v5045 = vadd.f32 %v3683, %v5044
    %v5046 = vpop.f32.mrf.mxu0
    %v5047 = vadd.f32 %v3687, %v5046
    %v5048 = vpop.f32.mrf.mxu0
    %v5049 = vadd.f32 %v3683, %v5048
    %v5050 = vpop.f32.mrf.mxu0
    %v5051 = vadd.f32 %v3687, %v5050
    %5052 = vmatprep.mubr.bf16.mxu0 %v3415
    %5053 = vmatmul.mubr.bf16.gmra.mxu0 %v3414
    %v5054 = vpop.f32.mrf.mxu0
    %v5055 = vadd.f32 %v3683, %v5054
    %v5056 = vpop.f32.mrf.mxu0
    %v5057 = vadd.f32 %v3687, %v5056
    %v5058 = vpop.f32.mrf.mxu0
    %v5059 = vadd.f32 %v3683, %v5058
    %v5060 = vpop.f32.mrf.mxu0
    %v5061 = vadd.f32 %v3687, %v5060
    %5062 = vmatprep.mubr.bf16.mxu0 %v3419
    %5063 = vmatmul.mubr.bf16.gmra.mxu0 %v3418
    %v5064 = vpop.f32.mrf.mxu0
    %v5065 = vadd.f32 %v3683, %v5064
    %v5066 = vpop.f32.mrf.mxu0
    %v5067 = vadd.f32 %v3687, %v5066
    %v5068 = vpop.f32.mrf.mxu0
    %v5069 = vadd.f32 %v3683, %v5068
    %v5070 = vpop.f32.mrf.mxu0
    %v5071 = vadd.f32 %v3687, %v5070
    %5072 = vdwg.mxu0
    %5073 = vmatprep.subr.bf16.mxu0 %v4673
    %5074 = vmatpush1.bf16.msra.mxu0 %v4672
    %5075 = vmatprep.subr.bf16.mxu0 %v4665
    %5076 = vmatpush1.bf16.msra.mxu0 %v4664
    %5077 = vmatprep.subr.bf16.mxu0 %v4657
    %5078 = vmatpush1.bf16.msra.mxu0 %v4656
    %5079 = vmatprep.subr.bf16.mxu0 %v4649
    %5080 = vmatpush1.bf16.msra.mxu0 %v4648
    %5081 = vmatprep.subr.bf16.mxu0 %v4641
    %5082 = vmatpush1.bf16.msra.mxu0 %v4640
    %5083 = vmatprep.subr.bf16.mxu0 %v4633
    %5084 = vmatpush1.bf16.msra.mxu0 %v4632
    %5085 = vmatprep.subr.bf16.mxu0 %v4625
    %5086 = vmatpush1.bf16.msra.mxu0 %v4624
    %5087 = vmatprep.subr.bf16.mxu0 %v4617
    %5088 = vmatpush1.bf16.msra.mxu0 %v4616
    %5089 = vmatprep.subr.bf16.mxu0 %v4737
    %5090 = vmatpush2.bf16.msra.mxu0 %v4736
    %5091 = vmatprep.subr.bf16.mxu0 %v4729
    %5092 = vmatpush2.bf16.msra.mxu0 %v4728
    %5093 = vmatprep.subr.bf16.mxu0 %v4721
    %5094 = vmatpush2.bf16.msra.mxu0 %v4720
    %5095 = vmatprep.subr.bf16.mxu0 %v4713
    %5096 = vmatpush2.bf16.msra.mxu0 %v4712
    %5097 = vmatprep.subr.bf16.mxu0 %v4705
    %5098 = vmatpush2.bf16.msra.mxu0 %v4704
    %5099 = vmatprep.subr.bf16.mxu0 %v4697
    %5100 = vmatpush2.bf16.msra.mxu0 %v4696
    %5101 = vmatprep.subr.bf16.mxu0 %v4689
    %5102 = vmatpush2.bf16.msra.mxu0 %v4688
    %5103 = vmatprep.subr.bf16.mxu0 %v4681
    %5104 = vmatpush2.bf16.msra.mxu0 %v4680
    %5105 = vmatprep.mubr.bf16.mxu0 %v3409
    %5106 = vmatmul.mubr.bf16.gmra.mxu0 %v3408
    %v5107 = vpop.f32.mrf.mxu0
    %v5108 = vadd.f32 %v5035, %v5107
    %v5109 = vpop.f32.mrf.mxu0
    %v5110 = vadd.f32 %v5037, %v5109
    %v5111 = vpop.f32.mrf.mxu0
    %v5112 = vadd.f32 %v5039, %v5111
    %v5113 = vpop.f32.mrf.mxu0
    %v5114 = vadd.f32 %v5041, %v5113
    %5115 = vmatprep.mubr.bf16.mxu0 %v3413
    %5116 = vmatmul.mubr.bf16.gmra.mxu0 %v3412
    %v5117 = vpop.f32.mrf.mxu0
    %v5118 = vadd.f32 %v5045, %v5117
    %v5119 = vpop.f32.mrf.mxu0
    %v5120 = vadd.f32 %v5047, %v5119
    %v5121 = vpop.f32.mrf.mxu0
    %v5122 = vadd.f32 %v5049, %v5121
    %v5123 = vpop.f32.mrf.mxu0
    %v5124 = vadd.f32 %v5051, %v5123
    %5125 = vmatprep.mubr.bf16.mxu0 %v3417
    %5126 = vmatmul.mubr.bf16.gmra.mxu0 %v3416
    %v5127 = vpop.f32.mrf.mxu0
    %v5128 = vadd.f32 %v5055, %v5127
    %v5129 = vpop.f32.mrf.mxu0
    %v5130 = vadd.f32 %v5057, %v5129
    %v5131 = vpop.f32.mrf.mxu0
    %v5132 = vadd.f32 %v5059, %v5131
    %v5133 = vpop.f32.mrf.mxu0
    %v5134 = vadd.f32 %v5061, %v5133
    %5135 = vmatprep.mubr.bf16.mxu0 %v3421
    %5136 = vmatmul.mubr.bf16.gmra.mxu0 %v3420
    %v5137 = vpop.f32.mrf.mxu0
    %v5138 = vadd.f32 %v5065, %v5137
    %v5139 = vpop.f32.mrf.mxu0
    %v5140 = vadd.f32 %v5067, %v5139
    %v5141 = vpop.f32.mrf.mxu0
    %v5142 = vadd.f32 %v5069, %v5141
    %v5143 = vpop.f32.mrf.mxu0
    %v5144 = vadd.f32 %v5071, %v5143
    %5145 = vdwg.mxu0
    %5146 = vmatprep.subr.bf16.mxu0 %v4547
    %5147 = vmatpush1.bf16.msra.mxu0 %v4546
    %5148 = vmatprep.subr.bf16.mxu0 %v4539
    %5149 = vmatpush1.bf16.msra.mxu0 %v4538
    %5150 = vmatprep.subr.bf16.mxu0 %v4531
    %5151 = vmatpush1.bf16.msra.mxu0 %v4530
    %5152 = vmatprep.subr.bf16.mxu0 %v4523
    %5153 = vmatpush1.bf16.msra.mxu0 %v4522
    %5154 = vmatprep.subr.bf16.mxu0 %v4515
    %5155 = vmatpush1.bf16.msra.mxu0 %v4514
    %5156 = vmatprep.subr.bf16.mxu0 %v4507
    %5157 = vmatpush1.bf16.msra.mxu0 %v4506
    %5158 = vmatprep.subr.bf16.mxu0 %v4499
    %5159 = vmatpush1.bf16.msra.mxu0 %v4498
    %5160 = vmatprep.subr.bf16.mxu0 %v4491
    %5161 = vmatpush1.bf16.msra.mxu0 %v4490
    %5162 = vmatprep.subr.bf16.mxu0 %v4611
    %5163 = vmatpush2.bf16.msra.mxu0 %v4610
    %5164 = vmatprep.subr.bf16.mxu0 %v4603
    %5165 = vmatpush2.bf16.msra.mxu0 %v4602
    %5166 = vmatprep.subr.bf16.mxu0 %v4595
    %5167 = vmatpush2.bf16.msra.mxu0 %v4594
    %5168 = vmatprep.subr.bf16.mxu0 %v4587
    %5169 = vmatpush2.bf16.msra.mxu0 %v4586
    %5170 = vmatprep.subr.bf16.mxu0 %v4579
    %5171 = vmatpush2.bf16.msra.mxu0 %v4578
    %5172 = vmatprep.subr.bf16.mxu0 %v4571
    %5173 = vmatpush2.bf16.msra.mxu0 %v4570
    %5174 = vmatprep.subr.bf16.mxu0 %v4563
    %5175 = vmatpush2.bf16.msra.mxu0 %v4562
    %5176 = vmatprep.subr.bf16.mxu0 %v4555
    %5177 = vmatpush2.bf16.msra.mxu0 %v4554
    %5178 = vmatprep.mubr.bf16.mxu0 %v3407
    %5179 = vmatmul.mubr.bf16.gmra.mxu0 %v3406
    %v5180 = vpop.f32.mrf.mxu0
    %v5181 = vadd.f32 %v3691, %v5180
    %v5182 = vpop.f32.mrf.mxu0
    %v5183 = vadd.f32 %v3695, %v5182
    %v5184 = vpop.f32.mrf.mxu0
    %v5185 = vadd.f32 %v3691, %v5184
    %v5186 = vpop.f32.mrf.mxu0
    %v5187 = vadd.f32 %v3695, %v5186
    %5188 = vmatprep.mubr.bf16.mxu0 %v3411
    %5189 = vmatmul.mubr.bf16.gmra.mxu0 %v3410
    %v5190 = vpop.f32.mrf.mxu0
    %v5191 = vadd.f32 %v3691, %v5190
    %v5192 = vpop.f32.mrf.mxu0
    %v5193 = vadd.f32 %v3695, %v5192
    %v5194 = vpop.f32.mrf.mxu0
    %v5195 = vadd.f32 %v3691, %v5194
    %v5196 = vpop.f32.mrf.mxu0
    %v5197 = vadd.f32 %v3695, %v5196
    %5198 = vmatprep.mubr.bf16.mxu0 %v3415
    %5199 = vmatmul.mubr.bf16.gmra.mxu0 %v3414
    %v5200 = vpop.f32.mrf.mxu0
    %v5201 = vadd.f32 %v3691, %v5200
    %v5202 = vpop.f32.mrf.mxu0
    %v5203 = vadd.f32 %v3695, %v5202
    %v5204 = vpop.f32.mrf.mxu0
    %v5205 = vadd.f32 %v3691, %v5204
    %v5206 = vpop.f32.mrf.mxu0
    %v5207 = vadd.f32 %v3695, %v5206
    %5208 = vmatprep.mubr.bf16.mxu0 %v3419
    %5209 = vmatmul.mubr.bf16.gmra.mxu0 %v3418
    %v5210 = vpop.f32.mrf.mxu0
    %v5211 = vadd.f32 %v3691, %v5210
    %v5212 = vpop.f32.mrf.mxu0
    %v5213 = vadd.f32 %v3695, %v5212
    %v5214 = vpop.f32.mrf.mxu0
    %v5215 = vadd.f32 %v3691, %v5214
    %v5216 = vpop.f32.mrf.mxu0
    %v5217 = vadd.f32 %v3695, %v5216
    %5218 = vdwg.mxu0
    %5219 = vmatprep.subr.bf16.mxu0 %v4675
    %5220 = vmatpush1.bf16.msra.mxu0 %v4674
    %5221 = vmatprep.subr.bf16.mxu0 %v4667
    %5222 = vmatpush1.bf16.msra.mxu0 %v4666
    %5223 = vmatprep.subr.bf16.mxu0 %v4659
    %5224 = vmatpush1.bf16.msra.mxu0 %v4658
    %5225 = vmatprep.subr.bf16.mxu0 %v4651
    %5226 = vmatpush1.bf16.msra.mxu0 %v4650
    %5227 = vmatprep.subr.bf16.mxu0 %v4643
    %5228 = vmatpush1.bf16.msra.mxu0 %v4642
    %5229 = vmatprep.subr.bf16.mxu0 %v4635
    %5230 = vmatpush1.bf16.msra.mxu0 %v4634
    %5231 = vmatprep.subr.bf16.mxu0 %v4627
    %5232 = vmatpush1.bf16.msra.mxu0 %v4626
    %5233 = vmatprep.subr.bf16.mxu0 %v4619
    %5234 = vmatpush1.bf16.msra.mxu0 %v4618
    %5235 = vmatprep.subr.bf16.mxu0 %v4739
    %5236 = vmatpush2.bf16.msra.mxu0 %v4738
    %5237 = vmatprep.subr.bf16.mxu0 %v4731
    %5238 = vmatpush2.bf16.msra.mxu0 %v4730
    %5239 = vmatprep.subr.bf16.mxu0 %v4723
    %5240 = vmatpush2.bf16.msra.mxu0 %v4722
    %5241 = vmatprep.subr.bf16.mxu0 %v4715
    %5242 = vmatpush2.bf16.msra.mxu0 %v4714
    %5243 = vmatprep.subr.bf16.mxu0 %v4707
    %5244 = vmatpush2.bf16.msra.mxu0 %v4706
    %5245 = vmatprep.subr.bf16.mxu0 %v4699
    %5246 = vmatpush2.bf16.msra.mxu0 %v4698
    %5247 = vmatprep.subr.bf16.mxu0 %v4691
    %5248 = vmatpush2.bf16.msra.mxu0 %v4690
    %5249 = vmatprep.subr.bf16.mxu0 %v4683
    %5250 = vmatpush2.bf16.msra.mxu0 %v4682
    %5251 = vmatprep.mubr.bf16.mxu0 %v3409
    %5252 = vmatmul.mubr.bf16.gmra.mxu0 %v3408
    %v5253 = vpop.f32.mrf.mxu0
    %v5254 = vadd.f32 %v5181, %v5253
    %v5255 = vpop.f32.mrf.mxu0
    %v5256 = vadd.f32 %v5183, %v5255
    %v5257 = vpop.f32.mrf.mxu0
    %v5258 = vadd.f32 %v5185, %v5257
    %v5259 = vpop.f32.mrf.mxu0
    %v5260 = vadd.f32 %v5187, %v5259
    %5261 = vmatprep.mubr.bf16.mxu0 %v3413
    %5262 = vmatmul.mubr.bf16.gmra.mxu0 %v3412
    %v5263 = vpop.f32.mrf.mxu0
    %v5264 = vadd.f32 %v5191, %v5263
    %v5265 = vpop.f32.mrf.mxu0
    %v5266 = vadd.f32 %v5193, %v5265
    %v5267 = vpop.f32.mrf.mxu0
    %v5268 = vadd.f32 %v5195, %v5267
    %v5269 = vpop.f32.mrf.mxu0
    %v5270 = vadd.f32 %v5197, %v5269
    %5271 = vmatprep.mubr.bf16.mxu0 %v3417
    %5272 = vmatmul.mubr.bf16.gmra.mxu0 %v3416
    %v5273 = vpop.f32.mrf.mxu0
    %v5274 = vadd.f32 %v5201, %v5273
    %v5275 = vpop.f32.mrf.mxu0
    %v5276 = vadd.f32 %v5203, %v5275
    %v5277 = vpop.f32.mrf.mxu0
    %v5278 = vadd.f32 %v5205, %v5277
    %v5279 = vpop.f32.mrf.mxu0
    %v5280 = vadd.f32 %v5207, %v5279
    %5281 = vmatprep.mubr.bf16.mxu0 %v3421
    %5282 = vmatmul.mubr.bf16.gmra.mxu0 %v3420
    %v5283 = vpop.f32.mrf.mxu0
    %v5284 = vadd.f32 %v5211, %v5283
    %v5285 = vpop.f32.mrf.mxu0
    %v5286 = vadd.f32 %v5213, %v5285
    %v5287 = vpop.f32.mrf.mxu0
    %v5288 = vadd.f32 %v5215, %v5287
    %v5289 = vpop.f32.mrf.mxu0
    %v5290 = vadd.f32 %v5217, %v5289
    %5291 = vdwg.mxu0
    %5292 = vmatprep.subr.bf16.mxu0 %v4549
    %5293 = vmatpush1.bf16.msra.mxu0 %v4548
    %5294 = vmatprep.subr.bf16.mxu0 %v4541
    %5295 = vmatpush1.bf16.msra.mxu0 %v4540
    %5296 = vmatprep.subr.bf16.mxu0 %v4533
    %5297 = vmatpush1.bf16.msra.mxu0 %v4532
    %5298 = vmatprep.subr.bf16.mxu0 %v4525
    %5299 = vmatpush1.bf16.msra.mxu0 %v4524
    %5300 = vmatprep.subr.bf16.mxu0 %v4517
    %5301 = vmatpush1.bf16.msra.mxu0 %v4516
    %5302 = vmatprep.subr.bf16.mxu0 %v4509
    %5303 = vmatpush1.bf16.msra.mxu0 %v4508
    %5304 = vmatprep.subr.bf16.mxu0 %v4501
    %5305 = vmatpush1.bf16.msra.mxu0 %v4500
    %5306 = vmatprep.subr.bf16.mxu0 %v4493
    %5307 = vmatpush1.bf16.msra.mxu0 %v4492
    %5308 = vmatprep.subr.bf16.mxu0 %v4613
    %5309 = vmatpush2.bf16.msra.mxu0 %v4612
    %5310 = vmatprep.subr.bf16.mxu0 %v4605
    %5311 = vmatpush2.bf16.msra.mxu0 %v4604
    %5312 = vmatprep.subr.bf16.mxu0 %v4597
    %5313 = vmatpush2.bf16.msra.mxu0 %v4596
    %5314 = vmatprep.subr.bf16.mxu0 %v4589
    %5315 = vmatpush2.bf16.msra.mxu0 %v4588
    %5316 = vmatprep.subr.bf16.mxu0 %v4581
    %5317 = vmatpush2.bf16.msra.mxu0 %v4580
    %5318 = vmatprep.subr.bf16.mxu0 %v4573
    %5319 = vmatpush2.bf16.msra.mxu0 %v4572
    %5320 = vmatprep.subr.bf16.mxu0 %v4565
    %5321 = vmatpush2.bf16.msra.mxu0 %v4564
    %5322 = vmatprep.subr.bf16.mxu0 %v4557
    %5323 = vmatpush2.bf16.msra.mxu0 %v4556
    %5324 = vmatprep.mubr.bf16.mxu0 %v3407
    %5325 = vmatmul.mubr.bf16.gmra.mxu0 %v3406
    %v5326 = vpop.f32.mrf.mxu0
    %v5327 = vadd.f32 %v3699, %v5326
    %v5328 = vpop.f32.mrf.mxu0
    %v5329 = vadd.f32 %v3703, %v5328
    %v5330 = vpop.f32.mrf.mxu0
    %v5331 = vadd.f32 %v3699, %v5330
    %v5332 = vpop.f32.mrf.mxu0
    %v5333 = vadd.f32 %v3703, %v5332
    %5334 = vmatprep.mubr.bf16.mxu0 %v3411
    %5335 = vmatmul.mubr.bf16.gmra.mxu0 %v3410
    %v5336 = vpop.f32.mrf.mxu0
    %v5337 = vadd.f32 %v3699, %v5336
    %v5338 = vpop.f32.mrf.mxu0
    %v5339 = vadd.f32 %v3703, %v5338
    %v5340 = vpop.f32.mrf.mxu0
    %v5341 = vadd.f32 %v3699, %v5340
    %v5342 = vpop.f32.mrf.mxu0
    %v5343 = vadd.f32 %v3703, %v5342
    %5344 = vmatprep.mubr.bf16.mxu0 %v3415
    %5345 = vmatmul.mubr.bf16.gmra.mxu0 %v3414
    %v5346 = vpop.f32.mrf.mxu0
    %v5347 = vadd.f32 %v3699, %v5346
    %v5348 = vpop.f32.mrf.mxu0
    %v5349 = vadd.f32 %v3703, %v5348
    %v5350 = vpop.f32.mrf.mxu0
    %v5351 = vadd.f32 %v3699, %v5350
    %v5352 = vpop.f32.mrf.mxu0
    %v5353 = vadd.f32 %v3703, %v5352
    %5354 = vmatprep.mubr.bf16.mxu0 %v3419
    %5355 = vmatmul.mubr.bf16.gmra.mxu0 %v3418
    %v5356 = vpop.f32.mrf.mxu0
    %v5357 = vadd.f32 %v3699, %v5356
    %v5358 = vpop.f32.mrf.mxu0
    %v5359 = vadd.f32 %v3703, %v5358
    %v5360 = vpop.f32.mrf.mxu0
    %v5361 = vadd.f32 %v3699, %v5360
    %v5362 = vpop.f32.mrf.mxu0
    %v5363 = vadd.f32 %v3703, %v5362
    %5364 = vdwg.mxu0
    %5365 = vmatprep.subr.bf16.mxu0 %v4677
    %5366 = vmatpush1.bf16.msra.mxu0 %v4676
    %5367 = vmatprep.subr.bf16.mxu0 %v4669
    %5368 = vmatpush1.bf16.msra.mxu0 %v4668
    %5369 = vmatprep.subr.bf16.mxu0 %v4661
    %5370 = vmatpush1.bf16.msra.mxu0 %v4660
    %5371 = vmatprep.subr.bf16.mxu0 %v4653
    %5372 = vmatpush1.bf16.msra.mxu0 %v4652
    %5373 = vmatprep.subr.bf16.mxu0 %v4645
    %5374 = vmatpush1.bf16.msra.mxu0 %v4644
    %5375 = vmatprep.subr.bf16.mxu0 %v4637
    %5376 = vmatpush1.bf16.msra.mxu0 %v4636
    %5377 = vmatprep.subr.bf16.mxu0 %v4629
    %5378 = vmatpush1.bf16.msra.mxu0 %v4628
    %5379 = vmatprep.subr.bf16.mxu0 %v4621
    %5380 = vmatpush1.bf16.msra.mxu0 %v4620
    %5381 = vmatprep.subr.bf16.mxu0 %v4741
    %5382 = vmatpush2.bf16.msra.mxu0 %v4740
    %5383 = vmatprep.subr.bf16.mxu0 %v4733
    %5384 = vmatpush2.bf16.msra.mxu0 %v4732
    %5385 = vmatprep.subr.bf16.mxu0 %v4725
    %5386 = vmatpush2.bf16.msra.mxu0 %v4724
    %5387 = vmatprep.subr.bf16.mxu0 %v4717
    %5388 = vmatpush2.bf16.msra.mxu0 %v4716
    %5389 = vmatprep.subr.bf16.mxu0 %v4709
    %5390 = vmatpush2.bf16.msra.mxu0 %v4708
    %5391 = vmatprep.subr.bf16.mxu0 %v4701
    %5392 = vmatpush2.bf16.msra.mxu0 %v4700
    %5393 = vmatprep.subr.bf16.mxu0 %v4693
    %5394 = vmatpush2.bf16.msra.mxu0 %v4692
    %5395 = vmatprep.subr.bf16.mxu0 %v4685
    %5396 = vmatpush2.bf16.msra.mxu0 %v4684
    %5397 = vmatprep.mubr.bf16.mxu0 %v3409
    %5398 = vmatmul.mubr.bf16.gmra.mxu0 %v3408
    %v5399 = vpop.f32.mrf.mxu0
    %v5400 = vadd.f32 %v5327, %v5399
    %v5401 = vpop.f32.mrf.mxu0
    %v5402 = vadd.f32 %v5329, %v5401
    %v5403 = vpop.f32.mrf.mxu0
    %v5404 = vadd.f32 %v5331, %v5403
    %v5405 = vpop.f32.mrf.mxu0
    %v5406 = vadd.f32 %v5333, %v5405
    %5407 = vmatprep.mubr.bf16.mxu0 %v3413
    %5408 = vmatmul.mubr.bf16.gmra.mxu0 %v3412
    %v5409 = vpop.f32.mrf.mxu0
    %v5410 = vadd.f32 %v5337, %v5409
    %v5411 = vpop.f32.mrf.mxu0
    %v5412 = vadd.f32 %v5339, %v5411
    %v5413 = vpop.f32.mrf.mxu0
    %v5414 = vadd.f32 %v5341, %v5413
    %v5415 = vpop.f32.mrf.mxu0
    %v5416 = vadd.f32 %v5343, %v5415
    %5417 = vmatprep.mubr.bf16.mxu0 %v3417
    %5418 = vmatmul.mubr.bf16.gmra.mxu0 %v3416
    %v5419 = vpop.f32.mrf.mxu0
    %v5420 = vadd.f32 %v5347, %v5419
    %v5421 = vpop.f32.mrf.mxu0
    %v5422 = vadd.f32 %v5349, %v5421
    %v5423 = vpop.f32.mrf.mxu0
    %v5424 = vadd.f32 %v5351, %v5423
    %v5425 = vpop.f32.mrf.mxu0
    %v5426 = vadd.f32 %v5353, %v5425
    %5427 = vmatprep.mubr.bf16.mxu0 %v3421
    %5428 = vmatmul.mubr.bf16.gmra.mxu0 %v3420
    %v5429 = vpop.f32.mrf.mxu0
    %v5430 = vadd.f32 %v5357, %v5429
    %v5431 = vpop.f32.mrf.mxu0
    %v5432 = vadd.f32 %v5359, %v5431
    %v5433 = vpop.f32.mrf.mxu0
    %v5434 = vadd.f32 %v5361, %v5433
    %v5435 = vpop.f32.mrf.mxu0
    %v5436 = vadd.f32 %v5363, %v5435
    %5437 = vdwg.mxu0
    %5438 = vmatprep.subr.bf16.mxu0 %v4551
    %5439 = vmatpush1.bf16.msra.mxu0 %v4550
    %5440 = vmatprep.subr.bf16.mxu0 %v4543
    %5441 = vmatpush1.bf16.msra.mxu0 %v4542
    %5442 = vmatprep.subr.bf16.mxu0 %v4535
    %5443 = vmatpush1.bf16.msra.mxu0 %v4534
    %5444 = vmatprep.subr.bf16.mxu0 %v4527
    %5445 = vmatpush1.bf16.msra.mxu0 %v4526
    %5446 = vmatprep.subr.bf16.mxu0 %v4519
    %5447 = vmatpush1.bf16.msra.mxu0 %v4518
    %5448 = vmatprep.subr.bf16.mxu0 %v4511
    %5449 = vmatpush1.bf16.msra.mxu0 %v4510
    %5450 = vmatprep.subr.bf16.mxu0 %v4503
    %5451 = vmatpush1.bf16.msra.mxu0 %v4502
    %5452 = vmatprep.subr.bf16.mxu0 %v4495
    %5453 = vmatpush1.bf16.msra.mxu0 %v4494
    %5454 = vmatprep.subr.bf16.mxu0 %v4615
    %5455 = vmatpush2.bf16.msra.mxu0 %v4614
    %5456 = vmatprep.subr.bf16.mxu0 %v4607
    %5457 = vmatpush2.bf16.msra.mxu0 %v4606
    %5458 = vmatprep.subr.bf16.mxu0 %v4599
    %5459 = vmatpush2.bf16.msra.mxu0 %v4598
    %5460 = vmatprep.subr.bf16.mxu0 %v4591
    %5461 = vmatpush2.bf16.msra.mxu0 %v4590
    %5462 = vmatprep.subr.bf16.mxu0 %v4583
    %5463 = vmatpush2.bf16.msra.mxu0 %v4582
    %5464 = vmatprep.subr.bf16.mxu0 %v4575
    %5465 = vmatpush2.bf16.msra.mxu0 %v4574
    %5466 = vmatprep.subr.bf16.mxu0 %v4567
    %5467 = vmatpush2.bf16.msra.mxu0 %v4566
    %5468 = vmatprep.subr.bf16.mxu0 %v4559
    %5469 = vmatpush2.bf16.msra.mxu0 %v4558
    %5470 = vmatprep.mubr.bf16.mxu0 %v3407
    %5471 = vmatmul.mubr.bf16.gmra.mxu0 %v3406
    %v5472 = vpop.f32.mrf.mxu0
    %v5473 = vadd.f32 %v3707, %v5472
    %v5474 = vpop.f32.mrf.mxu0
    %v5475 = vadd.f32 %v3711, %v5474
    %v5476 = vpop.f32.mrf.mxu0
    %v5477 = vadd.f32 %v3707, %v5476
    %v5478 = vpop.f32.mrf.mxu0
    %v5479 = vadd.f32 %v3711, %v5478
    %5480 = vmatprep.mubr.bf16.mxu0 %v3411
    %5481 = vmatmul.mubr.bf16.gmra.mxu0 %v3410
    %v5482 = vpop.f32.mrf.mxu0
    %v5483 = vadd.f32 %v3707, %v5482
    %v5484 = vpop.f32.mrf.mxu0
    %v5485 = vadd.f32 %v3711, %v5484
    %v5486 = vpop.f32.mrf.mxu0
    %v5487 = vadd.f32 %v3707, %v5486
    %v5488 = vpop.f32.mrf.mxu0
    %v5489 = vadd.f32 %v3711, %v5488
    %5490 = vmatprep.mubr.bf16.mxu0 %v3415
    %5491 = vmatmul.mubr.bf16.gmra.mxu0 %v3414
    %v5492 = vpop.f32.mrf.mxu0
    %v5493 = vadd.f32 %v3707, %v5492
    %v5494 = vpop.f32.mrf.mxu0
    %v5495 = vadd.f32 %v3711, %v5494
    %v5496 = vpop.f32.mrf.mxu0
    %v5497 = vadd.f32 %v3707, %v5496
    %v5498 = vpop.f32.mrf.mxu0
    %v5499 = vadd.f32 %v3711, %v5498
    %5500 = vmatprep.mubr.bf16.mxu0 %v3419
    %5501 = vmatmul.mubr.bf16.gmra.mxu0 %v3418
    %v5502 = vpop.f32.mrf.mxu0
    %v5503 = vadd.f32 %v3707, %v5502
    %v5504 = vpop.f32.mrf.mxu0
    %v5505 = vadd.f32 %v3711, %v5504
    %v5506 = vpop.f32.mrf.mxu0
    %v5507 = vadd.f32 %v3707, %v5506
    %v5508 = vpop.f32.mrf.mxu0
    %v5509 = vadd.f32 %v3711, %v5508
    %5510 = vdwg.mxu0
    %5511 = vmatprep.subr.bf16.mxu0 %v4679
    %5512 = vmatpush1.bf16.msra.mxu0 %v4678
    %5513 = vmatprep.subr.bf16.mxu0 %v4671
    %5514 = vmatpush1.bf16.msra.mxu0 %v4670
    %5515 = vmatprep.subr.bf16.mxu0 %v4663
    %5516 = vmatpush1.bf16.msra.mxu0 %v4662
    %5517 = vmatprep.subr.bf16.mxu0 %v4655
    %5518 = vmatpush1.bf16.msra.mxu0 %v4654
    %5519 = vmatprep.subr.bf16.mxu0 %v4647
    %5520 = vmatpush1.bf16.msra.mxu0 %v4646
    %5521 = vmatprep.subr.bf16.mxu0 %v4639
    %5522 = vmatpush1.bf16.msra.mxu0 %v4638
    %5523 = vmatprep.subr.bf16.mxu0 %v4631
    %5524 = vmatpush1.bf16.msra.mxu0 %v4630
    %5525 = vmatprep.subr.bf16.mxu0 %v4623
    %5526 = vmatpush1.bf16.msra.mxu0 %v4622
    %5527 = vmatprep.subr.bf16.mxu0 %v4743
    %5528 = vmatpush2.bf16.msra.mxu0 %v4742
    %5529 = vmatprep.subr.bf16.mxu0 %v4735
    %5530 = vmatpush2.bf16.msra.mxu0 %v4734
    %5531 = vmatprep.subr.bf16.mxu0 %v4727
    %5532 = vmatpush2.bf16.msra.mxu0 %v4726
    %5533 = vmatprep.subr.bf16.mxu0 %v4719
    %5534 = vmatpush2.bf16.msra.mxu0 %v4718
    %5535 = vmatprep.subr.bf16.mxu0 %v4711
    %5536 = vmatpush2.bf16.msra.mxu0 %v4710
    %5537 = vmatprep.subr.bf16.mxu0 %v4703
    %5538 = vmatpush2.bf16.msra.mxu0 %v4702
    %5539 = vmatprep.subr.bf16.mxu0 %v4695
    %5540 = vmatpush2.bf16.msra.mxu0 %v4694
    %5541 = vmatprep.subr.bf16.mxu0 %v4687
    %5542 = vmatpush2.bf16.msra.mxu0 %v4686
    %5543 = vmatprep.mubr.bf16.mxu0 %v3409
    %5544 = vmatmul.mubr.bf16.gmra.mxu0 %v3408
    %v5545 = vpop.f32.mrf.mxu0
    %v5546 = vadd.f32 %v5473, %v5545
    %v5547 = vpop.f32.mrf.mxu0
    %v5548 = vadd.f32 %v5475, %v5547
    %v5549 = vpop.f32.mrf.mxu0
    %v5550 = vadd.f32 %v5477, %v5549
    %v5551 = vpop.f32.mrf.mxu0
    %v5552 = vadd.f32 %v5479, %v5551
    %5553 = vmatprep.mubr.bf16.mxu0 %v3413
    %5554 = vmatmul.mubr.bf16.gmra.mxu0 %v3412
    %v5555 = vpop.f32.mrf.mxu0
    %v5556 = vadd.f32 %v5483, %v5555
    %v5557 = vpop.f32.mrf.mxu0
    %v5558 = vadd.f32 %v5485, %v5557
    %v5559 = vpop.f32.mrf.mxu0
    %v5560 = vadd.f32 %v5487, %v5559
    %v5561 = vpop.f32.mrf.mxu0
    %v5562 = vadd.f32 %v5489, %v5561
    %5563 = vmatprep.mubr.bf16.mxu0 %v3417
    %5564 = vmatmul.mubr.bf16.gmra.mxu0 %v3416
    %v5565 = vpop.f32.mrf.mxu0
    %v5566 = vadd.f32 %v5493, %v5565
    %v5567 = vpop.f32.mrf.mxu0
    %v5568 = vadd.f32 %v5495, %v5567
    %v5569 = vpop.f32.mrf.mxu0
    %v5570 = vadd.f32 %v5497, %v5569
    %v5571 = vpop.f32.mrf.mxu0
    %v5572 = vadd.f32 %v5499, %v5571
    %5573 = vmatprep.mubr.bf16.mxu0 %v3421
    %5574 = vmatmul.mubr.bf16.gmra.mxu0 %v3420
    %v5575 = vpop.f32.mrf.mxu0
    %v5576 = vadd.f32 %v5503, %v5575
    %v5577 = vpop.f32.mrf.mxu0
    %v5578 = vadd.f32 %v5505, %v5577
    %v5579 = vpop.f32.mrf.mxu0
    %v5580 = vadd.f32 %v5507, %v5579
    %v5581 = vpop.f32.mrf.mxu0
    %v5582 = vadd.f32 %v5509, %v5581
    %5583 = vdwg.mxu0
    %v5584 = vmax.f32 %v5108, 0.0
    %v5585 = vmax.f32 %v5110, 0.0
    %v5586 = vmax.f32 %v5254, 0.0
    %v5587 = vmax.f32 %v5256, 0.0
    %v5588 = vmax.f32 %v5400, 0.0
    %v5589 = vmax.f32 %v5402, 0.0
    %v5590 = vmax.f32 %v5546, 0.0
    %v5591 = vmax.f32 %v5548, 0.0
    %v5592 = vmax.f32 %v5112, 0.0
    %v5593 = vmax.f32 %v5114, 0.0
    %v5594 = vmax.f32 %v5258, 0.0
    %v5595 = vmax.f32 %v5260, 0.0
    %v5596 = vmax.f32 %v5404, 0.0
    %v5597 = vmax.f32 %v5406, 0.0
    %v5598 = vmax.f32 %v5550, 0.0
    %v5599 = vmax.f32 %v5552, 0.0
    %v5600 = vmax.f32 %v5118, 0.0
    %v5601 = vmax.f32 %v5120, 0.0
    %v5602 = vmax.f32 %v5264, 0.0
    %v5603 = vmax.f32 %v5266, 0.0
    %v5604 = vmax.f32 %v5410, 0.0
    %v5605 = vmax.f32 %v5412, 0.0
    %v5606 = vmax.f32 %v5556, 0.0
    %v5607 = vmax.f32 %v5558, 0.0
    %v5608 = vmax.f32 %v5122, 0.0
    %v5609 = vmax.f32 %v5124, 0.0
    %v5610 = vmax.f32 %v5268, 0.0
    %v5611 = vmax.f32 %v5270, 0.0
    %v5612 = vmax.f32 %v5414, 0.0
    %v5613 = vmax.f32 %v5416, 0.0
    %v5614 = vmax.f32 %v5560, 0.0
    %v5615 = vmax.f32 %v5562, 0.0
    %v5616 = vmax.f32 %v5128, 0.0
    %v5617 = vmax.f32 %v5130, 0.0
    %v5618 = vmax.f32 %v5274, 0.0
    %v5619 = vmax.f32 %v5276, 0.0
    %v5620 = vmax.f32 %v5420, 0.0
    %v5621 = vmax.f32 %v5422, 0.0
    %v5622 = vmax.f32 %v5566, 0.0
    %v5623 = vmax.f32 %v5568, 0.0
    %v5624 = vmax.f32 %v5132, 0.0
    %v5625 = vmax.f32 %v5134, 0.0
    %v5626 = vmax.f32 %v5278, 0.0
    %v5627 = vmax.f32 %v5280, 0.0
    %v5628 = vmax.f32 %v5424, 0.0
    %v5629 = vmax.f32 %v5426, 0.0
    %v5630 = vmax.f32 %v5570, 0.0
    %v5631 = vmax.f32 %v5572, 0.0
    %v5632 = vmax.f32 %v5138, 0.0
    %v5633 = vmax.f32 %v5140, 0.0
    %v5634 = vmax.f32 %v5284, 0.0
    %v5635 = vmax.f32 %v5286, 0.0
    %v5636 = vmax.f32 %v5430, 0.0
    %v5637 = vmax.f32 %v5432, 0.0
    %v5638 = vmax.f32 %v5576, 0.0
    %v5639 = vmax.f32 %v5578, 0.0
    %v5640 = vmax.f32 %v5142, 0.0
    %v5641 = vmax.f32 %v5144, 0.0
    %v5642 = vmax.f32 %v5288, 0.0
    %v5643 = vmax.f32 %v5290, 0.0
    %v5644 = vmax.f32 %v5434, 0.0
    %v5645 = vmax.f32 %v5436, 0.0
    %v5646 = vmax.f32 %v5580, 0.0
    %v5647 = vmax.f32 %v5582, 0.0
    %v5648 = vpack.c.bf16 %v5592, %v5584
    %v5649 = vpack.c.bf16 %v5593, %v5585
    %v5650 = vpack.c.bf16 %v5594, %v5586
    %v5651 = vpack.c.bf16 %v5595, %v5587
    %v5652 = vpack.c.bf16 %v5596, %v5588
    %v5653 = vpack.c.bf16 %v5597, %v5589
    %v5654 = vpack.c.bf16 %v5598, %v5590
    %v5655 = vpack.c.bf16 %v5599, %v5591
    %v5656 = vpack.c.bf16 %v5608, %v5600
    %v5657 = vpack.c.bf16 %v5609, %v5601
    %v5658 = vpack.c.bf16 %v5610, %v5602
    %v5659 = vpack.c.bf16 %v5611, %v5603
    %v5660 = vpack.c.bf16 %v5612, %v5604
    %v5661 = vpack.c.bf16 %v5613, %v5605
    %v5662 = vpack.c.bf16 %v5614, %v5606
    %v5663 = vpack.c.bf16 %v5615, %v5607
    %v5664 = vpack.c.bf16 %v5624, %v5616
    %v5665 = vpack.c.bf16 %v5625, %v5617
    %v5666 = vpack.c.bf16 %v5626, %v5618
    %v5667 = vpack.c.bf16 %v5627, %v5619
    %v5668 = vpack.c.bf16 %v5628, %v5620
    %v5669 = vpack.c.bf16 %v5629, %v5621
    %v5670 = vpack.c.bf16 %v5630, %v5622
    %v5671 = vpack.c.bf16 %v5631, %v5623
    %v5672 = vpack.c.bf16 %v5640, %v5632
    %v5673 = vpack.c.bf16 %v5641, %v5633
    %v5674 = vpack.c.bf16 %v5642, %v5634
    %v5675 = vpack.c.bf16 %v5643, %v5635
    %v5676 = vpack.c.bf16 %v5644, %v5636
    %v5677 = vpack.c.bf16 %v5645, %v5637
    %v5678 = vpack.c.bf16 %v5646, %v5638
    %v5679 = vpack.c.bf16 %v5647, %v5639
    %v5680 = vld [vmem:[#allocation6] sm:$0xf]
    %v5681 = vld [vmem:[#allocation6 + $0x4] sm:$0xf]
    %v5682 = vld [vmem:[#allocation6 + $0x8] sm:$0xf]
    %v5683 = vld [vmem:[#allocation6 + $0xc] sm:$0xf]
    %v5684 = vld [vmem:[#allocation6 + $0x10] sm:$0xf]
    %v5685 = vld [vmem:[#allocation6 + $0x14] sm:$0xf]
    %v5686 = vld [vmem:[#allocation6 + $0x18] sm:$0xf]
    %v5687 = vld [vmem:[#allocation6 + $0x1c] sm:$0xf]
    %v5688 = vld [vmem:[#allocation6 + $0x20] sm:$0xf]
    %v5689 = vld [vmem:[#allocation6 + $0x24] sm:$0xf]
    %v5690 = vld [vmem:[#allocation6 + $0x28] sm:$0xf]
    %v5691 = vld [vmem:[#allocation6 + $0x2c] sm:$0xf]
    %v5692 = vld [vmem:[#allocation6 + $0x30] sm:$0xf]
    %v5693 = vld [vmem:[#allocation6 + $0x34] sm:$0xf]
    %v5694 = vld [vmem:[#allocation6 + $0x38] sm:$0xf]
    %v5695 = vld [vmem:[#allocation6 + $0x3c] sm:$0xf]
    %v5696 = vld [vmem:[#allocation6 + $0x40] sm:$0xf]
    %v5697 = vld [vmem:[#allocation6 + $0x44] sm:$0xf]
    %v5698 = vld [vmem:[#allocation6 + $0x48] sm:$0xf]
    %v5699 = vld [vmem:[#allocation6 + $0x4c] sm:$0xf]
    %v5700 = vld [vmem:[#allocation6 + $0x50] sm:$0xf]
    %v5701 = vld [vmem:[#allocation6 + $0x54] sm:$0xf]
    %v5702 = vld [vmem:[#allocation6 + $0x58] sm:$0xf]
    %v5703 = vld [vmem:[#allocation6 + $0x5c] sm:$0xf]
    %v5704 = vld [vmem:[#allocation6 + $0x60] sm:$0xf]
    %v5705 = vld [vmem:[#allocation6 + $0x64] sm:$0xf]
    %v5706 = vld [vmem:[#allocation6 + $0x68] sm:$0xf]
    %v5707 = vld [vmem:[#allocation6 + $0x6c] sm:$0xf]
    %v5708 = vld [vmem:[#allocation6 + $0x70] sm:$0xf]
    %v5709 = vld [vmem:[#allocation6 + $0x74] sm:$0xf]
    %v5710 = vld [vmem:[#allocation6 + $0x78] sm:$0xf]
    %v5711 = vld [vmem:[#allocation6 + $0x7c] sm:$0xf]
    %v5712 = vld [vmem:[#allocation6 + $0x80] sm:$0xf]
    %v5713 = vld [vmem:[#allocation6 + $0x84] sm:$0xf]
    %v5714 = vld [vmem:[#allocation6 + $0x88] sm:$0xf]
    %v5715 = vld [vmem:[#allocation6 + $0x8c] sm:$0xf]
    %v5716 = vld [vmem:[#allocation6 + $0x90] sm:$0xf]
    %v5717 = vld [vmem:[#allocation6 + $0x94] sm:$0xf]
    %v5718 = vld [vmem:[#allocation6 + $0x98] sm:$0xf]
    %v5719 = vld [vmem:[#allocation6 + $0x9c] sm:$0xf]
    %v5720 = vld [vmem:[#allocation6 + $0xa0] sm:$0xf]
    %v5721 = vld [vmem:[#allocation6 + $0xa4] sm:$0xf]
    %v5722 = vld [vmem:[#allocation6 + $0xa8] sm:$0xf]
    %v5723 = vld [vmem:[#allocation6 + $0xac] sm:$0xf]
    %v5724 = vld [vmem:[#allocation6 + $0xb0] sm:$0xf]
    %v5725 = vld [vmem:[#allocation6 + $0xb4] sm:$0xf]
    %v5726 = vld [vmem:[#allocation6 + $0xb8] sm:$0xf]
    %v5727 = vld [vmem:[#allocation6 + $0xbc] sm:$0xf]
    %v5728 = vld [vmem:[#allocation6 + $0xc0] sm:$0xf]
    %v5729 = vld [vmem:[#allocation6 + $0xc4] sm:$0xf]
    %v5730 = vld [vmem:[#allocation6 + $0xc8] sm:$0xf]
    %v5731 = vld [vmem:[#allocation6 + $0xcc] sm:$0xf]
    %v5732 = vld [vmem:[#allocation6 + $0xd0] sm:$0xf]
    %v5733 = vld [vmem:[#allocation6 + $0xd4] sm:$0xf]
    %v5734 = vld [vmem:[#allocation6 + $0xd8] sm:$0xf]
    %v5735 = vld [vmem:[#allocation6 + $0xdc] sm:$0xf]
    %v5736 = vld [vmem:[#allocation6 + $0xe0] sm:$0xf]
    %v5737 = vld [vmem:[#allocation6 + $0xe4] sm:$0xf]
    %v5738 = vld [vmem:[#allocation6 + $0xe8] sm:$0xf]
    %v5739 = vld [vmem:[#allocation6 + $0xec] sm:$0xf]
    %v5740 = vld [vmem:[#allocation6 + $0xf0] sm:$0xf]
    %v5741 = vld [vmem:[#allocation6 + $0xf4] sm:$0xf]
    %v5742 = vld [vmem:[#allocation6 + $0xf8] sm:$0xf]
    %v5743 = vld [vmem:[#allocation6 + $0xfc] sm:$0xf]
    %v5744 = vld [vmem:[#allocation6 + $0x100] sm:$0xf]
    %v5745 = vld [vmem:[#allocation6 + $0x104] sm:$0xf]
    %v5746 = vld [vmem:[#allocation6 + $0x108] sm:$0xf]
    %v5747 = vld [vmem:[#allocation6 + $0x10c] sm:$0xf]
    %v5748 = vld [vmem:[#allocation6 + $0x110] sm:$0xf]
    %v5749 = vld [vmem:[#allocation6 + $0x114] sm:$0xf]
    %v5750 = vld [vmem:[#allocation6 + $0x118] sm:$0xf]
    %v5751 = vld [vmem:[#allocation6 + $0x11c] sm:$0xf]
    %v5752 = vld [vmem:[#allocation6 + $0x120] sm:$0xf]
    %v5753 = vld [vmem:[#allocation6 + $0x124] sm:$0xf]
    %v5754 = vld [vmem:[#allocation6 + $0x128] sm:$0xf]
    %v5755 = vld [vmem:[#allocation6 + $0x12c] sm:$0xf]
    %v5756 = vld [vmem:[#allocation6 + $0x130] sm:$0xf]
    %v5757 = vld [vmem:[#allocation6 + $0x134] sm:$0xf]
    %v5758 = vld [vmem:[#allocation6 + $0x138] sm:$0xf]
    %v5759 = vld [vmem:[#allocation6 + $0x13c] sm:$0xf]
    %v5760 = vld [vmem:[#allocation6 + $0x140] sm:$0xf]
    %v5761 = vld [vmem:[#allocation6 + $0x144] sm:$0xf]
    %v5762 = vld [vmem:[#allocation6 + $0x148] sm:$0xf]
    %v5763 = vld [vmem:[#allocation6 + $0x14c] sm:$0xf]
    %v5764 = vld [vmem:[#allocation6 + $0x150] sm:$0xf]
    %v5765 = vld [vmem:[#allocation6 + $0x154] sm:$0xf]
    %v5766 = vld [vmem:[#allocation6 + $0x158] sm:$0xf]
    %v5767 = vld [vmem:[#allocation6 + $0x15c] sm:$0xf]
    %v5768 = vld [vmem:[#allocation6 + $0x160] sm:$0xf]
    %v5769 = vld [vmem:[#allocation6 + $0x164] sm:$0xf]
    %v5770 = vld [vmem:[#allocation6 + $0x168] sm:$0xf]
    %v5771 = vld [vmem:[#allocation6 + $0x16c] sm:$0xf]
    %v5772 = vld [vmem:[#allocation6 + $0x170] sm:$0xf]
    %v5773 = vld [vmem:[#allocation6 + $0x174] sm:$0xf]
    %v5774 = vld [vmem:[#allocation6 + $0x178] sm:$0xf]
    %v5775 = vld [vmem:[#allocation6 + $0x17c] sm:$0xf]
    %v5776 = vld [vmem:[#allocation6 + $0x180] sm:$0xf]
    %v5777 = vld [vmem:[#allocation6 + $0x184] sm:$0xf]
    %v5778 = vld [vmem:[#allocation6 + $0x188] sm:$0xf]
    %v5779 = vld [vmem:[#allocation6 + $0x18c] sm:$0xf]
    %v5780 = vld [vmem:[#allocation6 + $0x190] sm:$0xf]
    %v5781 = vld [vmem:[#allocation6 + $0x194] sm:$0xf]
    %v5782 = vld [vmem:[#allocation6 + $0x198] sm:$0xf]
    %v5783 = vld [vmem:[#allocation6 + $0x19c] sm:$0xf]
    %v5784 = vld [vmem:[#allocation6 + $0x1a0] sm:$0xf]
    %v5785 = vld [vmem:[#allocation6 + $0x1a4] sm:$0xf]
    %v5786 = vld [vmem:[#allocation6 + $0x1a8] sm:$0xf]
    %v5787 = vld [vmem:[#allocation6 + $0x1ac] sm:$0xf]
    %v5788 = vld [vmem:[#allocation6 + $0x1b0] sm:$0xf]
    %v5789 = vld [vmem:[#allocation6 + $0x1b4] sm:$0xf]
    %v5790 = vld [vmem:[#allocation6 + $0x1b8] sm:$0xf]
    %v5791 = vld [vmem:[#allocation6 + $0x1bc] sm:$0xf]
    %v5792 = vld [vmem:[#allocation6 + $0x1c0] sm:$0xf]
    %v5793 = vld [vmem:[#allocation6 + $0x1c4] sm:$0xf]
    %v5794 = vld [vmem:[#allocation6 + $0x1c8] sm:$0xf]
    %v5795 = vld [vmem:[#allocation6 + $0x1cc] sm:$0xf]
    %v5796 = vld [vmem:[#allocation6 + $0x1d0] sm:$0xf]
    %v5797 = vld [vmem:[#allocation6 + $0x1d4] sm:$0xf]
    %v5798 = vld [vmem:[#allocation6 + $0x1d8] sm:$0xf]
    %v5799 = vld [vmem:[#allocation6 + $0x1dc] sm:$0xf]
    %v5800 = vld [vmem:[#allocation6 + $0x1e0] sm:$0xf]
    %v5801 = vld [vmem:[#allocation6 + $0x1e4] sm:$0xf]
    %v5802 = vld [vmem:[#allocation6 + $0x1e8] sm:$0xf]
    %v5803 = vld [vmem:[#allocation6 + $0x1ec] sm:$0xf]
    %v5804 = vld [vmem:[#allocation6 + $0x1f0] sm:$0xf]
    %v5805 = vld [vmem:[#allocation6 + $0x1f4] sm:$0xf]
    %v5806 = vld [vmem:[#allocation6 + $0x1f8] sm:$0xf]
    %v5807 = vld [vmem:[#allocation6 + $0x1fc] sm:$0xf]
    %v5808 = vld [vmem:[%s15] sm:$0x1]
    %v5810 = vlaneseq
    %v5811 = vshrl.u32 %v5810, 7
    %v5812 = vsub.s32 0, %v5811
    %v5813 = vrot.slane %v5808, %v5812
    %v5943 = vunpack.c.l.b16 %v5680
    %v5944 = vunpack.c.l.b16 %v5681
    %v5945 = vunpack.c.l.b16 %v5682
    %v5946 = vunpack.c.l.b16 %v5683
    %v5947 = vunpack.c.l.b16 %v5684
    %v5948 = vunpack.c.l.b16 %v5685
    %v5949 = vunpack.c.l.b16 %v5686
    %v5950 = vunpack.c.l.b16 %v5687
    %v5951 = vunpack.c.l.b16 %v5688
    %v5952 = vunpack.c.l.b16 %v5689
    %v5953 = vunpack.c.l.b16 %v5690
    %v5954 = vunpack.c.l.b16 %v5691
    %v5955 = vunpack.c.l.b16 %v5692
    %v5956 = vunpack.c.l.b16 %v5693
    %v5957 = vunpack.c.l.b16 %v5694
    %v5958 = vunpack.c.l.b16 %v5695
    %v5959 = vunpack.c.l.b16 %v5696
    %v5960 = vunpack.c.l.b16 %v5697
    %v5961 = vunpack.c.l.b16 %v5698
    %v5962 = vunpack.c.l.b16 %v5699
    %v5963 = vunpack.c.l.b16 %v5700
    %v5964 = vunpack.c.l.b16 %v5701
    %v5965 = vunpack.c.l.b16 %v5702
    %v5966 = vunpack.c.l.b16 %v5703
    %v5967 = vunpack.c.l.b16 %v5704
    %v5968 = vunpack.c.l.b16 %v5705
    %v5969 = vunpack.c.l.b16 %v5706
    %v5970 = vunpack.c.l.b16 %v5707
    %v5971 = vunpack.c.l.b16 %v5708
    %v5972 = vunpack.c.l.b16 %v5709
    %v5973 = vunpack.c.l.b16 %v5710
    %v5974 = vunpack.c.l.b16 %v5711
    %v5975 = vunpack.c.l.b16 %v5712
    %v5976 = vunpack.c.l.b16 %v5713
    %v5977 = vunpack.c.l.b16 %v5714
    %v5978 = vunpack.c.l.b16 %v5715
    %v5979 = vunpack.c.l.b16 %v5716
    %v5980 = vunpack.c.l.b16 %v5717
    %v5981 = vunpack.c.l.b16 %v5718
    %v5982 = vunpack.c.l.b16 %v5719
    %v5983 = vunpack.c.l.b16 %v5720
    %v5984 = vunpack.c.l.b16 %v5721
    %v5985 = vunpack.c.l.b16 %v5722
    %v5986 = vunpack.c.l.b16 %v5723
    %v5987 = vunpack.c.l.b16 %v5724
    %v5988 = vunpack.c.l.b16 %v5725
    %v5989 = vunpack.c.l.b16 %v5726
    %v5990 = vunpack.c.l.b16 %v5727
    %v5991 = vunpack.c.l.b16 %v5728
    %v5992 = vunpack.c.l.b16 %v5729
    %v5993 = vunpack.c.l.b16 %v5730
    %v5994 = vunpack.c.l.b16 %v5731
    %v5995 = vunpack.c.l.b16 %v5732
    %v5996 = vunpack.c.l.b16 %v5733
    %v5997 = vunpack.c.l.b16 %v5734
    %v5998 = vunpack.c.l.b16 %v5735
    %v5999 = vunpack.c.l.b16 %v5736
    %v6000 = vunpack.c.l.b16 %v5737
    %v6001 = vunpack.c.l.b16 %v5738
    %v6002 = vunpack.c.l.b16 %v5739
    %v6003 = vunpack.c.l.b16 %v5740
    %v6004 = vunpack.c.l.b16 %v5741
    %v6005 = vunpack.c.l.b16 %v5742
    %v6006 = vunpack.c.l.b16 %v5743
    %v6007 = vunpack.c.l.b16 %v5744
    %v6008 = vunpack.c.l.b16 %v5745
    %v6009 = vunpack.c.l.b16 %v5746
    %v6010 = vunpack.c.l.b16 %v5747
    %v6011 = vunpack.c.l.b16 %v5748
    %v6012 = vunpack.c.l.b16 %v5749
    %v6013 = vunpack.c.l.b16 %v5750
    %v6014 = vunpack.c.l.b16 %v5751
    %v6015 = vunpack.c.l.b16 %v5752
    %v6016 = vunpack.c.l.b16 %v5753
    %v6017 = vunpack.c.l.b16 %v5754
    %v6018 = vunpack.c.l.b16 %v5755
    %v6019 = vunpack.c.l.b16 %v5756
    %v6020 = vunpack.c.l.b16 %v5757
    %v6021 = vunpack.c.l.b16 %v5758
    %v6022 = vunpack.c.l.b16 %v5759
    %v6023 = vunpack.c.l.b16 %v5760
    %v6024 = vunpack.c.l.b16 %v5761
    %v6025 = vunpack.c.l.b16 %v5762
    %v6026 = vunpack.c.l.b16 %v5763
    %v6027 = vunpack.c.l.b16 %v5764
    %v6028 = vunpack.c.l.b16 %v5765
    %v6029 = vunpack.c.l.b16 %v5766
    %v6030 = vunpack.c.l.b16 %v5767
    %v6031 = vunpack.c.l.b16 %v5768
    %v6032 = vunpack.c.l.b16 %v5769
    %v6033 = vunpack.c.l.b16 %v5770
    %v6034 = vunpack.c.l.b16 %v5771
    %v6035 = vunpack.c.l.b16 %v5772
    %v6036 = vunpack.c.l.b16 %v5773
    %v6037 = vunpack.c.l.b16 %v5774
    %v6038 = vunpack.c.l.b16 %v5775
    %v6039 = vunpack.c.l.b16 %v5776
    %v6040 = vunpack.c.l.b16 %v5777
    %v6041 = vunpack.c.l.b16 %v5778
    %v6042 = vunpack.c.l.b16 %v5779
    %v6043 = vunpack.c.l.b16 %v5780
    %v6044 = vunpack.c.l.b16 %v5781
    %v6045 = vunpack.c.l.b16 %v5782
    %v6046 = vunpack.c.l.b16 %v5783
    %v6047 = vunpack.c.l.b16 %v5784
    %v6048 = vunpack.c.l.b16 %v5785
    %v6049 = vunpack.c.l.b16 %v5786
    %v6050 = vunpack.c.l.b16 %v5787
    %v6051 = vunpack.c.l.b16 %v5788
    %v6052 = vunpack.c.l.b16 %v5789
    %v6053 = vunpack.c.l.b16 %v5790
    %v6054 = vunpack.c.l.b16 %v5791
    %v6055 = vunpack.c.l.b16 %v5792
    %v6056 = vunpack.c.l.b16 %v5793
    %v6057 = vunpack.c.l.b16 %v5794
    %v6058 = vunpack.c.l.b16 %v5795
    %v6059 = vunpack.c.l.b16 %v5796
    %v6060 = vunpack.c.l.b16 %v5797
    %v6061 = vunpack.c.l.b16 %v5798
    %v6062 = vunpack.c.l.b16 %v5799
    %v6063 = vunpack.c.l.b16 %v5800
    %v6064 = vunpack.c.l.b16 %v5801
    %v6065 = vunpack.c.l.b16 %v5802
    %v6066 = vunpack.c.l.b16 %v5803
    %v6067 = vunpack.c.l.b16 %v5804
    %v6068 = vunpack.c.l.b16 %v5805
    %v6069 = vunpack.c.l.b16 %v5806
    %v6070 = vunpack.c.l.b16 %v5807
    %v6071 = vpack.c.b16 %v5944, %v5943
    %v6072 = vpack.c.b16 %v5946, %v5945
    %v6073 = vpack.c.b16 %v5948, %v5947
    %v6074 = vpack.c.b16 %v5950, %v5949
    %v6075 = vpack.c.b16 %v5952, %v5951
    %v6076 = vpack.c.b16 %v5954, %v5953
    %v6077 = vpack.c.b16 %v5956, %v5955
    %v6078 = vpack.c.b16 %v5958, %v5957
    %v6079 = vpack.c.b16 %v5960, %v5959
    %v6080 = vpack.c.b16 %v5962, %v5961
    %v6081 = vpack.c.b16 %v5964, %v5963
    %v6082 = vpack.c.b16 %v5966, %v5965
    %v6083 = vpack.c.b16 %v5968, %v5967
    %v6084 = vpack.c.b16 %v5970, %v5969
    %v6085 = vpack.c.b16 %v5972, %v5971
    %v6086 = vpack.c.b16 %v5974, %v5973
    %v6087 = vpack.c.b16 %v5976, %v5975
    %v6088 = vpack.c.b16 %v5978, %v5977
    %v6089 = vpack.c.b16 %v5980, %v5979
    %v6090 = vpack.c.b16 %v5982, %v5981
    %v6091 = vpack.c.b16 %v5984, %v5983
    %v6092 = vpack.c.b16 %v5986, %v5985
    %v6093 = vpack.c.b16 %v5988, %v5987
    %v6094 = vpack.c.b16 %v5990, %v5989
    %v6095 = vpack.c.b16 %v5992, %v5991
    %v6096 = vpack.c.b16 %v5994, %v5993
    %v6097 = vpack.c.b16 %v5996, %v5995
    %v6098 = vpack.c.b16 %v5998, %v5997
    %v6099 = vpack.c.b16 %v6000, %v5999
    %v6100 = vpack.c.b16 %v6002, %v6001
    %v6101 = vpack.c.b16 %v6004, %v6003
    %v6102 = vpack.c.b16 %v6006, %v6005
    %v6103 = vpack.c.b16 %v6008, %v6007
    %v6104 = vpack.c.b16 %v6010, %v6009
    %v6105 = vpack.c.b16 %v6012, %v6011
    %v6106 = vpack.c.b16 %v6014, %v6013
    %v6107 = vpack.c.b16 %v6016, %v6015
    %v6108 = vpack.c.b16 %v6018, %v6017
    %v6109 = vpack.c.b16 %v6020, %v6019
    %v6110 = vpack.c.b16 %v6022, %v6021
    %v6111 = vpack.c.b16 %v6024, %v6023
    %v6112 = vpack.c.b16 %v6026, %v6025
    %v6113 = vpack.c.b16 %v6028, %v6027
    %v6114 = vpack.c.b16 %v6030, %v6029
    %v6115 = vpack.c.b16 %v6032, %v6031
    %v6116 = vpack.c.b16 %v6034, %v6033
    %v6117 = vpack.c.b16 %v6036, %v6035
    %v6118 = vpack.c.b16 %v6038, %v6037
    %v6119 = vpack.c.b16 %v6040, %v6039
    %v6120 = vpack.c.b16 %v6042, %v6041
    %v6121 = vpack.c.b16 %v6044, %v6043
    %v6122 = vpack.c.b16 %v6046, %v6045
    %v6123 = vpack.c.b16 %v6048, %v6047
    %v6124 = vpack.c.b16 %v6050, %v6049
    %v6125 = vpack.c.b16 %v6052, %v6051
    %v6126 = vpack.c.b16 %v6054, %v6053
    %v6127 = vpack.c.b16 %v6056, %v6055
    %v6128 = vpack.c.b16 %v6058, %v6057
    %v6129 = vpack.c.b16 %v6060, %v6059
    %v6130 = vpack.c.b16 %v6062, %v6061
    %v6131 = vpack.c.b16 %v6064, %v6063
    %v6132 = vpack.c.b16 %v6066, %v6065
    %v6133 = vpack.c.b16 %v6068, %v6067
    %v6134 = vpack.c.b16 %v6070, %v6069
    %6199 = vmatprep.subr.bf16.mxu0 0
    %6200 = vmatpush1.bf16.msra.mxu0 %v6078
    %6201 = vmatprep.subr.bf16.mxu0 0
    %6202 = vmatpush1.bf16.msra.mxu0 %v6077
    %6203 = vmatprep.subr.bf16.mxu0 0
    %6204 = vmatpush1.bf16.msra.mxu0 %v6076
    %6205 = vmatprep.subr.bf16.mxu0 0
    %6206 = vmatpush1.bf16.msra.mxu0 %v6075
    %6207 = vmatprep.subr.bf16.mxu0 0
    %6208 = vmatpush1.bf16.msra.mxu0 %v6074
    %6209 = vmatprep.subr.bf16.mxu0 0
    %6210 = vmatpush1.bf16.msra.mxu0 %v6073
    %6211 = vmatprep.subr.bf16.mxu0 0
    %6212 = vmatpush1.bf16.msra.mxu0 %v6072
    %6213 = vmatprep.subr.bf16.mxu0 0
    %6214 = vmatpush1.bf16.msra.mxu0 %v6071
    %6215 = vmatprep.subr.bf16.mxu0 0
    %6216 = vmatpush2.bf16.msra.mxu0 %v6086
    %6217 = vmatprep.subr.bf16.mxu0 0
    %6218 = vmatpush2.bf16.msra.mxu0 %v6085
    %6219 = vmatprep.subr.bf16.mxu0 0
    %6220 = vmatpush2.bf16.msra.mxu0 %v6084
    %6221 = vmatprep.subr.bf16.mxu0 0
    %6222 = vmatpush2.bf16.msra.mxu0 %v6083
    %6223 = vmatprep.subr.bf16.mxu0 0
    %6224 = vmatpush2.bf16.msra.mxu0 %v6082
    %6225 = vmatprep.subr.bf16.mxu0 0
    %6226 = vmatpush2.bf16.msra.mxu0 %v6081
    %6227 = vmatprep.subr.bf16.mxu0 0
    %6228 = vmatpush2.bf16.msra.mxu0 %v6080
    %6229 = vmatprep.subr.bf16.mxu0 0
    %6230 = vmatpush2.bf16.msra.mxu0 %v6079
    %6231 = vmatprep.mubr.bf16.mxu0 %v5649
    %6232 = vmatmul.mubr.bf16.gmra.mxu0 %v5648
    %v6233 = vpop.f32.mrf.mxu0
    %v6234 = vadd.f32 %v5813, %v6233
    %v6235 = vpop.f32.mrf.mxu0
    %v6236 = vpop.f32.mrf.mxu0
    %v6237 = vadd.f32 %v5813, %v6236
    %v6238 = vpop.f32.mrf.mxu0
    %6239 = vmatprep.mubr.bf16.mxu0 %v5657
    %6240 = vmatmul.mubr.bf16.gmra.mxu0 %v5656
    %v6241 = vpop.f32.mrf.mxu0
    %v6242 = vadd.f32 %v5813, %v6241
    %v6243 = vpop.f32.mrf.mxu0
    %v6244 = vpop.f32.mrf.mxu0
    %v6245 = vadd.f32 %v5813, %v6244
    %v6246 = vpop.f32.mrf.mxu0
    %6247 = vmatprep.mubr.bf16.mxu0 %v5665
    %6248 = vmatmul.mubr.bf16.gmra.mxu0 %v5664
    %v6249 = vpop.f32.mrf.mxu0
    %v6250 = vadd.f32 %v5813, %v6249
    %v6251 = vpop.f32.mrf.mxu0
    %v6252 = vpop.f32.mrf.mxu0
    %v6253 = vadd.f32 %v5813, %v6252
    %v6254 = vpop.f32.mrf.mxu0
    %6255 = vmatprep.mubr.bf16.mxu0 %v5673
    %6256 = vmatmul.mubr.bf16.gmra.mxu0 %v5672
    %v6257 = vpop.f32.mrf.mxu0
    %v6258 = vadd.f32 %v5813, %v6257
    %v6259 = vpop.f32.mrf.mxu0
    %v6260 = vpop.f32.mrf.mxu0
    %v6261 = vadd.f32 %v5813, %v6260
    %v6262 = vpop.f32.mrf.mxu0
    %6263 = vdwg.mxu0
    %6264 = vmatprep.subr.bf16.mxu0 0
    %6265 = vmatpush1.bf16.msra.mxu0 %v6094
    %6266 = vmatprep.subr.bf16.mxu0 0
    %6267 = vmatpush1.bf16.msra.mxu0 %v6093
    %6268 = vmatprep.subr.bf16.mxu0 0
    %6269 = vmatpush1.bf16.msra.mxu0 %v6092
    %6270 = vmatprep.subr.bf16.mxu0 0
    %6271 = vmatpush1.bf16.msra.mxu0 %v6091
    %6272 = vmatprep.subr.bf16.mxu0 0
    %6273 = vmatpush1.bf16.msra.mxu0 %v6090
    %6274 = vmatprep.subr.bf16.mxu0 0
    %6275 = vmatpush1.bf16.msra.mxu0 %v6089
    %6276 = vmatprep.subr.bf16.mxu0 0
    %6277 = vmatpush1.bf16.msra.mxu0 %v6088
    %6278 = vmatprep.subr.bf16.mxu0 0
    %6279 = vmatpush1.bf16.msra.mxu0 %v6087
    %6280 = vmatprep.subr.bf16.mxu0 0
    %6281 = vmatpush2.bf16.msra.mxu0 %v6102
    %6282 = vmatprep.subr.bf16.mxu0 0
    %6283 = vmatpush2.bf16.msra.mxu0 %v6101
    %6284 = vmatprep.subr.bf16.mxu0 0
    %6285 = vmatpush2.bf16.msra.mxu0 %v6100
    %6286 = vmatprep.subr.bf16.mxu0 0
    %6287 = vmatpush2.bf16.msra.mxu0 %v6099
    %6288 = vmatprep.subr.bf16.mxu0 0
    %6289 = vmatpush2.bf16.msra.mxu0 %v6098
    %6290 = vmatprep.subr.bf16.mxu0 0
    %6291 = vmatpush2.bf16.msra.mxu0 %v6097
    %6292 = vmatprep.subr.bf16.mxu0 0
    %6293 = vmatpush2.bf16.msra.mxu0 %v6096
    %6294 = vmatprep.subr.bf16.mxu0 0
    %6295 = vmatpush2.bf16.msra.mxu0 %v6095
    %6296 = vmatprep.mubr.bf16.mxu0 %v5651
    %6297 = vmatmul.mubr.bf16.gmra.mxu0 %v5650
    %v6298 = vpop.f32.mrf.mxu0
    %v6299 = vadd.f32 %v6234, %v6298
    %v6300 = vpop.f32.mrf.mxu0
    %v6301 = vpop.f32.mrf.mxu0
    %v6302 = vadd.f32 %v6237, %v6301
    %v6303 = vpop.f32.mrf.mxu0
    %6304 = vmatprep.mubr.bf16.mxu0 %v5659
    %6305 = vmatmul.mubr.bf16.gmra.mxu0 %v5658
    %v6306 = vpop.f32.mrf.mxu0
    %v6307 = vadd.f32 %v6242, %v6306
    %v6308 = vpop.f32.mrf.mxu0
    %v6309 = vpop.f32.mrf.mxu0
    %v6310 = vadd.f32 %v6245, %v6309
    %v6311 = vpop.f32.mrf.mxu0
    %6312 = vmatprep.mubr.bf16.mxu0 %v5667
    %6313 = vmatmul.mubr.bf16.gmra.mxu0 %v5666
    %v6314 = vpop.f32.mrf.mxu0
    %v6315 = vadd.f32 %v6250, %v6314
    %v6316 = vpop.f32.mrf.mxu0
    %v6317 = vpop.f32.mrf.mxu0
    %v6318 = vadd.f32 %v6253, %v6317
    %v6319 = vpop.f32.mrf.mxu0
    %6320 = vmatprep.mubr.bf16.mxu0 %v5675
    %6321 = vmatmul.mubr.bf16.gmra.mxu0 %v5674
    %v6322 = vpop.f32.mrf.mxu0
    %v6323 = vadd.f32 %v6258, %v6322
    %v6324 = vpop.f32.mrf.mxu0
    %v6325 = vpop.f32.mrf.mxu0
    %v6326 = vadd.f32 %v6261, %v6325
    %v6327 = vpop.f32.mrf.mxu0
    %6328 = vdwg.mxu0
    %6329 = vmatprep.subr.bf16.mxu0 0
    %6330 = vmatpush1.bf16.msra.mxu0 %v6110
    %6331 = vmatprep.subr.bf16.mxu0 0
    %6332 = vmatpush1.bf16.msra.mxu0 %v6109
    %6333 = vmatprep.subr.bf16.mxu0 0
    %6334 = vmatpush1.bf16.msra.mxu0 %v6108
    %6335 = vmatprep.subr.bf16.mxu0 0
    %6336 = vmatpush1.bf16.msra.mxu0 %v6107
    %6337 = vmatprep.subr.bf16.mxu0 0
    %6338 = vmatpush1.bf16.msra.mxu0 %v6106
    %6339 = vmatprep.subr.bf16.mxu0 0
    %6340 = vmatpush1.bf16.msra.mxu0 %v6105
    %6341 = vmatprep.subr.bf16.mxu0 0
    %6342 = vmatpush1.bf16.msra.mxu0 %v6104
    %6343 = vmatprep.subr.bf16.mxu0 0
    %6344 = vmatpush1.bf16.msra.mxu0 %v6103
    %6345 = vmatprep.subr.bf16.mxu0 0
    %6346 = vmatpush2.bf16.msra.mxu0 %v6118
    %6347 = vmatprep.subr.bf16.mxu0 0
    %6348 = vmatpush2.bf16.msra.mxu0 %v6117
    %6349 = vmatprep.subr.bf16.mxu0 0
    %6350 = vmatpush2.bf16.msra.mxu0 %v6116
    %6351 = vmatprep.subr.bf16.mxu0 0
    %6352 = vmatpush2.bf16.msra.mxu0 %v6115
    %6353 = vmatprep.subr.bf16.mxu0 0
    %6354 = vmatpush2.bf16.msra.mxu0 %v6114
    %6355 = vmatprep.subr.bf16.mxu0 0
    %6356 = vmatpush2.bf16.msra.mxu0 %v6113
    %6357 = vmatprep.subr.bf16.mxu0 0
    %6358 = vmatpush2.bf16.msra.mxu0 %v6112
    %6359 = vmatprep.subr.bf16.mxu0 0
    %6360 = vmatpush2.bf16.msra.mxu0 %v6111
    %6361 = vmatprep.mubr.bf16.mxu0 %v5653
    %6362 = vmatmul.mubr.bf16.gmra.mxu0 %v5652
    %v6363 = vpop.f32.mrf.mxu0
    %v6364 = vadd.f32 %v6299, %v6363
    %v6365 = vpop.f32.mrf.mxu0
    %v6366 = vpop.f32.mrf.mxu0
    %v6367 = vadd.f32 %v6302, %v6366
    %v6368 = vpop.f32.mrf.mxu0
    %6369 = vmatprep.mubr.bf16.mxu0 %v5661
    %6370 = vmatmul.mubr.bf16.gmra.mxu0 %v5660
    %v6371 = vpop.f32.mrf.mxu0
    %v6372 = vadd.f32 %v6307, %v6371
    %v6373 = vpop.f32.mrf.mxu0
    %v6374 = vpop.f32.mrf.mxu0
    %v6375 = vadd.f32 %v6310, %v6374
    %v6376 = vpop.f32.mrf.mxu0
    %6377 = vmatprep.mubr.bf16.mxu0 %v5669
    %6378 = vmatmul.mubr.bf16.gmra.mxu0 %v5668
    %v6379 = vpop.f32.mrf.mxu0
    %v6380 = vadd.f32 %v6315, %v6379
    %v6381 = vpop.f32.mrf.mxu0
    %v6382 = vpop.f32.mrf.mxu0
    %v6383 = vadd.f32 %v6318, %v6382
    %v6384 = vpop.f32.mrf.mxu0
    %6385 = vmatprep.mubr.bf16.mxu0 %v5677
    %6386 = vmatmul.mubr.bf16.gmra.mxu0 %v5676
    %v6387 = vpop.f32.mrf.mxu0
    %v6388 = vadd.f32 %v6323, %v6387
    %v6389 = vpop.f32.mrf.mxu0
    %v6390 = vpop.f32.mrf.mxu0
    %v6391 = vadd.f32 %v6326, %v6390
    %v6392 = vpop.f32.mrf.mxu0
    %6393 = vdwg.mxu0
    %6394 = vmatprep.subr.bf16.mxu0 0
    %6395 = vmatpush1.bf16.msra.mxu0 %v6126
    %6396 = vmatprep.subr.bf16.mxu0 0
    %6397 = vmatpush1.bf16.msra.mxu0 %v6125
    %6398 = vmatprep.subr.bf16.mxu0 0
    %6399 = vmatpush1.bf16.msra.mxu0 %v6124
    %6400 = vmatprep.subr.bf16.mxu0 0
    %6401 = vmatpush1.bf16.msra.mxu0 %v6123
    %6402 = vmatprep.subr.bf16.mxu0 0
    %6403 = vmatpush1.bf16.msra.mxu0 %v6122
    %6404 = vmatprep.subr.bf16.mxu0 0
    %6405 = vmatpush1.bf16.msra.mxu0 %v6121
    %6406 = vmatprep.subr.bf16.mxu0 0
    %6407 = vmatpush1.bf16.msra.mxu0 %v6120
    %6408 = vmatprep.subr.bf16.mxu0 0
    %6409 = vmatpush1.bf16.msra.mxu0 %v6119
    %6410 = vmatprep.subr.bf16.mxu0 0
    %6411 = vmatpush2.bf16.msra.mxu0 %v6134
    %6412 = vmatprep.subr.bf16.mxu0 0
    %6413 = vmatpush2.bf16.msra.mxu0 %v6133
    %6414 = vmatprep.subr.bf16.mxu0 0
    %6415 = vmatpush2.bf16.msra.mxu0 %v6132
    %6416 = vmatprep.subr.bf16.mxu0 0
    %6417 = vmatpush2.bf16.msra.mxu0 %v6131
    %6418 = vmatprep.subr.bf16.mxu0 0
    %6419 = vmatpush2.bf16.msra.mxu0 %v6130
    %6420 = vmatprep.subr.bf16.mxu0 0
    %6421 = vmatpush2.bf16.msra.mxu0 %v6129
    %6422 = vmatprep.subr.bf16.mxu0 0
    %6423 = vmatpush2.bf16.msra.mxu0 %v6128
    %6424 = vmatprep.subr.bf16.mxu0 0
    %6425 = vmatpush2.bf16.msra.mxu0 %v6127
    %6426 = vmatprep.mubr.bf16.mxu0 %v5655
    %6427 = vmatmul.mubr.bf16.gmra.mxu0 %v5654
    %v6428 = vpop.f32.mrf.mxu0
    %v6429 = vadd.f32 %v6364, %v6428
    %v6430 = vpop.f32.mrf.mxu0
    %v6431 = vpop.f32.mrf.mxu0
    %v6432 = vadd.f32 %v6367, %v6431
    %v6433 = vpop.f32.mrf.mxu0
    %6434 = vmatprep.mubr.bf16.mxu0 %v5663
    %6435 = vmatmul.mubr.bf16.gmra.mxu0 %v5662
    %v6436 = vpop.f32.mrf.mxu0
    %v6437 = vadd.f32 %v6372, %v6436
    %v6438 = vpop.f32.mrf.mxu0
    %v6439 = vpop.f32.mrf.mxu0
    %v6440 = vadd.f32 %v6375, %v6439
    %v6441 = vpop.f32.mrf.mxu0
    %6442 = vmatprep.mubr.bf16.mxu0 %v5671
    %6443 = vmatmul.mubr.bf16.gmra.mxu0 %v5670
    %v6444 = vpop.f32.mrf.mxu0
    %v6445 = vadd.f32 %v6380, %v6444
    %v6446 = vpop.f32.mrf.mxu0
    %v6447 = vpop.f32.mrf.mxu0
    %v6448 = vadd.f32 %v6383, %v6447
    %v6449 = vpop.f32.mrf.mxu0
    %6450 = vmatprep.mubr.bf16.mxu0 %v5679
    %6451 = vmatmul.mubr.bf16.gmra.mxu0 %v5678
    %v6452 = vpop.f32.mrf.mxu0
    %v6453 = vadd.f32 %v6388, %v6452
    %v6454 = vpop.f32.mrf.mxu0
    %v6455 = vpop.f32.mrf.mxu0
    %v6456 = vadd.f32 %v6391, %v6455
    %v6457 = vpop.f32.mrf.mxu0
    %6458 = vdwg.mxu0
    %6459 = vst [vmem:[%s16] sm:$0xff] %v6429
    %6460 = vst [vmem:[%s16 + $0x8] sm:$0xff] %v6432
    %6461 = vst [vmem:[%s16 + $0x10] sm:$0xff] %v6437
    %6462 = vst [vmem:[%s16 + $0x18] sm:$0xff] %v6440
    %6463 = vst [vmem:[%s16 + $0x20] sm:$0xff] %v6445
    %6464 = vst [vmem:[%s16 + $0x28] sm:$0xff] %v6448
    %6465 = vst [vmem:[%s16 + $0x30] sm:$0xff] %v6453
    %6466 = vst [vmem:[%s16 + $0x38] sm:$0xff] %v6456
    // Predicated region
    $region90: #{kinematics_lstm_forward.1} parent=1 // pred_check
      _
    $region91: #{kinematics_lstm_forward.1} parent=1 // pred_check_branch
      %6468 = sbr.rel (0) target = $region93
    $region92: #{kinematics_lstm_forward.1} parent=1 // pred_region
      _
    $region93: #{kinematics_lstm_forward.1} parent=1 // pred_fallthru
      _
    // Predicated region
    $region94: #{kinematics_lstm_forward.1} parent=1 // pred_check
      _
    $region95: #{kinematics_lstm_forward.1} parent=1 // pred_check_branch
      %6470 = sbr.rel (0) target = $region97
    $region96: #{kinematics_lstm_forward.1} parent=1 // pred_region
      _
    $region97: #{kinematics_lstm_forward.1} parent=1 // pred_fallthru
      _
    %6471 = vsyncpa [#allocation9], 1
    %6472 = vsyncpa [#allocation11], 1
    %6473 = vsyncpa [#allocation14], 1
    %6474 = vsyncpa [#allocation17], 1
  %6475 = vsyncmov [#allocation7]
  %s6476 = vpop.sfrf %6475
  %p6477 = scmp.eq.s32.totalorder %s6476, 0
  %p6478 = pneg %p6477
  %6480 = shalt.err (%p6478)
  %s6481 = scalar_lea.sflag [#allocation7], 1
  %6482 = vsyncmov %s6481
  %s6483 = vpop.sfrf %6482
  %p6484 = scmp.eq.s32.totalorder %s6483, 0
  %p6485 = pneg %p6484
  %6487 = shalt.err (%p6485)

</llo_original>
